<compile_context>
chip_gen: v7x
topology: tpu7x:2x2x1
jax: 0.10.0
libtpu: 0.0.40
codegen_flags: <defaults>
</compile_context>

<pallas_src>
import functools

import jax
import jax.numpy as jnp
from jax.experimental import pallas as pl
from jax.experimental.pallas import tpu as pltpu


# ----------------------------------------------------------------------------
# Kernels
# ----------------------------------------------------------------------------
def _se_fused_kernel(x_ref, w1_ref, w2_ref, o_ref):
    """Fused pool+fc1 path: the global average pool is folded into fc1.

    x_ref : (nb, C*HW)   lane-dense flattened activations (one x block)
    w1_ref: (C*HW, Cmid) fc1 weight with 1/HW folded in, replicated over HW
    w2_ref: (Cmid, C)    fc2 weight (in-major)
    o_ref : (nb, C)      hsigmoid gate
    """
    # pool + fc1 as a single MXU matmul, f32 accumulation.
    h = jnp.dot(x_ref[...], w1_ref[...], preferred_element_type=jnp.float32)
    h = jnp.maximum(h, 0.0)                                        # ReLU
    # fc2 (tiny: K = Cmid)
    g = jnp.dot(h, w2_ref[...].astype(jnp.float32),
                preferred_element_type=jnp.float32)
    # Hsigmoid exactly as in the module: relu6(x + 3) / 3
    o_ref[...] = (jnp.clip(g + 3.0, 0.0, 6.0) * (1.0 / 3.0)).astype(o_ref.dtype)


def _se_pooled_kernel(x_ref, w1_ref, w2_ref, o_ref):
    """Plain path: VPU/XLU reduce for the pool, then two small MXU matmuls.

    x_ref : (nb, C, HW)  lane-dense activations (H*W on the lane axis)
    w1_ref: (C, Cmid)    fc1 weight (in-major)
    w2_ref: (Cmid, C)    fc2 weight (in-major)
    o_ref : (nb, C)
    """
    inv_hw = 1.0 / float(x_ref.shape[-1])
    # f32 accumulation for the pool even if x is bf16.
    y = jnp.sum(x_ref[...].astype(jnp.float32), axis=-1) * inv_hw   # (nb, C)
    h = jnp.maximum(
        jnp.dot(y, w1_ref[...].astype(jnp.float32),
                preferred_element_type=jnp.float32), 0.0)           # (nb, Cmid)
    g = jnp.dot(h, w2_ref[...].astype(jnp.float32),
                preferred_element_type=jnp.float32)                 # (nb, C)
    o_ref[...] = (jnp.clip(g + 3.0, 0.0, 6.0) * (1.0 / 3.0)).astype(o_ref.dtype)


# ----------------------------------------------------------------------------
# Block-size / VMEM heuristics
# ----------------------------------------------------------------------------
def _pick_batch_block(n, row_bytes, target_bytes=8 << 20):
    """Pick a batch block: ~8 MiB of x per block, multiple of 8 rows, and at
    least 2 grid steps when the batch allows (so both v7x TensorCores work)."""
    nb = max(1, int(target_bytes // max(row_bytes, 1)))
    nb = min(nb, n)
    if nb >= n and n >= 16:
        nb = n // 2                       # force >= 2 grid steps
    if nb >= n:
        return n                          # tiny batch: one full block
    nb = max(8, (nb // 8) * 8)            # sublane-aligned batch tile
    nb = min(nb, n)
    if nb >= n:
        return n
    return int(nb)


def _vmem_limit_bytes(block_bytes, out_bytes, weight_bytes):
    # 2x for double-buffered pipelining of each operand, plus slack for Mosaic
    # internal scratch.  Cap at 48 MiB so it always fits v7x's 64 MiB VMEM.
    needed = 2 * (block_bytes + out_bytes + weight_bytes) + (2 << 20)
    return int(min(max(needed, 16 << 20), 48 << 20))


# ----------------------------------------------------------------------------
# Wrapper
# ----------------------------------------------------------------------------
def se_attention_pallas(x_nchw, fc1_weight, fc2_weight, *, batch_block=None,
                        fuse_pool_into_fc1=True):
    """SEAttention.forward.

    x_nchw    : (N, C, H, W)   activations (f32 or bf16; bf16 halves HBM traffic)
    fc1_weight: (C//r, C)      PyTorch nn.Linear layout (out_features, in_features)
    fc2_weight: (C, C//r)      PyTorch nn.Linear layout
    Returns the gate of shape (N, C, 1, 1), matching the PyTorch module.

    fuse_pool_into_fc1=True (default) folds 1/HW into an HW-replicated fc1
    weight so the pool runs on the MXU (best on v7x).  Set it to False for very
    large H*W (replicated weight is C*HW*Cmid elements) or on v5e.
    """
    N, C, H, W = x_nchw.shape
    HW = H * W
    Cmid = fc1_weight.shape[0]
    assert fc1_weight.shape == (Cmid, C), (
        f"fc1_weight must be (C//r, C)={Cmid, C}, got {fc1_weight.shape}")
    assert fc2_weight.shape == (C, Cmid), (
        f"fc2_weight must be (C, C//r)={C, Cmid}, got {fc2_weight.shape}")

    w1 = jnp.transpose(fc1_weight)        # (C, Cmid)   in-major
    w2 = jnp.transpose(fc2_weight)        # (Cmid, C)   in-major

    itemsize = jnp.dtype(x_nchw.dtype).itemsize
    row_bytes = C * HW * itemsize
    nb = _pick_batch_block(N, row_bytes) if batch_block is None else min(int(batch_block), N)
    grid = (pl.cdiv(N, nb),)
    out_bytes = nb * C * 4

    if fuse_pool_into_fc1:
        # Free re-layout: NCHW is contiguous, so (N, C*H*W) is just a view.
        x_flat = x_nchw.reshape(N, C * HW)
        # Row c*HW + hw of the replicated weight holds w1[c, :] / HW, matching
        # x_flat's (c, hw) flattening order.
        w1_eff = jnp.repeat(w1 * (1.0 / float(HW)), HW, axis=0).astype(x_nchw.dtype)
        weight_bytes = w1_eff.size * jnp.dtype(w1_eff.dtype).itemsize \
            + w2.size * jnp.dtype(w2.dtype).itemsize
        kernel = _se_fused_kernel
        operands = (x_flat, w1_eff, w2)
        in_specs = [
            pl.BlockSpec((nb, C * HW), lambda i: (i, 0)),
            pl.BlockSpec((C * HW, Cmid), lambda i: (0, 0)),
            pl.BlockSpec((Cmid, C), lambda i: (0, 0)),
        ]
    else:
        # Lane-dense (C on sublanes, H*W on lanes); free reshape from NCHW.
        x3 = x_nchw.reshape(N, C, HW)
        weight_bytes = (w1.size + w2.size) * 4
        kernel = _se_pooled_kernel
        operands = (x3, w1, w2)
        in_specs = [
            pl.BlockSpec((nb, C, HW), lambda i: (i, 0, 0)),
            pl.BlockSpec((C, Cmid), lambda i: (0, 0)),
            pl.BlockSpec((Cmid, C), lambda i: (0, 0)),
        ]

    gate = pl.pallas_call(
        kernel,
        out_shape=jax.ShapeDtypeStruct((N, C), jnp.float32),
        grid_spec=pltpu.PrefetchScalarGridSpec(
            num_scalar_prefetch=0,
            grid=grid,
            in_specs=in_specs,
            out_specs=pl.BlockSpec((nb, C), lambda i: (i, 0)),
        ),
        compiler_params=pltpu.CompilerParams(
            # batch-tile axis: independent blocks -> shards across v7x's 2 TCs
            dimension_semantics=("parallel",),
            vmem_limit_bytes=_vmem_limit_bytes(nb * row_bytes, out_bytes,
                                               weight_bytes),
        ),
    )(*operands)

    return gate.reshape(N, C, 1, 1)


# ----------------------------------------------------------------------------
# Pure-JAX reference (PyTorch-layout weights)
# ----------------------------------------------------------------------------
def se_attention_ref(x_nchw, fc1_weight, fc2_weight):
    y = jnp.mean(x_nchw, axis=(2, 3))                      # (N, C)
    h = jnp.maximum(y @ fc1_weight.T, 0.0)                 # (N, Cmid)
    g = h @ fc2_weight.T                                   # (N, C)
    g = jnp.clip(g + 3.0, 0.0, 6.0) / 3.0                  # module's Hsigmoid (/3)
    return g.reshape(g.shape[0], g.shape[1], 1, 1)


if __name__ == "__main__":
    # channel=64 with the module's default reduction=16 -> Cmid=4.
    # N=16 so the wrapper picks nb=8 and a 2-step parallel grid (exercises
    # pipelining / megacore sharding while staying tiny: x is 1 MiB).
    N, C, H, W = 16, 64, 16, 16
    reduction = 16
    Cmid = C // reduction

    key = jax.random.PRNGKey(0)
    kx, k1, k2 = jax.random.split(key, 3)
    x = jax.random.normal(kx, (N, C, H, W), dtype=jnp.float32)
    # PyTorch nn.Linear layout: (out_features, in_features)
    fc1_w = jax.random.normal(k1, (Cmid, C), dtype=jnp.float32) * (1.0 / jnp.sqrt(C))
    fc2_w = jax.random.normal(k2, (C, Cmid), dtype=jnp.float32) * (1.0 / jnp.sqrt(Cmid))

    ref = se_attention_ref(x, fc1_w, fc2_w)

    # Default (fused pool+fc1, MXU pooling).  Slightly looser tolerance: the
    # pool is accumulated inside a K=C*HW MXU matmul (different accumulation
    # order / possible MXU passes) instead of an exact f32 vector sum.
    out_fused = jax.block_until_ready(
        se_attention_pallas(x, fc1_w, fc2_w, fuse_pool_into_fc1=True))
    assert out_fused.shape == (N, C, 1, 1)
    assert jnp.max(jnp.abs(out_fused - ref)) < 2e-3, "fused path mismatch vs reference"

    # Fallback path (explicit pool reduce), exact f32 pooling.
    out_pool = jax.block_until_ready(
        se_attention_pallas(x, fc1_w, fc2_w, fuse_pool_into_fc1=False))
    assert out_pool.shape == (N, C, 1, 1)
    assert jnp.max(jnp.abs(out_pool - ref)) < 1e-4, "pooled path mismatch vs reference"

    print("KERNEL_OK")
</pallas_src>

<mosaic_0001>
module attributes {stable_mosaic.version = 11 : i64} {
  func.func @_se_fused_kernel(%arg0: i32, %arg1: memref<8x16384xf32, #tpu.memory_space<vmem>>, %arg2: memref<16384x4xf32, #tpu.memory_space<vmem>>, %arg3: memref<4x64xf32, #tpu.memory_space<vmem>>, %arg4: memref<8x64xf32, #tpu.memory_space<vmem>>) attributes {dimension_semantics = [#tpu.dimension_semantics<parallel>], iteration_bounds = array<i64: 2>, scalar_prefetch = 0 : i64, scratch_operands = 0 : i64, tpu.core_type = #tpu.core_type<tc>, window_params = [{transform_indices = @transform_0, window_bounds = array<i64: 8, 16384>}, {pipeline_mode = #tpu.pipeline_mode<synchronous>, transform_indices = @transform_1, window_bounds = array<i64: 16384, 4>}, {pipeline_mode = #tpu.pipeline_mode<synchronous>, transform_indices = @transform_2, window_bounds = array<i64: 4, 64>}, {transform_indices = @transform_3, window_bounds = array<i64: 8, 64>}]} {
    %c0 = arith.constant 0 : index
    %c0_0 = arith.constant 0 : index
    %0 = vector.load %arg1[%c0, %c0_0] : memref<8x16384xf32, #tpu.memory_space<vmem>>, vector<8x16384xf32>
    %c0_1 = arith.constant 0 : index
    %c0_2 = arith.constant 0 : index
    %1 = vector.load %arg2[%c0_1, %c0_2] : memref<16384x4xf32, #tpu.memory_space<vmem>>, vector<16384x4xf32>
    %cst = arith.constant dense<0.000000e+00> : vector<8x4xf32>
    %2 = tpu.matmul %0, %1, %cst {dimension_numbers = #tpu.dot_dimension_numbers<[1], [0], [0], [1], [0, 0, 1, 1], [], []>} : vector<8x16384xf32>, vector<16384x4xf32>, vector<8x4xf32> -> vector<8x4xf32>
    %cst_3 = arith.constant 0.000000e+00 : f32
    %3 = vector.broadcast %cst_3 : f32 to vector<8x4xf32>
    %4 = arith.maximumf %2, %3 : vector<8x4xf32>
    %c0_4 = arith.constant 0 : index
    %c0_5 = arith.constant 0 : index
    %5 = vector.load %arg3[%c0_4, %c0_5] : memref<4x64xf32, #tpu.memory_space<vmem>>, vector<4x64xf32>
    %cst_6 = arith.constant dense<0.000000e+00> : vector<8x64xf32>
    %6 = tpu.matmul %4, %5, %cst_6 {dimension_numbers = #tpu.dot_dimension_numbers<[1], [0], [0], [1], [0, 0, 1, 1], [], []>} : vector<8x4xf32>, vector<4x64xf32>, vector<8x64xf32> -> vector<8x64xf32>
    %cst_7 = arith.constant 3.000000e+00 : f32
    %7 = vector.broadcast %cst_7 : f32 to vector<8x64xf32>
    %8 = arith.addf %6, %7 : vector<8x64xf32>
    %cst_8 = arith.constant 0.000000e+00 : f32
    %cst_9 = arith.constant 6.000000e+00 : f32
    %9 = vector.broadcast %cst_8 : f32 to vector<8x64xf32>
    %10 = arith.maximumf %9, %8 : vector<8x64xf32>
    %11 = vector.broadcast %cst_9 : f32 to vector<8x64xf32>
    %12 = arith.minimumf %11, %10 : vector<8x64xf32>
    %cst_10 = arith.constant 0.333333343 : f32
    %13 = vector.broadcast %cst_10 : f32 to vector<8x64xf32>
    %14 = arith.mulf %12, %13 : vector<8x64xf32>
    %c0_11 = arith.constant 0 : index
    %c0_12 = arith.constant 0 : index
    %15 = vector.load %arg4[%c0_11, %c0_12] : memref<8x64xf32, #tpu.memory_space<vmem>>, vector<8x64xf32>
    tpu.vector_store %arg4[%c0_11, %c0_12], %14 {strides = array<i32>} : memref<8x64xf32, #tpu.memory_space<vmem>>, vector<8x64xf32>,
    return
  }
  func.func @transform_0(%arg0: i32) -> (i32, i32) {
    %c0_i32 = arith.constant 0 : i32
    %c0_i32_0 = arith.constant 0 : i32
    return %arg0, %c0_i32 : i32, i32
  }
  func.func @transform_1(%arg0: i32) -> (i32, i32) {
    %c0_i32 = arith.constant 0 : i32
    %c0_i32_0 = arith.constant 0 : i32
    %c0_i32_1 = arith.constant 0 : i32
    return %c0_i32, %c0_i32_0 : i32, i32
  }
  func.func @transform_2(%arg0: i32) -> (i32, i32) {
    %c0_i32 = arith.constant 0 : i32
    %c0_i32_0 = arith.constant 0 : i32
    %c0_i32_1 = arith.constant 0 : i32
    return %c0_i32, %c0_i32_0 : i32, i32
  }
  func.func @transform_3(%arg0: i32) -> (i32, i32) {
    %c0_i32 = arith.constant 0 : i32
    %c0_i32_0 = arith.constant 0 : i32
    return %arg0, %c0_i32 : i32, i32
  }
}

</mosaic_0001>

<llo_original>
// kernel: tpu_custom_call.1
$region0: #{tpu_custom_call.1}
  #allocation0 [shape = 'u32[]', space=smem, size = 0x4, offset = 0x4, fixed_abs, tag = 'smem constant byte address 0x4 - core index']
  #allocation1 [shape = 'u32[144,128]{1,0:T(1,128)}', space=vmem, size = 0x12000, scoped, tag = 'internal scratch']
  %s0 = inlined_call_operand.vmem [shape: f32[16,16384], index: 0, kind: input, shape index: {}]
  %s1 = inlined_call_operand.vmem [shape: f32[16384,4], index: 1, kind: input, shape index: {}]
  %s2 = inlined_call_operand.vmem [shape: f32[4,64], index: 2, kind: input, shape index: {}]
  %s3 = inlined_call_operand.hbm [shape: f32[16,64], index: 3, kind: output, shape index: {}]
  %s4 = sld [smem:[#allocation0]]
  $region45: #{tpu_custom_call.1} parent=0
    _
  %s6 = ssub.s32 1, %s4
  %s7 = scalar_select 0, %s6, %s4
  $region1: #{tpu_custom_call.1} parent=0
    #allocation2 [shape = 'u8[8192]{0}', space=vmem, size = 0x2000, scoped, tag = 'output window, operand 0']
    #allocation3 [shape = 's32[2]{0}', space=sflag, size = 0x8, scoped, tag = 'scoped memory for tpu_custom_call.1']
    %8 = vsyncpa [#allocation3], 0
    %s9 = scalar_lea.sflag [#allocation3], 1
    %10 = vsyncpa %s9, 0
    loop: start=0, step=1, limit=4
    $region2: #{tpu_custom_call.1} parent=1 // loop_pre_header
      _
    $region3: #{tpu_custom_call.1} parent=1 // loop_header
      %s12 = sphi 0, %s16
      %p13 = scmp.ge.s32.totalorder %s12, 4
      %s22 = sphi 0, %s24
      %s25 = sphi 0, %s22
      %s26 = sphi 0, %s25
      %s42 = sphi 0, %s26
      %s46 = sphi 0, %s46
      %s48 = sphi 0, %s46
      %s49 = sphi 0, %s48
      %s63 = sphi 0, %s49
      %s67 = sphi 0, %s67
      %s69 = sphi 0, %s67
      %s70 = sphi 0, %s69
      %s84 = sphi 0, %s70
      %s90 = sphi 0, %s92
      %s93 = sphi 0, %s90
      %s94 = sphi 0, %s93
      %s110 = sphi 0, %s94
    $region4: #{tpu_custom_call.1} parent=1 // loop_header_branch
      %15 = sbr.rel (%p13) target = $region8
    $region5: #{tpu_custom_call.1} parent=1 // loop_body
      %s17 = ssub.s32 %s12, 1
      %s18 = ssub.s32 %s12, 2
      %s19 = sadd.s32 %s12, 1
      %s20 = ssub.s32 %s12, %s19
      %p21 = scmp.eq.s32.totalorder %s20, 0
      %s23 = sadd.s32 %s22, 1
      %s24 = scalar_select %p21, %s22, %s23
      %p27 = pneg %p21
      %p28 = scmp.eq.s32.totalorder %s12, 1
      %p29 = por %p27, %p28
      %p30 = scmp.ne.s32.totalorder %s22, %s25
      %p31 = scmp.eq.s32.totalorder %s12, 0
      %p32 = por %p30, %p31
      %p33 = scmp.ne.s32.totalorder %s22, %s25
      %p34 = scmp.eq.s32.totalorder %s17, 1
      %p35 = por %p33, %p34
      %p36 = scmp.ne.s32.totalorder %s25, %s26
      %p37 = scmp.eq.s32.totalorder %s17, 0
      %p38 = por %p36, %p37
      %p39 = scmp.ne.s32.totalorder %s25, %s26
      %p40 = scmp.eq.s32.totalorder %s18, 1
      %p41 = por %p39, %p40
      %p43 = scmp.ne.s32.totalorder %s26, %s42
      %p44 = scmp.eq.s32.totalorder %s18, 0
      %p45 = por %p43, %p44
      %s47 = sadd.s32 %s46, 1
      %p50 = scmp.eq.s32.totalorder %s12, 1
      %p51 = scmp.ne.s32.totalorder %s46, %s48
      %p52 = scmp.eq.s32.totalorder %s12, 0
      %p53 = por %p51, %p52
      %p54 = scmp.ne.s32.totalorder %s46, %s48
      %p55 = scmp.eq.s32.totalorder %s17, 1
      %p56 = por %p54, %p55
      %p57 = scmp.ne.s32.totalorder %s48, %s49
      %p58 = scmp.eq.s32.totalorder %s17, 0
      %p59 = por %p57, %p58
      %p60 = scmp.ne.s32.totalorder %s48, %s49
      %p61 = scmp.eq.s32.totalorder %s18, 1
      %p62 = por %p60, %p61
      %p64 = scmp.ne.s32.totalorder %s49, %s63
      %p65 = scmp.eq.s32.totalorder %s18, 0
      %p66 = por %p64, %p65
      %s68 = sadd.s32 %s67, 1
      %p71 = scmp.eq.s32.totalorder %s12, 1
      %p72 = scmp.ne.s32.totalorder %s67, %s69
      %p73 = scmp.eq.s32.totalorder %s12, 0
      %p74 = por %p72, %p73
      %p75 = scmp.ne.s32.totalorder %s67, %s69
      %p76 = scmp.eq.s32.totalorder %s17, 1
      %p77 = por %p75, %p76
      %p78 = scmp.ne.s32.totalorder %s69, %s70
      %p79 = scmp.eq.s32.totalorder %s17, 0
      %p80 = por %p78, %p79
      %p81 = scmp.ne.s32.totalorder %s69, %s70
      %p82 = scmp.eq.s32.totalorder %s18, 1
      %p83 = por %p81, %p82
      %p85 = scmp.ne.s32.totalorder %s70, %s84
      %p86 = scmp.eq.s32.totalorder %s18, 0
      %p87 = por %p85, %p86
      %s88 = ssub.s32 %s12, %s19
      %p89 = scmp.eq.s32.totalorder %s88, 0
      %s91 = sadd.s32 %s90, 1
      %s92 = scalar_select %p89, %s90, %s91
      %p95 = pneg %p89
      %p96 = scmp.eq.s32.totalorder %s12, 1
      %p97 = por %p95, %p96
      %p98 = scmp.ne.s32.totalorder %s90, %s93
      %p99 = scmp.eq.s32.totalorder %s12, 0
      %p100 = por %p98, %p99
      %p101 = scmp.ne.s32.totalorder %s90, %s93
      %p102 = scmp.eq.s32.totalorder %s17, 1
      %p103 = por %p101, %p102
      %p104 = scmp.ne.s32.totalorder %s93, %s94
      %p105 = scmp.eq.s32.totalorder %s17, 0
      %p106 = por %p104, %p105
      %p107 = scmp.ne.s32.totalorder %s93, %s94
      %p108 = scmp.eq.s32.totalorder %s18, 1
      %p109 = por %p107, %p108
      %p111 = scmp.ne.s32.totalorder %s94, %s110
      %p112 = scmp.eq.s32.totalorder %s18, 0
      %p113 = por %p111, %p112
      %p114 = scmp.le.s32.totalorder 1, %s12
      %p115 = scmp.lt.s32.totalorder %s12, 3
      %p116 = pnand %p114, %p115
      %p117 = pneg %p116
      // Predicated region
      $region9: #{tpu_custom_call.1} parent=5 // pred_check
        _
      $region10: #{tpu_custom_call.1} parent=5 // pred_check_branch
        %119 = sbr.rel (%p116) target = $region12
      $region11: #{tpu_custom_call.1} parent=5 // pred_region
        %s120 = ssub.s32 %s12, 1
        // Predicated region
        $region13: #{tpu_custom_call.1} parent=11 // pred_check
          %p121 = pneg %p59
        $region14: #{tpu_custom_call.1} parent=11 // pred_check_branch
          %123 = sbr.rel (%p121) target = $region16
        $region15: #{tpu_custom_call.1} parent=11 // pred_region
          _
        $region16: #{tpu_custom_call.1} parent=11 // pred_fallthru
          _
        // Predicated region
        $region17: #{tpu_custom_call.1} parent=11 // pred_check
          %p124 = pneg %p80
        $region18: #{tpu_custom_call.1} parent=11 // pred_check_branch
          %126 = sbr.rel (%p124) target = $region20
        $region19: #{tpu_custom_call.1} parent=11 // pred_region
          _
        $region20: #{tpu_custom_call.1} parent=11 // pred_fallthru
          _
      $region12: #{tpu_custom_call.1} parent=5 // pred_fallthru
        _
      %p127 = scmp.lt.s32.totalorder %s12, 2
      // Predicated region
      $region21: #{tpu_custom_call.1} parent=5 // pred_check
        %p128 = pneg %p127
      $region22: #{tpu_custom_call.1} parent=5 // pred_check_branch
        %130 = sbr.rel (%p128) target = $region24
      $region23: #{tpu_custom_call.1} parent=5 // pred_region
        // Predicated region
        $region25: #{tpu_custom_call.1} parent=23 // pred_check
          %p131 = pneg %p32
        $region26: #{tpu_custom_call.1} parent=23 // pred_check_branch
          %133 = sbr.rel (%p131) target = $region28
        $region27: #{tpu_custom_call.1} parent=23 // pred_region
          %p134 = scmp.lt.s32.totalorder %s12, 1
          %s135 = scalar_select %p134, %s12, 1
          %s136 = smul.addr %s135, 128
          %s137 = smul.addr %s136, 8
          %s138 = scalar_lea.vmem %s0, %s137
        $region28: #{tpu_custom_call.1} parent=23 // pred_fallthru
          _
      $region24: #{tpu_custom_call.1} parent=5 // pred_fallthru
        _
      %p139 = scmp.le.s32.totalorder 1, %s12
      %p140 = scmp.lt.s32.totalorder %s12, 3
      %p141 = pnand %p139, %p140
      %p142 = pneg %p141
      // Predicated region
      $region29: #{tpu_custom_call.1} parent=5 // pred_check
        _
      $region30: #{tpu_custom_call.1} parent=5 // pred_check_branch
        %144 = sbr.rel (%p141) target = $region32
      $region31: #{tpu_custom_call.1} parent=5 // pred_region
        %s145 = ssub.s32 %s12, 1
        %p146 = scmp.lt.s32.totalorder %s17, 1
        %s147 = scalar_select %p146, %s17, 1
        %s148 = smul.addr %s147, 128
        %s149 = smul.addr %s148, 8
        %s150 = scalar_lea.vmem %s0, %s149
        %p151 = pneg %p38
        %p152 = pneg %p35
        %p153 = pneg %p59
        %p154 = pneg %p56
        %p155 = pneg %p80
        %p156 = pneg %p77
        %p157 = pneg %p106
        %p158 = pneg %p103
        %s159 = sand.u32 %s93, 1
        %s160 = scalar_lea.sflag [#allocation3], %s159
        %s161 = sand.u32 %s93, 1
        %s162 = smul.addr %s161, 8
        %s163 = scalar_lea.vmem [#allocation2], %s162
        %p164 = scmp.lt.s32.totalorder %s17, 1
        %s165 = scalar_select %p164, %s17, 1
        %s166 = smul.addr %s165, 128
        %s167 = smul.addr %s166, 8
        %s168 = scalar_lea.vmem %s0, %s167
        %v169 = vld [vmem:[%s168] sm:$0xff]
        %v170 = vld [vmem:[%s168 + $0x8] sm:$0xff]
        %v171 = vld [vmem:[%s168 + $0x10] sm:$0xff]
        %v172 = vld [vmem:[%s168 + $0x18] sm:$0xff]
        %v173 = vld [vmem:[%s168 + $0x20] sm:$0xff]
        %v174 = vld [vmem:[%s168 + $0x28] sm:$0xff]
        %v175 = vld [vmem:[%s168 + $0x30] sm:$0xff]
        %v176 = vld [vmem:[%s168 + $0x38] sm:$0xff]
        %v177 = vld [vmem:[%s168 + $0x40] sm:$0xff]
        %v178 = vld [vmem:[%s168 + $0x48] sm:$0xff]
        %v179 = vld [vmem:[%s168 + $0x50] sm:$0xff]
        %v180 = vld [vmem:[%s168 + $0x58] sm:$0xff]
        %v181 = vld [vmem:[%s168 + $0x60] sm:$0xff]
        %v182 = vld [vmem:[%s168 + $0x68] sm:$0xff]
        %v183 = vld [vmem:[%s168 + $0x70] sm:$0xff]
        %v184 = vld [vmem:[%s168 + $0x78] sm:$0xff]
        %v185 = vld [vmem:[%s168 + $0x80] sm:$0xff]
        %v186 = vld [vmem:[%s168 + $0x88] sm:$0xff]
        %v187 = vld [vmem:[%s168 + $0x90] sm:$0xff]
        %v188 = vld [vmem:[%s168 + $0x98] sm:$0xff]
        %v189 = vld [vmem:[%s168 + $0xa0] sm:$0xff]
        %v190 = vld [vmem:[%s168 + $0xa8] sm:$0xff]
        %v191 = vld [vmem:[%s168 + $0xb0] sm:$0xff]
        %v192 = vld [vmem:[%s168 + $0xb8] sm:$0xff]
        %v193 = vld [vmem:[%s168 + $0xc0] sm:$0xff]
        %v194 = vld [vmem:[%s168 + $0xc8] sm:$0xff]
        %v195 = vld [vmem:[%s168 + $0xd0] sm:$0xff]
        %v196 = vld [vmem:[%s168 + $0xd8] sm:$0xff]
        %v197 = vld [vmem:[%s168 + $0xe0] sm:$0xff]
        %v198 = vld [vmem:[%s168 + $0xe8] sm:$0xff]
        %v199 = vld [vmem:[%s168 + $0xf0] sm:$0xff]
        %v200 = vld [vmem:[%s168 + $0xf8] sm:$0xff]
        %v201 = vld [vmem:[%s168 + $0x100] sm:$0xff]
        %v202 = vld [vmem:[%s168 + $0x108] sm:$0xff]
        %v203 = vld [vmem:[%s168 + $0x110] sm:$0xff]
        %v204 = vld [vmem:[%s168 + $0x118] sm:$0xff]
        %v205 = vld [vmem:[%s168 + $0x120] sm:$0xff]
        %v206 = vld [vmem:[%s168 + $0x128] sm:$0xff]
        %v207 = vld [vmem:[%s168 + $0x130] sm:$0xff]
        %v208 = vld [vmem:[%s168 + $0x138] sm:$0xff]
        %v209 = vld [vmem:[%s168 + $0x140] sm:$0xff]
        %v210 = vld [vmem:[%s168 + $0x148] sm:$0xff]
        %v211 = vld [vmem:[%s168 + $0x150] sm:$0xff]
        %v212 = vld [vmem:[%s168 + $0x158] sm:$0xff]
        %v213 = vld [vmem:[%s168 + $0x160] sm:$0xff]
        %v214 = vld [vmem:[%s168 + $0x168] sm:$0xff]
        %v215 = vld [vmem:[%s168 + $0x170] sm:$0xff]
        %v216 = vld [vmem:[%s168 + $0x178] sm:$0xff]
        %v217 = vld [vmem:[%s168 + $0x180] sm:$0xff]
        %v218 = vld [vmem:[%s168 + $0x188] sm:$0xff]
        %v219 = vld [vmem:[%s168 + $0x190] sm:$0xff]
        %v220 = vld [vmem:[%s168 + $0x198] sm:$0xff]
        %v221 = vld [vmem:[%s168 + $0x1a0] sm:$0xff]
        %v222 = vld [vmem:[%s168 + $0x1a8] sm:$0xff]
        %v223 = vld [vmem:[%s168 + $0x1b0] sm:$0xff]
        %v224 = vld [vmem:[%s168 + $0x1b8] sm:$0xff]
        %v225 = vld [vmem:[%s168 + $0x1c0] sm:$0xff]
        %v226 = vld [vmem:[%s168 + $0x1c8] sm:$0xff]
        %v227 = vld [vmem:[%s168 + $0x1d0] sm:$0xff]
        %v228 = vld [vmem:[%s168 + $0x1d8] sm:$0xff]
        %v229 = vld [vmem:[%s168 + $0x1e0] sm:$0xff]
        %v230 = vld [vmem:[%s168 + $0x1e8] sm:$0xff]
        %v231 = vld [vmem:[%s168 + $0x1f0] sm:$0xff]
        %v232 = vld [vmem:[%s168 + $0x1f8] sm:$0xff]
        %v233 = vld [vmem:[%s168 + $0x200] sm:$0xff]
        %v234 = vld [vmem:[%s168 + $0x208] sm:$0xff]
        %v235 = vld [vmem:[%s168 + $0x210] sm:$0xff]
        %v236 = vld [vmem:[%s168 + $0x218] sm:$0xff]
        %v237 = vld [vmem:[%s168 + $0x220] sm:$0xff]
        %v238 = vld [vmem:[%s168 + $0x228] sm:$0xff]
        %v239 = vld [vmem:[%s168 + $0x230] sm:$0xff]
        %v240 = vld [vmem:[%s168 + $0x238] sm:$0xff]
        %v241 = vld [vmem:[%s168 + $0x240] sm:$0xff]
        %v242 = vld [vmem:[%s168 + $0x248] sm:$0xff]
        %v243 = vld [vmem:[%s168 + $0x250] sm:$0xff]
        %v244 = vld [vmem:[%s168 + $0x258] sm:$0xff]
        %v245 = vld [vmem:[%s168 + $0x260] sm:$0xff]
        %v246 = vld [vmem:[%s168 + $0x268] sm:$0xff]
        %v247 = vld [vmem:[%s168 + $0x270] sm:$0xff]
        %v248 = vld [vmem:[%s168 + $0x278] sm:$0xff]
        %v249 = vld [vmem:[%s168 + $0x280] sm:$0xff]
        %v250 = vld [vmem:[%s168 + $0x288] sm:$0xff]
        %v251 = vld [vmem:[%s168 + $0x290] sm:$0xff]
        %v252 = vld [vmem:[%s168 + $0x298] sm:$0xff]
        %v253 = vld [vmem:[%s168 + $0x2a0] sm:$0xff]
        %v254 = vld [vmem:[%s168 + $0x2a8] sm:$0xff]
        %v255 = vld [vmem:[%s168 + $0x2b0] sm:$0xff]
        %v256 = vld [vmem:[%s168 + $0x2b8] sm:$0xff]
        %v257 = vld [vmem:[%s168 + $0x2c0] sm:$0xff]
        %v258 = vld [vmem:[%s168 + $0x2c8] sm:$0xff]
        %v259 = vld [vmem:[%s168 + $0x2d0] sm:$0xff]
        %v260 = vld [vmem:[%s168 + $0x2d8] sm:$0xff]
        %v261 = vld [vmem:[%s168 + $0x2e0] sm:$0xff]
        %v262 = vld [vmem:[%s168 + $0x2e8] sm:$0xff]
        %v263 = vld [vmem:[%s168 + $0x2f0] sm:$0xff]
        %v264 = vld [vmem:[%s168 + $0x2f8] sm:$0xff]
        %v265 = vld [vmem:[%s168 + $0x300] sm:$0xff]
        %v266 = vld [vmem:[%s168 + $0x308] sm:$0xff]
        %v267 = vld [vmem:[%s168 + $0x310] sm:$0xff]
        %v268 = vld [vmem:[%s168 + $0x318] sm:$0xff]
        %v269 = vld [vmem:[%s168 + $0x320] sm:$0xff]
        %v270 = vld [vmem:[%s168 + $0x328] sm:$0xff]
        %v271 = vld [vmem:[%s168 + $0x330] sm:$0xff]
        %v272 = vld [vmem:[%s168 + $0x338] sm:$0xff]
        %v273 = vld [vmem:[%s168 + $0x340] sm:$0xff]
        %v274 = vld [vmem:[%s168 + $0x348] sm:$0xff]
        %v275 = vld [vmem:[%s168 + $0x350] sm:$0xff]
        %v276 = vld [vmem:[%s168 + $0x358] sm:$0xff]
        %v277 = vld [vmem:[%s168 + $0x360] sm:$0xff]
        %v278 = vld [vmem:[%s168 + $0x368] sm:$0xff]
        %v279 = vld [vmem:[%s168 + $0x370] sm:$0xff]
        %v280 = vld [vmem:[%s168 + $0x378] sm:$0xff]
        %v281 = vld [vmem:[%s168 + $0x380] sm:$0xff]
        %v282 = vld [vmem:[%s168 + $0x388] sm:$0xff]
        %v283 = vld [vmem:[%s168 + $0x390] sm:$0xff]
        %v284 = vld [vmem:[%s168 + $0x398] sm:$0xff]
        %v285 = vld [vmem:[%s168 + $0x3a0] sm:$0xff]
        %v286 = vld [vmem:[%s168 + $0x3a8] sm:$0xff]
        %v287 = vld [vmem:[%s168 + $0x3b0] sm:$0xff]
        %v288 = vld [vmem:[%s168 + $0x3b8] sm:$0xff]
        %v289 = vld [vmem:[%s168 + $0x3c0] sm:$0xff]
        %v290 = vld [vmem:[%s168 + $0x3c8] sm:$0xff]
        %v291 = vld [vmem:[%s168 + $0x3d0] sm:$0xff]
        %v292 = vld [vmem:[%s168 + $0x3d8] sm:$0xff]
        %v293 = vld [vmem:[%s168 + $0x3e0] sm:$0xff]
        %v294 = vld [vmem:[%s168 + $0x3e8] sm:$0xff]
        %v295 = vld [vmem:[%s168 + $0x3f0] sm:$0xff]
        %v296 = vld [vmem:[%s168 + $0x3f8] sm:$0xff]
        %v297 = vld [vmem:[%s1] sm:$0xff]
        %v298 = vld [vmem:[%s1 + $0x8] sm:$0xff]
        %v299 = vld [vmem:[%s1 + $0x10] sm:$0xff]
        %v300 = vld [vmem:[%s1 + $0x18] sm:$0xff]
        %v301 = vld [vmem:[%s1 + $0x20] sm:$0xff]
        %v302 = vld [vmem:[%s1 + $0x28] sm:$0xff]
        %v303 = vld [vmem:[%s1 + $0x30] sm:$0xff]
        %v304 = vld [vmem:[%s1 + $0x38] sm:$0xff]
        %v305 = vld [vmem:[%s1 + $0x40] sm:$0xff]
        %v306 = vld [vmem:[%s1 + $0x48] sm:$0xff]
        %v307 = vld [vmem:[%s1 + $0x50] sm:$0xff]
        %v308 = vld [vmem:[%s1 + $0x58] sm:$0xff]
        %v309 = vld [vmem:[%s1 + $0x60] sm:$0xff]
        %v310 = vld [vmem:[%s1 + $0x68] sm:$0xff]
        %v311 = vld [vmem:[%s1 + $0x70] sm:$0xff]
        %v312 = vld [vmem:[%s1 + $0x78] sm:$0xff]
        %v313 = vld [vmem:[%s1 + $0x80] sm:$0xff]
        %v314 = vld [vmem:[%s1 + $0x88] sm:$0xff]
        %v315 = vld [vmem:[%s1 + $0x90] sm:$0xff]
        %v316 = vld [vmem:[%s1 + $0x98] sm:$0xff]
        %v317 = vld [vmem:[%s1 + $0xa0] sm:$0xff]
        %v318 = vld [vmem:[%s1 + $0xa8] sm:$0xff]
        %v319 = vld [vmem:[%s1 + $0xb0] sm:$0xff]
        %v320 = vld [vmem:[%s1 + $0xb8] sm:$0xff]
        %v321 = vld [vmem:[%s1 + $0xc0] sm:$0xff]
        %v322 = vld [vmem:[%s1 + $0xc8] sm:$0xff]
        %v323 = vld [vmem:[%s1 + $0xd0] sm:$0xff]
        %v324 = vld [vmem:[%s1 + $0xd8] sm:$0xff]
        %v325 = vld [vmem:[%s1 + $0xe0] sm:$0xff]
        %v326 = vld [vmem:[%s1 + $0xe8] sm:$0xff]
        %v327 = vld [vmem:[%s1 + $0xf0] sm:$0xff]
        %v328 = vld [vmem:[%s1 + $0xf8] sm:$0xff]
        %v329 = vld [vmem:[%s1 + $0x100] sm:$0xff]
        %v330 = vld [vmem:[%s1 + $0x108] sm:$0xff]
        %v331 = vld [vmem:[%s1 + $0x110] sm:$0xff]
        %v332 = vld [vmem:[%s1 + $0x118] sm:$0xff]
        %v333 = vld [vmem:[%s1 + $0x120] sm:$0xff]
        %v334 = vld [vmem:[%s1 + $0x128] sm:$0xff]
        %v335 = vld [vmem:[%s1 + $0x130] sm:$0xff]
        %v336 = vld [vmem:[%s1 + $0x138] sm:$0xff]
        %v337 = vld [vmem:[%s1 + $0x140] sm:$0xff]
        %v338 = vld [vmem:[%s1 + $0x148] sm:$0xff]
        %v339 = vld [vmem:[%s1 + $0x150] sm:$0xff]
        %v340 = vld [vmem:[%s1 + $0x158] sm:$0xff]
        %v341 = vld [vmem:[%s1 + $0x160] sm:$0xff]
        %v342 = vld [vmem:[%s1 + $0x168] sm:$0xff]
        %v343 = vld [vmem:[%s1 + $0x170] sm:$0xff]
        %v344 = vld [vmem:[%s1 + $0x178] sm:$0xff]
        %v345 = vld [vmem:[%s1 + $0x180] sm:$0xff]
        %v346 = vld [vmem:[%s1 + $0x188] sm:$0xff]
        %v347 = vld [vmem:[%s1 + $0x190] sm:$0xff]
        %v348 = vld [vmem:[%s1 + $0x198] sm:$0xff]
        %v349 = vld [vmem:[%s1 + $0x1a0] sm:$0xff]
        %v350 = vld [vmem:[%s1 + $0x1a8] sm:$0xff]
        %v351 = vld [vmem:[%s1 + $0x1b0] sm:$0xff]
        %v352 = vld [vmem:[%s1 + $0x1b8] sm:$0xff]
        %v353 = vld [vmem:[%s1 + $0x1c0] sm:$0xff]
        %v354 = vld [vmem:[%s1 + $0x1c8] sm:$0xff]
        %v355 = vld [vmem:[%s1 + $0x1d0] sm:$0xff]
        %v356 = vld [vmem:[%s1 + $0x1d8] sm:$0xff]
        %v357 = vld [vmem:[%s1 + $0x1e0] sm:$0xff]
        %v358 = vld [vmem:[%s1 + $0x1e8] sm:$0xff]
        %v359 = vld [vmem:[%s1 + $0x1f0] sm:$0xff]
        %v360 = vld [vmem:[%s1 + $0x1f8] sm:$0xff]
        %v361 = vld [vmem:[%s1 + $0x200] sm:$0xff]
        %v362 = vld [vmem:[%s1 + $0x208] sm:$0xff]
        %v363 = vld [vmem:[%s1 + $0x210] sm:$0xff]
        %v364 = vld [vmem:[%s1 + $0x218] sm:$0xff]
        %v365 = vld [vmem:[%s1 + $0x220] sm:$0xff]
        %v366 = vld [vmem:[%s1 + $0x228] sm:$0xff]
        %v367 = vld [vmem:[%s1 + $0x230] sm:$0xff]
        %v368 = vld [vmem:[%s1 + $0x238] sm:$0xff]
        %v369 = vld [vmem:[%s1 + $0x240] sm:$0xff]
        %v370 = vld [vmem:[%s1 + $0x248] sm:$0xff]
        %v371 = vld [vmem:[%s1 + $0x250] sm:$0xff]
        %v372 = vld [vmem:[%s1 + $0x258] sm:$0xff]
        %v373 = vld [vmem:[%s1 + $0x260] sm:$0xff]
        %v374 = vld [vmem:[%s1 + $0x268] sm:$0xff]
        %v375 = vld [vmem:[%s1 + $0x270] sm:$0xff]
        %v376 = vld [vmem:[%s1 + $0x278] sm:$0xff]
        %v377 = vld [vmem:[%s1 + $0x280] sm:$0xff]
        %v378 = vld [vmem:[%s1 + $0x288] sm:$0xff]
        %v379 = vld [vmem:[%s1 + $0x290] sm:$0xff]
        %v380 = vld [vmem:[%s1 + $0x298] sm:$0xff]
        %v381 = vld [vmem:[%s1 + $0x2a0] sm:$0xff]
        %v382 = vld [vmem:[%s1 + $0x2a8] sm:$0xff]
        %v383 = vld [vmem:[%s1 + $0x2b0] sm:$0xff]
        %v384 = vld [vmem:[%s1 + $0x2b8] sm:$0xff]
        %v385 = vld [vmem:[%s1 + $0x2c0] sm:$0xff]
        %v386 = vld [vmem:[%s1 + $0x2c8] sm:$0xff]
        %v387 = vld [vmem:[%s1 + $0x2d0] sm:$0xff]
        %v388 = vld [vmem:[%s1 + $0x2d8] sm:$0xff]
        %v389 = vld [vmem:[%s1 + $0x2e0] sm:$0xff]
        %v390 = vld [vmem:[%s1 + $0x2e8] sm:$0xff]
        %v391 = vld [vmem:[%s1 + $0x2f0] sm:$0xff]
        %v392 = vld [vmem:[%s1 + $0x2f8] sm:$0xff]
        %v393 = vld [vmem:[%s1 + $0x300] sm:$0xff]
        %v394 = vld [vmem:[%s1 + $0x308] sm:$0xff]
        %v395 = vld [vmem:[%s1 + $0x310] sm:$0xff]
        %v396 = vld [vmem:[%s1 + $0x318] sm:$0xff]
        %v397 = vld [vmem:[%s1 + $0x320] sm:$0xff]
        %v398 = vld [vmem:[%s1 + $0x328] sm:$0xff]
        %v399 = vld [vmem:[%s1 + $0x330] sm:$0xff]
        %v400 = vld [vmem:[%s1 + $0x338] sm:$0xff]
        %v401 = vld [vmem:[%s1 + $0x340] sm:$0xff]
        %v402 = vld [vmem:[%s1 + $0x348] sm:$0xff]
        %v403 = vld [vmem:[%s1 + $0x350] sm:$0xff]
        %v404 = vld [vmem:[%s1 + $0x358] sm:$0xff]
        %v405 = vld [vmem:[%s1 + $0x360] sm:$0xff]
        %v406 = vld [vmem:[%s1 + $0x368] sm:$0xff]
        %v407 = vld [vmem:[%s1 + $0x370] sm:$0xff]
        %v408 = vld [vmem:[%s1 + $0x378] sm:$0xff]
        %v409 = vld [vmem:[%s1 + $0x380] sm:$0xff]
        %v410 = vld [vmem:[%s1 + $0x388] sm:$0xff]
        %v411 = vld [vmem:[%s1 + $0x390] sm:$0xff]
        %v412 = vld [vmem:[%s1 + $0x398] sm:$0xff]
        %v413 = vld [vmem:[%s1 + $0x3a0] sm:$0xff]
        %v414 = vld [vmem:[%s1 + $0x3a8] sm:$0xff]
        %v415 = vld [vmem:[%s1 + $0x3b0] sm:$0xff]
        %v416 = vld [vmem:[%s1 + $0x3b8] sm:$0xff]
        %v417 = vld [vmem:[%s1 + $0x3c0] sm:$0xff]
        %v418 = vld [vmem:[%s1 + $0x3c8] sm:$0xff]
        %v419 = vld [vmem:[%s1 + $0x3d0] sm:$0xff]
        %v420 = vld [vmem:[%s1 + $0x3d8] sm:$0xff]
        %v421 = vld [vmem:[%s1 + $0x3e0] sm:$0xff]
        %v422 = vld [vmem:[%s1 + $0x3e8] sm:$0xff]
        %v423 = vld [vmem:[%s1 + $0x3f0] sm:$0xff]
        %v424 = vld [vmem:[%s1 + $0x3f8] sm:$0xff]
        %v425 = vld [vmem:[%s1 + $0x400] sm:$0xff]
        %v426 = vld [vmem:[%s1 + $0x408] sm:$0xff]
        %v427 = vld [vmem:[%s1 + $0x410] sm:$0xff]
        %v428 = vld [vmem:[%s1 + $0x418] sm:$0xff]
        %v429 = vld [vmem:[%s1 + $0x420] sm:$0xff]
        %v430 = vld [vmem:[%s1 + $0x428] sm:$0xff]
        %v431 = vld [vmem:[%s1 + $0x430] sm:$0xff]
        %v432 = vld [vmem:[%s1 + $0x438] sm:$0xff]
        %v433 = vld [vmem:[%s1 + $0x440] sm:$0xff]
        %v434 = vld [vmem:[%s1 + $0x448] sm:$0xff]
        %v435 = vld [vmem:[%s1 + $0x450] sm:$0xff]
        %v436 = vld [vmem:[%s1 + $0x458] sm:$0xff]
        %v437 = vld [vmem:[%s1 + $0x460] sm:$0xff]
        %v438 = vld [vmem:[%s1 + $0x468] sm:$0xff]
        %v439 = vld [vmem:[%s1 + $0x470] sm:$0xff]
        %v440 = vld [vmem:[%s1 + $0x478] sm:$0xff]
        %v441 = vld [vmem:[%s1 + $0x480] sm:$0xff]
        %v442 = vld [vmem:[%s1 + $0x488] sm:$0xff]
        %v443 = vld [vmem:[%s1 + $0x490] sm:$0xff]
        %v444 = vld [vmem:[%s1 + $0x498] sm:$0xff]
        %v445 = vld [vmem:[%s1 + $0x4a0] sm:$0xff]
        %v446 = vld [vmem:[%s1 + $0x4a8] sm:$0xff]
        %v447 = vld [vmem:[%s1 + $0x4b0] sm:$0xff]
        %v448 = vld [vmem:[%s1 + $0x4b8] sm:$0xff]
        %v449 = vld [vmem:[%s1 + $0x4c0] sm:$0xff]
        %v450 = vld [vmem:[%s1 + $0x4c8] sm:$0xff]
        %v451 = vld [vmem:[%s1 + $0x4d0] sm:$0xff]
        %v452 = vld [vmem:[%s1 + $0x4d8] sm:$0xff]
        %v453 = vld [vmem:[%s1 + $0x4e0] sm:$0xff]
        %v454 = vld [vmem:[%s1 + $0x4e8] sm:$0xff]
        %v455 = vld [vmem:[%s1 + $0x4f0] sm:$0xff]
        %v456 = vld [vmem:[%s1 + $0x4f8] sm:$0xff]
        %v457 = vld [vmem:[%s1 + $0x500] sm:$0xff]
        %v458 = vld [vmem:[%s1 + $0x508] sm:$0xff]
        %v459 = vld [vmem:[%s1 + $0x510] sm:$0xff]
        %v460 = vld [vmem:[%s1 + $0x518] sm:$0xff]
        %v461 = vld [vmem:[%s1 + $0x520] sm:$0xff]
        %v462 = vld [vmem:[%s1 + $0x528] sm:$0xff]
        %v463 = vld [vmem:[%s1 + $0x530] sm:$0xff]
        %v464 = vld [vmem:[%s1 + $0x538] sm:$0xff]
        %v465 = vld [vmem:[%s1 + $0x540] sm:$0xff]
        %v466 = vld [vmem:[%s1 + $0x548] sm:$0xff]
        %v467 = vld [vmem:[%s1 + $0x550] sm:$0xff]
        %v468 = vld [vmem:[%s1 + $0x558] sm:$0xff]
        %v469 = vld [vmem:[%s1 + $0x560] sm:$0xff]
        %v470 = vld [vmem:[%s1 + $0x568] sm:$0xff]
        %v471 = vld [vmem:[%s1 + $0x570] sm:$0xff]
        %v472 = vld [vmem:[%s1 + $0x578] sm:$0xff]
        %v473 = vld [vmem:[%s1 + $0x580] sm:$0xff]
        %v474 = vld [vmem:[%s1 + $0x588] sm:$0xff]
        %v475 = vld [vmem:[%s1 + $0x590] sm:$0xff]
        %v476 = vld [vmem:[%s1 + $0x598] sm:$0xff]
        %v477 = vld [vmem:[%s1 + $0x5a0] sm:$0xff]
        %v478 = vld [vmem:[%s1 + $0x5a8] sm:$0xff]
        %v479 = vld [vmem:[%s1 + $0x5b0] sm:$0xff]
        %v480 = vld [vmem:[%s1 + $0x5b8] sm:$0xff]
        %v481 = vld [vmem:[%s1 + $0x5c0] sm:$0xff]
        %v482 = vld [vmem:[%s1 + $0x5c8] sm:$0xff]
        %v483 = vld [vmem:[%s1 + $0x5d0] sm:$0xff]
        %v484 = vld [vmem:[%s1 + $0x5d8] sm:$0xff]
        %v485 = vld [vmem:[%s1 + $0x5e0] sm:$0xff]
        %v486 = vld [vmem:[%s1 + $0x5e8] sm:$0xff]
        %v487 = vld [vmem:[%s1 + $0x5f0] sm:$0xff]
        %v488 = vld [vmem:[%s1 + $0x5f8] sm:$0xff]
        %v489 = vld [vmem:[%s1 + $0x600] sm:$0xff]
        %v490 = vld [vmem:[%s1 + $0x608] sm:$0xff]
        %v491 = vld [vmem:[%s1 + $0x610] sm:$0xff]
        %v492 = vld [vmem:[%s1 + $0x618] sm:$0xff]
        %v493 = vld [vmem:[%s1 + $0x620] sm:$0xff]
        %v494 = vld [vmem:[%s1 + $0x628] sm:$0xff]
        %v495 = vld [vmem:[%s1 + $0x630] sm:$0xff]
        %v496 = vld [vmem:[%s1 + $0x638] sm:$0xff]
        %v497 = vld [vmem:[%s1 + $0x640] sm:$0xff]
        %v498 = vld [vmem:[%s1 + $0x648] sm:$0xff]
        %v499 = vld [vmem:[%s1 + $0x650] sm:$0xff]
        %v500 = vld [vmem:[%s1 + $0x658] sm:$0xff]
        %v501 = vld [vmem:[%s1 + $0x660] sm:$0xff]
        %v502 = vld [vmem:[%s1 + $0x668] sm:$0xff]
        %v503 = vld [vmem:[%s1 + $0x670] sm:$0xff]
        %v504 = vld [vmem:[%s1 + $0x678] sm:$0xff]
        %v505 = vld [vmem:[%s1 + $0x680] sm:$0xff]
        %v506 = vld [vmem:[%s1 + $0x688] sm:$0xff]
        %v507 = vld [vmem:[%s1 + $0x690] sm:$0xff]
        %v508 = vld [vmem:[%s1 + $0x698] sm:$0xff]
        %v509 = vld [vmem:[%s1 + $0x6a0] sm:$0xff]
        %v510 = vld [vmem:[%s1 + $0x6a8] sm:$0xff]
        %v511 = vld [vmem:[%s1 + $0x6b0] sm:$0xff]
        %v512 = vld [vmem:[%s1 + $0x6b8] sm:$0xff]
        %v513 = vld [vmem:[%s1 + $0x6c0] sm:$0xff]
        %v514 = vld [vmem:[%s1 + $0x6c8] sm:$0xff]
        %v515 = vld [vmem:[%s1 + $0x6d0] sm:$0xff]
        %v516 = vld [vmem:[%s1 + $0x6d8] sm:$0xff]
        %v517 = vld [vmem:[%s1 + $0x6e0] sm:$0xff]
        %v518 = vld [vmem:[%s1 + $0x6e8] sm:$0xff]
        %v519 = vld [vmem:[%s1 + $0x6f0] sm:$0xff]
        %v520 = vld [vmem:[%s1 + $0x6f8] sm:$0xff]
        %v521 = vld [vmem:[%s1 + $0x700] sm:$0xff]
        %v522 = vld [vmem:[%s1 + $0x708] sm:$0xff]
        %v523 = vld [vmem:[%s1 + $0x710] sm:$0xff]
        %v524 = vld [vmem:[%s1 + $0x718] sm:$0xff]
        %v525 = vld [vmem:[%s1 + $0x720] sm:$0xff]
        %v526 = vld [vmem:[%s1 + $0x728] sm:$0xff]
        %v527 = vld [vmem:[%s1 + $0x730] sm:$0xff]
        %v528 = vld [vmem:[%s1 + $0x738] sm:$0xff]
        %v529 = vld [vmem:[%s1 + $0x740] sm:$0xff]
        %v530 = vld [vmem:[%s1 + $0x748] sm:$0xff]
        %v531 = vld [vmem:[%s1 + $0x750] sm:$0xff]
        %v532 = vld [vmem:[%s1 + $0x758] sm:$0xff]
        %v533 = vld [vmem:[%s1 + $0x760] sm:$0xff]
        %v534 = vld [vmem:[%s1 + $0x768] sm:$0xff]
        %v535 = vld [vmem:[%s1 + $0x770] sm:$0xff]
        %v536 = vld [vmem:[%s1 + $0x778] sm:$0xff]
        %v537 = vld [vmem:[%s1 + $0x780] sm:$0xff]
        %v538 = vld [vmem:[%s1 + $0x788] sm:$0xff]
        %v539 = vld [vmem:[%s1 + $0x790] sm:$0xff]
        %v540 = vld [vmem:[%s1 + $0x798] sm:$0xff]
        %v541 = vld [vmem:[%s1 + $0x7a0] sm:$0xff]
        %v542 = vld [vmem:[%s1 + $0x7a8] sm:$0xff]
        %v543 = vld [vmem:[%s1 + $0x7b0] sm:$0xff]
        %v544 = vld [vmem:[%s1 + $0x7b8] sm:$0xff]
        %v545 = vld [vmem:[%s1 + $0x7c0] sm:$0xff]
        %v546 = vld [vmem:[%s1 + $0x7c8] sm:$0xff]
        %v547 = vld [vmem:[%s1 + $0x7d0] sm:$0xff]
        %v548 = vld [vmem:[%s1 + $0x7d8] sm:$0xff]
        %v549 = vld [vmem:[%s1 + $0x7e0] sm:$0xff]
        %v550 = vld [vmem:[%s1 + $0x7e8] sm:$0xff]
        %v551 = vld [vmem:[%s1 + $0x7f0] sm:$0xff]
        %v552 = vld [vmem:[%s1 + $0x7f8] sm:$0xff]
        %v553 = vld [vmem:[%s1 + $0x800] sm:$0xff]
        %v554 = vld [vmem:[%s1 + $0x808] sm:$0xff]
        %v555 = vld [vmem:[%s1 + $0x810] sm:$0xff]
        %v556 = vld [vmem:[%s1 + $0x818] sm:$0xff]
        %v557 = vld [vmem:[%s1 + $0x820] sm:$0xff]
        %v558 = vld [vmem:[%s1 + $0x828] sm:$0xff]
        %v559 = vld [vmem:[%s1 + $0x830] sm:$0xff]
        %v560 = vld [vmem:[%s1 + $0x838] sm:$0xff]
        %v561 = vld [vmem:[%s1 + $0x840] sm:$0xff]
        %v562 = vld [vmem:[%s1 + $0x848] sm:$0xff]
        %v563 = vld [vmem:[%s1 + $0x850] sm:$0xff]
        %v564 = vld [vmem:[%s1 + $0x858] sm:$0xff]
        %v565 = vld [vmem:[%s1 + $0x860] sm:$0xff]
        %v566 = vld [vmem:[%s1 + $0x868] sm:$0xff]
        %v567 = vld [vmem:[%s1 + $0x870] sm:$0xff]
        %v568 = vld [vmem:[%s1 + $0x878] sm:$0xff]
        %v569 = vld [vmem:[%s1 + $0x880] sm:$0xff]
        %v570 = vld [vmem:[%s1 + $0x888] sm:$0xff]
        %v571 = vld [vmem:[%s1 + $0x890] sm:$0xff]
        %v572 = vld [vmem:[%s1 + $0x898] sm:$0xff]
        %v573 = vld [vmem:[%s1 + $0x8a0] sm:$0xff]
        %v574 = vld [vmem:[%s1 + $0x8a8] sm:$0xff]
        %v575 = vld [vmem:[%s1 + $0x8b0] sm:$0xff]
        %v576 = vld [vmem:[%s1 + $0x8b8] sm:$0xff]
        %v577 = vld [vmem:[%s1 + $0x8c0] sm:$0xff]
        %v578 = vld [vmem:[%s1 + $0x8c8] sm:$0xff]
        %v579 = vld [vmem:[%s1 + $0x8d0] sm:$0xff]
        %v580 = vld [vmem:[%s1 + $0x8d8] sm:$0xff]
        %v581 = vld [vmem:[%s1 + $0x8e0] sm:$0xff]
        %v582 = vld [vmem:[%s1 + $0x8e8] sm:$0xff]
        %v583 = vld [vmem:[%s1 + $0x8f0] sm:$0xff]
        %v584 = vld [vmem:[%s1 + $0x8f8] sm:$0xff]
        %v585 = vld [vmem:[%s1 + $0x900] sm:$0xff]
        %v586 = vld [vmem:[%s1 + $0x908] sm:$0xff]
        %v587 = vld [vmem:[%s1 + $0x910] sm:$0xff]
        %v588 = vld [vmem:[%s1 + $0x918] sm:$0xff]
        %v589 = vld [vmem:[%s1 + $0x920] sm:$0xff]
        %v590 = vld [vmem:[%s1 + $0x928] sm:$0xff]
        %v591 = vld [vmem:[%s1 + $0x930] sm:$0xff]
        %v592 = vld [vmem:[%s1 + $0x938] sm:$0xff]
        %v593 = vld [vmem:[%s1 + $0x940] sm:$0xff]
        %v594 = vld [vmem:[%s1 + $0x948] sm:$0xff]
        %v595 = vld [vmem:[%s1 + $0x950] sm:$0xff]
        %v596 = vld [vmem:[%s1 + $0x958] sm:$0xff]
        %v597 = vld [vmem:[%s1 + $0x960] sm:$0xff]
        %v598 = vld [vmem:[%s1 + $0x968] sm:$0xff]
        %v599 = vld [vmem:[%s1 + $0x970] sm:$0xff]
        %v600 = vld [vmem:[%s1 + $0x978] sm:$0xff]
        %v601 = vld [vmem:[%s1 + $0x980] sm:$0xff]
        %v602 = vld [vmem:[%s1 + $0x988] sm:$0xff]
        %v603 = vld [vmem:[%s1 + $0x990] sm:$0xff]
        %v604 = vld [vmem:[%s1 + $0x998] sm:$0xff]
        %v605 = vld [vmem:[%s1 + $0x9a0] sm:$0xff]
        %v606 = vld [vmem:[%s1 + $0x9a8] sm:$0xff]
        %v607 = vld [vmem:[%s1 + $0x9b0] sm:$0xff]
        %v608 = vld [vmem:[%s1 + $0x9b8] sm:$0xff]
        %v609 = vld [vmem:[%s1 + $0x9c0] sm:$0xff]
        %v610 = vld [vmem:[%s1 + $0x9c8] sm:$0xff]
        %v611 = vld [vmem:[%s1 + $0x9d0] sm:$0xff]
        %v612 = vld [vmem:[%s1 + $0x9d8] sm:$0xff]
        %v613 = vld [vmem:[%s1 + $0x9e0] sm:$0xff]
        %v614 = vld [vmem:[%s1 + $0x9e8] sm:$0xff]
        %v615 = vld [vmem:[%s1 + $0x9f0] sm:$0xff]
        %v616 = vld [vmem:[%s1 + $0x9f8] sm:$0xff]
        %v617 = vld [vmem:[%s1 + $0xa00] sm:$0xff]
        %v618 = vld [vmem:[%s1 + $0xa08] sm:$0xff]
        %v619 = vld [vmem:[%s1 + $0xa10] sm:$0xff]
        %v620 = vld [vmem:[%s1 + $0xa18] sm:$0xff]
        %v621 = vld [vmem:[%s1 + $0xa20] sm:$0xff]
        %v622 = vld [vmem:[%s1 + $0xa28] sm:$0xff]
        %v623 = vld [vmem:[%s1 + $0xa30] sm:$0xff]
        %v624 = vld [vmem:[%s1 + $0xa38] sm:$0xff]
        %v625 = vld [vmem:[%s1 + $0xa40] sm:$0xff]
        %v626 = vld [vmem:[%s1 + $0xa48] sm:$0xff]
        %v627 = vld [vmem:[%s1 + $0xa50] sm:$0xff]
        %v628 = vld [vmem:[%s1 + $0xa58] sm:$0xff]
        %v629 = vld [vmem:[%s1 + $0xa60] sm:$0xff]
        %v630 = vld [vmem:[%s1 + $0xa68] sm:$0xff]
        %v631 = vld [vmem:[%s1 + $0xa70] sm:$0xff]
        %v632 = vld [vmem:[%s1 + $0xa78] sm:$0xff]
        %v633 = vld [vmem:[%s1 + $0xa80] sm:$0xff]
        %v634 = vld [vmem:[%s1 + $0xa88] sm:$0xff]
        %v635 = vld [vmem:[%s1 + $0xa90] sm:$0xff]
        %v636 = vld [vmem:[%s1 + $0xa98] sm:$0xff]
        %v637 = vld [vmem:[%s1 + $0xaa0] sm:$0xff]
        %v638 = vld [vmem:[%s1 + $0xaa8] sm:$0xff]
        %v639 = vld [vmem:[%s1 + $0xab0] sm:$0xff]
        %v640 = vld [vmem:[%s1 + $0xab8] sm:$0xff]
        %v641 = vld [vmem:[%s1 + $0xac0] sm:$0xff]
        %v642 = vld [vmem:[%s1 + $0xac8] sm:$0xff]
        %v643 = vld [vmem:[%s1 + $0xad0] sm:$0xff]
        %v644 = vld [vmem:[%s1 + $0xad8] sm:$0xff]
        %v645 = vld [vmem:[%s1 + $0xae0] sm:$0xff]
        %v646 = vld [vmem:[%s1 + $0xae8] sm:$0xff]
        %v647 = vld [vmem:[%s1 + $0xaf0] sm:$0xff]
        %v648 = vld [vmem:[%s1 + $0xaf8] sm:$0xff]
        %v649 = vld [vmem:[%s1 + $0xb00] sm:$0xff]
        %v650 = vld [vmem:[%s1 + $0xb08] sm:$0xff]
        %v651 = vld [vmem:[%s1 + $0xb10] sm:$0xff]
        %v652 = vld [vmem:[%s1 + $0xb18] sm:$0xff]
        %v653 = vld [vmem:[%s1 + $0xb20] sm:$0xff]
        %v654 = vld [vmem:[%s1 + $0xb28] sm:$0xff]
        %v655 = vld [vmem:[%s1 + $0xb30] sm:$0xff]
        %v656 = vld [vmem:[%s1 + $0xb38] sm:$0xff]
        %v657 = vld [vmem:[%s1 + $0xb40] sm:$0xff]
        %v658 = vld [vmem:[%s1 + $0xb48] sm:$0xff]
        %v659 = vld [vmem:[%s1 + $0xb50] sm:$0xff]
        %v660 = vld [vmem:[%s1 + $0xb58] sm:$0xff]
        %v661 = vld [vmem:[%s1 + $0xb60] sm:$0xff]
        %v662 = vld [vmem:[%s1 + $0xb68] sm:$0xff]
        %v663 = vld [vmem:[%s1 + $0xb70] sm:$0xff]
        %v664 = vld [vmem:[%s1 + $0xb78] sm:$0xff]
        %v665 = vld [vmem:[%s1 + $0xb80] sm:$0xff]
        %v666 = vld [vmem:[%s1 + $0xb88] sm:$0xff]
        %v667 = vld [vmem:[%s1 + $0xb90] sm:$0xff]
        %v668 = vld [vmem:[%s1 + $0xb98] sm:$0xff]
        %v669 = vld [vmem:[%s1 + $0xba0] sm:$0xff]
        %v670 = vld [vmem:[%s1 + $0xba8] sm:$0xff]
        %v671 = vld [vmem:[%s1 + $0xbb0] sm:$0xff]
        %v672 = vld [vmem:[%s1 + $0xbb8] sm:$0xff]
        %v673 = vld [vmem:[%s1 + $0xbc0] sm:$0xff]
        %v674 = vld [vmem:[%s1 + $0xbc8] sm:$0xff]
        %v675 = vld [vmem:[%s1 + $0xbd0] sm:$0xff]
        %v676 = vld [vmem:[%s1 + $0xbd8] sm:$0xff]
        %v677 = vld [vmem:[%s1 + $0xbe0] sm:$0xff]
        %v678 = vld [vmem:[%s1 + $0xbe8] sm:$0xff]
        %v679 = vld [vmem:[%s1 + $0xbf0] sm:$0xff]
        %v680 = vld [vmem:[%s1 + $0xbf8] sm:$0xff]
        %v681 = vld [vmem:[%s1 + $0xc00] sm:$0xff]
        %v682 = vld [vmem:[%s1 + $0xc08] sm:$0xff]
        %v683 = vld [vmem:[%s1 + $0xc10] sm:$0xff]
        %v684 = vld [vmem:[%s1 + $0xc18] sm:$0xff]
        %v685 = vld [vmem:[%s1 + $0xc20] sm:$0xff]
        %v686 = vld [vmem:[%s1 + $0xc28] sm:$0xff]
        %v687 = vld [vmem:[%s1 + $0xc30] sm:$0xff]
        %v688 = vld [vmem:[%s1 + $0xc38] sm:$0xff]
        %v689 = vld [vmem:[%s1 + $0xc40] sm:$0xff]
        %v690 = vld [vmem:[%s1 + $0xc48] sm:$0xff]
        %v691 = vld [vmem:[%s1 + $0xc50] sm:$0xff]
        %v692 = vld [vmem:[%s1 + $0xc58] sm:$0xff]
        %v693 = vld [vmem:[%s1 + $0xc60] sm:$0xff]
        %v694 = vld [vmem:[%s1 + $0xc68] sm:$0xff]
        %v695 = vld [vmem:[%s1 + $0xc70] sm:$0xff]
        %v696 = vld [vmem:[%s1 + $0xc78] sm:$0xff]
        %v697 = vld [vmem:[%s1 + $0xc80] sm:$0xff]
        %v698 = vld [vmem:[%s1 + $0xc88] sm:$0xff]
        %v699 = vld [vmem:[%s1 + $0xc90] sm:$0xff]
        %v700 = vld [vmem:[%s1 + $0xc98] sm:$0xff]
        %v701 = vld [vmem:[%s1 + $0xca0] sm:$0xff]
        %v702 = vld [vmem:[%s1 + $0xca8] sm:$0xff]
        %v703 = vld [vmem:[%s1 + $0xcb0] sm:$0xff]
        %v704 = vld [vmem:[%s1 + $0xcb8] sm:$0xff]
        %v705 = vld [vmem:[%s1 + $0xcc0] sm:$0xff]
        %v706 = vld [vmem:[%s1 + $0xcc8] sm:$0xff]
        %v707 = vld [vmem:[%s1 + $0xcd0] sm:$0xff]
        %v708 = vld [vmem:[%s1 + $0xcd8] sm:$0xff]
        %v709 = vld [vmem:[%s1 + $0xce0] sm:$0xff]
        %v710 = vld [vmem:[%s1 + $0xce8] sm:$0xff]
        %v711 = vld [vmem:[%s1 + $0xcf0] sm:$0xff]
        %v712 = vld [vmem:[%s1 + $0xcf8] sm:$0xff]
        %v713 = vld [vmem:[%s1 + $0xd00] sm:$0xff]
        %v714 = vld [vmem:[%s1 + $0xd08] sm:$0xff]
        %v715 = vld [vmem:[%s1 + $0xd10] sm:$0xff]
        %v716 = vld [vmem:[%s1 + $0xd18] sm:$0xff]
        %v717 = vld [vmem:[%s1 + $0xd20] sm:$0xff]
        %v718 = vld [vmem:[%s1 + $0xd28] sm:$0xff]
        %v719 = vld [vmem:[%s1 + $0xd30] sm:$0xff]
        %v720 = vld [vmem:[%s1 + $0xd38] sm:$0xff]
        %v721 = vld [vmem:[%s1 + $0xd40] sm:$0xff]
        %v722 = vld [vmem:[%s1 + $0xd48] sm:$0xff]
        %v723 = vld [vmem:[%s1 + $0xd50] sm:$0xff]
        %v724 = vld [vmem:[%s1 + $0xd58] sm:$0xff]
        %v725 = vld [vmem:[%s1 + $0xd60] sm:$0xff]
        %v726 = vld [vmem:[%s1 + $0xd68] sm:$0xff]
        %v727 = vld [vmem:[%s1 + $0xd70] sm:$0xff]
        %v728 = vld [vmem:[%s1 + $0xd78] sm:$0xff]
        %v729 = vld [vmem:[%s1 + $0xd80] sm:$0xff]
        %v730 = vld [vmem:[%s1 + $0xd88] sm:$0xff]
        %v731 = vld [vmem:[%s1 + $0xd90] sm:$0xff]
        %v732 = vld [vmem:[%s1 + $0xd98] sm:$0xff]
        %v733 = vld [vmem:[%s1 + $0xda0] sm:$0xff]
        %v734 = vld [vmem:[%s1 + $0xda8] sm:$0xff]
        %v735 = vld [vmem:[%s1 + $0xdb0] sm:$0xff]
        %v736 = vld [vmem:[%s1 + $0xdb8] sm:$0xff]
        %v737 = vld [vmem:[%s1 + $0xdc0] sm:$0xff]
        %v738 = vld [vmem:[%s1 + $0xdc8] sm:$0xff]
        %v739 = vld [vmem:[%s1 + $0xdd0] sm:$0xff]
        %v740 = vld [vmem:[%s1 + $0xdd8] sm:$0xff]
        %v741 = vld [vmem:[%s1 + $0xde0] sm:$0xff]
        %v742 = vld [vmem:[%s1 + $0xde8] sm:$0xff]
        %v743 = vld [vmem:[%s1 + $0xdf0] sm:$0xff]
        %v744 = vld [vmem:[%s1 + $0xdf8] sm:$0xff]
        %v745 = vld [vmem:[%s1 + $0xe00] sm:$0xff]
        %v746 = vld [vmem:[%s1 + $0xe08] sm:$0xff]
        %v747 = vld [vmem:[%s1 + $0xe10] sm:$0xff]
        %v748 = vld [vmem:[%s1 + $0xe18] sm:$0xff]
        %v749 = vld [vmem:[%s1 + $0xe20] sm:$0xff]
        %v750 = vld [vmem:[%s1 + $0xe28] sm:$0xff]
        %v751 = vld [vmem:[%s1 + $0xe30] sm:$0xff]
        %v752 = vld [vmem:[%s1 + $0xe38] sm:$0xff]
        %v753 = vld [vmem:[%s1 + $0xe40] sm:$0xff]
        %v754 = vld [vmem:[%s1 + $0xe48] sm:$0xff]
        %v755 = vld [vmem:[%s1 + $0xe50] sm:$0xff]
        %v756 = vld [vmem:[%s1 + $0xe58] sm:$0xff]
        %v757 = vld [vmem:[%s1 + $0xe60] sm:$0xff]
        %v758 = vld [vmem:[%s1 + $0xe68] sm:$0xff]
        %v759 = vld [vmem:[%s1 + $0xe70] sm:$0xff]
        %v760 = vld [vmem:[%s1 + $0xe78] sm:$0xff]
        %v761 = vld [vmem:[%s1 + $0xe80] sm:$0xff]
        %v762 = vld [vmem:[%s1 + $0xe88] sm:$0xff]
        %v763 = vld [vmem:[%s1 + $0xe90] sm:$0xff]
        %v764 = vld [vmem:[%s1 + $0xe98] sm:$0xff]
        %v765 = vld [vmem:[%s1 + $0xea0] sm:$0xff]
        %v766 = vld [vmem:[%s1 + $0xea8] sm:$0xff]
        %v767 = vld [vmem:[%s1 + $0xeb0] sm:$0xff]
        %v768 = vld [vmem:[%s1 + $0xeb8] sm:$0xff]
        %v769 = vld [vmem:[%s1 + $0xec0] sm:$0xff]
        %v770 = vld [vmem:[%s1 + $0xec8] sm:$0xff]
        %v771 = vld [vmem:[%s1 + $0xed0] sm:$0xff]
        %v772 = vld [vmem:[%s1 + $0xed8] sm:$0xff]
        %v773 = vld [vmem:[%s1 + $0xee0] sm:$0xff]
        %v774 = vld [vmem:[%s1 + $0xee8] sm:$0xff]
        %v775 = vld [vmem:[%s1 + $0xef0] sm:$0xff]
        %v776 = vld [vmem:[%s1 + $0xef8] sm:$0xff]
        %v777 = vld [vmem:[%s1 + $0xf00] sm:$0xff]
        %v778 = vld [vmem:[%s1 + $0xf08] sm:$0xff]
        %v779 = vld [vmem:[%s1 + $0xf10] sm:$0xff]
        %v780 = vld [vmem:[%s1 + $0xf18] sm:$0xff]
        %v781 = vld [vmem:[%s1 + $0xf20] sm:$0xff]
        %v782 = vld [vmem:[%s1 + $0xf28] sm:$0xff]
        %v783 = vld [vmem:[%s1 + $0xf30] sm:$0xff]
        %v784 = vld [vmem:[%s1 + $0xf38] sm:$0xff]
        %v785 = vld [vmem:[%s1 + $0xf40] sm:$0xff]
        %v786 = vld [vmem:[%s1 + $0xf48] sm:$0xff]
        %v787 = vld [vmem:[%s1 + $0xf50] sm:$0xff]
        %v788 = vld [vmem:[%s1 + $0xf58] sm:$0xff]
        %v789 = vld [vmem:[%s1 + $0xf60] sm:$0xff]
        %v790 = vld [vmem:[%s1 + $0xf68] sm:$0xff]
        %v791 = vld [vmem:[%s1 + $0xf70] sm:$0xff]
        %v792 = vld [vmem:[%s1 + $0xf78] sm:$0xff]
        %v793 = vld [vmem:[%s1 + $0xf80] sm:$0xff]
        %v794 = vld [vmem:[%s1 + $0xf88] sm:$0xff]
        %v795 = vld [vmem:[%s1 + $0xf90] sm:$0xff]
        %v796 = vld [vmem:[%s1 + $0xf98] sm:$0xff]
        %v797 = vld [vmem:[%s1 + $0xfa0] sm:$0xff]
        %v798 = vld [vmem:[%s1 + $0xfa8] sm:$0xff]
        %v799 = vld [vmem:[%s1 + $0xfb0] sm:$0xff]
        %v800 = vld [vmem:[%s1 + $0xfb8] sm:$0xff]
        %v801 = vld [vmem:[%s1 + $0xfc0] sm:$0xff]
        %v802 = vld [vmem:[%s1 + $0xfc8] sm:$0xff]
        %v803 = vld [vmem:[%s1 + $0xfd0] sm:$0xff]
        %v804 = vld [vmem:[%s1 + $0xfd8] sm:$0xff]
        %v805 = vld [vmem:[%s1 + $0xfe0] sm:$0xff]
        %v806 = vld [vmem:[%s1 + $0xfe8] sm:$0xff]
        %v807 = vld [vmem:[%s1 + $0xff0] sm:$0xff]
        %v808 = vld [vmem:[%s1 + $0xff8] sm:$0xff]
        %v809 = vld [vmem:[%s1 + $0x1000] sm:$0xff]
        %v810 = vld [vmem:[%s1 + $0x1008] sm:$0xff]
        %v811 = vld [vmem:[%s1 + $0x1010] sm:$0xff]
        %v812 = vld [vmem:[%s1 + $0x1018] sm:$0xff]
        %v813 = vld [vmem:[%s1 + $0x1020] sm:$0xff]
        %v814 = vld [vmem:[%s1 + $0x1028] sm:$0xff]
        %v815 = vld [vmem:[%s1 + $0x1030] sm:$0xff]
        %v816 = vld [vmem:[%s1 + $0x1038] sm:$0xff]
        %v817 = vld [vmem:[%s1 + $0x1040] sm:$0xff]
        %v818 = vld [vmem:[%s1 + $0x1048] sm:$0xff]
        %v819 = vld [vmem:[%s1 + $0x1050] sm:$0xff]
        %v820 = vld [vmem:[%s1 + $0x1058] sm:$0xff]
        %v821 = vld [vmem:[%s1 + $0x1060] sm:$0xff]
        %v822 = vld [vmem:[%s1 + $0x1068] sm:$0xff]
        %v823 = vld [vmem:[%s1 + $0x1070] sm:$0xff]
        %v824 = vld [vmem:[%s1 + $0x1078] sm:$0xff]
        %v825 = vld [vmem:[%s1 + $0x1080] sm:$0xff]
        %v826 = vld [vmem:[%s1 + $0x1088] sm:$0xff]
        %v827 = vld [vmem:[%s1 + $0x1090] sm:$0xff]
        %v828 = vld [vmem:[%s1 + $0x1098] sm:$0xff]
        %v829 = vld [vmem:[%s1 + $0x10a0] sm:$0xff]
        %v830 = vld [vmem:[%s1 + $0x10a8] sm:$0xff]
        %v831 = vld [vmem:[%s1 + $0x10b0] sm:$0xff]
        %v832 = vld [vmem:[%s1 + $0x10b8] sm:$0xff]
        %v833 = vld [vmem:[%s1 + $0x10c0] sm:$0xff]
        %v834 = vld [vmem:[%s1 + $0x10c8] sm:$0xff]
        %v835 = vld [vmem:[%s1 + $0x10d0] sm:$0xff]
        %v836 = vld [vmem:[%s1 + $0x10d8] sm:$0xff]
        %v837 = vld [vmem:[%s1 + $0x10e0] sm:$0xff]
        %v838 = vld [vmem:[%s1 + $0x10e8] sm:$0xff]
        %v839 = vld [vmem:[%s1 + $0x10f0] sm:$0xff]
        %v840 = vld [vmem:[%s1 + $0x10f8] sm:$0xff]
        %v841 = vld [vmem:[%s1 + $0x1100] sm:$0xff]
        %v842 = vld [vmem:[%s1 + $0x1108] sm:$0xff]
        %v843 = vld [vmem:[%s1 + $0x1110] sm:$0xff]
        %v844 = vld [vmem:[%s1 + $0x1118] sm:$0xff]
        %v845 = vld [vmem:[%s1 + $0x1120] sm:$0xff]
        %v846 = vld [vmem:[%s1 + $0x1128] sm:$0xff]
        %v847 = vld [vmem:[%s1 + $0x1130] sm:$0xff]
        %v848 = vld [vmem:[%s1 + $0x1138] sm:$0xff]
        %v849 = vld [vmem:[%s1 + $0x1140] sm:$0xff]
        %v850 = vld [vmem:[%s1 + $0x1148] sm:$0xff]
        %v851 = vld [vmem:[%s1 + $0x1150] sm:$0xff]
        %v852 = vld [vmem:[%s1 + $0x1158] sm:$0xff]
        %v853 = vld [vmem:[%s1 + $0x1160] sm:$0xff]
        %v854 = vld [vmem:[%s1 + $0x1168] sm:$0xff]
        %v855 = vld [vmem:[%s1 + $0x1170] sm:$0xff]
        %v856 = vld [vmem:[%s1 + $0x1178] sm:$0xff]
        %v857 = vld [vmem:[%s1 + $0x1180] sm:$0xff]
        %v858 = vld [vmem:[%s1 + $0x1188] sm:$0xff]
        %v859 = vld [vmem:[%s1 + $0x1190] sm:$0xff]
        %v860 = vld [vmem:[%s1 + $0x1198] sm:$0xff]
        %v861 = vld [vmem:[%s1 + $0x11a0] sm:$0xff]
        %v862 = vld [vmem:[%s1 + $0x11a8] sm:$0xff]
        %v863 = vld [vmem:[%s1 + $0x11b0] sm:$0xff]
        %v864 = vld [vmem:[%s1 + $0x11b8] sm:$0xff]
        %v865 = vld [vmem:[%s1 + $0x11c0] sm:$0xff]
        %v866 = vld [vmem:[%s1 + $0x11c8] sm:$0xff]
        %v867 = vld [vmem:[%s1 + $0x11d0] sm:$0xff]
        %v868 = vld [vmem:[%s1 + $0x11d8] sm:$0xff]
        %v869 = vld [vmem:[%s1 + $0x11e0] sm:$0xff]
        %v870 = vld [vmem:[%s1 + $0x11e8] sm:$0xff]
        %v871 = vld [vmem:[%s1 + $0x11f0] sm:$0xff]
        %v872 = vld [vmem:[%s1 + $0x11f8] sm:$0xff]
        %v873 = vld [vmem:[%s1 + $0x1200] sm:$0xff]
        %v874 = vld [vmem:[%s1 + $0x1208] sm:$0xff]
        %v875 = vld [vmem:[%s1 + $0x1210] sm:$0xff]
        %v876 = vld [vmem:[%s1 + $0x1218] sm:$0xff]
        %v877 = vld [vmem:[%s1 + $0x1220] sm:$0xff]
        %v878 = vld [vmem:[%s1 + $0x1228] sm:$0xff]
        %v879 = vld [vmem:[%s1 + $0x1230] sm:$0xff]
        %v880 = vld [vmem:[%s1 + $0x1238] sm:$0xff]
        %v881 = vld [vmem:[%s1 + $0x1240] sm:$0xff]
        %v882 = vld [vmem:[%s1 + $0x1248] sm:$0xff]
        %v883 = vld [vmem:[%s1 + $0x1250] sm:$0xff]
        %v884 = vld [vmem:[%s1 + $0x1258] sm:$0xff]
        %v885 = vld [vmem:[%s1 + $0x1260] sm:$0xff]
        %v886 = vld [vmem:[%s1 + $0x1268] sm:$0xff]
        %v887 = vld [vmem:[%s1 + $0x1270] sm:$0xff]
        %v888 = vld [vmem:[%s1 + $0x1278] sm:$0xff]
        %v889 = vld [vmem:[%s1 + $0x1280] sm:$0xff]
        %v890 = vld [vmem:[%s1 + $0x1288] sm:$0xff]
        %v891 = vld [vmem:[%s1 + $0x1290] sm:$0xff]
        %v892 = vld [vmem:[%s1 + $0x1298] sm:$0xff]
        %v893 = vld [vmem:[%s1 + $0x12a0] sm:$0xff]
        %v894 = vld [vmem:[%s1 + $0x12a8] sm:$0xff]
        %v895 = vld [vmem:[%s1 + $0x12b0] sm:$0xff]
        %v896 = vld [vmem:[%s1 + $0x12b8] sm:$0xff]
        %v897 = vld [vmem:[%s1 + $0x12c0] sm:$0xff]
        %v898 = vld [vmem:[%s1 + $0x12c8] sm:$0xff]
        %v899 = vld [vmem:[%s1 + $0x12d0] sm:$0xff]
        %v900 = vld [vmem:[%s1 + $0x12d8] sm:$0xff]
        %v901 = vld [vmem:[%s1 + $0x12e0] sm:$0xff]
        %v902 = vld [vmem:[%s1 + $0x12e8] sm:$0xff]
        %v903 = vld [vmem:[%s1 + $0x12f0] sm:$0xff]
        %v904 = vld [vmem:[%s1 + $0x12f8] sm:$0xff]
        %v905 = vld [vmem:[%s1 + $0x1300] sm:$0xff]
        %v906 = vld [vmem:[%s1 + $0x1308] sm:$0xff]
        %v907 = vld [vmem:[%s1 + $0x1310] sm:$0xff]
        %v908 = vld [vmem:[%s1 + $0x1318] sm:$0xff]
        %v909 = vld [vmem:[%s1 + $0x1320] sm:$0xff]
        %v910 = vld [vmem:[%s1 + $0x1328] sm:$0xff]
        %v911 = vld [vmem:[%s1 + $0x1330] sm:$0xff]
        %v912 = vld [vmem:[%s1 + $0x1338] sm:$0xff]
        %v913 = vld [vmem:[%s1 + $0x1340] sm:$0xff]
        %v914 = vld [vmem:[%s1 + $0x1348] sm:$0xff]
        %v915 = vld [vmem:[%s1 + $0x1350] sm:$0xff]
        %v916 = vld [vmem:[%s1 + $0x1358] sm:$0xff]
        %v917 = vld [vmem:[%s1 + $0x1360] sm:$0xff]
        %v918 = vld [vmem:[%s1 + $0x1368] sm:$0xff]
        %v919 = vld [vmem:[%s1 + $0x1370] sm:$0xff]
        %v920 = vld [vmem:[%s1 + $0x1378] sm:$0xff]
        %v921 = vld [vmem:[%s1 + $0x1380] sm:$0xff]
        %v922 = vld [vmem:[%s1 + $0x1388] sm:$0xff]
        %v923 = vld [vmem:[%s1 + $0x1390] sm:$0xff]
        %v924 = vld [vmem:[%s1 + $0x1398] sm:$0xff]
        %v925 = vld [vmem:[%s1 + $0x13a0] sm:$0xff]
        %v926 = vld [vmem:[%s1 + $0x13a8] sm:$0xff]
        %v927 = vld [vmem:[%s1 + $0x13b0] sm:$0xff]
        %v928 = vld [vmem:[%s1 + $0x13b8] sm:$0xff]
        %v929 = vld [vmem:[%s1 + $0x13c0] sm:$0xff]
        %v930 = vld [vmem:[%s1 + $0x13c8] sm:$0xff]
        %v931 = vld [vmem:[%s1 + $0x13d0] sm:$0xff]
        %v932 = vld [vmem:[%s1 + $0x13d8] sm:$0xff]
        %v933 = vld [vmem:[%s1 + $0x13e0] sm:$0xff]
        %v934 = vld [vmem:[%s1 + $0x13e8] sm:$0xff]
        %v935 = vld [vmem:[%s1 + $0x13f0] sm:$0xff]
        %v936 = vld [vmem:[%s1 + $0x13f8] sm:$0xff]
        %v937 = vld [vmem:[%s1 + $0x1400] sm:$0xff]
        %v938 = vld [vmem:[%s1 + $0x1408] sm:$0xff]
        %v939 = vld [vmem:[%s1 + $0x1410] sm:$0xff]
        %v940 = vld [vmem:[%s1 + $0x1418] sm:$0xff]
        %v941 = vld [vmem:[%s1 + $0x1420] sm:$0xff]
        %v942 = vld [vmem:[%s1 + $0x1428] sm:$0xff]
        %v943 = vld [vmem:[%s1 + $0x1430] sm:$0xff]
        %v944 = vld [vmem:[%s1 + $0x1438] sm:$0xff]
        %v945 = vld [vmem:[%s1 + $0x1440] sm:$0xff]
        %v946 = vld [vmem:[%s1 + $0x1448] sm:$0xff]
        %v947 = vld [vmem:[%s1 + $0x1450] sm:$0xff]
        %v948 = vld [vmem:[%s1 + $0x1458] sm:$0xff]
        %v949 = vld [vmem:[%s1 + $0x1460] sm:$0xff]
        %v950 = vld [vmem:[%s1 + $0x1468] sm:$0xff]
        %v951 = vld [vmem:[%s1 + $0x1470] sm:$0xff]
        %v952 = vld [vmem:[%s1 + $0x1478] sm:$0xff]
        %v953 = vld [vmem:[%s1 + $0x1480] sm:$0xff]
        %v954 = vld [vmem:[%s1 + $0x1488] sm:$0xff]
        %v955 = vld [vmem:[%s1 + $0x1490] sm:$0xff]
        %v956 = vld [vmem:[%s1 + $0x1498] sm:$0xff]
        %v957 = vld [vmem:[%s1 + $0x14a0] sm:$0xff]
        %v958 = vld [vmem:[%s1 + $0x14a8] sm:$0xff]
        %v959 = vld [vmem:[%s1 + $0x14b0] sm:$0xff]
        %v960 = vld [vmem:[%s1 + $0x14b8] sm:$0xff]
        %v961 = vld [vmem:[%s1 + $0x14c0] sm:$0xff]
        %v962 = vld [vmem:[%s1 + $0x14c8] sm:$0xff]
        %v963 = vld [vmem:[%s1 + $0x14d0] sm:$0xff]
        %v964 = vld [vmem:[%s1 + $0x14d8] sm:$0xff]
        %v965 = vld [vmem:[%s1 + $0x14e0] sm:$0xff]
        %v966 = vld [vmem:[%s1 + $0x14e8] sm:$0xff]
        %v967 = vld [vmem:[%s1 + $0x14f0] sm:$0xff]
        %v968 = vld [vmem:[%s1 + $0x14f8] sm:$0xff]
        %v969 = vld [vmem:[%s1 + $0x1500] sm:$0xff]
        %v970 = vld [vmem:[%s1 + $0x1508] sm:$0xff]
        %v971 = vld [vmem:[%s1 + $0x1510] sm:$0xff]
        %v972 = vld [vmem:[%s1 + $0x1518] sm:$0xff]
        %v973 = vld [vmem:[%s1 + $0x1520] sm:$0xff]
        %v974 = vld [vmem:[%s1 + $0x1528] sm:$0xff]
        %v975 = vld [vmem:[%s1 + $0x1530] sm:$0xff]
        %v976 = vld [vmem:[%s1 + $0x1538] sm:$0xff]
        %v977 = vld [vmem:[%s1 + $0x1540] sm:$0xff]
        %v978 = vld [vmem:[%s1 + $0x1548] sm:$0xff]
        %v979 = vld [vmem:[%s1 + $0x1550] sm:$0xff]
        %v980 = vld [vmem:[%s1 + $0x1558] sm:$0xff]
        %v981 = vld [vmem:[%s1 + $0x1560] sm:$0xff]
        %v982 = vld [vmem:[%s1 + $0x1568] sm:$0xff]
        %v983 = vld [vmem:[%s1 + $0x1570] sm:$0xff]
        %v984 = vld [vmem:[%s1 + $0x1578] sm:$0xff]
        %v985 = vld [vmem:[%s1 + $0x1580] sm:$0xff]
        %v986 = vld [vmem:[%s1 + $0x1588] sm:$0xff]
        %v987 = vld [vmem:[%s1 + $0x1590] sm:$0xff]
        %v988 = vld [vmem:[%s1 + $0x1598] sm:$0xff]
        %v989 = vld [vmem:[%s1 + $0x15a0] sm:$0xff]
        %v990 = vld [vmem:[%s1 + $0x15a8] sm:$0xff]
        %v991 = vld [vmem:[%s1 + $0x15b0] sm:$0xff]
        %v992 = vld [vmem:[%s1 + $0x15b8] sm:$0xff]
        %v993 = vld [vmem:[%s1 + $0x15c0] sm:$0xff]
        %v994 = vld [vmem:[%s1 + $0x15c8] sm:$0xff]
        %v995 = vld [vmem:[%s1 + $0x15d0] sm:$0xff]
        %v996 = vld [vmem:[%s1 + $0x15d8] sm:$0xff]
        %v997 = vld [vmem:[%s1 + $0x15e0] sm:$0xff]
        %v998 = vld [vmem:[%s1 + $0x15e8] sm:$0xff]
        %v999 = vld [vmem:[%s1 + $0x15f0] sm:$0xff]
        %v1000 = vld [vmem:[%s1 + $0x15f8] sm:$0xff]
        %v1001 = vld [vmem:[%s1 + $0x1600] sm:$0xff]
        %v1002 = vld [vmem:[%s1 + $0x1608] sm:$0xff]
        %v1003 = vld [vmem:[%s1 + $0x1610] sm:$0xff]
        %v1004 = vld [vmem:[%s1 + $0x1618] sm:$0xff]
        %v1005 = vld [vmem:[%s1 + $0x1620] sm:$0xff]
        %v1006 = vld [vmem:[%s1 + $0x1628] sm:$0xff]
        %v1007 = vld [vmem:[%s1 + $0x1630] sm:$0xff]
        %v1008 = vld [vmem:[%s1 + $0x1638] sm:$0xff]
        %v1009 = vld [vmem:[%s1 + $0x1640] sm:$0xff]
        %v1010 = vld [vmem:[%s1 + $0x1648] sm:$0xff]
        %v1011 = vld [vmem:[%s1 + $0x1650] sm:$0xff]
        %v1012 = vld [vmem:[%s1 + $0x1658] sm:$0xff]
        %v1013 = vld [vmem:[%s1 + $0x1660] sm:$0xff]
        %v1014 = vld [vmem:[%s1 + $0x1668] sm:$0xff]
        %v1015 = vld [vmem:[%s1 + $0x1670] sm:$0xff]
        %v1016 = vld [vmem:[%s1 + $0x1678] sm:$0xff]
        %v1017 = vld [vmem:[%s1 + $0x1680] sm:$0xff]
        %v1018 = vld [vmem:[%s1 + $0x1688] sm:$0xff]
        %v1019 = vld [vmem:[%s1 + $0x1690] sm:$0xff]
        %v1020 = vld [vmem:[%s1 + $0x1698] sm:$0xff]
        %v1021 = vld [vmem:[%s1 + $0x16a0] sm:$0xff]
        %v1022 = vld [vmem:[%s1 + $0x16a8] sm:$0xff]
        %v1023 = vld [vmem:[%s1 + $0x16b0] sm:$0xff]
        %v1024 = vld [vmem:[%s1 + $0x16b8] sm:$0xff]
        %v1025 = vld [vmem:[%s1 + $0x16c0] sm:$0xff]
        %v1026 = vld [vmem:[%s1 + $0x16c8] sm:$0xff]
        %v1027 = vld [vmem:[%s1 + $0x16d0] sm:$0xff]
        %v1028 = vld [vmem:[%s1 + $0x16d8] sm:$0xff]
        %v1029 = vld [vmem:[%s1 + $0x16e0] sm:$0xff]
        %v1030 = vld [vmem:[%s1 + $0x16e8] sm:$0xff]
        %v1031 = vld [vmem:[%s1 + $0x16f0] sm:$0xff]
        %v1032 = vld [vmem:[%s1 + $0x16f8] sm:$0xff]
        %v1033 = vld [vmem:[%s1 + $0x1700] sm:$0xff]
        %v1034 = vld [vmem:[%s1 + $0x1708] sm:$0xff]
        %v1035 = vld [vmem:[%s1 + $0x1710] sm:$0xff]
        %v1036 = vld [vmem:[%s1 + $0x1718] sm:$0xff]
        %v1037 = vld [vmem:[%s1 + $0x1720] sm:$0xff]
        %v1038 = vld [vmem:[%s1 + $0x1728] sm:$0xff]
        %v1039 = vld [vmem:[%s1 + $0x1730] sm:$0xff]
        %v1040 = vld [vmem:[%s1 + $0x1738] sm:$0xff]
        %v1041 = vld [vmem:[%s1 + $0x1740] sm:$0xff]
        %v1042 = vld [vmem:[%s1 + $0x1748] sm:$0xff]
        %v1043 = vld [vmem:[%s1 + $0x1750] sm:$0xff]
        %v1044 = vld [vmem:[%s1 + $0x1758] sm:$0xff]
        %v1045 = vld [vmem:[%s1 + $0x1760] sm:$0xff]
        %v1046 = vld [vmem:[%s1 + $0x1768] sm:$0xff]
        %v1047 = vld [vmem:[%s1 + $0x1770] sm:$0xff]
        %v1048 = vld [vmem:[%s1 + $0x1778] sm:$0xff]
        %v1049 = vld [vmem:[%s1 + $0x1780] sm:$0xff]
        %v1050 = vld [vmem:[%s1 + $0x1788] sm:$0xff]
        %v1051 = vld [vmem:[%s1 + $0x1790] sm:$0xff]
        %v1052 = vld [vmem:[%s1 + $0x1798] sm:$0xff]
        %v1053 = vld [vmem:[%s1 + $0x17a0] sm:$0xff]
        %v1054 = vld [vmem:[%s1 + $0x17a8] sm:$0xff]
        %v1055 = vld [vmem:[%s1 + $0x17b0] sm:$0xff]
        %v1056 = vld [vmem:[%s1 + $0x17b8] sm:$0xff]
        %v1057 = vld [vmem:[%s1 + $0x17c0] sm:$0xff]
        %v1058 = vld [vmem:[%s1 + $0x17c8] sm:$0xff]
        %v1059 = vld [vmem:[%s1 + $0x17d0] sm:$0xff]
        %v1060 = vld [vmem:[%s1 + $0x17d8] sm:$0xff]
        %v1061 = vld [vmem:[%s1 + $0x17e0] sm:$0xff]
        %v1062 = vld [vmem:[%s1 + $0x17e8] sm:$0xff]
        %v1063 = vld [vmem:[%s1 + $0x17f0] sm:$0xff]
        %v1064 = vld [vmem:[%s1 + $0x17f8] sm:$0xff]
        %v1065 = vld [vmem:[%s1 + $0x1800] sm:$0xff]
        %v1066 = vld [vmem:[%s1 + $0x1808] sm:$0xff]
        %v1067 = vld [vmem:[%s1 + $0x1810] sm:$0xff]
        %v1068 = vld [vmem:[%s1 + $0x1818] sm:$0xff]
        %v1069 = vld [vmem:[%s1 + $0x1820] sm:$0xff]
        %v1070 = vld [vmem:[%s1 + $0x1828] sm:$0xff]
        %v1071 = vld [vmem:[%s1 + $0x1830] sm:$0xff]
        %v1072 = vld [vmem:[%s1 + $0x1838] sm:$0xff]
        %v1073 = vld [vmem:[%s1 + $0x1840] sm:$0xff]
        %v1074 = vld [vmem:[%s1 + $0x1848] sm:$0xff]
        %v1075 = vld [vmem:[%s1 + $0x1850] sm:$0xff]
        %v1076 = vld [vmem:[%s1 + $0x1858] sm:$0xff]
        %v1077 = vld [vmem:[%s1 + $0x1860] sm:$0xff]
        %v1078 = vld [vmem:[%s1 + $0x1868] sm:$0xff]
        %v1079 = vld [vmem:[%s1 + $0x1870] sm:$0xff]
        %v1080 = vld [vmem:[%s1 + $0x1878] sm:$0xff]
        %v1081 = vld [vmem:[%s1 + $0x1880] sm:$0xff]
        %v1082 = vld [vmem:[%s1 + $0x1888] sm:$0xff]
        %v1083 = vld [vmem:[%s1 + $0x1890] sm:$0xff]
        %v1084 = vld [vmem:[%s1 + $0x1898] sm:$0xff]
        %v1085 = vld [vmem:[%s1 + $0x18a0] sm:$0xff]
        %v1086 = vld [vmem:[%s1 + $0x18a8] sm:$0xff]
        %v1087 = vld [vmem:[%s1 + $0x18b0] sm:$0xff]
        %v1088 = vld [vmem:[%s1 + $0x18b8] sm:$0xff]
        %v1089 = vld [vmem:[%s1 + $0x18c0] sm:$0xff]
        %v1090 = vld [vmem:[%s1 + $0x18c8] sm:$0xff]
        %v1091 = vld [vmem:[%s1 + $0x18d0] sm:$0xff]
        %v1092 = vld [vmem:[%s1 + $0x18d8] sm:$0xff]
        %v1093 = vld [vmem:[%s1 + $0x18e0] sm:$0xff]
        %v1094 = vld [vmem:[%s1 + $0x18e8] sm:$0xff]
        %v1095 = vld [vmem:[%s1 + $0x18f0] sm:$0xff]
        %v1096 = vld [vmem:[%s1 + $0x18f8] sm:$0xff]
        %v1097 = vld [vmem:[%s1 + $0x1900] sm:$0xff]
        %v1098 = vld [vmem:[%s1 + $0x1908] sm:$0xff]
        %v1099 = vld [vmem:[%s1 + $0x1910] sm:$0xff]
        %v1100 = vld [vmem:[%s1 + $0x1918] sm:$0xff]
        %v1101 = vld [vmem:[%s1 + $0x1920] sm:$0xff]
        %v1102 = vld [vmem:[%s1 + $0x1928] sm:$0xff]
        %v1103 = vld [vmem:[%s1 + $0x1930] sm:$0xff]
        %v1104 = vld [vmem:[%s1 + $0x1938] sm:$0xff]
        %v1105 = vld [vmem:[%s1 + $0x1940] sm:$0xff]
        %v1106 = vld [vmem:[%s1 + $0x1948] sm:$0xff]
        %v1107 = vld [vmem:[%s1 + $0x1950] sm:$0xff]
        %v1108 = vld [vmem:[%s1 + $0x1958] sm:$0xff]
        %v1109 = vld [vmem:[%s1 + $0x1960] sm:$0xff]
        %v1110 = vld [vmem:[%s1 + $0x1968] sm:$0xff]
        %v1111 = vld [vmem:[%s1 + $0x1970] sm:$0xff]
        %v1112 = vld [vmem:[%s1 + $0x1978] sm:$0xff]
        %v1113 = vld [vmem:[%s1 + $0x1980] sm:$0xff]
        %v1114 = vld [vmem:[%s1 + $0x1988] sm:$0xff]
        %v1115 = vld [vmem:[%s1 + $0x1990] sm:$0xff]
        %v1116 = vld [vmem:[%s1 + $0x1998] sm:$0xff]
        %v1117 = vld [vmem:[%s1 + $0x19a0] sm:$0xff]
        %v1118 = vld [vmem:[%s1 + $0x19a8] sm:$0xff]
        %v1119 = vld [vmem:[%s1 + $0x19b0] sm:$0xff]
        %v1120 = vld [vmem:[%s1 + $0x19b8] sm:$0xff]
        %v1121 = vld [vmem:[%s1 + $0x19c0] sm:$0xff]
        %v1122 = vld [vmem:[%s1 + $0x19c8] sm:$0xff]
        %v1123 = vld [vmem:[%s1 + $0x19d0] sm:$0xff]
        %v1124 = vld [vmem:[%s1 + $0x19d8] sm:$0xff]
        %v1125 = vld [vmem:[%s1 + $0x19e0] sm:$0xff]
        %v1126 = vld [vmem:[%s1 + $0x19e8] sm:$0xff]
        %v1127 = vld [vmem:[%s1 + $0x19f0] sm:$0xff]
        %v1128 = vld [vmem:[%s1 + $0x19f8] sm:$0xff]
        %v1129 = vld [vmem:[%s1 + $0x1a00] sm:$0xff]
        %v1130 = vld [vmem:[%s1 + $0x1a08] sm:$0xff]
        %v1131 = vld [vmem:[%s1 + $0x1a10] sm:$0xff]
        %v1132 = vld [vmem:[%s1 + $0x1a18] sm:$0xff]
        %v1133 = vld [vmem:[%s1 + $0x1a20] sm:$0xff]
        %v1134 = vld [vmem:[%s1 + $0x1a28] sm:$0xff]
        %v1135 = vld [vmem:[%s1 + $0x1a30] sm:$0xff]
        %v1136 = vld [vmem:[%s1 + $0x1a38] sm:$0xff]
        %v1137 = vld [vmem:[%s1 + $0x1a40] sm:$0xff]
        %v1138 = vld [vmem:[%s1 + $0x1a48] sm:$0xff]
        %v1139 = vld [vmem:[%s1 + $0x1a50] sm:$0xff]
        %v1140 = vld [vmem:[%s1 + $0x1a58] sm:$0xff]
        %v1141 = vld [vmem:[%s1 + $0x1a60] sm:$0xff]
        %v1142 = vld [vmem:[%s1 + $0x1a68] sm:$0xff]
        %v1143 = vld [vmem:[%s1 + $0x1a70] sm:$0xff]
        %v1144 = vld [vmem:[%s1 + $0x1a78] sm:$0xff]
        %v1145 = vld [vmem:[%s1 + $0x1a80] sm:$0xff]
        %v1146 = vld [vmem:[%s1 + $0x1a88] sm:$0xff]
        %v1147 = vld [vmem:[%s1 + $0x1a90] sm:$0xff]
        %v1148 = vld [vmem:[%s1 + $0x1a98] sm:$0xff]
        %v1149 = vld [vmem:[%s1 + $0x1aa0] sm:$0xff]
        %v1150 = vld [vmem:[%s1 + $0x1aa8] sm:$0xff]
        %v1151 = vld [vmem:[%s1 + $0x1ab0] sm:$0xff]
        %v1152 = vld [vmem:[%s1 + $0x1ab8] sm:$0xff]
        %v1153 = vld [vmem:[%s1 + $0x1ac0] sm:$0xff]
        %v1154 = vld [vmem:[%s1 + $0x1ac8] sm:$0xff]
        %v1155 = vld [vmem:[%s1 + $0x1ad0] sm:$0xff]
        %v1156 = vld [vmem:[%s1 + $0x1ad8] sm:$0xff]
        %v1157 = vld [vmem:[%s1 + $0x1ae0] sm:$0xff]
        %v1158 = vld [vmem:[%s1 + $0x1ae8] sm:$0xff]
        %v1159 = vld [vmem:[%s1 + $0x1af0] sm:$0xff]
        %v1160 = vld [vmem:[%s1 + $0x1af8] sm:$0xff]
        %v1161 = vld [vmem:[%s1 + $0x1b00] sm:$0xff]
        %v1162 = vld [vmem:[%s1 + $0x1b08] sm:$0xff]
        %v1163 = vld [vmem:[%s1 + $0x1b10] sm:$0xff]
        %v1164 = vld [vmem:[%s1 + $0x1b18] sm:$0xff]
        %v1165 = vld [vmem:[%s1 + $0x1b20] sm:$0xff]
        %v1166 = vld [vmem:[%s1 + $0x1b28] sm:$0xff]
        %v1167 = vld [vmem:[%s1 + $0x1b30] sm:$0xff]
        %v1168 = vld [vmem:[%s1 + $0x1b38] sm:$0xff]
        %v1169 = vld [vmem:[%s1 + $0x1b40] sm:$0xff]
        %v1170 = vld [vmem:[%s1 + $0x1b48] sm:$0xff]
        %v1171 = vld [vmem:[%s1 + $0x1b50] sm:$0xff]
        %v1172 = vld [vmem:[%s1 + $0x1b58] sm:$0xff]
        %v1173 = vld [vmem:[%s1 + $0x1b60] sm:$0xff]
        %v1174 = vld [vmem:[%s1 + $0x1b68] sm:$0xff]
        %v1175 = vld [vmem:[%s1 + $0x1b70] sm:$0xff]
        %v1176 = vld [vmem:[%s1 + $0x1b78] sm:$0xff]
        %v1177 = vld [vmem:[%s1 + $0x1b80] sm:$0xff]
        %v1178 = vld [vmem:[%s1 + $0x1b88] sm:$0xff]
        %v1179 = vld [vmem:[%s1 + $0x1b90] sm:$0xff]
        %v1180 = vld [vmem:[%s1 + $0x1b98] sm:$0xff]
        %v1181 = vld [vmem:[%s1 + $0x1ba0] sm:$0xff]
        %v1182 = vld [vmem:[%s1 + $0x1ba8] sm:$0xff]
        %v1183 = vld [vmem:[%s1 + $0x1bb0] sm:$0xff]
        %v1184 = vld [vmem:[%s1 + $0x1bb8] sm:$0xff]
        %v1185 = vld [vmem:[%s1 + $0x1bc0] sm:$0xff]
        %v1186 = vld [vmem:[%s1 + $0x1bc8] sm:$0xff]
        %v1187 = vld [vmem:[%s1 + $0x1bd0] sm:$0xff]
        %v1188 = vld [vmem:[%s1 + $0x1bd8] sm:$0xff]
        %v1189 = vld [vmem:[%s1 + $0x1be0] sm:$0xff]
        %v1190 = vld [vmem:[%s1 + $0x1be8] sm:$0xff]
        %v1191 = vld [vmem:[%s1 + $0x1bf0] sm:$0xff]
        %v1192 = vld [vmem:[%s1 + $0x1bf8] sm:$0xff]
        %v1193 = vld [vmem:[%s1 + $0x1c00] sm:$0xff]
        %v1194 = vld [vmem:[%s1 + $0x1c08] sm:$0xff]
        %v1195 = vld [vmem:[%s1 + $0x1c10] sm:$0xff]
        %v1196 = vld [vmem:[%s1 + $0x1c18] sm:$0xff]
        %v1197 = vld [vmem:[%s1 + $0x1c20] sm:$0xff]
        %v1198 = vld [vmem:[%s1 + $0x1c28] sm:$0xff]
        %v1199 = vld [vmem:[%s1 + $0x1c30] sm:$0xff]
        %v1200 = vld [vmem:[%s1 + $0x1c38] sm:$0xff]
        %v1201 = vld [vmem:[%s1 + $0x1c40] sm:$0xff]
        %v1202 = vld [vmem:[%s1 + $0x1c48] sm:$0xff]
        %v1203 = vld [vmem:[%s1 + $0x1c50] sm:$0xff]
        %v1204 = vld [vmem:[%s1 + $0x1c58] sm:$0xff]
        %v1205 = vld [vmem:[%s1 + $0x1c60] sm:$0xff]
        %v1206 = vld [vmem:[%s1 + $0x1c68] sm:$0xff]
        %v1207 = vld [vmem:[%s1 + $0x1c70] sm:$0xff]
        %v1208 = vld [vmem:[%s1 + $0x1c78] sm:$0xff]
        %v1209 = vld [vmem:[%s1 + $0x1c80] sm:$0xff]
        %v1210 = vld [vmem:[%s1 + $0x1c88] sm:$0xff]
        %v1211 = vld [vmem:[%s1 + $0x1c90] sm:$0xff]
        %v1212 = vld [vmem:[%s1 + $0x1c98] sm:$0xff]
        %v1213 = vld [vmem:[%s1 + $0x1ca0] sm:$0xff]
        %v1214 = vld [vmem:[%s1 + $0x1ca8] sm:$0xff]
        %v1215 = vld [vmem:[%s1 + $0x1cb0] sm:$0xff]
        %v1216 = vld [vmem:[%s1 + $0x1cb8] sm:$0xff]
        %v1217 = vld [vmem:[%s1 + $0x1cc0] sm:$0xff]
        %v1218 = vld [vmem:[%s1 + $0x1cc8] sm:$0xff]
        %v1219 = vld [vmem:[%s1 + $0x1cd0] sm:$0xff]
        %v1220 = vld [vmem:[%s1 + $0x1cd8] sm:$0xff]
        %v1221 = vld [vmem:[%s1 + $0x1ce0] sm:$0xff]
        %v1222 = vld [vmem:[%s1 + $0x1ce8] sm:$0xff]
        %v1223 = vld [vmem:[%s1 + $0x1cf0] sm:$0xff]
        %v1224 = vld [vmem:[%s1 + $0x1cf8] sm:$0xff]
        %v1225 = vld [vmem:[%s1 + $0x1d00] sm:$0xff]
        %v1226 = vld [vmem:[%s1 + $0x1d08] sm:$0xff]
        %v1227 = vld [vmem:[%s1 + $0x1d10] sm:$0xff]
        %v1228 = vld [vmem:[%s1 + $0x1d18] sm:$0xff]
        %v1229 = vld [vmem:[%s1 + $0x1d20] sm:$0xff]
        %v1230 = vld [vmem:[%s1 + $0x1d28] sm:$0xff]
        %v1231 = vld [vmem:[%s1 + $0x1d30] sm:$0xff]
        %v1232 = vld [vmem:[%s1 + $0x1d38] sm:$0xff]
        %v1233 = vld [vmem:[%s1 + $0x1d40] sm:$0xff]
        %v1234 = vld [vmem:[%s1 + $0x1d48] sm:$0xff]
        %v1235 = vld [vmem:[%s1 + $0x1d50] sm:$0xff]
        %v1236 = vld [vmem:[%s1 + $0x1d58] sm:$0xff]
        %v1237 = vld [vmem:[%s1 + $0x1d60] sm:$0xff]
        %v1238 = vld [vmem:[%s1 + $0x1d68] sm:$0xff]
        %v1239 = vld [vmem:[%s1 + $0x1d70] sm:$0xff]
        %v1240 = vld [vmem:[%s1 + $0x1d78] sm:$0xff]
        %v1241 = vld [vmem:[%s1 + $0x1d80] sm:$0xff]
        %v1242 = vld [vmem:[%s1 + $0x1d88] sm:$0xff]
        %v1243 = vld [vmem:[%s1 + $0x1d90] sm:$0xff]
        %v1244 = vld [vmem:[%s1 + $0x1d98] sm:$0xff]
        %v1245 = vld [vmem:[%s1 + $0x1da0] sm:$0xff]
        %v1246 = vld [vmem:[%s1 + $0x1da8] sm:$0xff]
        %v1247 = vld [vmem:[%s1 + $0x1db0] sm:$0xff]
        %v1248 = vld [vmem:[%s1 + $0x1db8] sm:$0xff]
        %v1249 = vld [vmem:[%s1 + $0x1dc0] sm:$0xff]
        %v1250 = vld [vmem:[%s1 + $0x1dc8] sm:$0xff]
        %v1251 = vld [vmem:[%s1 + $0x1dd0] sm:$0xff]
        %v1252 = vld [vmem:[%s1 + $0x1dd8] sm:$0xff]
        %v1253 = vld [vmem:[%s1 + $0x1de0] sm:$0xff]
        %v1254 = vld [vmem:[%s1 + $0x1de8] sm:$0xff]
        %v1255 = vld [vmem:[%s1 + $0x1df0] sm:$0xff]
        %v1256 = vld [vmem:[%s1 + $0x1df8] sm:$0xff]
        %v1257 = vld [vmem:[%s1 + $0x1e00] sm:$0xff]
        %v1258 = vld [vmem:[%s1 + $0x1e08] sm:$0xff]
        %v1259 = vld [vmem:[%s1 + $0x1e10] sm:$0xff]
        %v1260 = vld [vmem:[%s1 + $0x1e18] sm:$0xff]
        %v1261 = vld [vmem:[%s1 + $0x1e20] sm:$0xff]
        %v1262 = vld [vmem:[%s1 + $0x1e28] sm:$0xff]
        %v1263 = vld [vmem:[%s1 + $0x1e30] sm:$0xff]
        %v1264 = vld [vmem:[%s1 + $0x1e38] sm:$0xff]
        %v1265 = vld [vmem:[%s1 + $0x1e40] sm:$0xff]
        %v1266 = vld [vmem:[%s1 + $0x1e48] sm:$0xff]
        %v1267 = vld [vmem:[%s1 + $0x1e50] sm:$0xff]
        %v1268 = vld [vmem:[%s1 + $0x1e58] sm:$0xff]
        %v1269 = vld [vmem:[%s1 + $0x1e60] sm:$0xff]
        %v1270 = vld [vmem:[%s1 + $0x1e68] sm:$0xff]
        %v1271 = vld [vmem:[%s1 + $0x1e70] sm:$0xff]
        %v1272 = vld [vmem:[%s1 + $0x1e78] sm:$0xff]
        %v1273 = vld [vmem:[%s1 + $0x1e80] sm:$0xff]
        %v1274 = vld [vmem:[%s1 + $0x1e88] sm:$0xff]
        %v1275 = vld [vmem:[%s1 + $0x1e90] sm:$0xff]
        %v1276 = vld [vmem:[%s1 + $0x1e98] sm:$0xff]
        %v1277 = vld [vmem:[%s1 + $0x1ea0] sm:$0xff]
        %v1278 = vld [vmem:[%s1 + $0x1ea8] sm:$0xff]
        %v1279 = vld [vmem:[%s1 + $0x1eb0] sm:$0xff]
        %v1280 = vld [vmem:[%s1 + $0x1eb8] sm:$0xff]
        %v1281 = vld [vmem:[%s1 + $0x1ec0] sm:$0xff]
        %v1282 = vld [vmem:[%s1 + $0x1ec8] sm:$0xff]
        %v1283 = vld [vmem:[%s1 + $0x1ed0] sm:$0xff]
        %v1284 = vld [vmem:[%s1 + $0x1ed8] sm:$0xff]
        %v1285 = vld [vmem:[%s1 + $0x1ee0] sm:$0xff]
        %v1286 = vld [vmem:[%s1 + $0x1ee8] sm:$0xff]
        %v1287 = vld [vmem:[%s1 + $0x1ef0] sm:$0xff]
        %v1288 = vld [vmem:[%s1 + $0x1ef8] sm:$0xff]
        %v1289 = vld [vmem:[%s1 + $0x1f00] sm:$0xff]
        %v1290 = vld [vmem:[%s1 + $0x1f08] sm:$0xff]
        %v1291 = vld [vmem:[%s1 + $0x1f10] sm:$0xff]
        %v1292 = vld [vmem:[%s1 + $0x1f18] sm:$0xff]
        %v1293 = vld [vmem:[%s1 + $0x1f20] sm:$0xff]
        %v1294 = vld [vmem:[%s1 + $0x1f28] sm:$0xff]
        %v1295 = vld [vmem:[%s1 + $0x1f30] sm:$0xff]
        %v1296 = vld [vmem:[%s1 + $0x1f38] sm:$0xff]
        %v1297 = vld [vmem:[%s1 + $0x1f40] sm:$0xff]
        %v1298 = vld [vmem:[%s1 + $0x1f48] sm:$0xff]
        %v1299 = vld [vmem:[%s1 + $0x1f50] sm:$0xff]
        %v1300 = vld [vmem:[%s1 + $0x1f58] sm:$0xff]
        %v1301 = vld [vmem:[%s1 + $0x1f60] sm:$0xff]
        %v1302 = vld [vmem:[%s1 + $0x1f68] sm:$0xff]
        %v1303 = vld [vmem:[%s1 + $0x1f70] sm:$0xff]
        %v1304 = vld [vmem:[%s1 + $0x1f78] sm:$0xff]
        %v1305 = vld [vmem:[%s1 + $0x1f80] sm:$0xff]
        %v1306 = vld [vmem:[%s1 + $0x1f88] sm:$0xff]
        %v1307 = vld [vmem:[%s1 + $0x1f90] sm:$0xff]
        %v1308 = vld [vmem:[%s1 + $0x1f98] sm:$0xff]
        %v1309 = vld [vmem:[%s1 + $0x1fa0] sm:$0xff]
        %v1310 = vld [vmem:[%s1 + $0x1fa8] sm:$0xff]
        %v1311 = vld [vmem:[%s1 + $0x1fb0] sm:$0xff]
        %v1312 = vld [vmem:[%s1 + $0x1fb8] sm:$0xff]
        %v1313 = vld [vmem:[%s1 + $0x1fc0] sm:$0xff]
        %v1314 = vld [vmem:[%s1 + $0x1fc8] sm:$0xff]
        %v1315 = vld [vmem:[%s1 + $0x1fd0] sm:$0xff]
        %v1316 = vld [vmem:[%s1 + $0x1fd8] sm:$0xff]
        %v1317 = vld [vmem:[%s1 + $0x1fe0] sm:$0xff]
        %v1318 = vld [vmem:[%s1 + $0x1fe8] sm:$0xff]
        %v1319 = vld [vmem:[%s1 + $0x1ff0] sm:$0xff]
        %v1320 = vld [vmem:[%s1 + $0x1ff8] sm:$0xff]
        %v1321 = vld [vmem:[%s1 + $0x2000] sm:$0xff]
        %v1322 = vld [vmem:[%s1 + $0x2008] sm:$0xff]
        %v1323 = vld [vmem:[%s1 + $0x2010] sm:$0xff]
        %v1324 = vld [vmem:[%s1 + $0x2018] sm:$0xff]
        %v1325 = vld [vmem:[%s1 + $0x2020] sm:$0xff]
        %v1326 = vld [vmem:[%s1 + $0x2028] sm:$0xff]
        %v1327 = vld [vmem:[%s1 + $0x2030] sm:$0xff]
        %v1328 = vld [vmem:[%s1 + $0x2038] sm:$0xff]
        %v1329 = vld [vmem:[%s1 + $0x2040] sm:$0xff]
        %v1330 = vld [vmem:[%s1 + $0x2048] sm:$0xff]
        %v1331 = vld [vmem:[%s1 + $0x2050] sm:$0xff]
        %v1332 = vld [vmem:[%s1 + $0x2058] sm:$0xff]
        %v1333 = vld [vmem:[%s1 + $0x2060] sm:$0xff]
        %v1334 = vld [vmem:[%s1 + $0x2068] sm:$0xff]
        %v1335 = vld [vmem:[%s1 + $0x2070] sm:$0xff]
        %v1336 = vld [vmem:[%s1 + $0x2078] sm:$0xff]
        %v1337 = vld [vmem:[%s1 + $0x2080] sm:$0xff]
        %v1338 = vld [vmem:[%s1 + $0x2088] sm:$0xff]
        %v1339 = vld [vmem:[%s1 + $0x2090] sm:$0xff]
        %v1340 = vld [vmem:[%s1 + $0x2098] sm:$0xff]
        %v1341 = vld [vmem:[%s1 + $0x20a0] sm:$0xff]
        %v1342 = vld [vmem:[%s1 + $0x20a8] sm:$0xff]
        %v1343 = vld [vmem:[%s1 + $0x20b0] sm:$0xff]
        %v1344 = vld [vmem:[%s1 + $0x20b8] sm:$0xff]
        %v1345 = vld [vmem:[%s1 + $0x20c0] sm:$0xff]
        %v1346 = vld [vmem:[%s1 + $0x20c8] sm:$0xff]
        %v1347 = vld [vmem:[%s1 + $0x20d0] sm:$0xff]
        %v1348 = vld [vmem:[%s1 + $0x20d8] sm:$0xff]
        %v1349 = vld [vmem:[%s1 + $0x20e0] sm:$0xff]
        %v1350 = vld [vmem:[%s1 + $0x20e8] sm:$0xff]
        %v1351 = vld [vmem:[%s1 + $0x20f0] sm:$0xff]
        %v1352 = vld [vmem:[%s1 + $0x20f8] sm:$0xff]
        %v1353 = vld [vmem:[%s1 + $0x2100] sm:$0xff]
        %v1354 = vld [vmem:[%s1 + $0x2108] sm:$0xff]
        %v1355 = vld [vmem:[%s1 + $0x2110] sm:$0xff]
        %v1356 = vld [vmem:[%s1 + $0x2118] sm:$0xff]
        %v1357 = vld [vmem:[%s1 + $0x2120] sm:$0xff]
        %v1358 = vld [vmem:[%s1 + $0x2128] sm:$0xff]
        %v1359 = vld [vmem:[%s1 + $0x2130] sm:$0xff]
        %v1360 = vld [vmem:[%s1 + $0x2138] sm:$0xff]
        %v1361 = vld [vmem:[%s1 + $0x2140] sm:$0xff]
        %v1362 = vld [vmem:[%s1 + $0x2148] sm:$0xff]
        %v1363 = vld [vmem:[%s1 + $0x2150] sm:$0xff]
        %v1364 = vld [vmem:[%s1 + $0x2158] sm:$0xff]
        %v1365 = vld [vmem:[%s1 + $0x2160] sm:$0xff]
        %v1366 = vld [vmem:[%s1 + $0x2168] sm:$0xff]
        %v1367 = vld [vmem:[%s1 + $0x2170] sm:$0xff]
        %v1368 = vld [vmem:[%s1 + $0x2178] sm:$0xff]
        %v1369 = vld [vmem:[%s1 + $0x2180] sm:$0xff]
        %v1370 = vld [vmem:[%s1 + $0x2188] sm:$0xff]
        %v1371 = vld [vmem:[%s1 + $0x2190] sm:$0xff]
        %v1372 = vld [vmem:[%s1 + $0x2198] sm:$0xff]
        %v1373 = vld [vmem:[%s1 + $0x21a0] sm:$0xff]
        %v1374 = vld [vmem:[%s1 + $0x21a8] sm:$0xff]
        %v1375 = vld [vmem:[%s1 + $0x21b0] sm:$0xff]
        %v1376 = vld [vmem:[%s1 + $0x21b8] sm:$0xff]
        %v1377 = vld [vmem:[%s1 + $0x21c0] sm:$0xff]
        %v1378 = vld [vmem:[%s1 + $0x21c8] sm:$0xff]
        %v1379 = vld [vmem:[%s1 + $0x21d0] sm:$0xff]
        %v1380 = vld [vmem:[%s1 + $0x21d8] sm:$0xff]
        %v1381 = vld [vmem:[%s1 + $0x21e0] sm:$0xff]
        %v1382 = vld [vmem:[%s1 + $0x21e8] sm:$0xff]
        %v1383 = vld [vmem:[%s1 + $0x21f0] sm:$0xff]
        %v1384 = vld [vmem:[%s1 + $0x21f8] sm:$0xff]
        %v1385 = vld [vmem:[%s1 + $0x2200] sm:$0xff]
        %v1386 = vld [vmem:[%s1 + $0x2208] sm:$0xff]
        %v1387 = vld [vmem:[%s1 + $0x2210] sm:$0xff]
        %v1388 = vld [vmem:[%s1 + $0x2218] sm:$0xff]
        %v1389 = vld [vmem:[%s1 + $0x2220] sm:$0xff]
        %v1390 = vld [vmem:[%s1 + $0x2228] sm:$0xff]
        %v1391 = vld [vmem:[%s1 + $0x2230] sm:$0xff]
        %v1392 = vld [vmem:[%s1 + $0x2238] sm:$0xff]
        %v1393 = vld [vmem:[%s1 + $0x2240] sm:$0xff]
        %v1394 = vld [vmem:[%s1 + $0x2248] sm:$0xff]
        %v1395 = vld [vmem:[%s1 + $0x2250] sm:$0xff]
        %v1396 = vld [vmem:[%s1 + $0x2258] sm:$0xff]
        %v1397 = vld [vmem:[%s1 + $0x2260] sm:$0xff]
        %v1398 = vld [vmem:[%s1 + $0x2268] sm:$0xff]
        %v1399 = vld [vmem:[%s1 + $0x2270] sm:$0xff]
        %v1400 = vld [vmem:[%s1 + $0x2278] sm:$0xff]
        %v1401 = vld [vmem:[%s1 + $0x2280] sm:$0xff]
        %v1402 = vld [vmem:[%s1 + $0x2288] sm:$0xff]
        %v1403 = vld [vmem:[%s1 + $0x2290] sm:$0xff]
        %v1404 = vld [vmem:[%s1 + $0x2298] sm:$0xff]
        %v1405 = vld [vmem:[%s1 + $0x22a0] sm:$0xff]
        %v1406 = vld [vmem:[%s1 + $0x22a8] sm:$0xff]
        %v1407 = vld [vmem:[%s1 + $0x22b0] sm:$0xff]
        %v1408 = vld [vmem:[%s1 + $0x22b8] sm:$0xff]
        %v1409 = vld [vmem:[%s1 + $0x22c0] sm:$0xff]
        %v1410 = vld [vmem:[%s1 + $0x22c8] sm:$0xff]
        %v1411 = vld [vmem:[%s1 + $0x22d0] sm:$0xff]
        %v1412 = vld [vmem:[%s1 + $0x22d8] sm:$0xff]
        %v1413 = vld [vmem:[%s1 + $0x22e0] sm:$0xff]
        %v1414 = vld [vmem:[%s1 + $0x22e8] sm:$0xff]
        %v1415 = vld [vmem:[%s1 + $0x22f0] sm:$0xff]
        %v1416 = vld [vmem:[%s1 + $0x22f8] sm:$0xff]
        %v1417 = vld [vmem:[%s1 + $0x2300] sm:$0xff]
        %v1418 = vld [vmem:[%s1 + $0x2308] sm:$0xff]
        %v1419 = vld [vmem:[%s1 + $0x2310] sm:$0xff]
        %v1420 = vld [vmem:[%s1 + $0x2318] sm:$0xff]
        %v1421 = vld [vmem:[%s1 + $0x2320] sm:$0xff]
        %v1422 = vld [vmem:[%s1 + $0x2328] sm:$0xff]
        %v1423 = vld [vmem:[%s1 + $0x2330] sm:$0xff]
        %v1424 = vld [vmem:[%s1 + $0x2338] sm:$0xff]
        %v1425 = vld [vmem:[%s1 + $0x2340] sm:$0xff]
        %v1426 = vld [vmem:[%s1 + $0x2348] sm:$0xff]
        %v1427 = vld [vmem:[%s1 + $0x2350] sm:$0xff]
        %v1428 = vld [vmem:[%s1 + $0x2358] sm:$0xff]
        %v1429 = vld [vmem:[%s1 + $0x2360] sm:$0xff]
        %v1430 = vld [vmem:[%s1 + $0x2368] sm:$0xff]
        %v1431 = vld [vmem:[%s1 + $0x2370] sm:$0xff]
        %v1432 = vld [vmem:[%s1 + $0x2378] sm:$0xff]
        %v1433 = vld [vmem:[%s1 + $0x2380] sm:$0xff]
        %v1434 = vld [vmem:[%s1 + $0x2388] sm:$0xff]
        %v1435 = vld [vmem:[%s1 + $0x2390] sm:$0xff]
        %v1436 = vld [vmem:[%s1 + $0x2398] sm:$0xff]
        %v1437 = vld [vmem:[%s1 + $0x23a0] sm:$0xff]
        %v1438 = vld [vmem:[%s1 + $0x23a8] sm:$0xff]
        %v1439 = vld [vmem:[%s1 + $0x23b0] sm:$0xff]
        %v1440 = vld [vmem:[%s1 + $0x23b8] sm:$0xff]
        %v1441 = vld [vmem:[%s1 + $0x23c0] sm:$0xff]
        %v1442 = vld [vmem:[%s1 + $0x23c8] sm:$0xff]
        %v1443 = vld [vmem:[%s1 + $0x23d0] sm:$0xff]
        %v1444 = vld [vmem:[%s1 + $0x23d8] sm:$0xff]
        %v1445 = vld [vmem:[%s1 + $0x23e0] sm:$0xff]
        %v1446 = vld [vmem:[%s1 + $0x23e8] sm:$0xff]
        %v1447 = vld [vmem:[%s1 + $0x23f0] sm:$0xff]
        %v1448 = vld [vmem:[%s1 + $0x23f8] sm:$0xff]
        %v1449 = vld [vmem:[%s1 + $0x2400] sm:$0xff]
        %v1450 = vld [vmem:[%s1 + $0x2408] sm:$0xff]
        %v1451 = vld [vmem:[%s1 + $0x2410] sm:$0xff]
        %v1452 = vld [vmem:[%s1 + $0x2418] sm:$0xff]
        %v1453 = vld [vmem:[%s1 + $0x2420] sm:$0xff]
        %v1454 = vld [vmem:[%s1 + $0x2428] sm:$0xff]
        %v1455 = vld [vmem:[%s1 + $0x2430] sm:$0xff]
        %v1456 = vld [vmem:[%s1 + $0x2438] sm:$0xff]
        %v1457 = vld [vmem:[%s1 + $0x2440] sm:$0xff]
        %v1458 = vld [vmem:[%s1 + $0x2448] sm:$0xff]
        %v1459 = vld [vmem:[%s1 + $0x2450] sm:$0xff]
        %v1460 = vld [vmem:[%s1 + $0x2458] sm:$0xff]
        %v1461 = vld [vmem:[%s1 + $0x2460] sm:$0xff]
        %v1462 = vld [vmem:[%s1 + $0x2468] sm:$0xff]
        %v1463 = vld [vmem:[%s1 + $0x2470] sm:$0xff]
        %v1464 = vld [vmem:[%s1 + $0x2478] sm:$0xff]
        %v1465 = vld [vmem:[%s1 + $0x2480] sm:$0xff]
        %v1466 = vld [vmem:[%s1 + $0x2488] sm:$0xff]
        %v1467 = vld [vmem:[%s1 + $0x2490] sm:$0xff]
        %v1468 = vld [vmem:[%s1 + $0x2498] sm:$0xff]
        %v1469 = vld [vmem:[%s1 + $0x24a0] sm:$0xff]
        %v1470 = vld [vmem:[%s1 + $0x24a8] sm:$0xff]
        %v1471 = vld [vmem:[%s1 + $0x24b0] sm:$0xff]
        %v1472 = vld [vmem:[%s1 + $0x24b8] sm:$0xff]
        %v1473 = vld [vmem:[%s1 + $0x24c0] sm:$0xff]
        %v1474 = vld [vmem:[%s1 + $0x24c8] sm:$0xff]
        %v1475 = vld [vmem:[%s1 + $0x24d0] sm:$0xff]
        %v1476 = vld [vmem:[%s1 + $0x24d8] sm:$0xff]
        %v1477 = vld [vmem:[%s1 + $0x24e0] sm:$0xff]
        %v1478 = vld [vmem:[%s1 + $0x24e8] sm:$0xff]
        %v1479 = vld [vmem:[%s1 + $0x24f0] sm:$0xff]
        %v1480 = vld [vmem:[%s1 + $0x24f8] sm:$0xff]
        %v1481 = vld [vmem:[%s1 + $0x2500] sm:$0xff]
        %v1482 = vld [vmem:[%s1 + $0x2508] sm:$0xff]
        %v1483 = vld [vmem:[%s1 + $0x2510] sm:$0xff]
        %v1484 = vld [vmem:[%s1 + $0x2518] sm:$0xff]
        %v1485 = vld [vmem:[%s1 + $0x2520] sm:$0xff]
        %v1486 = vld [vmem:[%s1 + $0x2528] sm:$0xff]
        %v1487 = vld [vmem:[%s1 + $0x2530] sm:$0xff]
        %v1488 = vld [vmem:[%s1 + $0x2538] sm:$0xff]
        %v1489 = vld [vmem:[%s1 + $0x2540] sm:$0xff]
        %v1490 = vld [vmem:[%s1 + $0x2548] sm:$0xff]
        %v1491 = vld [vmem:[%s1 + $0x2550] sm:$0xff]
        %v1492 = vld [vmem:[%s1 + $0x2558] sm:$0xff]
        %v1493 = vld [vmem:[%s1 + $0x2560] sm:$0xff]
        %v1494 = vld [vmem:[%s1 + $0x2568] sm:$0xff]
        %v1495 = vld [vmem:[%s1 + $0x2570] sm:$0xff]
        %v1496 = vld [vmem:[%s1 + $0x2578] sm:$0xff]
        %v1497 = vld [vmem:[%s1 + $0x2580] sm:$0xff]
        %v1498 = vld [vmem:[%s1 + $0x2588] sm:$0xff]
        %v1499 = vld [vmem:[%s1 + $0x2590] sm:$0xff]
        %v1500 = vld [vmem:[%s1 + $0x2598] sm:$0xff]
        %v1501 = vld [vmem:[%s1 + $0x25a0] sm:$0xff]
        %v1502 = vld [vmem:[%s1 + $0x25a8] sm:$0xff]
        %v1503 = vld [vmem:[%s1 + $0x25b0] sm:$0xff]
        %v1504 = vld [vmem:[%s1 + $0x25b8] sm:$0xff]
        %v1505 = vld [vmem:[%s1 + $0x25c0] sm:$0xff]
        %v1506 = vld [vmem:[%s1 + $0x25c8] sm:$0xff]
        %v1507 = vld [vmem:[%s1 + $0x25d0] sm:$0xff]
        %v1508 = vld [vmem:[%s1 + $0x25d8] sm:$0xff]
        %v1509 = vld [vmem:[%s1 + $0x25e0] sm:$0xff]
        %v1510 = vld [vmem:[%s1 + $0x25e8] sm:$0xff]
        %v1511 = vld [vmem:[%s1 + $0x25f0] sm:$0xff]
        %v1512 = vld [vmem:[%s1 + $0x25f8] sm:$0xff]
        %v1513 = vld [vmem:[%s1 + $0x2600] sm:$0xff]
        %v1514 = vld [vmem:[%s1 + $0x2608] sm:$0xff]
        %v1515 = vld [vmem:[%s1 + $0x2610] sm:$0xff]
        %v1516 = vld [vmem:[%s1 + $0x2618] sm:$0xff]
        %v1517 = vld [vmem:[%s1 + $0x2620] sm:$0xff]
        %v1518 = vld [vmem:[%s1 + $0x2628] sm:$0xff]
        %v1519 = vld [vmem:[%s1 + $0x2630] sm:$0xff]
        %v1520 = vld [vmem:[%s1 + $0x2638] sm:$0xff]
        %v1521 = vld [vmem:[%s1 + $0x2640] sm:$0xff]
        %v1522 = vld [vmem:[%s1 + $0x2648] sm:$0xff]
        %v1523 = vld [vmem:[%s1 + $0x2650] sm:$0xff]
        %v1524 = vld [vmem:[%s1 + $0x2658] sm:$0xff]
        %v1525 = vld [vmem:[%s1 + $0x2660] sm:$0xff]
        %v1526 = vld [vmem:[%s1 + $0x2668] sm:$0xff]
        %v1527 = vld [vmem:[%s1 + $0x2670] sm:$0xff]
        %v1528 = vld [vmem:[%s1 + $0x2678] sm:$0xff]
        %v1529 = vld [vmem:[%s1 + $0x2680] sm:$0xff]
        %v1530 = vld [vmem:[%s1 + $0x2688] sm:$0xff]
        %v1531 = vld [vmem:[%s1 + $0x2690] sm:$0xff]
        %v1532 = vld [vmem:[%s1 + $0x2698] sm:$0xff]
        %v1533 = vld [vmem:[%s1 + $0x26a0] sm:$0xff]
        %v1534 = vld [vmem:[%s1 + $0x26a8] sm:$0xff]
        %v1535 = vld [vmem:[%s1 + $0x26b0] sm:$0xff]
        %v1536 = vld [vmem:[%s1 + $0x26b8] sm:$0xff]
        %v1537 = vld [vmem:[%s1 + $0x26c0] sm:$0xff]
        %v1538 = vld [vmem:[%s1 + $0x26c8] sm:$0xff]
        %v1539 = vld [vmem:[%s1 + $0x26d0] sm:$0xff]
        %v1540 = vld [vmem:[%s1 + $0x26d8] sm:$0xff]
        %v1541 = vld [vmem:[%s1 + $0x26e0] sm:$0xff]
        %v1542 = vld [vmem:[%s1 + $0x26e8] sm:$0xff]
        %v1543 = vld [vmem:[%s1 + $0x26f0] sm:$0xff]
        %v1544 = vld [vmem:[%s1 + $0x26f8] sm:$0xff]
        %v1545 = vld [vmem:[%s1 + $0x2700] sm:$0xff]
        %v1546 = vld [vmem:[%s1 + $0x2708] sm:$0xff]
        %v1547 = vld [vmem:[%s1 + $0x2710] sm:$0xff]
        %v1548 = vld [vmem:[%s1 + $0x2718] sm:$0xff]
        %v1549 = vld [vmem:[%s1 + $0x2720] sm:$0xff]
        %v1550 = vld [vmem:[%s1 + $0x2728] sm:$0xff]
        %v1551 = vld [vmem:[%s1 + $0x2730] sm:$0xff]
        %v1552 = vld [vmem:[%s1 + $0x2738] sm:$0xff]
        %v1553 = vld [vmem:[%s1 + $0x2740] sm:$0xff]
        %v1554 = vld [vmem:[%s1 + $0x2748] sm:$0xff]
        %v1555 = vld [vmem:[%s1 + $0x2750] sm:$0xff]
        %v1556 = vld [vmem:[%s1 + $0x2758] sm:$0xff]
        %v1557 = vld [vmem:[%s1 + $0x2760] sm:$0xff]
        %v1558 = vld [vmem:[%s1 + $0x2768] sm:$0xff]
        %v1559 = vld [vmem:[%s1 + $0x2770] sm:$0xff]
        %v1560 = vld [vmem:[%s1 + $0x2778] sm:$0xff]
        %v1561 = vld [vmem:[%s1 + $0x2780] sm:$0xff]
        %v1562 = vld [vmem:[%s1 + $0x2788] sm:$0xff]
        %v1563 = vld [vmem:[%s1 + $0x2790] sm:$0xff]
        %v1564 = vld [vmem:[%s1 + $0x2798] sm:$0xff]
        %v1565 = vld [vmem:[%s1 + $0x27a0] sm:$0xff]
        %v1566 = vld [vmem:[%s1 + $0x27a8] sm:$0xff]
        %v1567 = vld [vmem:[%s1 + $0x27b0] sm:$0xff]
        %v1568 = vld [vmem:[%s1 + $0x27b8] sm:$0xff]
        %v1569 = vld [vmem:[%s1 + $0x27c0] sm:$0xff]
        %v1570 = vld [vmem:[%s1 + $0x27c8] sm:$0xff]
        %v1571 = vld [vmem:[%s1 + $0x27d0] sm:$0xff]
        %v1572 = vld [vmem:[%s1 + $0x27d8] sm:$0xff]
        %v1573 = vld [vmem:[%s1 + $0x27e0] sm:$0xff]
        %v1574 = vld [vmem:[%s1 + $0x27e8] sm:$0xff]
        %v1575 = vld [vmem:[%s1 + $0x27f0] sm:$0xff]
        %v1576 = vld [vmem:[%s1 + $0x27f8] sm:$0xff]
        %v1577 = vld [vmem:[%s1 + $0x2800] sm:$0xff]
        %v1578 = vld [vmem:[%s1 + $0x2808] sm:$0xff]
        %v1579 = vld [vmem:[%s1 + $0x2810] sm:$0xff]
        %v1580 = vld [vmem:[%s1 + $0x2818] sm:$0xff]
        %v1581 = vld [vmem:[%s1 + $0x2820] sm:$0xff]
        %v1582 = vld [vmem:[%s1 + $0x2828] sm:$0xff]
        %v1583 = vld [vmem:[%s1 + $0x2830] sm:$0xff]
        %v1584 = vld [vmem:[%s1 + $0x2838] sm:$0xff]
        %v1585 = vld [vmem:[%s1 + $0x2840] sm:$0xff]
        %v1586 = vld [vmem:[%s1 + $0x2848] sm:$0xff]
        %v1587 = vld [vmem:[%s1 + $0x2850] sm:$0xff]
        %v1588 = vld [vmem:[%s1 + $0x2858] sm:$0xff]
        %v1589 = vld [vmem:[%s1 + $0x2860] sm:$0xff]
        %v1590 = vld [vmem:[%s1 + $0x2868] sm:$0xff]
        %v1591 = vld [vmem:[%s1 + $0x2870] sm:$0xff]
        %v1592 = vld [vmem:[%s1 + $0x2878] sm:$0xff]
        %v1593 = vld [vmem:[%s1 + $0x2880] sm:$0xff]
        %v1594 = vld [vmem:[%s1 + $0x2888] sm:$0xff]
        %v1595 = vld [vmem:[%s1 + $0x2890] sm:$0xff]
        %v1596 = vld [vmem:[%s1 + $0x2898] sm:$0xff]
        %v1597 = vld [vmem:[%s1 + $0x28a0] sm:$0xff]
        %v1598 = vld [vmem:[%s1 + $0x28a8] sm:$0xff]
        %v1599 = vld [vmem:[%s1 + $0x28b0] sm:$0xff]
        %v1600 = vld [vmem:[%s1 + $0x28b8] sm:$0xff]
        %v1601 = vld [vmem:[%s1 + $0x28c0] sm:$0xff]
        %v1602 = vld [vmem:[%s1 + $0x28c8] sm:$0xff]
        %v1603 = vld [vmem:[%s1 + $0x28d0] sm:$0xff]
        %v1604 = vld [vmem:[%s1 + $0x28d8] sm:$0xff]
        %v1605 = vld [vmem:[%s1 + $0x28e0] sm:$0xff]
        %v1606 = vld [vmem:[%s1 + $0x28e8] sm:$0xff]
        %v1607 = vld [vmem:[%s1 + $0x28f0] sm:$0xff]
        %v1608 = vld [vmem:[%s1 + $0x28f8] sm:$0xff]
        %v1609 = vld [vmem:[%s1 + $0x2900] sm:$0xff]
        %v1610 = vld [vmem:[%s1 + $0x2908] sm:$0xff]
        %v1611 = vld [vmem:[%s1 + $0x2910] sm:$0xff]
        %v1612 = vld [vmem:[%s1 + $0x2918] sm:$0xff]
        %v1613 = vld [vmem:[%s1 + $0x2920] sm:$0xff]
        %v1614 = vld [vmem:[%s1 + $0x2928] sm:$0xff]
        %v1615 = vld [vmem:[%s1 + $0x2930] sm:$0xff]
        %v1616 = vld [vmem:[%s1 + $0x2938] sm:$0xff]
        %v1617 = vld [vmem:[%s1 + $0x2940] sm:$0xff]
        %v1618 = vld [vmem:[%s1 + $0x2948] sm:$0xff]
        %v1619 = vld [vmem:[%s1 + $0x2950] sm:$0xff]
        %v1620 = vld [vmem:[%s1 + $0x2958] sm:$0xff]
        %v1621 = vld [vmem:[%s1 + $0x2960] sm:$0xff]
        %v1622 = vld [vmem:[%s1 + $0x2968] sm:$0xff]
        %v1623 = vld [vmem:[%s1 + $0x2970] sm:$0xff]
        %v1624 = vld [vmem:[%s1 + $0x2978] sm:$0xff]
        %v1625 = vld [vmem:[%s1 + $0x2980] sm:$0xff]
        %v1626 = vld [vmem:[%s1 + $0x2988] sm:$0xff]
        %v1627 = vld [vmem:[%s1 + $0x2990] sm:$0xff]
        %v1628 = vld [vmem:[%s1 + $0x2998] sm:$0xff]
        %v1629 = vld [vmem:[%s1 + $0x29a0] sm:$0xff]
        %v1630 = vld [vmem:[%s1 + $0x29a8] sm:$0xff]
        %v1631 = vld [vmem:[%s1 + $0x29b0] sm:$0xff]
        %v1632 = vld [vmem:[%s1 + $0x29b8] sm:$0xff]
        %v1633 = vld [vmem:[%s1 + $0x29c0] sm:$0xff]
        %v1634 = vld [vmem:[%s1 + $0x29c8] sm:$0xff]
        %v1635 = vld [vmem:[%s1 + $0x29d0] sm:$0xff]
        %v1636 = vld [vmem:[%s1 + $0x29d8] sm:$0xff]
        %v1637 = vld [vmem:[%s1 + $0x29e0] sm:$0xff]
        %v1638 = vld [vmem:[%s1 + $0x29e8] sm:$0xff]
        %v1639 = vld [vmem:[%s1 + $0x29f0] sm:$0xff]
        %v1640 = vld [vmem:[%s1 + $0x29f8] sm:$0xff]
        %v1641 = vld [vmem:[%s1 + $0x2a00] sm:$0xff]
        %v1642 = vld [vmem:[%s1 + $0x2a08] sm:$0xff]
        %v1643 = vld [vmem:[%s1 + $0x2a10] sm:$0xff]
        %v1644 = vld [vmem:[%s1 + $0x2a18] sm:$0xff]
        %v1645 = vld [vmem:[%s1 + $0x2a20] sm:$0xff]
        %v1646 = vld [vmem:[%s1 + $0x2a28] sm:$0xff]
        %v1647 = vld [vmem:[%s1 + $0x2a30] sm:$0xff]
        %v1648 = vld [vmem:[%s1 + $0x2a38] sm:$0xff]
        %v1649 = vld [vmem:[%s1 + $0x2a40] sm:$0xff]
        %v1650 = vld [vmem:[%s1 + $0x2a48] sm:$0xff]
        %v1651 = vld [vmem:[%s1 + $0x2a50] sm:$0xff]
        %v1652 = vld [vmem:[%s1 + $0x2a58] sm:$0xff]
        %v1653 = vld [vmem:[%s1 + $0x2a60] sm:$0xff]
        %v1654 = vld [vmem:[%s1 + $0x2a68] sm:$0xff]
        %v1655 = vld [vmem:[%s1 + $0x2a70] sm:$0xff]
        %v1656 = vld [vmem:[%s1 + $0x2a78] sm:$0xff]
        %v1657 = vld [vmem:[%s1 + $0x2a80] sm:$0xff]
        %v1658 = vld [vmem:[%s1 + $0x2a88] sm:$0xff]
        %v1659 = vld [vmem:[%s1 + $0x2a90] sm:$0xff]
        %v1660 = vld [vmem:[%s1 + $0x2a98] sm:$0xff]
        %v1661 = vld [vmem:[%s1 + $0x2aa0] sm:$0xff]
        %v1662 = vld [vmem:[%s1 + $0x2aa8] sm:$0xff]
        %v1663 = vld [vmem:[%s1 + $0x2ab0] sm:$0xff]
        %v1664 = vld [vmem:[%s1 + $0x2ab8] sm:$0xff]
        %v1665 = vld [vmem:[%s1 + $0x2ac0] sm:$0xff]
        %v1666 = vld [vmem:[%s1 + $0x2ac8] sm:$0xff]
        %v1667 = vld [vmem:[%s1 + $0x2ad0] sm:$0xff]
        %v1668 = vld [vmem:[%s1 + $0x2ad8] sm:$0xff]
        %v1669 = vld [vmem:[%s1 + $0x2ae0] sm:$0xff]
        %v1670 = vld [vmem:[%s1 + $0x2ae8] sm:$0xff]
        %v1671 = vld [vmem:[%s1 + $0x2af0] sm:$0xff]
        %v1672 = vld [vmem:[%s1 + $0x2af8] sm:$0xff]
        %v1673 = vld [vmem:[%s1 + $0x2b00] sm:$0xff]
        %v1674 = vld [vmem:[%s1 + $0x2b08] sm:$0xff]
        %v1675 = vld [vmem:[%s1 + $0x2b10] sm:$0xff]
        %v1676 = vld [vmem:[%s1 + $0x2b18] sm:$0xff]
        %v1677 = vld [vmem:[%s1 + $0x2b20] sm:$0xff]
        %v1678 = vld [vmem:[%s1 + $0x2b28] sm:$0xff]
        %v1679 = vld [vmem:[%s1 + $0x2b30] sm:$0xff]
        %v1680 = vld [vmem:[%s1 + $0x2b38] sm:$0xff]
        %v1681 = vld [vmem:[%s1 + $0x2b40] sm:$0xff]
        %v1682 = vld [vmem:[%s1 + $0x2b48] sm:$0xff]
        %v1683 = vld [vmem:[%s1 + $0x2b50] sm:$0xff]
        %v1684 = vld [vmem:[%s1 + $0x2b58] sm:$0xff]
        %v1685 = vld [vmem:[%s1 + $0x2b60] sm:$0xff]
        %v1686 = vld [vmem:[%s1 + $0x2b68] sm:$0xff]
        %v1687 = vld [vmem:[%s1 + $0x2b70] sm:$0xff]
        %v1688 = vld [vmem:[%s1 + $0x2b78] sm:$0xff]
        %v1689 = vld [vmem:[%s1 + $0x2b80] sm:$0xff]
        %v1690 = vld [vmem:[%s1 + $0x2b88] sm:$0xff]
        %v1691 = vld [vmem:[%s1 + $0x2b90] sm:$0xff]
        %v1692 = vld [vmem:[%s1 + $0x2b98] sm:$0xff]
        %v1693 = vld [vmem:[%s1 + $0x2ba0] sm:$0xff]
        %v1694 = vld [vmem:[%s1 + $0x2ba8] sm:$0xff]
        %v1695 = vld [vmem:[%s1 + $0x2bb0] sm:$0xff]
        %v1696 = vld [vmem:[%s1 + $0x2bb8] sm:$0xff]
        %v1697 = vld [vmem:[%s1 + $0x2bc0] sm:$0xff]
        %v1698 = vld [vmem:[%s1 + $0x2bc8] sm:$0xff]
        %v1699 = vld [vmem:[%s1 + $0x2bd0] sm:$0xff]
        %v1700 = vld [vmem:[%s1 + $0x2bd8] sm:$0xff]
        %v1701 = vld [vmem:[%s1 + $0x2be0] sm:$0xff]
        %v1702 = vld [vmem:[%s1 + $0x2be8] sm:$0xff]
        %v1703 = vld [vmem:[%s1 + $0x2bf0] sm:$0xff]
        %v1704 = vld [vmem:[%s1 + $0x2bf8] sm:$0xff]
        %v1705 = vld [vmem:[%s1 + $0x2c00] sm:$0xff]
        %v1706 = vld [vmem:[%s1 + $0x2c08] sm:$0xff]
        %v1707 = vld [vmem:[%s1 + $0x2c10] sm:$0xff]
        %v1708 = vld [vmem:[%s1 + $0x2c18] sm:$0xff]
        %v1709 = vld [vmem:[%s1 + $0x2c20] sm:$0xff]
        %v1710 = vld [vmem:[%s1 + $0x2c28] sm:$0xff]
        %v1711 = vld [vmem:[%s1 + $0x2c30] sm:$0xff]
        %v1712 = vld [vmem:[%s1 + $0x2c38] sm:$0xff]
        %v1713 = vld [vmem:[%s1 + $0x2c40] sm:$0xff]
        %v1714 = vld [vmem:[%s1 + $0x2c48] sm:$0xff]
        %v1715 = vld [vmem:[%s1 + $0x2c50] sm:$0xff]
        %v1716 = vld [vmem:[%s1 + $0x2c58] sm:$0xff]
        %v1717 = vld [vmem:[%s1 + $0x2c60] sm:$0xff]
        %v1718 = vld [vmem:[%s1 + $0x2c68] sm:$0xff]
        %v1719 = vld [vmem:[%s1 + $0x2c70] sm:$0xff]
        %v1720 = vld [vmem:[%s1 + $0x2c78] sm:$0xff]
        %v1721 = vld [vmem:[%s1 + $0x2c80] sm:$0xff]
        %v1722 = vld [vmem:[%s1 + $0x2c88] sm:$0xff]
        %v1723 = vld [vmem:[%s1 + $0x2c90] sm:$0xff]
        %v1724 = vld [vmem:[%s1 + $0x2c98] sm:$0xff]
        %v1725 = vld [vmem:[%s1 + $0x2ca0] sm:$0xff]
        %v1726 = vld [vmem:[%s1 + $0x2ca8] sm:$0xff]
        %v1727 = vld [vmem:[%s1 + $0x2cb0] sm:$0xff]
        %v1728 = vld [vmem:[%s1 + $0x2cb8] sm:$0xff]
        %v1729 = vld [vmem:[%s1 + $0x2cc0] sm:$0xff]
        %v1730 = vld [vmem:[%s1 + $0x2cc8] sm:$0xff]
        %v1731 = vld [vmem:[%s1 + $0x2cd0] sm:$0xff]
        %v1732 = vld [vmem:[%s1 + $0x2cd8] sm:$0xff]
        %v1733 = vld [vmem:[%s1 + $0x2ce0] sm:$0xff]
        %v1734 = vld [vmem:[%s1 + $0x2ce8] sm:$0xff]
        %v1735 = vld [vmem:[%s1 + $0x2cf0] sm:$0xff]
        %v1736 = vld [vmem:[%s1 + $0x2cf8] sm:$0xff]
        %v1737 = vld [vmem:[%s1 + $0x2d00] sm:$0xff]
        %v1738 = vld [vmem:[%s1 + $0x2d08] sm:$0xff]
        %v1739 = vld [vmem:[%s1 + $0x2d10] sm:$0xff]
        %v1740 = vld [vmem:[%s1 + $0x2d18] sm:$0xff]
        %v1741 = vld [vmem:[%s1 + $0x2d20] sm:$0xff]
        %v1742 = vld [vmem:[%s1 + $0x2d28] sm:$0xff]
        %v1743 = vld [vmem:[%s1 + $0x2d30] sm:$0xff]
        %v1744 = vld [vmem:[%s1 + $0x2d38] sm:$0xff]
        %v1745 = vld [vmem:[%s1 + $0x2d40] sm:$0xff]
        %v1746 = vld [vmem:[%s1 + $0x2d48] sm:$0xff]
        %v1747 = vld [vmem:[%s1 + $0x2d50] sm:$0xff]
        %v1748 = vld [vmem:[%s1 + $0x2d58] sm:$0xff]
        %v1749 = vld [vmem:[%s1 + $0x2d60] sm:$0xff]
        %v1750 = vld [vmem:[%s1 + $0x2d68] sm:$0xff]
        %v1751 = vld [vmem:[%s1 + $0x2d70] sm:$0xff]
        %v1752 = vld [vmem:[%s1 + $0x2d78] sm:$0xff]
        %v1753 = vld [vmem:[%s1 + $0x2d80] sm:$0xff]
        %v1754 = vld [vmem:[%s1 + $0x2d88] sm:$0xff]
        %v1755 = vld [vmem:[%s1 + $0x2d90] sm:$0xff]
        %v1756 = vld [vmem:[%s1 + $0x2d98] sm:$0xff]
        %v1757 = vld [vmem:[%s1 + $0x2da0] sm:$0xff]
        %v1758 = vld [vmem:[%s1 + $0x2da8] sm:$0xff]
        %v1759 = vld [vmem:[%s1 + $0x2db0] sm:$0xff]
        %v1760 = vld [vmem:[%s1 + $0x2db8] sm:$0xff]
        %v1761 = vld [vmem:[%s1 + $0x2dc0] sm:$0xff]
        %v1762 = vld [vmem:[%s1 + $0x2dc8] sm:$0xff]
        %v1763 = vld [vmem:[%s1 + $0x2dd0] sm:$0xff]
        %v1764 = vld [vmem:[%s1 + $0x2dd8] sm:$0xff]
        %v1765 = vld [vmem:[%s1 + $0x2de0] sm:$0xff]
        %v1766 = vld [vmem:[%s1 + $0x2de8] sm:$0xff]
        %v1767 = vld [vmem:[%s1 + $0x2df0] sm:$0xff]
        %v1768 = vld [vmem:[%s1 + $0x2df8] sm:$0xff]
        %v1769 = vld [vmem:[%s1 + $0x2e00] sm:$0xff]
        %v1770 = vld [vmem:[%s1 + $0x2e08] sm:$0xff]
        %v1771 = vld [vmem:[%s1 + $0x2e10] sm:$0xff]
        %v1772 = vld [vmem:[%s1 + $0x2e18] sm:$0xff]
        %v1773 = vld [vmem:[%s1 + $0x2e20] sm:$0xff]
        %v1774 = vld [vmem:[%s1 + $0x2e28] sm:$0xff]
        %v1775 = vld [vmem:[%s1 + $0x2e30] sm:$0xff]
        %v1776 = vld [vmem:[%s1 + $0x2e38] sm:$0xff]
        %v1777 = vld [vmem:[%s1 + $0x2e40] sm:$0xff]
        %v1778 = vld [vmem:[%s1 + $0x2e48] sm:$0xff]
        %v1779 = vld [vmem:[%s1 + $0x2e50] sm:$0xff]
        %v1780 = vld [vmem:[%s1 + $0x2e58] sm:$0xff]
        %v1781 = vld [vmem:[%s1 + $0x2e60] sm:$0xff]
        %v1782 = vld [vmem:[%s1 + $0x2e68] sm:$0xff]
        %v1783 = vld [vmem:[%s1 + $0x2e70] sm:$0xff]
        %v1784 = vld [vmem:[%s1 + $0x2e78] sm:$0xff]
        %v1785 = vld [vmem:[%s1 + $0x2e80] sm:$0xff]
        %v1786 = vld [vmem:[%s1 + $0x2e88] sm:$0xff]
        %v1787 = vld [vmem:[%s1 + $0x2e90] sm:$0xff]
        %v1788 = vld [vmem:[%s1 + $0x2e98] sm:$0xff]
        %v1789 = vld [vmem:[%s1 + $0x2ea0] sm:$0xff]
        %v1790 = vld [vmem:[%s1 + $0x2ea8] sm:$0xff]
        %v1791 = vld [vmem:[%s1 + $0x2eb0] sm:$0xff]
        %v1792 = vld [vmem:[%s1 + $0x2eb8] sm:$0xff]
        %v1793 = vld [vmem:[%s1 + $0x2ec0] sm:$0xff]
        %v1794 = vld [vmem:[%s1 + $0x2ec8] sm:$0xff]
        %v1795 = vld [vmem:[%s1 + $0x2ed0] sm:$0xff]
        %v1796 = vld [vmem:[%s1 + $0x2ed8] sm:$0xff]
        %v1797 = vld [vmem:[%s1 + $0x2ee0] sm:$0xff]
        %v1798 = vld [vmem:[%s1 + $0x2ee8] sm:$0xff]
        %v1799 = vld [vmem:[%s1 + $0x2ef0] sm:$0xff]
        %v1800 = vld [vmem:[%s1 + $0x2ef8] sm:$0xff]
        %v1801 = vld [vmem:[%s1 + $0x2f00] sm:$0xff]
        %v1802 = vld [vmem:[%s1 + $0x2f08] sm:$0xff]
        %v1803 = vld [vmem:[%s1 + $0x2f10] sm:$0xff]
        %v1804 = vld [vmem:[%s1 + $0x2f18] sm:$0xff]
        %v1805 = vld [vmem:[%s1 + $0x2f20] sm:$0xff]
        %v1806 = vld [vmem:[%s1 + $0x2f28] sm:$0xff]
        %v1807 = vld [vmem:[%s1 + $0x2f30] sm:$0xff]
        %v1808 = vld [vmem:[%s1 + $0x2f38] sm:$0xff]
        %v1809 = vld [vmem:[%s1 + $0x2f40] sm:$0xff]
        %v1810 = vld [vmem:[%s1 + $0x2f48] sm:$0xff]
        %v1811 = vld [vmem:[%s1 + $0x2f50] sm:$0xff]
        %v1812 = vld [vmem:[%s1 + $0x2f58] sm:$0xff]
        %v1813 = vld [vmem:[%s1 + $0x2f60] sm:$0xff]
        %v1814 = vld [vmem:[%s1 + $0x2f68] sm:$0xff]
        %v1815 = vld [vmem:[%s1 + $0x2f70] sm:$0xff]
        %v1816 = vld [vmem:[%s1 + $0x2f78] sm:$0xff]
        %v1817 = vld [vmem:[%s1 + $0x2f80] sm:$0xff]
        %v1818 = vld [vmem:[%s1 + $0x2f88] sm:$0xff]
        %v1819 = vld [vmem:[%s1 + $0x2f90] sm:$0xff]
        %v1820 = vld [vmem:[%s1 + $0x2f98] sm:$0xff]
        %v1821 = vld [vmem:[%s1 + $0x2fa0] sm:$0xff]
        %v1822 = vld [vmem:[%s1 + $0x2fa8] sm:$0xff]
        %v1823 = vld [vmem:[%s1 + $0x2fb0] sm:$0xff]
        %v1824 = vld [vmem:[%s1 + $0x2fb8] sm:$0xff]
        %v1825 = vld [vmem:[%s1 + $0x2fc0] sm:$0xff]
        %v1826 = vld [vmem:[%s1 + $0x2fc8] sm:$0xff]
        %v1827 = vld [vmem:[%s1 + $0x2fd0] sm:$0xff]
        %v1828 = vld [vmem:[%s1 + $0x2fd8] sm:$0xff]
        %v1829 = vld [vmem:[%s1 + $0x2fe0] sm:$0xff]
        %v1830 = vld [vmem:[%s1 + $0x2fe8] sm:$0xff]
        %v1831 = vld [vmem:[%s1 + $0x2ff0] sm:$0xff]
        %v1832 = vld [vmem:[%s1 + $0x2ff8] sm:$0xff]
        %v1833 = vld [vmem:[%s1 + $0x3000] sm:$0xff]
        %v1834 = vld [vmem:[%s1 + $0x3008] sm:$0xff]
        %v1835 = vld [vmem:[%s1 + $0x3010] sm:$0xff]
        %v1836 = vld [vmem:[%s1 + $0x3018] sm:$0xff]
        %v1837 = vld [vmem:[%s1 + $0x3020] sm:$0xff]
        %v1838 = vld [vmem:[%s1 + $0x3028] sm:$0xff]
        %v1839 = vld [vmem:[%s1 + $0x3030] sm:$0xff]
        %v1840 = vld [vmem:[%s1 + $0x3038] sm:$0xff]
        %v1841 = vld [vmem:[%s1 + $0x3040] sm:$0xff]
        %v1842 = vld [vmem:[%s1 + $0x3048] sm:$0xff]
        %v1843 = vld [vmem:[%s1 + $0x3050] sm:$0xff]
        %v1844 = vld [vmem:[%s1 + $0x3058] sm:$0xff]
        %v1845 = vld [vmem:[%s1 + $0x3060] sm:$0xff]
        %v1846 = vld [vmem:[%s1 + $0x3068] sm:$0xff]
        %v1847 = vld [vmem:[%s1 + $0x3070] sm:$0xff]
        %v1848 = vld [vmem:[%s1 + $0x3078] sm:$0xff]
        %v1849 = vld [vmem:[%s1 + $0x3080] sm:$0xff]
        %v1850 = vld [vmem:[%s1 + $0x3088] sm:$0xff]
        %v1851 = vld [vmem:[%s1 + $0x3090] sm:$0xff]
        %v1852 = vld [vmem:[%s1 + $0x3098] sm:$0xff]
        %v1853 = vld [vmem:[%s1 + $0x30a0] sm:$0xff]
        %v1854 = vld [vmem:[%s1 + $0x30a8] sm:$0xff]
        %v1855 = vld [vmem:[%s1 + $0x30b0] sm:$0xff]
        %v1856 = vld [vmem:[%s1 + $0x30b8] sm:$0xff]
        %v1857 = vld [vmem:[%s1 + $0x30c0] sm:$0xff]
        %v1858 = vld [vmem:[%s1 + $0x30c8] sm:$0xff]
        %v1859 = vld [vmem:[%s1 + $0x30d0] sm:$0xff]
        %v1860 = vld [vmem:[%s1 + $0x30d8] sm:$0xff]
        %v1861 = vld [vmem:[%s1 + $0x30e0] sm:$0xff]
        %v1862 = vld [vmem:[%s1 + $0x30e8] sm:$0xff]
        %v1863 = vld [vmem:[%s1 + $0x30f0] sm:$0xff]
        %v1864 = vld [vmem:[%s1 + $0x30f8] sm:$0xff]
        %v1865 = vld [vmem:[%s1 + $0x3100] sm:$0xff]
        %v1866 = vld [vmem:[%s1 + $0x3108] sm:$0xff]
        %v1867 = vld [vmem:[%s1 + $0x3110] sm:$0xff]
        %v1868 = vld [vmem:[%s1 + $0x3118] sm:$0xff]
        %v1869 = vld [vmem:[%s1 + $0x3120] sm:$0xff]
        %v1870 = vld [vmem:[%s1 + $0x3128] sm:$0xff]
        %v1871 = vld [vmem:[%s1 + $0x3130] sm:$0xff]
        %v1872 = vld [vmem:[%s1 + $0x3138] sm:$0xff]
        %v1873 = vld [vmem:[%s1 + $0x3140] sm:$0xff]
        %v1874 = vld [vmem:[%s1 + $0x3148] sm:$0xff]
        %v1875 = vld [vmem:[%s1 + $0x3150] sm:$0xff]
        %v1876 = vld [vmem:[%s1 + $0x3158] sm:$0xff]
        %v1877 = vld [vmem:[%s1 + $0x3160] sm:$0xff]
        %v1878 = vld [vmem:[%s1 + $0x3168] sm:$0xff]
        %v1879 = vld [vmem:[%s1 + $0x3170] sm:$0xff]
        %v1880 = vld [vmem:[%s1 + $0x3178] sm:$0xff]
        %v1881 = vld [vmem:[%s1 + $0x3180] sm:$0xff]
        %v1882 = vld [vmem:[%s1 + $0x3188] sm:$0xff]
        %v1883 = vld [vmem:[%s1 + $0x3190] sm:$0xff]
        %v1884 = vld [vmem:[%s1 + $0x3198] sm:$0xff]
        %v1885 = vld [vmem:[%s1 + $0x31a0] sm:$0xff]
        %v1886 = vld [vmem:[%s1 + $0x31a8] sm:$0xff]
        %v1887 = vld [vmem:[%s1 + $0x31b0] sm:$0xff]
        %v1888 = vld [vmem:[%s1 + $0x31b8] sm:$0xff]
        %v1889 = vld [vmem:[%s1 + $0x31c0] sm:$0xff]
        %v1890 = vld [vmem:[%s1 + $0x31c8] sm:$0xff]
        %v1891 = vld [vmem:[%s1 + $0x31d0] sm:$0xff]
        %v1892 = vld [vmem:[%s1 + $0x31d8] sm:$0xff]
        %v1893 = vld [vmem:[%s1 + $0x31e0] sm:$0xff]
        %v1894 = vld [vmem:[%s1 + $0x31e8] sm:$0xff]
        %v1895 = vld [vmem:[%s1 + $0x31f0] sm:$0xff]
        %v1896 = vld [vmem:[%s1 + $0x31f8] sm:$0xff]
        %v1897 = vld [vmem:[%s1 + $0x3200] sm:$0xff]
        %v1898 = vld [vmem:[%s1 + $0x3208] sm:$0xff]
        %v1899 = vld [vmem:[%s1 + $0x3210] sm:$0xff]
        %v1900 = vld [vmem:[%s1 + $0x3218] sm:$0xff]
        %v1901 = vld [vmem:[%s1 + $0x3220] sm:$0xff]
        %v1902 = vld [vmem:[%s1 + $0x3228] sm:$0xff]
        %v1903 = vld [vmem:[%s1 + $0x3230] sm:$0xff]
        %v1904 = vld [vmem:[%s1 + $0x3238] sm:$0xff]
        %v1905 = vld [vmem:[%s1 + $0x3240] sm:$0xff]
        %v1906 = vld [vmem:[%s1 + $0x3248] sm:$0xff]
        %v1907 = vld [vmem:[%s1 + $0x3250] sm:$0xff]
        %v1908 = vld [vmem:[%s1 + $0x3258] sm:$0xff]
        %v1909 = vld [vmem:[%s1 + $0x3260] sm:$0xff]
        %v1910 = vld [vmem:[%s1 + $0x3268] sm:$0xff]
        %v1911 = vld [vmem:[%s1 + $0x3270] sm:$0xff]
        %v1912 = vld [vmem:[%s1 + $0x3278] sm:$0xff]
        %v1913 = vld [vmem:[%s1 + $0x3280] sm:$0xff]
        %v1914 = vld [vmem:[%s1 + $0x3288] sm:$0xff]
        %v1915 = vld [vmem:[%s1 + $0x3290] sm:$0xff]
        %v1916 = vld [vmem:[%s1 + $0x3298] sm:$0xff]
        %v1917 = vld [vmem:[%s1 + $0x32a0] sm:$0xff]
        %v1918 = vld [vmem:[%s1 + $0x32a8] sm:$0xff]
        %v1919 = vld [vmem:[%s1 + $0x32b0] sm:$0xff]
        %v1920 = vld [vmem:[%s1 + $0x32b8] sm:$0xff]
        %v1921 = vld [vmem:[%s1 + $0x32c0] sm:$0xff]
        %v1922 = vld [vmem:[%s1 + $0x32c8] sm:$0xff]
        %v1923 = vld [vmem:[%s1 + $0x32d0] sm:$0xff]
        %v1924 = vld [vmem:[%s1 + $0x32d8] sm:$0xff]
        %v1925 = vld [vmem:[%s1 + $0x32e0] sm:$0xff]
        %v1926 = vld [vmem:[%s1 + $0x32e8] sm:$0xff]
        %v1927 = vld [vmem:[%s1 + $0x32f0] sm:$0xff]
        %v1928 = vld [vmem:[%s1 + $0x32f8] sm:$0xff]
        %v1929 = vld [vmem:[%s1 + $0x3300] sm:$0xff]
        %v1930 = vld [vmem:[%s1 + $0x3308] sm:$0xff]
        %v1931 = vld [vmem:[%s1 + $0x3310] sm:$0xff]
        %v1932 = vld [vmem:[%s1 + $0x3318] sm:$0xff]
        %v1933 = vld [vmem:[%s1 + $0x3320] sm:$0xff]
        %v1934 = vld [vmem:[%s1 + $0x3328] sm:$0xff]
        %v1935 = vld [vmem:[%s1 + $0x3330] sm:$0xff]
        %v1936 = vld [vmem:[%s1 + $0x3338] sm:$0xff]
        %v1937 = vld [vmem:[%s1 + $0x3340] sm:$0xff]
        %v1938 = vld [vmem:[%s1 + $0x3348] sm:$0xff]
        %v1939 = vld [vmem:[%s1 + $0x3350] sm:$0xff]
        %v1940 = vld [vmem:[%s1 + $0x3358] sm:$0xff]
        %v1941 = vld [vmem:[%s1 + $0x3360] sm:$0xff]
        %v1942 = vld [vmem:[%s1 + $0x3368] sm:$0xff]
        %v1943 = vld [vmem:[%s1 + $0x3370] sm:$0xff]
        %v1944 = vld [vmem:[%s1 + $0x3378] sm:$0xff]
        %v1945 = vld [vmem:[%s1 + $0x3380] sm:$0xff]
        %v1946 = vld [vmem:[%s1 + $0x3388] sm:$0xff]
        %v1947 = vld [vmem:[%s1 + $0x3390] sm:$0xff]
        %v1948 = vld [vmem:[%s1 + $0x3398] sm:$0xff]
        %v1949 = vld [vmem:[%s1 + $0x33a0] sm:$0xff]
        %v1950 = vld [vmem:[%s1 + $0x33a8] sm:$0xff]
        %v1951 = vld [vmem:[%s1 + $0x33b0] sm:$0xff]
        %v1952 = vld [vmem:[%s1 + $0x33b8] sm:$0xff]
        %v1953 = vld [vmem:[%s1 + $0x33c0] sm:$0xff]
        %v1954 = vld [vmem:[%s1 + $0x33c8] sm:$0xff]
        %v1955 = vld [vmem:[%s1 + $0x33d0] sm:$0xff]
        %v1956 = vld [vmem:[%s1 + $0x33d8] sm:$0xff]
        %v1957 = vld [vmem:[%s1 + $0x33e0] sm:$0xff]
        %v1958 = vld [vmem:[%s1 + $0x33e8] sm:$0xff]
        %v1959 = vld [vmem:[%s1 + $0x33f0] sm:$0xff]
        %v1960 = vld [vmem:[%s1 + $0x33f8] sm:$0xff]
        %v1961 = vld [vmem:[%s1 + $0x3400] sm:$0xff]
        %v1962 = vld [vmem:[%s1 + $0x3408] sm:$0xff]
        %v1963 = vld [vmem:[%s1 + $0x3410] sm:$0xff]
        %v1964 = vld [vmem:[%s1 + $0x3418] sm:$0xff]
        %v1965 = vld [vmem:[%s1 + $0x3420] sm:$0xff]
        %v1966 = vld [vmem:[%s1 + $0x3428] sm:$0xff]
        %v1967 = vld [vmem:[%s1 + $0x3430] sm:$0xff]
        %v1968 = vld [vmem:[%s1 + $0x3438] sm:$0xff]
        %v1969 = vld [vmem:[%s1 + $0x3440] sm:$0xff]
        %v1970 = vld [vmem:[%s1 + $0x3448] sm:$0xff]
        %v1971 = vld [vmem:[%s1 + $0x3450] sm:$0xff]
        %v1972 = vld [vmem:[%s1 + $0x3458] sm:$0xff]
        %v1973 = vld [vmem:[%s1 + $0x3460] sm:$0xff]
        %v1974 = vld [vmem:[%s1 + $0x3468] sm:$0xff]
        %v1975 = vld [vmem:[%s1 + $0x3470] sm:$0xff]
        %v1976 = vld [vmem:[%s1 + $0x3478] sm:$0xff]
        %v1977 = vld [vmem:[%s1 + $0x3480] sm:$0xff]
        %v1978 = vld [vmem:[%s1 + $0x3488] sm:$0xff]
        %v1979 = vld [vmem:[%s1 + $0x3490] sm:$0xff]
        %v1980 = vld [vmem:[%s1 + $0x3498] sm:$0xff]
        %v1981 = vld [vmem:[%s1 + $0x34a0] sm:$0xff]
        %v1982 = vld [vmem:[%s1 + $0x34a8] sm:$0xff]
        %v1983 = vld [vmem:[%s1 + $0x34b0] sm:$0xff]
        %v1984 = vld [vmem:[%s1 + $0x34b8] sm:$0xff]
        %v1985 = vld [vmem:[%s1 + $0x34c0] sm:$0xff]
        %v1986 = vld [vmem:[%s1 + $0x34c8] sm:$0xff]
        %v1987 = vld [vmem:[%s1 + $0x34d0] sm:$0xff]
        %v1988 = vld [vmem:[%s1 + $0x34d8] sm:$0xff]
        %v1989 = vld [vmem:[%s1 + $0x34e0] sm:$0xff]
        %v1990 = vld [vmem:[%s1 + $0x34e8] sm:$0xff]
        %v1991 = vld [vmem:[%s1 + $0x34f0] sm:$0xff]
        %v1992 = vld [vmem:[%s1 + $0x34f8] sm:$0xff]
        %v1993 = vld [vmem:[%s1 + $0x3500] sm:$0xff]
        %v1994 = vld [vmem:[%s1 + $0x3508] sm:$0xff]
        %v1995 = vld [vmem:[%s1 + $0x3510] sm:$0xff]
        %v1996 = vld [vmem:[%s1 + $0x3518] sm:$0xff]
        %v1997 = vld [vmem:[%s1 + $0x3520] sm:$0xff]
        %v1998 = vld [vmem:[%s1 + $0x3528] sm:$0xff]
        %v1999 = vld [vmem:[%s1 + $0x3530] sm:$0xff]
        %v2000 = vld [vmem:[%s1 + $0x3538] sm:$0xff]
        %v2001 = vld [vmem:[%s1 + $0x3540] sm:$0xff]
        %v2002 = vld [vmem:[%s1 + $0x3548] sm:$0xff]
        %v2003 = vld [vmem:[%s1 + $0x3550] sm:$0xff]
        %v2004 = vld [vmem:[%s1 + $0x3558] sm:$0xff]
        %v2005 = vld [vmem:[%s1 + $0x3560] sm:$0xff]
        %v2006 = vld [vmem:[%s1 + $0x3568] sm:$0xff]
        %v2007 = vld [vmem:[%s1 + $0x3570] sm:$0xff]
        %v2008 = vld [vmem:[%s1 + $0x3578] sm:$0xff]
        %v2009 = vld [vmem:[%s1 + $0x3580] sm:$0xff]
        %v2010 = vld [vmem:[%s1 + $0x3588] sm:$0xff]
        %v2011 = vld [vmem:[%s1 + $0x3590] sm:$0xff]
        %v2012 = vld [vmem:[%s1 + $0x3598] sm:$0xff]
        %v2013 = vld [vmem:[%s1 + $0x35a0] sm:$0xff]
        %v2014 = vld [vmem:[%s1 + $0x35a8] sm:$0xff]
        %v2015 = vld [vmem:[%s1 + $0x35b0] sm:$0xff]
        %v2016 = vld [vmem:[%s1 + $0x35b8] sm:$0xff]
        %v2017 = vld [vmem:[%s1 + $0x35c0] sm:$0xff]
        %v2018 = vld [vmem:[%s1 + $0x35c8] sm:$0xff]
        %v2019 = vld [vmem:[%s1 + $0x35d0] sm:$0xff]
        %v2020 = vld [vmem:[%s1 + $0x35d8] sm:$0xff]
        %v2021 = vld [vmem:[%s1 + $0x35e0] sm:$0xff]
        %v2022 = vld [vmem:[%s1 + $0x35e8] sm:$0xff]
        %v2023 = vld [vmem:[%s1 + $0x35f0] sm:$0xff]
        %v2024 = vld [vmem:[%s1 + $0x35f8] sm:$0xff]
        %v2025 = vld [vmem:[%s1 + $0x3600] sm:$0xff]
        %v2026 = vld [vmem:[%s1 + $0x3608] sm:$0xff]
        %v2027 = vld [vmem:[%s1 + $0x3610] sm:$0xff]
        %v2028 = vld [vmem:[%s1 + $0x3618] sm:$0xff]
        %v2029 = vld [vmem:[%s1 + $0x3620] sm:$0xff]
        %v2030 = vld [vmem:[%s1 + $0x3628] sm:$0xff]
        %v2031 = vld [vmem:[%s1 + $0x3630] sm:$0xff]
        %v2032 = vld [vmem:[%s1 + $0x3638] sm:$0xff]
        %v2033 = vld [vmem:[%s1 + $0x3640] sm:$0xff]
        %v2034 = vld [vmem:[%s1 + $0x3648] sm:$0xff]
        %v2035 = vld [vmem:[%s1 + $0x3650] sm:$0xff]
        %v2036 = vld [vmem:[%s1 + $0x3658] sm:$0xff]
        %v2037 = vld [vmem:[%s1 + $0x3660] sm:$0xff]
        %v2038 = vld [vmem:[%s1 + $0x3668] sm:$0xff]
        %v2039 = vld [vmem:[%s1 + $0x3670] sm:$0xff]
        %v2040 = vld [vmem:[%s1 + $0x3678] sm:$0xff]
        %v2041 = vld [vmem:[%s1 + $0x3680] sm:$0xff]
        %v2042 = vld [vmem:[%s1 + $0x3688] sm:$0xff]
        %v2043 = vld [vmem:[%s1 + $0x3690] sm:$0xff]
        %v2044 = vld [vmem:[%s1 + $0x3698] sm:$0xff]
        %v2045 = vld [vmem:[%s1 + $0x36a0] sm:$0xff]
        %v2046 = vld [vmem:[%s1 + $0x36a8] sm:$0xff]
        %v2047 = vld [vmem:[%s1 + $0x36b0] sm:$0xff]
        %v2048 = vld [vmem:[%s1 + $0x36b8] sm:$0xff]
        %v2049 = vld [vmem:[%s1 + $0x36c0] sm:$0xff]
        %v2050 = vld [vmem:[%s1 + $0x36c8] sm:$0xff]
        %v2051 = vld [vmem:[%s1 + $0x36d0] sm:$0xff]
        %v2052 = vld [vmem:[%s1 + $0x36d8] sm:$0xff]
        %v2053 = vld [vmem:[%s1 + $0x36e0] sm:$0xff]
        %v2054 = vld [vmem:[%s1 + $0x36e8] sm:$0xff]
        %v2055 = vld [vmem:[%s1 + $0x36f0] sm:$0xff]
        %v2056 = vld [vmem:[%s1 + $0x36f8] sm:$0xff]
        %v2057 = vld [vmem:[%s1 + $0x3700] sm:$0xff]
        %v2058 = vld [vmem:[%s1 + $0x3708] sm:$0xff]
        %v2059 = vld [vmem:[%s1 + $0x3710] sm:$0xff]
        %v2060 = vld [vmem:[%s1 + $0x3718] sm:$0xff]
        %v2061 = vld [vmem:[%s1 + $0x3720] sm:$0xff]
        %v2062 = vld [vmem:[%s1 + $0x3728] sm:$0xff]
        %v2063 = vld [vmem:[%s1 + $0x3730] sm:$0xff]
        %v2064 = vld [vmem:[%s1 + $0x3738] sm:$0xff]
        %v2065 = vld [vmem:[%s1 + $0x3740] sm:$0xff]
        %v2066 = vld [vmem:[%s1 + $0x3748] sm:$0xff]
        %v2067 = vld [vmem:[%s1 + $0x3750] sm:$0xff]
        %v2068 = vld [vmem:[%s1 + $0x3758] sm:$0xff]
        %v2069 = vld [vmem:[%s1 + $0x3760] sm:$0xff]
        %v2070 = vld [vmem:[%s1 + $0x3768] sm:$0xff]
        %v2071 = vld [vmem:[%s1 + $0x3770] sm:$0xff]
        %v2072 = vld [vmem:[%s1 + $0x3778] sm:$0xff]
        %v2073 = vld [vmem:[%s1 + $0x3780] sm:$0xff]
        %v2074 = vld [vmem:[%s1 + $0x3788] sm:$0xff]
        %v2075 = vld [vmem:[%s1 + $0x3790] sm:$0xff]
        %v2076 = vld [vmem:[%s1 + $0x3798] sm:$0xff]
        %v2077 = vld [vmem:[%s1 + $0x37a0] sm:$0xff]
        %v2078 = vld [vmem:[%s1 + $0x37a8] sm:$0xff]
        %v2079 = vld [vmem:[%s1 + $0x37b0] sm:$0xff]
        %v2080 = vld [vmem:[%s1 + $0x37b8] sm:$0xff]
        %v2081 = vld [vmem:[%s1 + $0x37c0] sm:$0xff]
        %v2082 = vld [vmem:[%s1 + $0x37c8] sm:$0xff]
        %v2083 = vld [vmem:[%s1 + $0x37d0] sm:$0xff]
        %v2084 = vld [vmem:[%s1 + $0x37d8] sm:$0xff]
        %v2085 = vld [vmem:[%s1 + $0x37e0] sm:$0xff]
        %v2086 = vld [vmem:[%s1 + $0x37e8] sm:$0xff]
        %v2087 = vld [vmem:[%s1 + $0x37f0] sm:$0xff]
        %v2088 = vld [vmem:[%s1 + $0x37f8] sm:$0xff]
        %v2089 = vld [vmem:[%s1 + $0x3800] sm:$0xff]
        %v2090 = vld [vmem:[%s1 + $0x3808] sm:$0xff]
        %v2091 = vld [vmem:[%s1 + $0x3810] sm:$0xff]
        %v2092 = vld [vmem:[%s1 + $0x3818] sm:$0xff]
        %v2093 = vld [vmem:[%s1 + $0x3820] sm:$0xff]
        %v2094 = vld [vmem:[%s1 + $0x3828] sm:$0xff]
        %v2095 = vld [vmem:[%s1 + $0x3830] sm:$0xff]
        %v2096 = vld [vmem:[%s1 + $0x3838] sm:$0xff]
        %v2097 = vld [vmem:[%s1 + $0x3840] sm:$0xff]
        %v2098 = vld [vmem:[%s1 + $0x3848] sm:$0xff]
        %v2099 = vld [vmem:[%s1 + $0x3850] sm:$0xff]
        %v2100 = vld [vmem:[%s1 + $0x3858] sm:$0xff]
        %v2101 = vld [vmem:[%s1 + $0x3860] sm:$0xff]
        %v2102 = vld [vmem:[%s1 + $0x3868] sm:$0xff]
        %v2103 = vld [vmem:[%s1 + $0x3870] sm:$0xff]
        %v2104 = vld [vmem:[%s1 + $0x3878] sm:$0xff]
        %v2105 = vld [vmem:[%s1 + $0x3880] sm:$0xff]
        %v2106 = vld [vmem:[%s1 + $0x3888] sm:$0xff]
        %v2107 = vld [vmem:[%s1 + $0x3890] sm:$0xff]
        %v2108 = vld [vmem:[%s1 + $0x3898] sm:$0xff]
        %v2109 = vld [vmem:[%s1 + $0x38a0] sm:$0xff]
        %v2110 = vld [vmem:[%s1 + $0x38a8] sm:$0xff]
        %v2111 = vld [vmem:[%s1 + $0x38b0] sm:$0xff]
        %v2112 = vld [vmem:[%s1 + $0x38b8] sm:$0xff]
        %v2113 = vld [vmem:[%s1 + $0x38c0] sm:$0xff]
        %v2114 = vld [vmem:[%s1 + $0x38c8] sm:$0xff]
        %v2115 = vld [vmem:[%s1 + $0x38d0] sm:$0xff]
        %v2116 = vld [vmem:[%s1 + $0x38d8] sm:$0xff]
        %v2117 = vld [vmem:[%s1 + $0x38e0] sm:$0xff]
        %v2118 = vld [vmem:[%s1 + $0x38e8] sm:$0xff]
        %v2119 = vld [vmem:[%s1 + $0x38f0] sm:$0xff]
        %v2120 = vld [vmem:[%s1 + $0x38f8] sm:$0xff]
        %v2121 = vld [vmem:[%s1 + $0x3900] sm:$0xff]
        %v2122 = vld [vmem:[%s1 + $0x3908] sm:$0xff]
        %v2123 = vld [vmem:[%s1 + $0x3910] sm:$0xff]
        %v2124 = vld [vmem:[%s1 + $0x3918] sm:$0xff]
        %v2125 = vld [vmem:[%s1 + $0x3920] sm:$0xff]
        %v2126 = vld [vmem:[%s1 + $0x3928] sm:$0xff]
        %v2127 = vld [vmem:[%s1 + $0x3930] sm:$0xff]
        %v2128 = vld [vmem:[%s1 + $0x3938] sm:$0xff]
        %v2129 = vld [vmem:[%s1 + $0x3940] sm:$0xff]
        %v2130 = vld [vmem:[%s1 + $0x3948] sm:$0xff]
        %v2131 = vld [vmem:[%s1 + $0x3950] sm:$0xff]
        %v2132 = vld [vmem:[%s1 + $0x3958] sm:$0xff]
        %v2133 = vld [vmem:[%s1 + $0x3960] sm:$0xff]
        %v2134 = vld [vmem:[%s1 + $0x3968] sm:$0xff]
        %v2135 = vld [vmem:[%s1 + $0x3970] sm:$0xff]
        %v2136 = vld [vmem:[%s1 + $0x3978] sm:$0xff]
        %v2137 = vld [vmem:[%s1 + $0x3980] sm:$0xff]
        %v2138 = vld [vmem:[%s1 + $0x3988] sm:$0xff]
        %v2139 = vld [vmem:[%s1 + $0x3990] sm:$0xff]
        %v2140 = vld [vmem:[%s1 + $0x3998] sm:$0xff]
        %v2141 = vld [vmem:[%s1 + $0x39a0] sm:$0xff]
        %v2142 = vld [vmem:[%s1 + $0x39a8] sm:$0xff]
        %v2143 = vld [vmem:[%s1 + $0x39b0] sm:$0xff]
        %v2144 = vld [vmem:[%s1 + $0x39b8] sm:$0xff]
        %v2145 = vld [vmem:[%s1 + $0x39c0] sm:$0xff]
        %v2146 = vld [vmem:[%s1 + $0x39c8] sm:$0xff]
        %v2147 = vld [vmem:[%s1 + $0x39d0] sm:$0xff]
        %v2148 = vld [vmem:[%s1 + $0x39d8] sm:$0xff]
        %v2149 = vld [vmem:[%s1 + $0x39e0] sm:$0xff]
        %v2150 = vld [vmem:[%s1 + $0x39e8] sm:$0xff]
        %v2151 = vld [vmem:[%s1 + $0x39f0] sm:$0xff]
        %v2152 = vld [vmem:[%s1 + $0x39f8] sm:$0xff]
        %v2153 = vld [vmem:[%s1 + $0x3a00] sm:$0xff]
        %v2154 = vld [vmem:[%s1 + $0x3a08] sm:$0xff]
        %v2155 = vld [vmem:[%s1 + $0x3a10] sm:$0xff]
        %v2156 = vld [vmem:[%s1 + $0x3a18] sm:$0xff]
        %v2157 = vld [vmem:[%s1 + $0x3a20] sm:$0xff]
        %v2158 = vld [vmem:[%s1 + $0x3a28] sm:$0xff]
        %v2159 = vld [vmem:[%s1 + $0x3a30] sm:$0xff]
        %v2160 = vld [vmem:[%s1 + $0x3a38] sm:$0xff]
        %v2161 = vld [vmem:[%s1 + $0x3a40] sm:$0xff]
        %v2162 = vld [vmem:[%s1 + $0x3a48] sm:$0xff]
        %v2163 = vld [vmem:[%s1 + $0x3a50] sm:$0xff]
        %v2164 = vld [vmem:[%s1 + $0x3a58] sm:$0xff]
        %v2165 = vld [vmem:[%s1 + $0x3a60] sm:$0xff]
        %v2166 = vld [vmem:[%s1 + $0x3a68] sm:$0xff]
        %v2167 = vld [vmem:[%s1 + $0x3a70] sm:$0xff]
        %v2168 = vld [vmem:[%s1 + $0x3a78] sm:$0xff]
        %v2169 = vld [vmem:[%s1 + $0x3a80] sm:$0xff]
        %v2170 = vld [vmem:[%s1 + $0x3a88] sm:$0xff]
        %v2171 = vld [vmem:[%s1 + $0x3a90] sm:$0xff]
        %v2172 = vld [vmem:[%s1 + $0x3a98] sm:$0xff]
        %v2173 = vld [vmem:[%s1 + $0x3aa0] sm:$0xff]
        %v2174 = vld [vmem:[%s1 + $0x3aa8] sm:$0xff]
        %v2175 = vld [vmem:[%s1 + $0x3ab0] sm:$0xff]
        %v2176 = vld [vmem:[%s1 + $0x3ab8] sm:$0xff]
        %v2177 = vld [vmem:[%s1 + $0x3ac0] sm:$0xff]
        %v2178 = vld [vmem:[%s1 + $0x3ac8] sm:$0xff]
        %v2179 = vld [vmem:[%s1 + $0x3ad0] sm:$0xff]
        %v2180 = vld [vmem:[%s1 + $0x3ad8] sm:$0xff]
        %v2181 = vld [vmem:[%s1 + $0x3ae0] sm:$0xff]
        %v2182 = vld [vmem:[%s1 + $0x3ae8] sm:$0xff]
        %v2183 = vld [vmem:[%s1 + $0x3af0] sm:$0xff]
        %v2184 = vld [vmem:[%s1 + $0x3af8] sm:$0xff]
        %v2185 = vld [vmem:[%s1 + $0x3b00] sm:$0xff]
        %v2186 = vld [vmem:[%s1 + $0x3b08] sm:$0xff]
        %v2187 = vld [vmem:[%s1 + $0x3b10] sm:$0xff]
        %v2188 = vld [vmem:[%s1 + $0x3b18] sm:$0xff]
        %v2189 = vld [vmem:[%s1 + $0x3b20] sm:$0xff]
        %v2190 = vld [vmem:[%s1 + $0x3b28] sm:$0xff]
        %v2191 = vld [vmem:[%s1 + $0x3b30] sm:$0xff]
        %v2192 = vld [vmem:[%s1 + $0x3b38] sm:$0xff]
        %v2193 = vld [vmem:[%s1 + $0x3b40] sm:$0xff]
        %v2194 = vld [vmem:[%s1 + $0x3b48] sm:$0xff]
        %v2195 = vld [vmem:[%s1 + $0x3b50] sm:$0xff]
        %v2196 = vld [vmem:[%s1 + $0x3b58] sm:$0xff]
        %v2197 = vld [vmem:[%s1 + $0x3b60] sm:$0xff]
        %v2198 = vld [vmem:[%s1 + $0x3b68] sm:$0xff]
        %v2199 = vld [vmem:[%s1 + $0x3b70] sm:$0xff]
        %v2200 = vld [vmem:[%s1 + $0x3b78] sm:$0xff]
        %v2201 = vld [vmem:[%s1 + $0x3b80] sm:$0xff]
        %v2202 = vld [vmem:[%s1 + $0x3b88] sm:$0xff]
        %v2203 = vld [vmem:[%s1 + $0x3b90] sm:$0xff]
        %v2204 = vld [vmem:[%s1 + $0x3b98] sm:$0xff]
        %v2205 = vld [vmem:[%s1 + $0x3ba0] sm:$0xff]
        %v2206 = vld [vmem:[%s1 + $0x3ba8] sm:$0xff]
        %v2207 = vld [vmem:[%s1 + $0x3bb0] sm:$0xff]
        %v2208 = vld [vmem:[%s1 + $0x3bb8] sm:$0xff]
        %v2209 = vld [vmem:[%s1 + $0x3bc0] sm:$0xff]
        %v2210 = vld [vmem:[%s1 + $0x3bc8] sm:$0xff]
        %v2211 = vld [vmem:[%s1 + $0x3bd0] sm:$0xff]
        %v2212 = vld [vmem:[%s1 + $0x3bd8] sm:$0xff]
        %v2213 = vld [vmem:[%s1 + $0x3be0] sm:$0xff]
        %v2214 = vld [vmem:[%s1 + $0x3be8] sm:$0xff]
        %v2215 = vld [vmem:[%s1 + $0x3bf0] sm:$0xff]
        %v2216 = vld [vmem:[%s1 + $0x3bf8] sm:$0xff]
        %v2217 = vld [vmem:[%s1 + $0x3c00] sm:$0xff]
        %v2218 = vld [vmem:[%s1 + $0x3c08] sm:$0xff]
        %v2219 = vld [vmem:[%s1 + $0x3c10] sm:$0xff]
        %v2220 = vld [vmem:[%s1 + $0x3c18] sm:$0xff]
        %v2221 = vld [vmem:[%s1 + $0x3c20] sm:$0xff]
        %v2222 = vld [vmem:[%s1 + $0x3c28] sm:$0xff]
        %v2223 = vld [vmem:[%s1 + $0x3c30] sm:$0xff]
        %v2224 = vld [vmem:[%s1 + $0x3c38] sm:$0xff]
        %v2225 = vld [vmem:[%s1 + $0x3c40] sm:$0xff]
        %v2226 = vld [vmem:[%s1 + $0x3c48] sm:$0xff]
        %v2227 = vld [vmem:[%s1 + $0x3c50] sm:$0xff]
        %v2228 = vld [vmem:[%s1 + $0x3c58] sm:$0xff]
        %v2229 = vld [vmem:[%s1 + $0x3c60] sm:$0xff]
        %v2230 = vld [vmem:[%s1 + $0x3c68] sm:$0xff]
        %v2231 = vld [vmem:[%s1 + $0x3c70] sm:$0xff]
        %v2232 = vld [vmem:[%s1 + $0x3c78] sm:$0xff]
        %v2233 = vld [vmem:[%s1 + $0x3c80] sm:$0xff]
        %v2234 = vld [vmem:[%s1 + $0x3c88] sm:$0xff]
        %v2235 = vld [vmem:[%s1 + $0x3c90] sm:$0xff]
        %v2236 = vld [vmem:[%s1 + $0x3c98] sm:$0xff]
        %v2237 = vld [vmem:[%s1 + $0x3ca0] sm:$0xff]
        %v2238 = vld [vmem:[%s1 + $0x3ca8] sm:$0xff]
        %v2239 = vld [vmem:[%s1 + $0x3cb0] sm:$0xff]
        %v2240 = vld [vmem:[%s1 + $0x3cb8] sm:$0xff]
        %v2241 = vld [vmem:[%s1 + $0x3cc0] sm:$0xff]
        %v2242 = vld [vmem:[%s1 + $0x3cc8] sm:$0xff]
        %v2243 = vld [vmem:[%s1 + $0x3cd0] sm:$0xff]
        %v2244 = vld [vmem:[%s1 + $0x3cd8] sm:$0xff]
        %v2245 = vld [vmem:[%s1 + $0x3ce0] sm:$0xff]
        %v2246 = vld [vmem:[%s1 + $0x3ce8] sm:$0xff]
        %v2247 = vld [vmem:[%s1 + $0x3cf0] sm:$0xff]
        %v2248 = vld [vmem:[%s1 + $0x3cf8] sm:$0xff]
        %v2249 = vld [vmem:[%s1 + $0x3d00] sm:$0xff]
        %v2250 = vld [vmem:[%s1 + $0x3d08] sm:$0xff]
        %v2251 = vld [vmem:[%s1 + $0x3d10] sm:$0xff]
        %v2252 = vld [vmem:[%s1 + $0x3d18] sm:$0xff]
        %v2253 = vld [vmem:[%s1 + $0x3d20] sm:$0xff]
        %v2254 = vld [vmem:[%s1 + $0x3d28] sm:$0xff]
        %v2255 = vld [vmem:[%s1 + $0x3d30] sm:$0xff]
        %v2256 = vld [vmem:[%s1 + $0x3d38] sm:$0xff]
        %v2257 = vld [vmem:[%s1 + $0x3d40] sm:$0xff]
        %v2258 = vld [vmem:[%s1 + $0x3d48] sm:$0xff]
        %v2259 = vld [vmem:[%s1 + $0x3d50] sm:$0xff]
        %v2260 = vld [vmem:[%s1 + $0x3d58] sm:$0xff]
        %v2261 = vld [vmem:[%s1 + $0x3d60] sm:$0xff]
        %v2262 = vld [vmem:[%s1 + $0x3d68] sm:$0xff]
        %v2263 = vld [vmem:[%s1 + $0x3d70] sm:$0xff]
        %v2264 = vld [vmem:[%s1 + $0x3d78] sm:$0xff]
        %v2265 = vld [vmem:[%s1 + $0x3d80] sm:$0xff]
        %v2266 = vld [vmem:[%s1 + $0x3d88] sm:$0xff]
        %v2267 = vld [vmem:[%s1 + $0x3d90] sm:$0xff]
        %v2268 = vld [vmem:[%s1 + $0x3d98] sm:$0xff]
        %v2269 = vld [vmem:[%s1 + $0x3da0] sm:$0xff]
        %v2270 = vld [vmem:[%s1 + $0x3da8] sm:$0xff]
        %v2271 = vld [vmem:[%s1 + $0x3db0] sm:$0xff]
        %v2272 = vld [vmem:[%s1 + $0x3db8] sm:$0xff]
        %v2273 = vld [vmem:[%s1 + $0x3dc0] sm:$0xff]
        %v2274 = vld [vmem:[%s1 + $0x3dc8] sm:$0xff]
        %v2275 = vld [vmem:[%s1 + $0x3dd0] sm:$0xff]
        %v2276 = vld [vmem:[%s1 + $0x3dd8] sm:$0xff]
        %v2277 = vld [vmem:[%s1 + $0x3de0] sm:$0xff]
        %v2278 = vld [vmem:[%s1 + $0x3de8] sm:$0xff]
        %v2279 = vld [vmem:[%s1 + $0x3df0] sm:$0xff]
        %v2280 = vld [vmem:[%s1 + $0x3df8] sm:$0xff]
        %v2281 = vld [vmem:[%s1 + $0x3e00] sm:$0xff]
        %v2282 = vld [vmem:[%s1 + $0x3e08] sm:$0xff]
        %v2283 = vld [vmem:[%s1 + $0x3e10] sm:$0xff]
        %v2284 = vld [vmem:[%s1 + $0x3e18] sm:$0xff]
        %v2285 = vld [vmem:[%s1 + $0x3e20] sm:$0xff]
        %v2286 = vld [vmem:[%s1 + $0x3e28] sm:$0xff]
        %v2287 = vld [vmem:[%s1 + $0x3e30] sm:$0xff]
        %v2288 = vld [vmem:[%s1 + $0x3e38] sm:$0xff]
        %v2289 = vld [vmem:[%s1 + $0x3e40] sm:$0xff]
        %v2290 = vld [vmem:[%s1 + $0x3e48] sm:$0xff]
        %v2291 = vld [vmem:[%s1 + $0x3e50] sm:$0xff]
        %v2292 = vld [vmem:[%s1 + $0x3e58] sm:$0xff]
        %v2293 = vld [vmem:[%s1 + $0x3e60] sm:$0xff]
        %v2294 = vld [vmem:[%s1 + $0x3e68] sm:$0xff]
        %v2295 = vld [vmem:[%s1 + $0x3e70] sm:$0xff]
        %v2296 = vld [vmem:[%s1 + $0x3e78] sm:$0xff]
        %v2297 = vld [vmem:[%s1 + $0x3e80] sm:$0xff]
        %v2298 = vld [vmem:[%s1 + $0x3e88] sm:$0xff]
        %v2299 = vld [vmem:[%s1 + $0x3e90] sm:$0xff]
        %v2300 = vld [vmem:[%s1 + $0x3e98] sm:$0xff]
        %v2301 = vld [vmem:[%s1 + $0x3ea0] sm:$0xff]
        %v2302 = vld [vmem:[%s1 + $0x3ea8] sm:$0xff]
        %v2303 = vld [vmem:[%s1 + $0x3eb0] sm:$0xff]
        %v2304 = vld [vmem:[%s1 + $0x3eb8] sm:$0xff]
        %v2305 = vld [vmem:[%s1 + $0x3ec0] sm:$0xff]
        %v2306 = vld [vmem:[%s1 + $0x3ec8] sm:$0xff]
        %v2307 = vld [vmem:[%s1 + $0x3ed0] sm:$0xff]
        %v2308 = vld [vmem:[%s1 + $0x3ed8] sm:$0xff]
        %v2309 = vld [vmem:[%s1 + $0x3ee0] sm:$0xff]
        %v2310 = vld [vmem:[%s1 + $0x3ee8] sm:$0xff]
        %v2311 = vld [vmem:[%s1 + $0x3ef0] sm:$0xff]
        %v2312 = vld [vmem:[%s1 + $0x3ef8] sm:$0xff]
        %v2313 = vld [vmem:[%s1 + $0x3f00] sm:$0xff]
        %v2314 = vld [vmem:[%s1 + $0x3f08] sm:$0xff]
        %v2315 = vld [vmem:[%s1 + $0x3f10] sm:$0xff]
        %v2316 = vld [vmem:[%s1 + $0x3f18] sm:$0xff]
        %v2317 = vld [vmem:[%s1 + $0x3f20] sm:$0xff]
        %v2318 = vld [vmem:[%s1 + $0x3f28] sm:$0xff]
        %v2319 = vld [vmem:[%s1 + $0x3f30] sm:$0xff]
        %v2320 = vld [vmem:[%s1 + $0x3f38] sm:$0xff]
        %v2321 = vld [vmem:[%s1 + $0x3f40] sm:$0xff]
        %v2322 = vld [vmem:[%s1 + $0x3f48] sm:$0xff]
        %v2323 = vld [vmem:[%s1 + $0x3f50] sm:$0xff]
        %v2324 = vld [vmem:[%s1 + $0x3f58] sm:$0xff]
        %v2325 = vld [vmem:[%s1 + $0x3f60] sm:$0xff]
        %v2326 = vld [vmem:[%s1 + $0x3f68] sm:$0xff]
        %v2327 = vld [vmem:[%s1 + $0x3f70] sm:$0xff]
        %v2328 = vld [vmem:[%s1 + $0x3f78] sm:$0xff]
        %v2329 = vld [vmem:[%s1 + $0x3f80] sm:$0xff]
        %v2330 = vld [vmem:[%s1 + $0x3f88] sm:$0xff]
        %v2331 = vld [vmem:[%s1 + $0x3f90] sm:$0xff]
        %v2332 = vld [vmem:[%s1 + $0x3f98] sm:$0xff]
        %v2333 = vld [vmem:[%s1 + $0x3fa0] sm:$0xff]
        %v2334 = vld [vmem:[%s1 + $0x3fa8] sm:$0xff]
        %v2335 = vld [vmem:[%s1 + $0x3fb0] sm:$0xff]
        %v2336 = vld [vmem:[%s1 + $0x3fb8] sm:$0xff]
        %v2337 = vld [vmem:[%s1 + $0x3fc0] sm:$0xff]
        %v2338 = vld [vmem:[%s1 + $0x3fc8] sm:$0xff]
        %v2339 = vld [vmem:[%s1 + $0x3fd0] sm:$0xff]
        %v2340 = vld [vmem:[%s1 + $0x3fd8] sm:$0xff]
        %v2341 = vld [vmem:[%s1 + $0x3fe0] sm:$0xff]
        %v2342 = vld [vmem:[%s1 + $0x3fe8] sm:$0xff]
        %v2343 = vld [vmem:[%s1 + $0x3ff0] sm:$0xff]
        %v2344 = vld [vmem:[%s1 + $0x3ff8] sm:$0xff]
        %2345 = vmatprep.subr.mxu0 0.0
        %2346 = vmatpush1.msra.mxu0 %v297
        %2347 = vmatprep.subr.mxu0 0.0
        %2348 = vmatpush1.msra.mxu0 %v298
        %2349 = vmatprep.subr.mxu0 0.0
        %2350 = vmatpush1.msra.mxu0 %v299
        %2351 = vmatprep.subr.mxu0 0.0
        %2352 = vmatpush1.msra.mxu0 %v300
        %2353 = vmatprep.subr.mxu0 0.0
        %2354 = vmatpush1.msra.mxu0 %v301
        %2355 = vmatprep.subr.mxu0 0.0
        %2356 = vmatpush1.msra.mxu0 %v302
        %2357 = vmatprep.subr.mxu0 0.0
        %2358 = vmatpush1.msra.mxu0 %v303
        %2359 = vmatprep.subr.mxu0 0.0
        %2360 = vmatpush1.msra.mxu0 %v304
        %2361 = vmatprep.subr.mxu0 0.0
        %2362 = vmatpush1.msra.mxu0 %v305
        %2363 = vmatprep.subr.mxu0 0.0
        %2364 = vmatpush1.msra.mxu0 %v306
        %2365 = vmatprep.subr.mxu0 0.0
        %2366 = vmatpush1.msra.mxu0 %v307
        %2367 = vmatprep.subr.mxu0 0.0
        %2368 = vmatpush1.msra.mxu0 %v308
        %2369 = vmatprep.subr.mxu0 0.0
        %2370 = vmatpush1.msra.mxu0 %v309
        %2371 = vmatprep.subr.mxu0 0.0
        %2372 = vmatpush1.msra.mxu0 %v310
        %2373 = vmatprep.subr.mxu0 0.0
        %2374 = vmatpush1.msra.mxu0 %v311
        %2375 = vmatprep.subr.mxu0 0.0
        %2376 = vmatpush1.msra.mxu0 %v312
        %2377 = vmatprep.subr.mxu0 0.0
        %2378 = vmatpush1.msra.mxu0 %v313
        %2379 = vmatprep.subr.mxu0 0.0
        %2380 = vmatpush1.msra.mxu0 %v314
        %2381 = vmatprep.subr.mxu0 0.0
        %2382 = vmatpush1.msra.mxu0 %v315
        %2383 = vmatprep.subr.mxu0 0.0
        %2384 = vmatpush1.msra.mxu0 %v316
        %2385 = vmatprep.subr.mxu0 0.0
        %2386 = vmatpush1.msra.mxu0 %v317
        %2387 = vmatprep.subr.mxu0 0.0
        %2388 = vmatpush1.msra.mxu0 %v318
        %2389 = vmatprep.subr.mxu0 0.0
        %2390 = vmatpush1.msra.mxu0 %v319
        %2391 = vmatprep.subr.mxu0 0.0
        %2392 = vmatpush1.msra.mxu0 %v320
        %2393 = vmatprep.subr.mxu0 0.0
        %2394 = vmatpush1.msra.mxu0 %v321
        %2395 = vmatprep.subr.mxu0 0.0
        %2396 = vmatpush1.msra.mxu0 %v322
        %2397 = vmatprep.subr.mxu0 0.0
        %2398 = vmatpush1.msra.mxu0 %v323
        %2399 = vmatprep.subr.mxu0 0.0
        %2400 = vmatpush1.msra.mxu0 %v324
        %2401 = vmatprep.subr.mxu0 0.0
        %2402 = vmatpush1.msra.mxu0 %v325
        %2403 = vmatprep.subr.mxu0 0.0
        %2404 = vmatpush1.msra.mxu0 %v326
        %2405 = vmatprep.subr.mxu0 0.0
        %2406 = vmatpush1.msra.mxu0 %v327
        %2407 = vmatprep.subr.mxu0 0.0
        %2408 = vmatpush1.msra.mxu0 %v328
        %2409 = vmatprep.mubr.f32.mxu0 %v170
        %2410 = vmatmul.mubr.f32.gmra.mrb[0].mxu0 %v169
        %v2411 = vpop.f32.mrb[0].mxu0
        %v2412 = vadd.f32 0.0, %v2411
        %v2413 = vpop.f32.mrb[0].mxu0
        %2414 = vdwg.mxu0
        %2415 = vmatprep.subr.mxu0 0.0
        %2416 = vmatpush1.msra.mxu0 %v329
        %2417 = vmatprep.subr.mxu0 0.0
        %2418 = vmatpush1.msra.mxu0 %v330
        %2419 = vmatprep.subr.mxu0 0.0
        %2420 = vmatpush1.msra.mxu0 %v331
        %2421 = vmatprep.subr.mxu0 0.0
        %2422 = vmatpush1.msra.mxu0 %v332
        %2423 = vmatprep.subr.mxu0 0.0
        %2424 = vmatpush1.msra.mxu0 %v333
        %2425 = vmatprep.subr.mxu0 0.0
        %2426 = vmatpush1.msra.mxu0 %v334
        %2427 = vmatprep.subr.mxu0 0.0
        %2428 = vmatpush1.msra.mxu0 %v335
        %2429 = vmatprep.subr.mxu0 0.0
        %2430 = vmatpush1.msra.mxu0 %v336
        %2431 = vmatprep.subr.mxu0 0.0
        %2432 = vmatpush1.msra.mxu0 %v337
        %2433 = vmatprep.subr.mxu0 0.0
        %2434 = vmatpush1.msra.mxu0 %v338
        %2435 = vmatprep.subr.mxu0 0.0
        %2436 = vmatpush1.msra.mxu0 %v339
        %2437 = vmatprep.subr.mxu0 0.0
        %2438 = vmatpush1.msra.mxu0 %v340
        %2439 = vmatprep.subr.mxu0 0.0
        %2440 = vmatpush1.msra.mxu0 %v341
        %2441 = vmatprep.subr.mxu0 0.0
        %2442 = vmatpush1.msra.mxu0 %v342
        %2443 = vmatprep.subr.mxu0 0.0
        %2444 = vmatpush1.msra.mxu0 %v343
        %2445 = vmatprep.subr.mxu0 0.0
        %2446 = vmatpush1.msra.mxu0 %v344
        %2447 = vmatprep.subr.mxu0 0.0
        %2448 = vmatpush1.msra.mxu0 %v345
        %2449 = vmatprep.subr.mxu0 0.0
        %2450 = vmatpush1.msra.mxu0 %v346
        %2451 = vmatprep.subr.mxu0 0.0
        %2452 = vmatpush1.msra.mxu0 %v347
        %2453 = vmatprep.subr.mxu0 0.0
        %2454 = vmatpush1.msra.mxu0 %v348
        %2455 = vmatprep.subr.mxu0 0.0
        %2456 = vmatpush1.msra.mxu0 %v349
        %2457 = vmatprep.subr.mxu0 0.0
        %2458 = vmatpush1.msra.mxu0 %v350
        %2459 = vmatprep.subr.mxu0 0.0
        %2460 = vmatpush1.msra.mxu0 %v351
        %2461 = vmatprep.subr.mxu0 0.0
        %2462 = vmatpush1.msra.mxu0 %v352
        %2463 = vmatprep.subr.mxu0 0.0
        %2464 = vmatpush1.msra.mxu0 %v353
        %2465 = vmatprep.subr.mxu0 0.0
        %2466 = vmatpush1.msra.mxu0 %v354
        %2467 = vmatprep.subr.mxu0 0.0
        %2468 = vmatpush1.msra.mxu0 %v355
        %2469 = vmatprep.subr.mxu0 0.0
        %2470 = vmatpush1.msra.mxu0 %v356
        %2471 = vmatprep.subr.mxu0 0.0
        %2472 = vmatpush1.msra.mxu0 %v357
        %2473 = vmatprep.subr.mxu0 0.0
        %2474 = vmatpush1.msra.mxu0 %v358
        %2475 = vmatprep.subr.mxu0 0.0
        %2476 = vmatpush1.msra.mxu0 %v359
        %2477 = vmatprep.subr.mxu0 0.0
        %2478 = vmatpush1.msra.mxu0 %v360
        %2479 = vmatprep.mubr.f32.mxu0 %v172
        %2480 = vmatmul.mubr.f32.gmra.mrb[0].mxu0 %v171
        %v2481 = vpop.f32.mrb[0].mxu0
        %v2482 = vadd.f32 %v2412, %v2481
        %v2483 = vpop.f32.mrb[0].mxu0
        %2484 = vdwg.mxu0
        %2485 = vmatprep.subr.mxu0 0.0
        %2486 = vmatpush1.msra.mxu0 %v361
        %2487 = vmatprep.subr.mxu0 0.0
        %2488 = vmatpush1.msra.mxu0 %v362
        %2489 = vmatprep.subr.mxu0 0.0
        %2490 = vmatpush1.msra.mxu0 %v363
        %2491 = vmatprep.subr.mxu0 0.0
        %2492 = vmatpush1.msra.mxu0 %v364
        %2493 = vmatprep.subr.mxu0 0.0
        %2494 = vmatpush1.msra.mxu0 %v365
        %2495 = vmatprep.subr.mxu0 0.0
        %2496 = vmatpush1.msra.mxu0 %v366
        %2497 = vmatprep.subr.mxu0 0.0
        %2498 = vmatpush1.msra.mxu0 %v367
        %2499 = vmatprep.subr.mxu0 0.0
        %2500 = vmatpush1.msra.mxu0 %v368
        %2501 = vmatprep.subr.mxu0 0.0
        %2502 = vmatpush1.msra.mxu0 %v369
        %2503 = vmatprep.subr.mxu0 0.0
        %2504 = vmatpush1.msra.mxu0 %v370
        %2505 = vmatprep.subr.mxu0 0.0
        %2506 = vmatpush1.msra.mxu0 %v371
        %2507 = vmatprep.subr.mxu0 0.0
        %2508 = vmatpush1.msra.mxu0 %v372
        %2509 = vmatprep.subr.mxu0 0.0
        %2510 = vmatpush1.msra.mxu0 %v373
        %2511 = vmatprep.subr.mxu0 0.0
        %2512 = vmatpush1.msra.mxu0 %v374
        %2513 = vmatprep.subr.mxu0 0.0
        %2514 = vmatpush1.msra.mxu0 %v375
        %2515 = vmatprep.subr.mxu0 0.0
        %2516 = vmatpush1.msra.mxu0 %v376
        %2517 = vmatprep.subr.mxu0 0.0
        %2518 = vmatpush1.msra.mxu0 %v377
        %2519 = vmatprep.subr.mxu0 0.0
        %2520 = vmatpush1.msra.mxu0 %v378
        %2521 = vmatprep.subr.mxu0 0.0
        %2522 = vmatpush1.msra.mxu0 %v379
        %2523 = vmatprep.subr.mxu0 0.0
        %2524 = vmatpush1.msra.mxu0 %v380
        %2525 = vmatprep.subr.mxu0 0.0
        %2526 = vmatpush1.msra.mxu0 %v381
        %2527 = vmatprep.subr.mxu0 0.0
        %2528 = vmatpush1.msra.mxu0 %v382
        %2529 = vmatprep.subr.mxu0 0.0
        %2530 = vmatpush1.msra.mxu0 %v383
        %2531 = vmatprep.subr.mxu0 0.0
        %2532 = vmatpush1.msra.mxu0 %v384
        %2533 = vmatprep.subr.mxu0 0.0
        %2534 = vmatpush1.msra.mxu0 %v385
        %2535 = vmatprep.subr.mxu0 0.0
        %2536 = vmatpush1.msra.mxu0 %v386
        %2537 = vmatprep.subr.mxu0 0.0
        %2538 = vmatpush1.msra.mxu0 %v387
        %2539 = vmatprep.subr.mxu0 0.0
        %2540 = vmatpush1.msra.mxu0 %v388
        %2541 = vmatprep.subr.mxu0 0.0
        %2542 = vmatpush1.msra.mxu0 %v389
        %2543 = vmatprep.subr.mxu0 0.0
        %2544 = vmatpush1.msra.mxu0 %v390
        %2545 = vmatprep.subr.mxu0 0.0
        %2546 = vmatpush1.msra.mxu0 %v391
        %2547 = vmatprep.subr.mxu0 0.0
        %2548 = vmatpush1.msra.mxu0 %v392
        %2549 = vmatprep.mubr.f32.mxu0 %v174
        %2550 = vmatmul.mubr.f32.gmra.mrb[0].mxu0 %v173
        %v2551 = vpop.f32.mrb[0].mxu0
        %v2552 = vadd.f32 %v2482, %v2551
        %v2553 = vpop.f32.mrb[0].mxu0
        %2554 = vdwg.mxu0
        %2555 = vmatprep.subr.mxu0 0.0
        %2556 = vmatpush1.msra.mxu0 %v393
        %2557 = vmatprep.subr.mxu0 0.0
        %2558 = vmatpush1.msra.mxu0 %v394
        %2559 = vmatprep.subr.mxu0 0.0
        %2560 = vmatpush1.msra.mxu0 %v395
        %2561 = vmatprep.subr.mxu0 0.0
        %2562 = vmatpush1.msra.mxu0 %v396
        %2563 = vmatprep.subr.mxu0 0.0
        %2564 = vmatpush1.msra.mxu0 %v397
        %2565 = vmatprep.subr.mxu0 0.0
        %2566 = vmatpush1.msra.mxu0 %v398
        %2567 = vmatprep.subr.mxu0 0.0
        %2568 = vmatpush1.msra.mxu0 %v399
        %2569 = vmatprep.subr.mxu0 0.0
        %2570 = vmatpush1.msra.mxu0 %v400
        %2571 = vmatprep.subr.mxu0 0.0
        %2572 = vmatpush1.msra.mxu0 %v401
        %2573 = vmatprep.subr.mxu0 0.0
        %2574 = vmatpush1.msra.mxu0 %v402
        %2575 = vmatprep.subr.mxu0 0.0
        %2576 = vmatpush1.msra.mxu0 %v403
        %2577 = vmatprep.subr.mxu0 0.0
        %2578 = vmatpush1.msra.mxu0 %v404
        %2579 = vmatprep.subr.mxu0 0.0
        %2580 = vmatpush1.msra.mxu0 %v405
        %2581 = vmatprep.subr.mxu0 0.0
        %2582 = vmatpush1.msra.mxu0 %v406
        %2583 = vmatprep.subr.mxu0 0.0
        %2584 = vmatpush1.msra.mxu0 %v407
        %2585 = vmatprep.subr.mxu0 0.0
        %2586 = vmatpush1.msra.mxu0 %v408
        %2587 = vmatprep.subr.mxu0 0.0
        %2588 = vmatpush1.msra.mxu0 %v409
        %2589 = vmatprep.subr.mxu0 0.0
        %2590 = vmatpush1.msra.mxu0 %v410
        %2591 = vmatprep.subr.mxu0 0.0
        %2592 = vmatpush1.msra.mxu0 %v411
        %2593 = vmatprep.subr.mxu0 0.0
        %2594 = vmatpush1.msra.mxu0 %v412
        %2595 = vmatprep.subr.mxu0 0.0
        %2596 = vmatpush1.msra.mxu0 %v413
        %2597 = vmatprep.subr.mxu0 0.0
        %2598 = vmatpush1.msra.mxu0 %v414
        %2599 = vmatprep.subr.mxu0 0.0
        %2600 = vmatpush1.msra.mxu0 %v415
        %2601 = vmatprep.subr.mxu0 0.0
        %2602 = vmatpush1.msra.mxu0 %v416
        %2603 = vmatprep.subr.mxu0 0.0
        %2604 = vmatpush1.msra.mxu0 %v417
        %2605 = vmatprep.subr.mxu0 0.0
        %2606 = vmatpush1.msra.mxu0 %v418
        %2607 = vmatprep.subr.mxu0 0.0
        %2608 = vmatpush1.msra.mxu0 %v419
        %2609 = vmatprep.subr.mxu0 0.0
        %2610 = vmatpush1.msra.mxu0 %v420
        %2611 = vmatprep.subr.mxu0 0.0
        %2612 = vmatpush1.msra.mxu0 %v421
        %2613 = vmatprep.subr.mxu0 0.0
        %2614 = vmatpush1.msra.mxu0 %v422
        %2615 = vmatprep.subr.mxu0 0.0
        %2616 = vmatpush1.msra.mxu0 %v423
        %2617 = vmatprep.subr.mxu0 0.0
        %2618 = vmatpush1.msra.mxu0 %v424
        %2619 = vmatprep.mubr.f32.mxu0 %v176
        %2620 = vmatmul.mubr.f32.gmra.mrb[0].mxu0 %v175
        %v2621 = vpop.f32.mrb[0].mxu0
        %v2622 = vadd.f32 %v2552, %v2621
        %v2623 = vpop.f32.mrb[0].mxu0
        %2624 = vdwg.mxu0
        %2625 = vmatprep.subr.mxu0 0.0
        %2626 = vmatpush1.msra.mxu0 %v425
        %2627 = vmatprep.subr.mxu0 0.0
        %2628 = vmatpush1.msra.mxu0 %v426
        %2629 = vmatprep.subr.mxu0 0.0
        %2630 = vmatpush1.msra.mxu0 %v427
        %2631 = vmatprep.subr.mxu0 0.0
        %2632 = vmatpush1.msra.mxu0 %v428
        %2633 = vmatprep.subr.mxu0 0.0
        %2634 = vmatpush1.msra.mxu0 %v429
        %2635 = vmatprep.subr.mxu0 0.0
        %2636 = vmatpush1.msra.mxu0 %v430
        %2637 = vmatprep.subr.mxu0 0.0
        %2638 = vmatpush1.msra.mxu0 %v431
        %2639 = vmatprep.subr.mxu0 0.0
        %2640 = vmatpush1.msra.mxu0 %v432
        %2641 = vmatprep.subr.mxu0 0.0
        %2642 = vmatpush1.msra.mxu0 %v433
        %2643 = vmatprep.subr.mxu0 0.0
        %2644 = vmatpush1.msra.mxu0 %v434
        %2645 = vmatprep.subr.mxu0 0.0
        %2646 = vmatpush1.msra.mxu0 %v435
        %2647 = vmatprep.subr.mxu0 0.0
        %2648 = vmatpush1.msra.mxu0 %v436
        %2649 = vmatprep.subr.mxu0 0.0
        %2650 = vmatpush1.msra.mxu0 %v437
        %2651 = vmatprep.subr.mxu0 0.0
        %2652 = vmatpush1.msra.mxu0 %v438
        %2653 = vmatprep.subr.mxu0 0.0
        %2654 = vmatpush1.msra.mxu0 %v439
        %2655 = vmatprep.subr.mxu0 0.0
        %2656 = vmatpush1.msra.mxu0 %v440
        %2657 = vmatprep.subr.mxu0 0.0
        %2658 = vmatpush1.msra.mxu0 %v441
        %2659 = vmatprep.subr.mxu0 0.0
        %2660 = vmatpush1.msra.mxu0 %v442
        %2661 = vmatprep.subr.mxu0 0.0
        %2662 = vmatpush1.msra.mxu0 %v443
        %2663 = vmatprep.subr.mxu0 0.0
        %2664 = vmatpush1.msra.mxu0 %v444
        %2665 = vmatprep.subr.mxu0 0.0
        %2666 = vmatpush1.msra.mxu0 %v445
        %2667 = vmatprep.subr.mxu0 0.0
        %2668 = vmatpush1.msra.mxu0 %v446
        %2669 = vmatprep.subr.mxu0 0.0
        %2670 = vmatpush1.msra.mxu0 %v447
        %2671 = vmatprep.subr.mxu0 0.0
        %2672 = vmatpush1.msra.mxu0 %v448
        %2673 = vmatprep.subr.mxu0 0.0
        %2674 = vmatpush1.msra.mxu0 %v449
        %2675 = vmatprep.subr.mxu0 0.0
        %2676 = vmatpush1.msra.mxu0 %v450
        %2677 = vmatprep.subr.mxu0 0.0
        %2678 = vmatpush1.msra.mxu0 %v451
        %2679 = vmatprep.subr.mxu0 0.0
        %2680 = vmatpush1.msra.mxu0 %v452
        %2681 = vmatprep.subr.mxu0 0.0
        %2682 = vmatpush1.msra.mxu0 %v453
        %2683 = vmatprep.subr.mxu0 0.0
        %2684 = vmatpush1.msra.mxu0 %v454
        %2685 = vmatprep.subr.mxu0 0.0
        %2686 = vmatpush1.msra.mxu0 %v455
        %2687 = vmatprep.subr.mxu0 0.0
        %2688 = vmatpush1.msra.mxu0 %v456
        %2689 = vmatprep.mubr.f32.mxu0 %v178
        %2690 = vmatmul.mubr.f32.gmra.mrb[0].mxu0 %v177
        %v2691 = vpop.f32.mrb[0].mxu0
        %v2692 = vadd.f32 %v2622, %v2691
        %v2693 = vpop.f32.mrb[0].mxu0
        %2694 = vdwg.mxu0
        %2695 = vmatprep.subr.mxu0 0.0
        %2696 = vmatpush1.msra.mxu0 %v457
        %2697 = vmatprep.subr.mxu0 0.0
        %2698 = vmatpush1.msra.mxu0 %v458
        %2699 = vmatprep.subr.mxu0 0.0
        %2700 = vmatpush1.msra.mxu0 %v459
        %2701 = vmatprep.subr.mxu0 0.0
        %2702 = vmatpush1.msra.mxu0 %v460
        %2703 = vmatprep.subr.mxu0 0.0
        %2704 = vmatpush1.msra.mxu0 %v461
        %2705 = vmatprep.subr.mxu0 0.0
        %2706 = vmatpush1.msra.mxu0 %v462
        %2707 = vmatprep.subr.mxu0 0.0
        %2708 = vmatpush1.msra.mxu0 %v463
        %2709 = vmatprep.subr.mxu0 0.0
        %2710 = vmatpush1.msra.mxu0 %v464
        %2711 = vmatprep.subr.mxu0 0.0
        %2712 = vmatpush1.msra.mxu0 %v465
        %2713 = vmatprep.subr.mxu0 0.0
        %2714 = vmatpush1.msra.mxu0 %v466
        %2715 = vmatprep.subr.mxu0 0.0
        %2716 = vmatpush1.msra.mxu0 %v467
        %2717 = vmatprep.subr.mxu0 0.0
        %2718 = vmatpush1.msra.mxu0 %v468
        %2719 = vmatprep.subr.mxu0 0.0
        %2720 = vmatpush1.msra.mxu0 %v469
        %2721 = vmatprep.subr.mxu0 0.0
        %2722 = vmatpush1.msra.mxu0 %v470
        %2723 = vmatprep.subr.mxu0 0.0
        %2724 = vmatpush1.msra.mxu0 %v471
        %2725 = vmatprep.subr.mxu0 0.0
        %2726 = vmatpush1.msra.mxu0 %v472
        %2727 = vmatprep.subr.mxu0 0.0
        %2728 = vmatpush1.msra.mxu0 %v473
        %2729 = vmatprep.subr.mxu0 0.0
        %2730 = vmatpush1.msra.mxu0 %v474
        %2731 = vmatprep.subr.mxu0 0.0
        %2732 = vmatpush1.msra.mxu0 %v475
        %2733 = vmatprep.subr.mxu0 0.0
        %2734 = vmatpush1.msra.mxu0 %v476
        %2735 = vmatprep.subr.mxu0 0.0
        %2736 = vmatpush1.msra.mxu0 %v477
        %2737 = vmatprep.subr.mxu0 0.0
        %2738 = vmatpush1.msra.mxu0 %v478
        %2739 = vmatprep.subr.mxu0 0.0
        %2740 = vmatpush1.msra.mxu0 %v479
        %2741 = vmatprep.subr.mxu0 0.0
        %2742 = vmatpush1.msra.mxu0 %v480
        %2743 = vmatprep.subr.mxu0 0.0
        %2744 = vmatpush1.msra.mxu0 %v481
        %2745 = vmatprep.subr.mxu0 0.0
        %2746 = vmatpush1.msra.mxu0 %v482
        %2747 = vmatprep.subr.mxu0 0.0
        %2748 = vmatpush1.msra.mxu0 %v483
        %2749 = vmatprep.subr.mxu0 0.0
        %2750 = vmatpush1.msra.mxu0 %v484
        %2751 = vmatprep.subr.mxu0 0.0
        %2752 = vmatpush1.msra.mxu0 %v485
        %2753 = vmatprep.subr.mxu0 0.0
        %2754 = vmatpush1.msra.mxu0 %v486
        %2755 = vmatprep.subr.mxu0 0.0
        %2756 = vmatpush1.msra.mxu0 %v487
        %2757 = vmatprep.subr.mxu0 0.0
        %2758 = vmatpush1.msra.mxu0 %v488
        %2759 = vmatprep.mubr.f32.mxu0 %v180
        %2760 = vmatmul.mubr.f32.gmra.mrb[0].mxu0 %v179
        %v2761 = vpop.f32.mrb[0].mxu0
        %v2762 = vadd.f32 %v2692, %v2761
        %v2763 = vpop.f32.mrb[0].mxu0
        %2764 = vdwg.mxu0
        %2765 = vmatprep.subr.mxu0 0.0
        %2766 = vmatpush1.msra.mxu0 %v489
        %2767 = vmatprep.subr.mxu0 0.0
        %2768 = vmatpush1.msra.mxu0 %v490
        %2769 = vmatprep.subr.mxu0 0.0
        %2770 = vmatpush1.msra.mxu0 %v491
        %2771 = vmatprep.subr.mxu0 0.0
        %2772 = vmatpush1.msra.mxu0 %v492
        %2773 = vmatprep.subr.mxu0 0.0
        %2774 = vmatpush1.msra.mxu0 %v493
        %2775 = vmatprep.subr.mxu0 0.0
        %2776 = vmatpush1.msra.mxu0 %v494
        %2777 = vmatprep.subr.mxu0 0.0
        %2778 = vmatpush1.msra.mxu0 %v495
        %2779 = vmatprep.subr.mxu0 0.0
        %2780 = vmatpush1.msra.mxu0 %v496
        %2781 = vmatprep.subr.mxu0 0.0
        %2782 = vmatpush1.msra.mxu0 %v497
        %2783 = vmatprep.subr.mxu0 0.0
        %2784 = vmatpush1.msra.mxu0 %v498
        %2785 = vmatprep.subr.mxu0 0.0
        %2786 = vmatpush1.msra.mxu0 %v499
        %2787 = vmatprep.subr.mxu0 0.0
        %2788 = vmatpush1.msra.mxu0 %v500
        %2789 = vmatprep.subr.mxu0 0.0
        %2790 = vmatpush1.msra.mxu0 %v501
        %2791 = vmatprep.subr.mxu0 0.0
        %2792 = vmatpush1.msra.mxu0 %v502
        %2793 = vmatprep.subr.mxu0 0.0
        %2794 = vmatpush1.msra.mxu0 %v503
        %2795 = vmatprep.subr.mxu0 0.0
        %2796 = vmatpush1.msra.mxu0 %v504
        %2797 = vmatprep.subr.mxu0 0.0
        %2798 = vmatpush1.msra.mxu0 %v505
        %2799 = vmatprep.subr.mxu0 0.0
        %2800 = vmatpush1.msra.mxu0 %v506
        %2801 = vmatprep.subr.mxu0 0.0
        %2802 = vmatpush1.msra.mxu0 %v507
        %2803 = vmatprep.subr.mxu0 0.0
        %2804 = vmatpush1.msra.mxu0 %v508
        %2805 = vmatprep.subr.mxu0 0.0
        %2806 = vmatpush1.msra.mxu0 %v509
        %2807 = vmatprep.subr.mxu0 0.0
        %2808 = vmatpush1.msra.mxu0 %v510
        %2809 = vmatprep.subr.mxu0 0.0
        %2810 = vmatpush1.msra.mxu0 %v511
        %2811 = vmatprep.subr.mxu0 0.0
        %2812 = vmatpush1.msra.mxu0 %v512
        %2813 = vmatprep.subr.mxu0 0.0
        %2814 = vmatpush1.msra.mxu0 %v513
        %2815 = vmatprep.subr.mxu0 0.0
        %2816 = vmatpush1.msra.mxu0 %v514
        %2817 = vmatprep.subr.mxu0 0.0
        %2818 = vmatpush1.msra.mxu0 %v515
        %2819 = vmatprep.subr.mxu0 0.0
        %2820 = vmatpush1.msra.mxu0 %v516
        %2821 = vmatprep.subr.mxu0 0.0
        %2822 = vmatpush1.msra.mxu0 %v517
        %2823 = vmatprep.subr.mxu0 0.0
        %2824 = vmatpush1.msra.mxu0 %v518
        %2825 = vmatprep.subr.mxu0 0.0
        %2826 = vmatpush1.msra.mxu0 %v519
        %2827 = vmatprep.subr.mxu0 0.0
        %2828 = vmatpush1.msra.mxu0 %v520
        %2829 = vmatprep.mubr.f32.mxu0 %v182
        %2830 = vmatmul.mubr.f32.gmra.mrb[0].mxu0 %v181
        %v2831 = vpop.f32.mrb[0].mxu0
        %v2832 = vadd.f32 %v2762, %v2831
        %v2833 = vpop.f32.mrb[0].mxu0
        %2834 = vdwg.mxu0
        %2835 = vmatprep.subr.mxu0 0.0
        %2836 = vmatpush1.msra.mxu0 %v521
        %2837 = vmatprep.subr.mxu0 0.0
        %2838 = vmatpush1.msra.mxu0 %v522
        %2839 = vmatprep.subr.mxu0 0.0
        %2840 = vmatpush1.msra.mxu0 %v523
        %2841 = vmatprep.subr.mxu0 0.0
        %2842 = vmatpush1.msra.mxu0 %v524
        %2843 = vmatprep.subr.mxu0 0.0
        %2844 = vmatpush1.msra.mxu0 %v525
        %2845 = vmatprep.subr.mxu0 0.0
        %2846 = vmatpush1.msra.mxu0 %v526
        %2847 = vmatprep.subr.mxu0 0.0
        %2848 = vmatpush1.msra.mxu0 %v527
        %2849 = vmatprep.subr.mxu0 0.0
        %2850 = vmatpush1.msra.mxu0 %v528
        %2851 = vmatprep.subr.mxu0 0.0
        %2852 = vmatpush1.msra.mxu0 %v529
        %2853 = vmatprep.subr.mxu0 0.0
        %2854 = vmatpush1.msra.mxu0 %v530
        %2855 = vmatprep.subr.mxu0 0.0
        %2856 = vmatpush1.msra.mxu0 %v531
        %2857 = vmatprep.subr.mxu0 0.0
        %2858 = vmatpush1.msra.mxu0 %v532
        %2859 = vmatprep.subr.mxu0 0.0
        %2860 = vmatpush1.msra.mxu0 %v533
        %2861 = vmatprep.subr.mxu0 0.0
        %2862 = vmatpush1.msra.mxu0 %v534
        %2863 = vmatprep.subr.mxu0 0.0
        %2864 = vmatpush1.msra.mxu0 %v535
        %2865 = vmatprep.subr.mxu0 0.0
        %2866 = vmatpush1.msra.mxu0 %v536
        %2867 = vmatprep.subr.mxu0 0.0
        %2868 = vmatpush1.msra.mxu0 %v537
        %2869 = vmatprep.subr.mxu0 0.0
        %2870 = vmatpush1.msra.mxu0 %v538
        %2871 = vmatprep.subr.mxu0 0.0
        %2872 = vmatpush1.msra.mxu0 %v539
        %2873 = vmatprep.subr.mxu0 0.0
        %2874 = vmatpush1.msra.mxu0 %v540
        %2875 = vmatprep.subr.mxu0 0.0
        %2876 = vmatpush1.msra.mxu0 %v541
        %2877 = vmatprep.subr.mxu0 0.0
        %2878 = vmatpush1.msra.mxu0 %v542
        %2879 = vmatprep.subr.mxu0 0.0
        %2880 = vmatpush1.msra.mxu0 %v543
        %2881 = vmatprep.subr.mxu0 0.0
        %2882 = vmatpush1.msra.mxu0 %v544
        %2883 = vmatprep.subr.mxu0 0.0
        %2884 = vmatpush1.msra.mxu0 %v545
        %2885 = vmatprep.subr.mxu0 0.0
        %2886 = vmatpush1.msra.mxu0 %v546
        %2887 = vmatprep.subr.mxu0 0.0
        %2888 = vmatpush1.msra.mxu0 %v547
        %2889 = vmatprep.subr.mxu0 0.0
        %2890 = vmatpush1.msra.mxu0 %v548
        %2891 = vmatprep.subr.mxu0 0.0
        %2892 = vmatpush1.msra.mxu0 %v549
        %2893 = vmatprep.subr.mxu0 0.0
        %2894 = vmatpush1.msra.mxu0 %v550
        %2895 = vmatprep.subr.mxu0 0.0
        %2896 = vmatpush1.msra.mxu0 %v551
        %2897 = vmatprep.subr.mxu0 0.0
        %2898 = vmatpush1.msra.mxu0 %v552
        %2899 = vmatprep.mubr.f32.mxu0 %v184
        %2900 = vmatmul.mubr.f32.gmra.mrb[0].mxu0 %v183
        %v2901 = vpop.f32.mrb[0].mxu0
        %v2902 = vadd.f32 %v2832, %v2901
        %v2903 = vpop.f32.mrb[0].mxu0
        %2904 = vdwg.mxu0
        %2905 = vmatprep.subr.mxu0 0.0
        %2906 = vmatpush1.msra.mxu0 %v553
        %2907 = vmatprep.subr.mxu0 0.0
        %2908 = vmatpush1.msra.mxu0 %v554
        %2909 = vmatprep.subr.mxu0 0.0
        %2910 = vmatpush1.msra.mxu0 %v555
        %2911 = vmatprep.subr.mxu0 0.0
        %2912 = vmatpush1.msra.mxu0 %v556
        %2913 = vmatprep.subr.mxu0 0.0
        %2914 = vmatpush1.msra.mxu0 %v557
        %2915 = vmatprep.subr.mxu0 0.0
        %2916 = vmatpush1.msra.mxu0 %v558
        %2917 = vmatprep.subr.mxu0 0.0
        %2918 = vmatpush1.msra.mxu0 %v559
        %2919 = vmatprep.subr.mxu0 0.0
        %2920 = vmatpush1.msra.mxu0 %v560
        %2921 = vmatprep.subr.mxu0 0.0
        %2922 = vmatpush1.msra.mxu0 %v561
        %2923 = vmatprep.subr.mxu0 0.0
        %2924 = vmatpush1.msra.mxu0 %v562
        %2925 = vmatprep.subr.mxu0 0.0
        %2926 = vmatpush1.msra.mxu0 %v563
        %2927 = vmatprep.subr.mxu0 0.0
        %2928 = vmatpush1.msra.mxu0 %v564
        %2929 = vmatprep.subr.mxu0 0.0
        %2930 = vmatpush1.msra.mxu0 %v565
        %2931 = vmatprep.subr.mxu0 0.0
        %2932 = vmatpush1.msra.mxu0 %v566
        %2933 = vmatprep.subr.mxu0 0.0
        %2934 = vmatpush1.msra.mxu0 %v567
        %2935 = vmatprep.subr.mxu0 0.0
        %2936 = vmatpush1.msra.mxu0 %v568
        %2937 = vmatprep.subr.mxu0 0.0
        %2938 = vmatpush1.msra.mxu0 %v569
        %2939 = vmatprep.subr.mxu0 0.0
        %2940 = vmatpush1.msra.mxu0 %v570
        %2941 = vmatprep.subr.mxu0 0.0
        %2942 = vmatpush1.msra.mxu0 %v571
        %2943 = vmatprep.subr.mxu0 0.0
        %2944 = vmatpush1.msra.mxu0 %v572
        %2945 = vmatprep.subr.mxu0 0.0
        %2946 = vmatpush1.msra.mxu0 %v573
        %2947 = vmatprep.subr.mxu0 0.0
        %2948 = vmatpush1.msra.mxu0 %v574
        %2949 = vmatprep.subr.mxu0 0.0
        %2950 = vmatpush1.msra.mxu0 %v575
        %2951 = vmatprep.subr.mxu0 0.0
        %2952 = vmatpush1.msra.mxu0 %v576
        %2953 = vmatprep.subr.mxu0 0.0
        %2954 = vmatpush1.msra.mxu0 %v577
        %2955 = vmatprep.subr.mxu0 0.0
        %2956 = vmatpush1.msra.mxu0 %v578
        %2957 = vmatprep.subr.mxu0 0.0
        %2958 = vmatpush1.msra.mxu0 %v579
        %2959 = vmatprep.subr.mxu0 0.0
        %2960 = vmatpush1.msra.mxu0 %v580
        %2961 = vmatprep.subr.mxu0 0.0
        %2962 = vmatpush1.msra.mxu0 %v581
        %2963 = vmatprep.subr.mxu0 0.0
        %2964 = vmatpush1.msra.mxu0 %v582
        %2965 = vmatprep.subr.mxu0 0.0
        %2966 = vmatpush1.msra.mxu0 %v583
        %2967 = vmatprep.subr.mxu0 0.0
        %2968 = vmatpush1.msra.mxu0 %v584
        %2969 = vmatprep.mubr.f32.mxu0 %v186
        %2970 = vmatmul.mubr.f32.gmra.mrb[0].mxu0 %v185
        %v2971 = vpop.f32.mrb[0].mxu0
        %v2972 = vadd.f32 %v2902, %v2971
        %v2973 = vpop.f32.mrb[0].mxu0
        %2974 = vdwg.mxu0
        %2975 = vmatprep.subr.mxu0 0.0
        %2976 = vmatpush1.msra.mxu0 %v585
        %2977 = vmatprep.subr.mxu0 0.0
        %2978 = vmatpush1.msra.mxu0 %v586
        %2979 = vmatprep.subr.mxu0 0.0
        %2980 = vmatpush1.msra.mxu0 %v587
        %2981 = vmatprep.subr.mxu0 0.0
        %2982 = vmatpush1.msra.mxu0 %v588
        %2983 = vmatprep.subr.mxu0 0.0
        %2984 = vmatpush1.msra.mxu0 %v589
        %2985 = vmatprep.subr.mxu0 0.0
        %2986 = vmatpush1.msra.mxu0 %v590
        %2987 = vmatprep.subr.mxu0 0.0
        %2988 = vmatpush1.msra.mxu0 %v591
        %2989 = vmatprep.subr.mxu0 0.0
        %2990 = vmatpush1.msra.mxu0 %v592
        %2991 = vmatprep.subr.mxu0 0.0
        %2992 = vmatpush1.msra.mxu0 %v593
        %2993 = vmatprep.subr.mxu0 0.0
        %2994 = vmatpush1.msra.mxu0 %v594
        %2995 = vmatprep.subr.mxu0 0.0
        %2996 = vmatpush1.msra.mxu0 %v595
        %2997 = vmatprep.subr.mxu0 0.0
        %2998 = vmatpush1.msra.mxu0 %v596
        %2999 = vmatprep.subr.mxu0 0.0
        %3000 = vmatpush1.msra.mxu0 %v597
        %3001 = vmatprep.subr.mxu0 0.0
        %3002 = vmatpush1.msra.mxu0 %v598
        %3003 = vmatprep.subr.mxu0 0.0
        %3004 = vmatpush1.msra.mxu0 %v599
        %3005 = vmatprep.subr.mxu0 0.0
        %3006 = vmatpush1.msra.mxu0 %v600
        %3007 = vmatprep.subr.mxu0 0.0
        %3008 = vmatpush1.msra.mxu0 %v601
        %3009 = vmatprep.subr.mxu0 0.0
        %3010 = vmatpush1.msra.mxu0 %v602
        %3011 = vmatprep.subr.mxu0 0.0
        %3012 = vmatpush1.msra.mxu0 %v603
        %3013 = vmatprep.subr.mxu0 0.0
        %3014 = vmatpush1.msra.mxu0 %v604
        %3015 = vmatprep.subr.mxu0 0.0
        %3016 = vmatpush1.msra.mxu0 %v605
        %3017 = vmatprep.subr.mxu0 0.0
        %3018 = vmatpush1.msra.mxu0 %v606
        %3019 = vmatprep.subr.mxu0 0.0
        %3020 = vmatpush1.msra.mxu0 %v607
        %3021 = vmatprep.subr.mxu0 0.0
        %3022 = vmatpush1.msra.mxu0 %v608
        %3023 = vmatprep.subr.mxu0 0.0
        %3024 = vmatpush1.msra.mxu0 %v609
        %3025 = vmatprep.subr.mxu0 0.0
        %3026 = vmatpush1.msra.mxu0 %v610
        %3027 = vmatprep.subr.mxu0 0.0
        %3028 = vmatpush1.msra.mxu0 %v611
        %3029 = vmatprep.subr.mxu0 0.0
        %3030 = vmatpush1.msra.mxu0 %v612
        %3031 = vmatprep.subr.mxu0 0.0
        %3032 = vmatpush1.msra.mxu0 %v613
        %3033 = vmatprep.subr.mxu0 0.0
        %3034 = vmatpush1.msra.mxu0 %v614
        %3035 = vmatprep.subr.mxu0 0.0
        %3036 = vmatpush1.msra.mxu0 %v615
        %3037 = vmatprep.subr.mxu0 0.0
        %3038 = vmatpush1.msra.mxu0 %v616
        %3039 = vmatprep.mubr.f32.mxu0 %v188
        %3040 = vmatmul.mubr.f32.gmra.mrb[0].mxu0 %v187
        %v3041 = vpop.f32.mrb[0].mxu0
        %v3042 = vadd.f32 %v2972, %v3041
        %v3043 = vpop.f32.mrb[0].mxu0
        %3044 = vdwg.mxu0
        %3045 = vmatprep.subr.mxu0 0.0
        %3046 = vmatpush1.msra.mxu0 %v617
        %3047 = vmatprep.subr.mxu0 0.0
        %3048 = vmatpush1.msra.mxu0 %v618
        %3049 = vmatprep.subr.mxu0 0.0
        %3050 = vmatpush1.msra.mxu0 %v619
        %3051 = vmatprep.subr.mxu0 0.0
        %3052 = vmatpush1.msra.mxu0 %v620
        %3053 = vmatprep.subr.mxu0 0.0
        %3054 = vmatpush1.msra.mxu0 %v621
        %3055 = vmatprep.subr.mxu0 0.0
        %3056 = vmatpush1.msra.mxu0 %v622
        %3057 = vmatprep.subr.mxu0 0.0
        %3058 = vmatpush1.msra.mxu0 %v623
        %3059 = vmatprep.subr.mxu0 0.0
        %3060 = vmatpush1.msra.mxu0 %v624
        %3061 = vmatprep.subr.mxu0 0.0
        %3062 = vmatpush1.msra.mxu0 %v625
        %3063 = vmatprep.subr.mxu0 0.0
        %3064 = vmatpush1.msra.mxu0 %v626
        %3065 = vmatprep.subr.mxu0 0.0
        %3066 = vmatpush1.msra.mxu0 %v627
        %3067 = vmatprep.subr.mxu0 0.0
        %3068 = vmatpush1.msra.mxu0 %v628
        %3069 = vmatprep.subr.mxu0 0.0
        %3070 = vmatpush1.msra.mxu0 %v629
        %3071 = vmatprep.subr.mxu0 0.0
        %3072 = vmatpush1.msra.mxu0 %v630
        %3073 = vmatprep.subr.mxu0 0.0
        %3074 = vmatpush1.msra.mxu0 %v631
        %3075 = vmatprep.subr.mxu0 0.0
        %3076 = vmatpush1.msra.mxu0 %v632
        %3077 = vmatprep.subr.mxu0 0.0
        %3078 = vmatpush1.msra.mxu0 %v633
        %3079 = vmatprep.subr.mxu0 0.0
        %3080 = vmatpush1.msra.mxu0 %v634
        %3081 = vmatprep.subr.mxu0 0.0
        %3082 = vmatpush1.msra.mxu0 %v635
        %3083 = vmatprep.subr.mxu0 0.0
        %3084 = vmatpush1.msra.mxu0 %v636
        %3085 = vmatprep.subr.mxu0 0.0
        %3086 = vmatpush1.msra.mxu0 %v637
        %3087 = vmatprep.subr.mxu0 0.0
        %3088 = vmatpush1.msra.mxu0 %v638
        %3089 = vmatprep.subr.mxu0 0.0
        %3090 = vmatpush1.msra.mxu0 %v639
        %3091 = vmatprep.subr.mxu0 0.0
        %3092 = vmatpush1.msra.mxu0 %v640
        %3093 = vmatprep.subr.mxu0 0.0
        %3094 = vmatpush1.msra.mxu0 %v641
        %3095 = vmatprep.subr.mxu0 0.0
        %3096 = vmatpush1.msra.mxu0 %v642
        %3097 = vmatprep.subr.mxu0 0.0
        %3098 = vmatpush1.msra.mxu0 %v643
        %3099 = vmatprep.subr.mxu0 0.0
        %3100 = vmatpush1.msra.mxu0 %v644
        %3101 = vmatprep.subr.mxu0 0.0
        %3102 = vmatpush1.msra.mxu0 %v645
        %3103 = vmatprep.subr.mxu0 0.0
        %3104 = vmatpush1.msra.mxu0 %v646
        %3105 = vmatprep.subr.mxu0 0.0
        %3106 = vmatpush1.msra.mxu0 %v647
        %3107 = vmatprep.subr.mxu0 0.0
        %3108 = vmatpush1.msra.mxu0 %v648
        %3109 = vmatprep.mubr.f32.mxu0 %v190
        %3110 = vmatmul.mubr.f32.gmra.mrb[0].mxu0 %v189
        %v3111 = vpop.f32.mrb[0].mxu0
        %v3112 = vadd.f32 %v3042, %v3111
        %v3113 = vpop.f32.mrb[0].mxu0
        %3114 = vdwg.mxu0
        %3115 = vmatprep.subr.mxu0 0.0
        %3116 = vmatpush1.msra.mxu0 %v649
        %3117 = vmatprep.subr.mxu0 0.0
        %3118 = vmatpush1.msra.mxu0 %v650
        %3119 = vmatprep.subr.mxu0 0.0
        %3120 = vmatpush1.msra.mxu0 %v651
        %3121 = vmatprep.subr.mxu0 0.0
        %3122 = vmatpush1.msra.mxu0 %v652
        %3123 = vmatprep.subr.mxu0 0.0
        %3124 = vmatpush1.msra.mxu0 %v653
        %3125 = vmatprep.subr.mxu0 0.0
        %3126 = vmatpush1.msra.mxu0 %v654
        %3127 = vmatprep.subr.mxu0 0.0
        %3128 = vmatpush1.msra.mxu0 %v655
        %3129 = vmatprep.subr.mxu0 0.0
        %3130 = vmatpush1.msra.mxu0 %v656
        %3131 = vmatprep.subr.mxu0 0.0
        %3132 = vmatpush1.msra.mxu0 %v657
        %3133 = vmatprep.subr.mxu0 0.0
        %3134 = vmatpush1.msra.mxu0 %v658
        %3135 = vmatprep.subr.mxu0 0.0
        %3136 = vmatpush1.msra.mxu0 %v659
        %3137 = vmatprep.subr.mxu0 0.0
        %3138 = vmatpush1.msra.mxu0 %v660
        %3139 = vmatprep.subr.mxu0 0.0
        %3140 = vmatpush1.msra.mxu0 %v661
        %3141 = vmatprep.subr.mxu0 0.0
        %3142 = vmatpush1.msra.mxu0 %v662
        %3143 = vmatprep.subr.mxu0 0.0
        %3144 = vmatpush1.msra.mxu0 %v663
        %3145 = vmatprep.subr.mxu0 0.0
        %3146 = vmatpush1.msra.mxu0 %v664
        %3147 = vmatprep.subr.mxu0 0.0
        %3148 = vmatpush1.msra.mxu0 %v665
        %3149 = vmatprep.subr.mxu0 0.0
        %3150 = vmatpush1.msra.mxu0 %v666
        %3151 = vmatprep.subr.mxu0 0.0
        %3152 = vmatpush1.msra.mxu0 %v667
        %3153 = vmatprep.subr.mxu0 0.0
        %3154 = vmatpush1.msra.mxu0 %v668
        %3155 = vmatprep.subr.mxu0 0.0
        %3156 = vmatpush1.msra.mxu0 %v669
        %3157 = vmatprep.subr.mxu0 0.0
        %3158 = vmatpush1.msra.mxu0 %v670
        %3159 = vmatprep.subr.mxu0 0.0
        %3160 = vmatpush1.msra.mxu0 %v671
        %3161 = vmatprep.subr.mxu0 0.0
        %3162 = vmatpush1.msra.mxu0 %v672
        %3163 = vmatprep.subr.mxu0 0.0
        %3164 = vmatpush1.msra.mxu0 %v673
        %3165 = vmatprep.subr.mxu0 0.0
        %3166 = vmatpush1.msra.mxu0 %v674
        %3167 = vmatprep.subr.mxu0 0.0
        %3168 = vmatpush1.msra.mxu0 %v675
        %3169 = vmatprep.subr.mxu0 0.0
        %3170 = vmatpush1.msra.mxu0 %v676
        %3171 = vmatprep.subr.mxu0 0.0
        %3172 = vmatpush1.msra.mxu0 %v677
        %3173 = vmatprep.subr.mxu0 0.0
        %3174 = vmatpush1.msra.mxu0 %v678
        %3175 = vmatprep.subr.mxu0 0.0
        %3176 = vmatpush1.msra.mxu0 %v679
        %3177 = vmatprep.subr.mxu0 0.0
        %3178 = vmatpush1.msra.mxu0 %v680
        %3179 = vmatprep.mubr.f32.mxu0 %v192
        %3180 = vmatmul.mubr.f32.gmra.mrb[0].mxu0 %v191
        %v3181 = vpop.f32.mrb[0].mxu0
        %v3182 = vadd.f32 %v3112, %v3181
        %v3183 = vpop.f32.mrb[0].mxu0
        %3184 = vdwg.mxu0
        %3185 = vmatprep.subr.mxu0 0.0
        %3186 = vmatpush1.msra.mxu0 %v681
        %3187 = vmatprep.subr.mxu0 0.0
        %3188 = vmatpush1.msra.mxu0 %v682
        %3189 = vmatprep.subr.mxu0 0.0
        %3190 = vmatpush1.msra.mxu0 %v683
        %3191 = vmatprep.subr.mxu0 0.0
        %3192 = vmatpush1.msra.mxu0 %v684
        %3193 = vmatprep.subr.mxu0 0.0
        %3194 = vmatpush1.msra.mxu0 %v685
        %3195 = vmatprep.subr.mxu0 0.0
        %3196 = vmatpush1.msra.mxu0 %v686
        %3197 = vmatprep.subr.mxu0 0.0
        %3198 = vmatpush1.msra.mxu0 %v687
        %3199 = vmatprep.subr.mxu0 0.0
        %3200 = vmatpush1.msra.mxu0 %v688
        %3201 = vmatprep.subr.mxu0 0.0
        %3202 = vmatpush1.msra.mxu0 %v689
        %3203 = vmatprep.subr.mxu0 0.0
        %3204 = vmatpush1.msra.mxu0 %v690
        %3205 = vmatprep.subr.mxu0 0.0
        %3206 = vmatpush1.msra.mxu0 %v691
        %3207 = vmatprep.subr.mxu0 0.0
        %3208 = vmatpush1.msra.mxu0 %v692
        %3209 = vmatprep.subr.mxu0 0.0
        %3210 = vmatpush1.msra.mxu0 %v693
        %3211 = vmatprep.subr.mxu0 0.0
        %3212 = vmatpush1.msra.mxu0 %v694
        %3213 = vmatprep.subr.mxu0 0.0
        %3214 = vmatpush1.msra.mxu0 %v695
        %3215 = vmatprep.subr.mxu0 0.0
        %3216 = vmatpush1.msra.mxu0 %v696
        %3217 = vmatprep.subr.mxu0 0.0
        %3218 = vmatpush1.msra.mxu0 %v697
        %3219 = vmatprep.subr.mxu0 0.0
        %3220 = vmatpush1.msra.mxu0 %v698
        %3221 = vmatprep.subr.mxu0 0.0
        %3222 = vmatpush1.msra.mxu0 %v699
        %3223 = vmatprep.subr.mxu0 0.0
        %3224 = vmatpush1.msra.mxu0 %v700
        %3225 = vmatprep.subr.mxu0 0.0
        %3226 = vmatpush1.msra.mxu0 %v701
        %3227 = vmatprep.subr.mxu0 0.0
        %3228 = vmatpush1.msra.mxu0 %v702
        %3229 = vmatprep.subr.mxu0 0.0
        %3230 = vmatpush1.msra.mxu0 %v703
        %3231 = vmatprep.subr.mxu0 0.0
        %3232 = vmatpush1.msra.mxu0 %v704
        %3233 = vmatprep.subr.mxu0 0.0
        %3234 = vmatpush1.msra.mxu0 %v705
        %3235 = vmatprep.subr.mxu0 0.0
        %3236 = vmatpush1.msra.mxu0 %v706
        %3237 = vmatprep.subr.mxu0 0.0
        %3238 = vmatpush1.msra.mxu0 %v707
        %3239 = vmatprep.subr.mxu0 0.0
        %3240 = vmatpush1.msra.mxu0 %v708
        %3241 = vmatprep.subr.mxu0 0.0
        %3242 = vmatpush1.msra.mxu0 %v709
        %3243 = vmatprep.subr.mxu0 0.0
        %3244 = vmatpush1.msra.mxu0 %v710
        %3245 = vmatprep.subr.mxu0 0.0
        %3246 = vmatpush1.msra.mxu0 %v711
        %3247 = vmatprep.subr.mxu0 0.0
        %3248 = vmatpush1.msra.mxu0 %v712
        %3249 = vmatprep.mubr.f32.mxu0 %v194
        %3250 = vmatmul.mubr.f32.gmra.mrb[0].mxu0 %v193
        %v3251 = vpop.f32.mrb[0].mxu0
        %v3252 = vadd.f32 %v3182, %v3251
        %v3253 = vpop.f32.mrb[0].mxu0
        %3254 = vdwg.mxu0
        %3255 = vmatprep.subr.mxu0 0.0
        %3256 = vmatpush1.msra.mxu0 %v713
        %3257 = vmatprep.subr.mxu0 0.0
        %3258 = vmatpush1.msra.mxu0 %v714
        %3259 = vmatprep.subr.mxu0 0.0
        %3260 = vmatpush1.msra.mxu0 %v715
        %3261 = vmatprep.subr.mxu0 0.0
        %3262 = vmatpush1.msra.mxu0 %v716
        %3263 = vmatprep.subr.mxu0 0.0
        %3264 = vmatpush1.msra.mxu0 %v717
        %3265 = vmatprep.subr.mxu0 0.0
        %3266 = vmatpush1.msra.mxu0 %v718
        %3267 = vmatprep.subr.mxu0 0.0
        %3268 = vmatpush1.msra.mxu0 %v719
        %3269 = vmatprep.subr.mxu0 0.0
        %3270 = vmatpush1.msra.mxu0 %v720
        %3271 = vmatprep.subr.mxu0 0.0
        %3272 = vmatpush1.msra.mxu0 %v721
        %3273 = vmatprep.subr.mxu0 0.0
        %3274 = vmatpush1.msra.mxu0 %v722
        %3275 = vmatprep.subr.mxu0 0.0
        %3276 = vmatpush1.msra.mxu0 %v723
        %3277 = vmatprep.subr.mxu0 0.0
        %3278 = vmatpush1.msra.mxu0 %v724
        %3279 = vmatprep.subr.mxu0 0.0
        %3280 = vmatpush1.msra.mxu0 %v725
        %3281 = vmatprep.subr.mxu0 0.0
        %3282 = vmatpush1.msra.mxu0 %v726
        %3283 = vmatprep.subr.mxu0 0.0
        %3284 = vmatpush1.msra.mxu0 %v727
        %3285 = vmatprep.subr.mxu0 0.0
        %3286 = vmatpush1.msra.mxu0 %v728
        %3287 = vmatprep.subr.mxu0 0.0
        %3288 = vmatpush1.msra.mxu0 %v729
        %3289 = vmatprep.subr.mxu0 0.0
        %3290 = vmatpush1.msra.mxu0 %v730
        %3291 = vmatprep.subr.mxu0 0.0
        %3292 = vmatpush1.msra.mxu0 %v731
        %3293 = vmatprep.subr.mxu0 0.0
        %3294 = vmatpush1.msra.mxu0 %v732
        %3295 = vmatprep.subr.mxu0 0.0
        %3296 = vmatpush1.msra.mxu0 %v733
        %3297 = vmatprep.subr.mxu0 0.0
        %3298 = vmatpush1.msra.mxu0 %v734
        %3299 = vmatprep.subr.mxu0 0.0
        %3300 = vmatpush1.msra.mxu0 %v735
        %3301 = vmatprep.subr.mxu0 0.0
        %3302 = vmatpush1.msra.mxu0 %v736
        %3303 = vmatprep.subr.mxu0 0.0
        %3304 = vmatpush1.msra.mxu0 %v737
        %3305 = vmatprep.subr.mxu0 0.0
        %3306 = vmatpush1.msra.mxu0 %v738
        %3307 = vmatprep.subr.mxu0 0.0
        %3308 = vmatpush1.msra.mxu0 %v739
        %3309 = vmatprep.subr.mxu0 0.0
        %3310 = vmatpush1.msra.mxu0 %v740
        %3311 = vmatprep.subr.mxu0 0.0
        %3312 = vmatpush1.msra.mxu0 %v741
        %3313 = vmatprep.subr.mxu0 0.0
        %3314 = vmatpush1.msra.mxu0 %v742
        %3315 = vmatprep.subr.mxu0 0.0
        %3316 = vmatpush1.msra.mxu0 %v743
        %3317 = vmatprep.subr.mxu0 0.0
        %3318 = vmatpush1.msra.mxu0 %v744
        %3319 = vmatprep.mubr.f32.mxu0 %v196
        %3320 = vmatmul.mubr.f32.gmra.mrb[0].mxu0 %v195
        %v3321 = vpop.f32.mrb[0].mxu0
        %v3322 = vadd.f32 %v3252, %v3321
        %v3323 = vpop.f32.mrb[0].mxu0
        %3324 = vdwg.mxu0
        %3325 = vmatprep.subr.mxu0 0.0
        %3326 = vmatpush1.msra.mxu0 %v745
        %3327 = vmatprep.subr.mxu0 0.0
        %3328 = vmatpush1.msra.mxu0 %v746
        %3329 = vmatprep.subr.mxu0 0.0
        %3330 = vmatpush1.msra.mxu0 %v747
        %3331 = vmatprep.subr.mxu0 0.0
        %3332 = vmatpush1.msra.mxu0 %v748
        %3333 = vmatprep.subr.mxu0 0.0
        %3334 = vmatpush1.msra.mxu0 %v749
        %3335 = vmatprep.subr.mxu0 0.0
        %3336 = vmatpush1.msra.mxu0 %v750
        %3337 = vmatprep.subr.mxu0 0.0
        %3338 = vmatpush1.msra.mxu0 %v751
        %3339 = vmatprep.subr.mxu0 0.0
        %3340 = vmatpush1.msra.mxu0 %v752
        %3341 = vmatprep.subr.mxu0 0.0
        %3342 = vmatpush1.msra.mxu0 %v753
        %3343 = vmatprep.subr.mxu0 0.0
        %3344 = vmatpush1.msra.mxu0 %v754
        %3345 = vmatprep.subr.mxu0 0.0
        %3346 = vmatpush1.msra.mxu0 %v755
        %3347 = vmatprep.subr.mxu0 0.0
        %3348 = vmatpush1.msra.mxu0 %v756
        %3349 = vmatprep.subr.mxu0 0.0
        %3350 = vmatpush1.msra.mxu0 %v757
        %3351 = vmatprep.subr.mxu0 0.0
        %3352 = vmatpush1.msra.mxu0 %v758
        %3353 = vmatprep.subr.mxu0 0.0
        %3354 = vmatpush1.msra.mxu0 %v759
        %3355 = vmatprep.subr.mxu0 0.0
        %3356 = vmatpush1.msra.mxu0 %v760
        %3357 = vmatprep.subr.mxu0 0.0
        %3358 = vmatpush1.msra.mxu0 %v761
        %3359 = vmatprep.subr.mxu0 0.0
        %3360 = vmatpush1.msra.mxu0 %v762
        %3361 = vmatprep.subr.mxu0 0.0
        %3362 = vmatpush1.msra.mxu0 %v763
        %3363 = vmatprep.subr.mxu0 0.0
        %3364 = vmatpush1.msra.mxu0 %v764
        %3365 = vmatprep.subr.mxu0 0.0
        %3366 = vmatpush1.msra.mxu0 %v765
        %3367 = vmatprep.subr.mxu0 0.0
        %3368 = vmatpush1.msra.mxu0 %v766
        %3369 = vmatprep.subr.mxu0 0.0
        %3370 = vmatpush1.msra.mxu0 %v767
        %3371 = vmatprep.subr.mxu0 0.0
        %3372 = vmatpush1.msra.mxu0 %v768
        %3373 = vmatprep.subr.mxu0 0.0
        %3374 = vmatpush1.msra.mxu0 %v769
        %3375 = vmatprep.subr.mxu0 0.0
        %3376 = vmatpush1.msra.mxu0 %v770
        %3377 = vmatprep.subr.mxu0 0.0
        %3378 = vmatpush1.msra.mxu0 %v771
        %3379 = vmatprep.subr.mxu0 0.0
        %3380 = vmatpush1.msra.mxu0 %v772
        %3381 = vmatprep.subr.mxu0 0.0
        %3382 = vmatpush1.msra.mxu0 %v773
        %3383 = vmatprep.subr.mxu0 0.0
        %3384 = vmatpush1.msra.mxu0 %v774
        %3385 = vmatprep.subr.mxu0 0.0
        %3386 = vmatpush1.msra.mxu0 %v775
        %3387 = vmatprep.subr.mxu0 0.0
        %3388 = vmatpush1.msra.mxu0 %v776
        %3389 = vmatprep.mubr.f32.mxu0 %v198
        %3390 = vmatmul.mubr.f32.gmra.mrb[0].mxu0 %v197
        %v3391 = vpop.f32.mrb[0].mxu0
        %v3392 = vadd.f32 %v3322, %v3391
        %v3393 = vpop.f32.mrb[0].mxu0
        %3394 = vdwg.mxu0
        %3395 = vmatprep.subr.mxu0 0.0
        %3396 = vmatpush1.msra.mxu0 %v777
        %3397 = vmatprep.subr.mxu0 0.0
        %3398 = vmatpush1.msra.mxu0 %v778
        %3399 = vmatprep.subr.mxu0 0.0
        %3400 = vmatpush1.msra.mxu0 %v779
        %3401 = vmatprep.subr.mxu0 0.0
        %3402 = vmatpush1.msra.mxu0 %v780
        %3403 = vmatprep.subr.mxu0 0.0
        %3404 = vmatpush1.msra.mxu0 %v781
        %3405 = vmatprep.subr.mxu0 0.0
        %3406 = vmatpush1.msra.mxu0 %v782
        %3407 = vmatprep.subr.mxu0 0.0
        %3408 = vmatpush1.msra.mxu0 %v783
        %3409 = vmatprep.subr.mxu0 0.0
        %3410 = vmatpush1.msra.mxu0 %v784
        %3411 = vmatprep.subr.mxu0 0.0
        %3412 = vmatpush1.msra.mxu0 %v785
        %3413 = vmatprep.subr.mxu0 0.0
        %3414 = vmatpush1.msra.mxu0 %v786
        %3415 = vmatprep.subr.mxu0 0.0
        %3416 = vmatpush1.msra.mxu0 %v787
        %3417 = vmatprep.subr.mxu0 0.0
        %3418 = vmatpush1.msra.mxu0 %v788
        %3419 = vmatprep.subr.mxu0 0.0
        %3420 = vmatpush1.msra.mxu0 %v789
        %3421 = vmatprep.subr.mxu0 0.0
        %3422 = vmatpush1.msra.mxu0 %v790
        %3423 = vmatprep.subr.mxu0 0.0
        %3424 = vmatpush1.msra.mxu0 %v791
        %3425 = vmatprep.subr.mxu0 0.0
        %3426 = vmatpush1.msra.mxu0 %v792
        %3427 = vmatprep.subr.mxu0 0.0
        %3428 = vmatpush1.msra.mxu0 %v793
        %3429 = vmatprep.subr.mxu0 0.0
        %3430 = vmatpush1.msra.mxu0 %v794
        %3431 = vmatprep.subr.mxu0 0.0
        %3432 = vmatpush1.msra.mxu0 %v795
        %3433 = vmatprep.subr.mxu0 0.0
        %3434 = vmatpush1.msra.mxu0 %v796
        %3435 = vmatprep.subr.mxu0 0.0
        %3436 = vmatpush1.msra.mxu0 %v797
        %3437 = vmatprep.subr.mxu0 0.0
        %3438 = vmatpush1.msra.mxu0 %v798
        %3439 = vmatprep.subr.mxu0 0.0
        %3440 = vmatpush1.msra.mxu0 %v799
        %3441 = vmatprep.subr.mxu0 0.0
        %3442 = vmatpush1.msra.mxu0 %v800
        %3443 = vmatprep.subr.mxu0 0.0
        %3444 = vmatpush1.msra.mxu0 %v801
        %3445 = vmatprep.subr.mxu0 0.0
        %3446 = vmatpush1.msra.mxu0 %v802
        %3447 = vmatprep.subr.mxu0 0.0
        %3448 = vmatpush1.msra.mxu0 %v803
        %3449 = vmatprep.subr.mxu0 0.0
        %3450 = vmatpush1.msra.mxu0 %v804
        %3451 = vmatprep.subr.mxu0 0.0
        %3452 = vmatpush1.msra.mxu0 %v805
        %3453 = vmatprep.subr.mxu0 0.0
        %3454 = vmatpush1.msra.mxu0 %v806
        %3455 = vmatprep.subr.mxu0 0.0
        %3456 = vmatpush1.msra.mxu0 %v807
        %3457 = vmatprep.subr.mxu0 0.0
        %3458 = vmatpush1.msra.mxu0 %v808
        %3459 = vmatprep.mubr.f32.mxu0 %v200
        %3460 = vmatmul.mubr.f32.gmra.mrb[0].mxu0 %v199
        %v3461 = vpop.f32.mrb[0].mxu0
        %v3462 = vadd.f32 %v3392, %v3461
        %v3463 = vpop.f32.mrb[0].mxu0
        %3464 = vdwg.mxu0
        %3465 = vmatprep.subr.mxu0 0.0
        %3466 = vmatpush1.msra.mxu0 %v809
        %3467 = vmatprep.subr.mxu0 0.0
        %3468 = vmatpush1.msra.mxu0 %v810
        %3469 = vmatprep.subr.mxu0 0.0
        %3470 = vmatpush1.msra.mxu0 %v811
        %3471 = vmatprep.subr.mxu0 0.0
        %3472 = vmatpush1.msra.mxu0 %v812
        %3473 = vmatprep.subr.mxu0 0.0
        %3474 = vmatpush1.msra.mxu0 %v813
        %3475 = vmatprep.subr.mxu0 0.0
        %3476 = vmatpush1.msra.mxu0 %v814
        %3477 = vmatprep.subr.mxu0 0.0
        %3478 = vmatpush1.msra.mxu0 %v815
        %3479 = vmatprep.subr.mxu0 0.0
        %3480 = vmatpush1.msra.mxu0 %v816
        %3481 = vmatprep.subr.mxu0 0.0
        %3482 = vmatpush1.msra.mxu0 %v817
        %3483 = vmatprep.subr.mxu0 0.0
        %3484 = vmatpush1.msra.mxu0 %v818
        %3485 = vmatprep.subr.mxu0 0.0
        %3486 = vmatpush1.msra.mxu0 %v819
        %3487 = vmatprep.subr.mxu0 0.0
        %3488 = vmatpush1.msra.mxu0 %v820
        %3489 = vmatprep.subr.mxu0 0.0
        %3490 = vmatpush1.msra.mxu0 %v821
        %3491 = vmatprep.subr.mxu0 0.0
        %3492 = vmatpush1.msra.mxu0 %v822
        %3493 = vmatprep.subr.mxu0 0.0
        %3494 = vmatpush1.msra.mxu0 %v823
        %3495 = vmatprep.subr.mxu0 0.0
        %3496 = vmatpush1.msra.mxu0 %v824
        %3497 = vmatprep.subr.mxu0 0.0
        %3498 = vmatpush1.msra.mxu0 %v825
        %3499 = vmatprep.subr.mxu0 0.0
        %3500 = vmatpush1.msra.mxu0 %v826
        %3501 = vmatprep.subr.mxu0 0.0
        %3502 = vmatpush1.msra.mxu0 %v827
        %3503 = vmatprep.subr.mxu0 0.0
        %3504 = vmatpush1.msra.mxu0 %v828
        %3505 = vmatprep.subr.mxu0 0.0
        %3506 = vmatpush1.msra.mxu0 %v829
        %3507 = vmatprep.subr.mxu0 0.0
        %3508 = vmatpush1.msra.mxu0 %v830
        %3509 = vmatprep.subr.mxu0 0.0
        %3510 = vmatpush1.msra.mxu0 %v831
        %3511 = vmatprep.subr.mxu0 0.0
        %3512 = vmatpush1.msra.mxu0 %v832
        %3513 = vmatprep.subr.mxu0 0.0
        %3514 = vmatpush1.msra.mxu0 %v833
        %3515 = vmatprep.subr.mxu0 0.0
        %3516 = vmatpush1.msra.mxu0 %v834
        %3517 = vmatprep.subr.mxu0 0.0
        %3518 = vmatpush1.msra.mxu0 %v835
        %3519 = vmatprep.subr.mxu0 0.0
        %3520 = vmatpush1.msra.mxu0 %v836
        %3521 = vmatprep.subr.mxu0 0.0
        %3522 = vmatpush1.msra.mxu0 %v837
        %3523 = vmatprep.subr.mxu0 0.0
        %3524 = vmatpush1.msra.mxu0 %v838
        %3525 = vmatprep.subr.mxu0 0.0
        %3526 = vmatpush1.msra.mxu0 %v839
        %3527 = vmatprep.subr.mxu0 0.0
        %3528 = vmatpush1.msra.mxu0 %v840
        %3529 = vmatprep.mubr.f32.mxu0 %v202
        %3530 = vmatmul.mubr.f32.gmra.mrb[0].mxu0 %v201
        %v3531 = vpop.f32.mrb[0].mxu0
        %v3532 = vadd.f32 %v3462, %v3531
        %v3533 = vpop.f32.mrb[0].mxu0
        %3534 = vdwg.mxu0
        %3535 = vmatprep.subr.mxu0 0.0
        %3536 = vmatpush1.msra.mxu0 %v841
        %3537 = vmatprep.subr.mxu0 0.0
        %3538 = vmatpush1.msra.mxu0 %v842
        %3539 = vmatprep.subr.mxu0 0.0
        %3540 = vmatpush1.msra.mxu0 %v843
        %3541 = vmatprep.subr.mxu0 0.0
        %3542 = vmatpush1.msra.mxu0 %v844
        %3543 = vmatprep.subr.mxu0 0.0
        %3544 = vmatpush1.msra.mxu0 %v845
        %3545 = vmatprep.subr.mxu0 0.0
        %3546 = vmatpush1.msra.mxu0 %v846
        %3547 = vmatprep.subr.mxu0 0.0
        %3548 = vmatpush1.msra.mxu0 %v847
        %3549 = vmatprep.subr.mxu0 0.0
        %3550 = vmatpush1.msra.mxu0 %v848
        %3551 = vmatprep.subr.mxu0 0.0
        %3552 = vmatpush1.msra.mxu0 %v849
        %3553 = vmatprep.subr.mxu0 0.0
        %3554 = vmatpush1.msra.mxu0 %v850
        %3555 = vmatprep.subr.mxu0 0.0
        %3556 = vmatpush1.msra.mxu0 %v851
        %3557 = vmatprep.subr.mxu0 0.0
        %3558 = vmatpush1.msra.mxu0 %v852
        %3559 = vmatprep.subr.mxu0 0.0
        %3560 = vmatpush1.msra.mxu0 %v853
        %3561 = vmatprep.subr.mxu0 0.0
        %3562 = vmatpush1.msra.mxu0 %v854
        %3563 = vmatprep.subr.mxu0 0.0
        %3564 = vmatpush1.msra.mxu0 %v855
        %3565 = vmatprep.subr.mxu0 0.0
        %3566 = vmatpush1.msra.mxu0 %v856
        %3567 = vmatprep.subr.mxu0 0.0
        %3568 = vmatpush1.msra.mxu0 %v857
        %3569 = vmatprep.subr.mxu0 0.0
        %3570 = vmatpush1.msra.mxu0 %v858
        %3571 = vmatprep.subr.mxu0 0.0
        %3572 = vmatpush1.msra.mxu0 %v859
        %3573 = vmatprep.subr.mxu0 0.0
        %3574 = vmatpush1.msra.mxu0 %v860
        %3575 = vmatprep.subr.mxu0 0.0
        %3576 = vmatpush1.msra.mxu0 %v861
        %3577 = vmatprep.subr.mxu0 0.0
        %3578 = vmatpush1.msra.mxu0 %v862
        %3579 = vmatprep.subr.mxu0 0.0
        %3580 = vmatpush1.msra.mxu0 %v863
        %3581 = vmatprep.subr.mxu0 0.0
        %3582 = vmatpush1.msra.mxu0 %v864
        %3583 = vmatprep.subr.mxu0 0.0
        %3584 = vmatpush1.msra.mxu0 %v865
        %3585 = vmatprep.subr.mxu0 0.0
        %3586 = vmatpush1.msra.mxu0 %v866
        %3587 = vmatprep.subr.mxu0 0.0
        %3588 = vmatpush1.msra.mxu0 %v867
        %3589 = vmatprep.subr.mxu0 0.0
        %3590 = vmatpush1.msra.mxu0 %v868
        %3591 = vmatprep.subr.mxu0 0.0
        %3592 = vmatpush1.msra.mxu0 %v869
        %3593 = vmatprep.subr.mxu0 0.0
        %3594 = vmatpush1.msra.mxu0 %v870
        %3595 = vmatprep.subr.mxu0 0.0
        %3596 = vmatpush1.msra.mxu0 %v871
        %3597 = vmatprep.subr.mxu0 0.0
        %3598 = vmatpush1.msra.mxu0 %v872
        %3599 = vmatprep.mubr.f32.mxu0 %v204
        %3600 = vmatmul.mubr.f32.gmra.mrb[0].mxu0 %v203
        %v3601 = vpop.f32.mrb[0].mxu0
        %v3602 = vadd.f32 %v3532, %v3601
        %v3603 = vpop.f32.mrb[0].mxu0
        %3604 = vdwg.mxu0
        %3605 = vmatprep.subr.mxu0 0.0
        %3606 = vmatpush1.msra.mxu0 %v873
        %3607 = vmatprep.subr.mxu0 0.0
        %3608 = vmatpush1.msra.mxu0 %v874
        %3609 = vmatprep.subr.mxu0 0.0
        %3610 = vmatpush1.msra.mxu0 %v875
        %3611 = vmatprep.subr.mxu0 0.0
        %3612 = vmatpush1.msra.mxu0 %v876
        %3613 = vmatprep.subr.mxu0 0.0
        %3614 = vmatpush1.msra.mxu0 %v877
        %3615 = vmatprep.subr.mxu0 0.0
        %3616 = vmatpush1.msra.mxu0 %v878
        %3617 = vmatprep.subr.mxu0 0.0
        %3618 = vmatpush1.msra.mxu0 %v879
        %3619 = vmatprep.subr.mxu0 0.0
        %3620 = vmatpush1.msra.mxu0 %v880
        %3621 = vmatprep.subr.mxu0 0.0
        %3622 = vmatpush1.msra.mxu0 %v881
        %3623 = vmatprep.subr.mxu0 0.0
        %3624 = vmatpush1.msra.mxu0 %v882
        %3625 = vmatprep.subr.mxu0 0.0
        %3626 = vmatpush1.msra.mxu0 %v883
        %3627 = vmatprep.subr.mxu0 0.0
        %3628 = vmatpush1.msra.mxu0 %v884
        %3629 = vmatprep.subr.mxu0 0.0
        %3630 = vmatpush1.msra.mxu0 %v885
        %3631 = vmatprep.subr.mxu0 0.0
        %3632 = vmatpush1.msra.mxu0 %v886
        %3633 = vmatprep.subr.mxu0 0.0
        %3634 = vmatpush1.msra.mxu0 %v887
        %3635 = vmatprep.subr.mxu0 0.0
        %3636 = vmatpush1.msra.mxu0 %v888
        %3637 = vmatprep.subr.mxu0 0.0
        %3638 = vmatpush1.msra.mxu0 %v889
        %3639 = vmatprep.subr.mxu0 0.0
        %3640 = vmatpush1.msra.mxu0 %v890
        %3641 = vmatprep.subr.mxu0 0.0
        %3642 = vmatpush1.msra.mxu0 %v891
        %3643 = vmatprep.subr.mxu0 0.0
        %3644 = vmatpush1.msra.mxu0 %v892
        %3645 = vmatprep.subr.mxu0 0.0
        %3646 = vmatpush1.msra.mxu0 %v893
        %3647 = vmatprep.subr.mxu0 0.0
        %3648 = vmatpush1.msra.mxu0 %v894
        %3649 = vmatprep.subr.mxu0 0.0
        %3650 = vmatpush1.msra.mxu0 %v895
        %3651 = vmatprep.subr.mxu0 0.0
        %3652 = vmatpush1.msra.mxu0 %v896
        %3653 = vmatprep.subr.mxu0 0.0
        %3654 = vmatpush1.msra.mxu0 %v897
        %3655 = vmatprep.subr.mxu0 0.0
        %3656 = vmatpush1.msra.mxu0 %v898
        %3657 = vmatprep.subr.mxu0 0.0
        %3658 = vmatpush1.msra.mxu0 %v899
        %3659 = vmatprep.subr.mxu0 0.0
        %3660 = vmatpush1.msra.mxu0 %v900
        %3661 = vmatprep.subr.mxu0 0.0
        %3662 = vmatpush1.msra.mxu0 %v901
        %3663 = vmatprep.subr.mxu0 0.0
        %3664 = vmatpush1.msra.mxu0 %v902
        %3665 = vmatprep.subr.mxu0 0.0
        %3666 = vmatpush1.msra.mxu0 %v903
        %3667 = vmatprep.subr.mxu0 0.0
        %3668 = vmatpush1.msra.mxu0 %v904
        %3669 = vmatprep.mubr.f32.mxu0 %v206
        %3670 = vmatmul.mubr.f32.gmra.mrb[0].mxu0 %v205
        %v3671 = vpop.f32.mrb[0].mxu0
        %v3672 = vadd.f32 %v3602, %v3671
        %v3673 = vpop.f32.mrb[0].mxu0
        %3674 = vdwg.mxu0
        %3675 = vmatprep.subr.mxu0 0.0
        %3676 = vmatpush1.msra.mxu0 %v905
        %3677 = vmatprep.subr.mxu0 0.0
        %3678 = vmatpush1.msra.mxu0 %v906
        %3679 = vmatprep.subr.mxu0 0.0
        %3680 = vmatpush1.msra.mxu0 %v907
        %3681 = vmatprep.subr.mxu0 0.0
        %3682 = vmatpush1.msra.mxu0 %v908
        %3683 = vmatprep.subr.mxu0 0.0
        %3684 = vmatpush1.msra.mxu0 %v909
        %3685 = vmatprep.subr.mxu0 0.0
        %3686 = vmatpush1.msra.mxu0 %v910
        %3687 = vmatprep.subr.mxu0 0.0
        %3688 = vmatpush1.msra.mxu0 %v911
        %3689 = vmatprep.subr.mxu0 0.0
        %3690 = vmatpush1.msra.mxu0 %v912
        %3691 = vmatprep.subr.mxu0 0.0
        %3692 = vmatpush1.msra.mxu0 %v913
        %3693 = vmatprep.subr.mxu0 0.0
        %3694 = vmatpush1.msra.mxu0 %v914
        %3695 = vmatprep.subr.mxu0 0.0
        %3696 = vmatpush1.msra.mxu0 %v915
        %3697 = vmatprep.subr.mxu0 0.0
        %3698 = vmatpush1.msra.mxu0 %v916
        %3699 = vmatprep.subr.mxu0 0.0
        %3700 = vmatpush1.msra.mxu0 %v917
        %3701 = vmatprep.subr.mxu0 0.0
        %3702 = vmatpush1.msra.mxu0 %v918
        %3703 = vmatprep.subr.mxu0 0.0
        %3704 = vmatpush1.msra.mxu0 %v919
        %3705 = vmatprep.subr.mxu0 0.0
        %3706 = vmatpush1.msra.mxu0 %v920
        %3707 = vmatprep.subr.mxu0 0.0
        %3708 = vmatpush1.msra.mxu0 %v921
        %3709 = vmatprep.subr.mxu0 0.0
        %3710 = vmatpush1.msra.mxu0 %v922
        %3711 = vmatprep.subr.mxu0 0.0
        %3712 = vmatpush1.msra.mxu0 %v923
        %3713 = vmatprep.subr.mxu0 0.0
        %3714 = vmatpush1.msra.mxu0 %v924
        %3715 = vmatprep.subr.mxu0 0.0
        %3716 = vmatpush1.msra.mxu0 %v925
        %3717 = vmatprep.subr.mxu0 0.0
        %3718 = vmatpush1.msra.mxu0 %v926
        %3719 = vmatprep.subr.mxu0 0.0
        %3720 = vmatpush1.msra.mxu0 %v927
        %3721 = vmatprep.subr.mxu0 0.0
        %3722 = vmatpush1.msra.mxu0 %v928
        %3723 = vmatprep.subr.mxu0 0.0
        %3724 = vmatpush1.msra.mxu0 %v929
        %3725 = vmatprep.subr.mxu0 0.0
        %3726 = vmatpush1.msra.mxu0 %v930
        %3727 = vmatprep.subr.mxu0 0.0
        %3728 = vmatpush1.msra.mxu0 %v931
        %3729 = vmatprep.subr.mxu0 0.0
        %3730 = vmatpush1.msra.mxu0 %v932
        %3731 = vmatprep.subr.mxu0 0.0
        %3732 = vmatpush1.msra.mxu0 %v933
        %3733 = vmatprep.subr.mxu0 0.0
        %3734 = vmatpush1.msra.mxu0 %v934
        %3735 = vmatprep.subr.mxu0 0.0
        %3736 = vmatpush1.msra.mxu0 %v935
        %3737 = vmatprep.subr.mxu0 0.0
        %3738 = vmatpush1.msra.mxu0 %v936
        %3739 = vmatprep.mubr.f32.mxu0 %v208
        %3740 = vmatmul.mubr.f32.gmra.mrb[0].mxu0 %v207
        %v3741 = vpop.f32.mrb[0].mxu0
        %v3742 = vadd.f32 %v3672, %v3741
        %v3743 = vpop.f32.mrb[0].mxu0
        %3744 = vdwg.mxu0
        %3745 = vmatprep.subr.mxu0 0.0
        %3746 = vmatpush1.msra.mxu0 %v937
        %3747 = vmatprep.subr.mxu0 0.0
        %3748 = vmatpush1.msra.mxu0 %v938
        %3749 = vmatprep.subr.mxu0 0.0
        %3750 = vmatpush1.msra.mxu0 %v939
        %3751 = vmatprep.subr.mxu0 0.0
        %3752 = vmatpush1.msra.mxu0 %v940
        %3753 = vmatprep.subr.mxu0 0.0
        %3754 = vmatpush1.msra.mxu0 %v941
        %3755 = vmatprep.subr.mxu0 0.0
        %3756 = vmatpush1.msra.mxu0 %v942
        %3757 = vmatprep.subr.mxu0 0.0
        %3758 = vmatpush1.msra.mxu0 %v943
        %3759 = vmatprep.subr.mxu0 0.0
        %3760 = vmatpush1.msra.mxu0 %v944
        %3761 = vmatprep.subr.mxu0 0.0
        %3762 = vmatpush1.msra.mxu0 %v945
        %3763 = vmatprep.subr.mxu0 0.0
        %3764 = vmatpush1.msra.mxu0 %v946
        %3765 = vmatprep.subr.mxu0 0.0
        %3766 = vmatpush1.msra.mxu0 %v947
        %3767 = vmatprep.subr.mxu0 0.0
        %3768 = vmatpush1.msra.mxu0 %v948
        %3769 = vmatprep.subr.mxu0 0.0
        %3770 = vmatpush1.msra.mxu0 %v949
        %3771 = vmatprep.subr.mxu0 0.0
        %3772 = vmatpush1.msra.mxu0 %v950
        %3773 = vmatprep.subr.mxu0 0.0
        %3774 = vmatpush1.msra.mxu0 %v951
        %3775 = vmatprep.subr.mxu0 0.0
        %3776 = vmatpush1.msra.mxu0 %v952
        %3777 = vmatprep.subr.mxu0 0.0
        %3778 = vmatpush1.msra.mxu0 %v953
        %3779 = vmatprep.subr.mxu0 0.0
        %3780 = vmatpush1.msra.mxu0 %v954
        %3781 = vmatprep.subr.mxu0 0.0
        %3782 = vmatpush1.msra.mxu0 %v955
        %3783 = vmatprep.subr.mxu0 0.0
        %3784 = vmatpush1.msra.mxu0 %v956
        %3785 = vmatprep.subr.mxu0 0.0
        %3786 = vmatpush1.msra.mxu0 %v957
        %3787 = vmatprep.subr.mxu0 0.0
        %3788 = vmatpush1.msra.mxu0 %v958
        %3789 = vmatprep.subr.mxu0 0.0
        %3790 = vmatpush1.msra.mxu0 %v959
        %3791 = vmatprep.subr.mxu0 0.0
        %3792 = vmatpush1.msra.mxu0 %v960
        %3793 = vmatprep.subr.mxu0 0.0
        %3794 = vmatpush1.msra.mxu0 %v961
        %3795 = vmatprep.subr.mxu0 0.0
        %3796 = vmatpush1.msra.mxu0 %v962
        %3797 = vmatprep.subr.mxu0 0.0
        %3798 = vmatpush1.msra.mxu0 %v963
        %3799 = vmatprep.subr.mxu0 0.0
        %3800 = vmatpush1.msra.mxu0 %v964
        %3801 = vmatprep.subr.mxu0 0.0
        %3802 = vmatpush1.msra.mxu0 %v965
        %3803 = vmatprep.subr.mxu0 0.0
        %3804 = vmatpush1.msra.mxu0 %v966
        %3805 = vmatprep.subr.mxu0 0.0
        %3806 = vmatpush1.msra.mxu0 %v967
        %3807 = vmatprep.subr.mxu0 0.0
        %3808 = vmatpush1.msra.mxu0 %v968
        %3809 = vmatprep.mubr.f32.mxu0 %v210
        %3810 = vmatmul.mubr.f32.gmra.mrb[0].mxu0 %v209
        %v3811 = vpop.f32.mrb[0].mxu0
        %v3812 = vadd.f32 %v3742, %v3811
        %v3813 = vpop.f32.mrb[0].mxu0
        %3814 = vdwg.mxu0
        %3815 = vmatprep.subr.mxu0 0.0
        %3816 = vmatpush1.msra.mxu0 %v969
        %3817 = vmatprep.subr.mxu0 0.0
        %3818 = vmatpush1.msra.mxu0 %v970
        %3819 = vmatprep.subr.mxu0 0.0
        %3820 = vmatpush1.msra.mxu0 %v971
        %3821 = vmatprep.subr.mxu0 0.0
        %3822 = vmatpush1.msra.mxu0 %v972
        %3823 = vmatprep.subr.mxu0 0.0
        %3824 = vmatpush1.msra.mxu0 %v973
        %3825 = vmatprep.subr.mxu0 0.0
        %3826 = vmatpush1.msra.mxu0 %v974
        %3827 = vmatprep.subr.mxu0 0.0
        %3828 = vmatpush1.msra.mxu0 %v975
        %3829 = vmatprep.subr.mxu0 0.0
        %3830 = vmatpush1.msra.mxu0 %v976
        %3831 = vmatprep.subr.mxu0 0.0
        %3832 = vmatpush1.msra.mxu0 %v977
        %3833 = vmatprep.subr.mxu0 0.0
        %3834 = vmatpush1.msra.mxu0 %v978
        %3835 = vmatprep.subr.mxu0 0.0
        %3836 = vmatpush1.msra.mxu0 %v979
        %3837 = vmatprep.subr.mxu0 0.0
        %3838 = vmatpush1.msra.mxu0 %v980
        %3839 = vmatprep.subr.mxu0 0.0
        %3840 = vmatpush1.msra.mxu0 %v981
        %3841 = vmatprep.subr.mxu0 0.0
        %3842 = vmatpush1.msra.mxu0 %v982
        %3843 = vmatprep.subr.mxu0 0.0
        %3844 = vmatpush1.msra.mxu0 %v983
        %3845 = vmatprep.subr.mxu0 0.0
        %3846 = vmatpush1.msra.mxu0 %v984
        %3847 = vmatprep.subr.mxu0 0.0
        %3848 = vmatpush1.msra.mxu0 %v985
        %3849 = vmatprep.subr.mxu0 0.0
        %3850 = vmatpush1.msra.mxu0 %v986
        %3851 = vmatprep.subr.mxu0 0.0
        %3852 = vmatpush1.msra.mxu0 %v987
        %3853 = vmatprep.subr.mxu0 0.0
        %3854 = vmatpush1.msra.mxu0 %v988
        %3855 = vmatprep.subr.mxu0 0.0
        %3856 = vmatpush1.msra.mxu0 %v989
        %3857 = vmatprep.subr.mxu0 0.0
        %3858 = vmatpush1.msra.mxu0 %v990
        %3859 = vmatprep.subr.mxu0 0.0
        %3860 = vmatpush1.msra.mxu0 %v991
        %3861 = vmatprep.subr.mxu0 0.0
        %3862 = vmatpush1.msra.mxu0 %v992
        %3863 = vmatprep.subr.mxu0 0.0
        %3864 = vmatpush1.msra.mxu0 %v993
        %3865 = vmatprep.subr.mxu0 0.0
        %3866 = vmatpush1.msra.mxu0 %v994
        %3867 = vmatprep.subr.mxu0 0.0
        %3868 = vmatpush1.msra.mxu0 %v995
        %3869 = vmatprep.subr.mxu0 0.0
        %3870 = vmatpush1.msra.mxu0 %v996
        %3871 = vmatprep.subr.mxu0 0.0
        %3872 = vmatpush1.msra.mxu0 %v997
        %3873 = vmatprep.subr.mxu0 0.0
        %3874 = vmatpush1.msra.mxu0 %v998
        %3875 = vmatprep.subr.mxu0 0.0
        %3876 = vmatpush1.msra.mxu0 %v999
        %3877 = vmatprep.subr.mxu0 0.0
        %3878 = vmatpush1.msra.mxu0 %v1000
        %3879 = vmatprep.mubr.f32.mxu0 %v212
        %3880 = vmatmul.mubr.f32.gmra.mrb[0].mxu0 %v211
        %v3881 = vpop.f32.mrb[0].mxu0
        %v3882 = vadd.f32 %v3812, %v3881
        %v3883 = vpop.f32.mrb[0].mxu0
        %3884 = vdwg.mxu0
        %3885 = vmatprep.subr.mxu0 0.0
        %3886 = vmatpush1.msra.mxu0 %v1001
        %3887 = vmatprep.subr.mxu0 0.0
        %3888 = vmatpush1.msra.mxu0 %v1002
        %3889 = vmatprep.subr.mxu0 0.0
        %3890 = vmatpush1.msra.mxu0 %v1003
        %3891 = vmatprep.subr.mxu0 0.0
        %3892 = vmatpush1.msra.mxu0 %v1004
        %3893 = vmatprep.subr.mxu0 0.0
        %3894 = vmatpush1.msra.mxu0 %v1005
        %3895 = vmatprep.subr.mxu0 0.0
        %3896 = vmatpush1.msra.mxu0 %v1006
        %3897 = vmatprep.subr.mxu0 0.0
        %3898 = vmatpush1.msra.mxu0 %v1007
        %3899 = vmatprep.subr.mxu0 0.0
        %3900 = vmatpush1.msra.mxu0 %v1008
        %3901 = vmatprep.subr.mxu0 0.0
        %3902 = vmatpush1.msra.mxu0 %v1009
        %3903 = vmatprep.subr.mxu0 0.0
        %3904 = vmatpush1.msra.mxu0 %v1010
        %3905 = vmatprep.subr.mxu0 0.0
        %3906 = vmatpush1.msra.mxu0 %v1011
        %3907 = vmatprep.subr.mxu0 0.0
        %3908 = vmatpush1.msra.mxu0 %v1012
        %3909 = vmatprep.subr.mxu0 0.0
        %3910 = vmatpush1.msra.mxu0 %v1013
        %3911 = vmatprep.subr.mxu0 0.0
        %3912 = vmatpush1.msra.mxu0 %v1014
        %3913 = vmatprep.subr.mxu0 0.0
        %3914 = vmatpush1.msra.mxu0 %v1015
        %3915 = vmatprep.subr.mxu0 0.0
        %3916 = vmatpush1.msra.mxu0 %v1016
        %3917 = vmatprep.subr.mxu0 0.0
        %3918 = vmatpush1.msra.mxu0 %v1017
        %3919 = vmatprep.subr.mxu0 0.0
        %3920 = vmatpush1.msra.mxu0 %v1018
        %3921 = vmatprep.subr.mxu0 0.0
        %3922 = vmatpush1.msra.mxu0 %v1019
        %3923 = vmatprep.subr.mxu0 0.0
        %3924 = vmatpush1.msra.mxu0 %v1020
        %3925 = vmatprep.subr.mxu0 0.0
        %3926 = vmatpush1.msra.mxu0 %v1021
        %3927 = vmatprep.subr.mxu0 0.0
        %3928 = vmatpush1.msra.mxu0 %v1022
        %3929 = vmatprep.subr.mxu0 0.0
        %3930 = vmatpush1.msra.mxu0 %v1023
        %3931 = vmatprep.subr.mxu0 0.0
        %3932 = vmatpush1.msra.mxu0 %v1024
        %3933 = vmatprep.subr.mxu0 0.0
        %3934 = vmatpush1.msra.mxu0 %v1025
        %3935 = vmatprep.subr.mxu0 0.0
        %3936 = vmatpush1.msra.mxu0 %v1026
        %3937 = vmatprep.subr.mxu0 0.0
        %3938 = vmatpush1.msra.mxu0 %v1027
        %3939 = vmatprep.subr.mxu0 0.0
        %3940 = vmatpush1.msra.mxu0 %v1028
        %3941 = vmatprep.subr.mxu0 0.0
        %3942 = vmatpush1.msra.mxu0 %v1029
        %3943 = vmatprep.subr.mxu0 0.0
        %3944 = vmatpush1.msra.mxu0 %v1030
        %3945 = vmatprep.subr.mxu0 0.0
        %3946 = vmatpush1.msra.mxu0 %v1031
        %3947 = vmatprep.subr.mxu0 0.0
        %3948 = vmatpush1.msra.mxu0 %v1032
        %3949 = vmatprep.mubr.f32.mxu0 %v214
        %3950 = vmatmul.mubr.f32.gmra.mrb[0].mxu0 %v213
        %v3951 = vpop.f32.mrb[0].mxu0
        %v3952 = vadd.f32 %v3882, %v3951
        %v3953 = vpop.f32.mrb[0].mxu0
        %3954 = vdwg.mxu0
        %3955 = vmatprep.subr.mxu0 0.0
        %3956 = vmatpush1.msra.mxu0 %v1033
        %3957 = vmatprep.subr.mxu0 0.0
        %3958 = vmatpush1.msra.mxu0 %v1034
        %3959 = vmatprep.subr.mxu0 0.0
        %3960 = vmatpush1.msra.mxu0 %v1035
        %3961 = vmatprep.subr.mxu0 0.0
        %3962 = vmatpush1.msra.mxu0 %v1036
        %3963 = vmatprep.subr.mxu0 0.0
        %3964 = vmatpush1.msra.mxu0 %v1037
        %3965 = vmatprep.subr.mxu0 0.0
        %3966 = vmatpush1.msra.mxu0 %v1038
        %3967 = vmatprep.subr.mxu0 0.0
        %3968 = vmatpush1.msra.mxu0 %v1039
        %3969 = vmatprep.subr.mxu0 0.0
        %3970 = vmatpush1.msra.mxu0 %v1040
        %3971 = vmatprep.subr.mxu0 0.0
        %3972 = vmatpush1.msra.mxu0 %v1041
        %3973 = vmatprep.subr.mxu0 0.0
        %3974 = vmatpush1.msra.mxu0 %v1042
        %3975 = vmatprep.subr.mxu0 0.0
        %3976 = vmatpush1.msra.mxu0 %v1043
        %3977 = vmatprep.subr.mxu0 0.0
        %3978 = vmatpush1.msra.mxu0 %v1044
        %3979 = vmatprep.subr.mxu0 0.0
        %3980 = vmatpush1.msra.mxu0 %v1045
        %3981 = vmatprep.subr.mxu0 0.0
        %3982 = vmatpush1.msra.mxu0 %v1046
        %3983 = vmatprep.subr.mxu0 0.0
        %3984 = vmatpush1.msra.mxu0 %v1047
        %3985 = vmatprep.subr.mxu0 0.0
        %3986 = vmatpush1.msra.mxu0 %v1048
        %3987 = vmatprep.subr.mxu0 0.0
        %3988 = vmatpush1.msra.mxu0 %v1049
        %3989 = vmatprep.subr.mxu0 0.0
        %3990 = vmatpush1.msra.mxu0 %v1050
        %3991 = vmatprep.subr.mxu0 0.0
        %3992 = vmatpush1.msra.mxu0 %v1051
        %3993 = vmatprep.subr.mxu0 0.0
        %3994 = vmatpush1.msra.mxu0 %v1052
        %3995 = vmatprep.subr.mxu0 0.0
        %3996 = vmatpush1.msra.mxu0 %v1053
        %3997 = vmatprep.subr.mxu0 0.0
        %3998 = vmatpush1.msra.mxu0 %v1054
        %3999 = vmatprep.subr.mxu0 0.0
        %4000 = vmatpush1.msra.mxu0 %v1055
        %4001 = vmatprep.subr.mxu0 0.0
        %4002 = vmatpush1.msra.mxu0 %v1056
        %4003 = vmatprep.subr.mxu0 0.0
        %4004 = vmatpush1.msra.mxu0 %v1057
        %4005 = vmatprep.subr.mxu0 0.0
        %4006 = vmatpush1.msra.mxu0 %v1058
        %4007 = vmatprep.subr.mxu0 0.0
        %4008 = vmatpush1.msra.mxu0 %v1059
        %4009 = vmatprep.subr.mxu0 0.0
        %4010 = vmatpush1.msra.mxu0 %v1060
        %4011 = vmatprep.subr.mxu0 0.0
        %4012 = vmatpush1.msra.mxu0 %v1061
        %4013 = vmatprep.subr.mxu0 0.0
        %4014 = vmatpush1.msra.mxu0 %v1062
        %4015 = vmatprep.subr.mxu0 0.0
        %4016 = vmatpush1.msra.mxu0 %v1063
        %4017 = vmatprep.subr.mxu0 0.0
        %4018 = vmatpush1.msra.mxu0 %v1064
        %4019 = vmatprep.mubr.f32.mxu0 %v216
        %4020 = vmatmul.mubr.f32.gmra.mrb[0].mxu0 %v215
        %v4021 = vpop.f32.mrb[0].mxu0
        %v4022 = vadd.f32 %v3952, %v4021
        %v4023 = vpop.f32.mrb[0].mxu0
        %4024 = vdwg.mxu0
        %4025 = vmatprep.subr.mxu0 0.0
        %4026 = vmatpush1.msra.mxu0 %v1065
        %4027 = vmatprep.subr.mxu0 0.0
        %4028 = vmatpush1.msra.mxu0 %v1066
        %4029 = vmatprep.subr.mxu0 0.0
        %4030 = vmatpush1.msra.mxu0 %v1067
        %4031 = vmatprep.subr.mxu0 0.0
        %4032 = vmatpush1.msra.mxu0 %v1068
        %4033 = vmatprep.subr.mxu0 0.0
        %4034 = vmatpush1.msra.mxu0 %v1069
        %4035 = vmatprep.subr.mxu0 0.0
        %4036 = vmatpush1.msra.mxu0 %v1070
        %4037 = vmatprep.subr.mxu0 0.0
        %4038 = vmatpush1.msra.mxu0 %v1071
        %4039 = vmatprep.subr.mxu0 0.0
        %4040 = vmatpush1.msra.mxu0 %v1072
        %4041 = vmatprep.subr.mxu0 0.0
        %4042 = vmatpush1.msra.mxu0 %v1073
        %4043 = vmatprep.subr.mxu0 0.0
        %4044 = vmatpush1.msra.mxu0 %v1074
        %4045 = vmatprep.subr.mxu0 0.0
        %4046 = vmatpush1.msra.mxu0 %v1075
        %4047 = vmatprep.subr.mxu0 0.0
        %4048 = vmatpush1.msra.mxu0 %v1076
        %4049 = vmatprep.subr.mxu0 0.0
        %4050 = vmatpush1.msra.mxu0 %v1077
        %4051 = vmatprep.subr.mxu0 0.0
        %4052 = vmatpush1.msra.mxu0 %v1078
        %4053 = vmatprep.subr.mxu0 0.0
        %4054 = vmatpush1.msra.mxu0 %v1079
        %4055 = vmatprep.subr.mxu0 0.0
        %4056 = vmatpush1.msra.mxu0 %v1080
        %4057 = vmatprep.subr.mxu0 0.0
        %4058 = vmatpush1.msra.mxu0 %v1081
        %4059 = vmatprep.subr.mxu0 0.0
        %4060 = vmatpush1.msra.mxu0 %v1082
        %4061 = vmatprep.subr.mxu0 0.0
        %4062 = vmatpush1.msra.mxu0 %v1083
        %4063 = vmatprep.subr.mxu0 0.0
        %4064 = vmatpush1.msra.mxu0 %v1084
        %4065 = vmatprep.subr.mxu0 0.0
        %4066 = vmatpush1.msra.mxu0 %v1085
        %4067 = vmatprep.subr.mxu0 0.0
        %4068 = vmatpush1.msra.mxu0 %v1086
        %4069 = vmatprep.subr.mxu0 0.0
        %4070 = vmatpush1.msra.mxu0 %v1087
        %4071 = vmatprep.subr.mxu0 0.0
        %4072 = vmatpush1.msra.mxu0 %v1088
        %4073 = vmatprep.subr.mxu0 0.0
        %4074 = vmatpush1.msra.mxu0 %v1089
        %4075 = vmatprep.subr.mxu0 0.0
        %4076 = vmatpush1.msra.mxu0 %v1090
        %4077 = vmatprep.subr.mxu0 0.0
        %4078 = vmatpush1.msra.mxu0 %v1091
        %4079 = vmatprep.subr.mxu0 0.0
        %4080 = vmatpush1.msra.mxu0 %v1092
        %4081 = vmatprep.subr.mxu0 0.0
        %4082 = vmatpush1.msra.mxu0 %v1093
        %4083 = vmatprep.subr.mxu0 0.0
        %4084 = vmatpush1.msra.mxu0 %v1094
        %4085 = vmatprep.subr.mxu0 0.0
        %4086 = vmatpush1.msra.mxu0 %v1095
        %4087 = vmatprep.subr.mxu0 0.0
        %4088 = vmatpush1.msra.mxu0 %v1096
        %4089 = vmatprep.mubr.f32.mxu0 %v218
        %4090 = vmatmul.mubr.f32.gmra.mrb[0].mxu0 %v217
        %v4091 = vpop.f32.mrb[0].mxu0
        %v4092 = vadd.f32 %v4022, %v4091
        %v4093 = vpop.f32.mrb[0].mxu0
        %4094 = vdwg.mxu0
        %4095 = vmatprep.subr.mxu0 0.0
        %4096 = vmatpush1.msra.mxu0 %v1097
        %4097 = vmatprep.subr.mxu0 0.0
        %4098 = vmatpush1.msra.mxu0 %v1098
        %4099 = vmatprep.subr.mxu0 0.0
        %4100 = vmatpush1.msra.mxu0 %v1099
        %4101 = vmatprep.subr.mxu0 0.0
        %4102 = vmatpush1.msra.mxu0 %v1100
        %4103 = vmatprep.subr.mxu0 0.0
        %4104 = vmatpush1.msra.mxu0 %v1101
        %4105 = vmatprep.subr.mxu0 0.0
        %4106 = vmatpush1.msra.mxu0 %v1102
        %4107 = vmatprep.subr.mxu0 0.0
        %4108 = vmatpush1.msra.mxu0 %v1103
        %4109 = vmatprep.subr.mxu0 0.0
        %4110 = vmatpush1.msra.mxu0 %v1104
        %4111 = vmatprep.subr.mxu0 0.0
        %4112 = vmatpush1.msra.mxu0 %v1105
        %4113 = vmatprep.subr.mxu0 0.0
        %4114 = vmatpush1.msra.mxu0 %v1106
        %4115 = vmatprep.subr.mxu0 0.0
        %4116 = vmatpush1.msra.mxu0 %v1107
        %4117 = vmatprep.subr.mxu0 0.0
        %4118 = vmatpush1.msra.mxu0 %v1108
        %4119 = vmatprep.subr.mxu0 0.0
        %4120 = vmatpush1.msra.mxu0 %v1109
        %4121 = vmatprep.subr.mxu0 0.0
        %4122 = vmatpush1.msra.mxu0 %v1110
        %4123 = vmatprep.subr.mxu0 0.0
        %4124 = vmatpush1.msra.mxu0 %v1111
        %4125 = vmatprep.subr.mxu0 0.0
        %4126 = vmatpush1.msra.mxu0 %v1112
        %4127 = vmatprep.subr.mxu0 0.0
        %4128 = vmatpush1.msra.mxu0 %v1113
        %4129 = vmatprep.subr.mxu0 0.0
        %4130 = vmatpush1.msra.mxu0 %v1114
        %4131 = vmatprep.subr.mxu0 0.0
        %4132 = vmatpush1.msra.mxu0 %v1115
        %4133 = vmatprep.subr.mxu0 0.0
        %4134 = vmatpush1.msra.mxu0 %v1116
        %4135 = vmatprep.subr.mxu0 0.0
        %4136 = vmatpush1.msra.mxu0 %v1117
        %4137 = vmatprep.subr.mxu0 0.0
        %4138 = vmatpush1.msra.mxu0 %v1118
        %4139 = vmatprep.subr.mxu0 0.0
        %4140 = vmatpush1.msra.mxu0 %v1119
        %4141 = vmatprep.subr.mxu0 0.0
        %4142 = vmatpush1.msra.mxu0 %v1120
        %4143 = vmatprep.subr.mxu0 0.0
        %4144 = vmatpush1.msra.mxu0 %v1121
        %4145 = vmatprep.subr.mxu0 0.0
        %4146 = vmatpush1.msra.mxu0 %v1122
        %4147 = vmatprep.subr.mxu0 0.0
        %4148 = vmatpush1.msra.mxu0 %v1123
        %4149 = vmatprep.subr.mxu0 0.0
        %4150 = vmatpush1.msra.mxu0 %v1124
        %4151 = vmatprep.subr.mxu0 0.0
        %4152 = vmatpush1.msra.mxu0 %v1125
        %4153 = vmatprep.subr.mxu0 0.0
        %4154 = vmatpush1.msra.mxu0 %v1126
        %4155 = vmatprep.subr.mxu0 0.0
        %4156 = vmatpush1.msra.mxu0 %v1127
        %4157 = vmatprep.subr.mxu0 0.0
        %4158 = vmatpush1.msra.mxu0 %v1128
        %4159 = vmatprep.mubr.f32.mxu0 %v220
        %4160 = vmatmul.mubr.f32.gmra.mrb[0].mxu0 %v219
        %v4161 = vpop.f32.mrb[0].mxu0
        %v4162 = vadd.f32 %v4092, %v4161
        %v4163 = vpop.f32.mrb[0].mxu0
        %4164 = vdwg.mxu0
        %4165 = vmatprep.subr.mxu0 0.0
        %4166 = vmatpush1.msra.mxu0 %v1129
        %4167 = vmatprep.subr.mxu0 0.0
        %4168 = vmatpush1.msra.mxu0 %v1130
        %4169 = vmatprep.subr.mxu0 0.0
        %4170 = vmatpush1.msra.mxu0 %v1131
        %4171 = vmatprep.subr.mxu0 0.0
        %4172 = vmatpush1.msra.mxu0 %v1132
        %4173 = vmatprep.subr.mxu0 0.0
        %4174 = vmatpush1.msra.mxu0 %v1133
        %4175 = vmatprep.subr.mxu0 0.0
        %4176 = vmatpush1.msra.mxu0 %v1134
        %4177 = vmatprep.subr.mxu0 0.0
        %4178 = vmatpush1.msra.mxu0 %v1135
        %4179 = vmatprep.subr.mxu0 0.0
        %4180 = vmatpush1.msra.mxu0 %v1136
        %4181 = vmatprep.subr.mxu0 0.0
        %4182 = vmatpush1.msra.mxu0 %v1137
        %4183 = vmatprep.subr.mxu0 0.0
        %4184 = vmatpush1.msra.mxu0 %v1138
        %4185 = vmatprep.subr.mxu0 0.0
        %4186 = vmatpush1.msra.mxu0 %v1139
        %4187 = vmatprep.subr.mxu0 0.0
        %4188 = vmatpush1.msra.mxu0 %v1140
        %4189 = vmatprep.subr.mxu0 0.0
        %4190 = vmatpush1.msra.mxu0 %v1141
        %4191 = vmatprep.subr.mxu0 0.0
        %4192 = vmatpush1.msra.mxu0 %v1142
        %4193 = vmatprep.subr.mxu0 0.0
        %4194 = vmatpush1.msra.mxu0 %v1143
        %4195 = vmatprep.subr.mxu0 0.0
        %4196 = vmatpush1.msra.mxu0 %v1144
        %4197 = vmatprep.subr.mxu0 0.0
        %4198 = vmatpush1.msra.mxu0 %v1145
        %4199 = vmatprep.subr.mxu0 0.0
        %4200 = vmatpush1.msra.mxu0 %v1146
        %4201 = vmatprep.subr.mxu0 0.0
        %4202 = vmatpush1.msra.mxu0 %v1147
        %4203 = vmatprep.subr.mxu0 0.0
        %4204 = vmatpush1.msra.mxu0 %v1148
        %4205 = vmatprep.subr.mxu0 0.0
        %4206 = vmatpush1.msra.mxu0 %v1149
        %4207 = vmatprep.subr.mxu0 0.0
        %4208 = vmatpush1.msra.mxu0 %v1150
        %4209 = vmatprep.subr.mxu0 0.0
        %4210 = vmatpush1.msra.mxu0 %v1151
        %4211 = vmatprep.subr.mxu0 0.0
        %4212 = vmatpush1.msra.mxu0 %v1152
        %4213 = vmatprep.subr.mxu0 0.0
        %4214 = vmatpush1.msra.mxu0 %v1153
        %4215 = vmatprep.subr.mxu0 0.0
        %4216 = vmatpush1.msra.mxu0 %v1154
        %4217 = vmatprep.subr.mxu0 0.0
        %4218 = vmatpush1.msra.mxu0 %v1155
        %4219 = vmatprep.subr.mxu0 0.0
        %4220 = vmatpush1.msra.mxu0 %v1156
        %4221 = vmatprep.subr.mxu0 0.0
        %4222 = vmatpush1.msra.mxu0 %v1157
        %4223 = vmatprep.subr.mxu0 0.0
        %4224 = vmatpush1.msra.mxu0 %v1158
        %4225 = vmatprep.subr.mxu0 0.0
        %4226 = vmatpush1.msra.mxu0 %v1159
        %4227 = vmatprep.subr.mxu0 0.0
        %4228 = vmatpush1.msra.mxu0 %v1160
        %4229 = vmatprep.mubr.f32.mxu0 %v222
        %4230 = vmatmul.mubr.f32.gmra.mrb[0].mxu0 %v221
        %v4231 = vpop.f32.mrb[0].mxu0
        %v4232 = vadd.f32 %v4162, %v4231
        %v4233 = vpop.f32.mrb[0].mxu0
        %4234 = vdwg.mxu0
        %4235 = vmatprep.subr.mxu0 0.0
        %4236 = vmatpush1.msra.mxu0 %v1161
        %4237 = vmatprep.subr.mxu0 0.0
        %4238 = vmatpush1.msra.mxu0 %v1162
        %4239 = vmatprep.subr.mxu0 0.0
        %4240 = vmatpush1.msra.mxu0 %v1163
        %4241 = vmatprep.subr.mxu0 0.0
        %4242 = vmatpush1.msra.mxu0 %v1164
        %4243 = vmatprep.subr.mxu0 0.0
        %4244 = vmatpush1.msra.mxu0 %v1165
        %4245 = vmatprep.subr.mxu0 0.0
        %4246 = vmatpush1.msra.mxu0 %v1166
        %4247 = vmatprep.subr.mxu0 0.0
        %4248 = vmatpush1.msra.mxu0 %v1167
        %4249 = vmatprep.subr.mxu0 0.0
        %4250 = vmatpush1.msra.mxu0 %v1168
        %4251 = vmatprep.subr.mxu0 0.0
        %4252 = vmatpush1.msra.mxu0 %v1169
        %4253 = vmatprep.subr.mxu0 0.0
        %4254 = vmatpush1.msra.mxu0 %v1170
        %4255 = vmatprep.subr.mxu0 0.0
        %4256 = vmatpush1.msra.mxu0 %v1171
        %4257 = vmatprep.subr.mxu0 0.0
        %4258 = vmatpush1.msra.mxu0 %v1172
        %4259 = vmatprep.subr.mxu0 0.0
        %4260 = vmatpush1.msra.mxu0 %v1173
        %4261 = vmatprep.subr.mxu0 0.0
        %4262 = vmatpush1.msra.mxu0 %v1174
        %4263 = vmatprep.subr.mxu0 0.0
        %4264 = vmatpush1.msra.mxu0 %v1175
        %4265 = vmatprep.subr.mxu0 0.0
        %4266 = vmatpush1.msra.mxu0 %v1176
        %4267 = vmatprep.subr.mxu0 0.0
        %4268 = vmatpush1.msra.mxu0 %v1177
        %4269 = vmatprep.subr.mxu0 0.0
        %4270 = vmatpush1.msra.mxu0 %v1178
        %4271 = vmatprep.subr.mxu0 0.0
        %4272 = vmatpush1.msra.mxu0 %v1179
        %4273 = vmatprep.subr.mxu0 0.0
        %4274 = vmatpush1.msra.mxu0 %v1180
        %4275 = vmatprep.subr.mxu0 0.0
        %4276 = vmatpush1.msra.mxu0 %v1181
        %4277 = vmatprep.subr.mxu0 0.0
        %4278 = vmatpush1.msra.mxu0 %v1182
        %4279 = vmatprep.subr.mxu0 0.0
        %4280 = vmatpush1.msra.mxu0 %v1183
        %4281 = vmatprep.subr.mxu0 0.0
        %4282 = vmatpush1.msra.mxu0 %v1184
        %4283 = vmatprep.subr.mxu0 0.0
        %4284 = vmatpush1.msra.mxu0 %v1185
        %4285 = vmatprep.subr.mxu0 0.0
        %4286 = vmatpush1.msra.mxu0 %v1186
        %4287 = vmatprep.subr.mxu0 0.0
        %4288 = vmatpush1.msra.mxu0 %v1187
        %4289 = vmatprep.subr.mxu0 0.0
        %4290 = vmatpush1.msra.mxu0 %v1188
        %4291 = vmatprep.subr.mxu0 0.0
        %4292 = vmatpush1.msra.mxu0 %v1189
        %4293 = vmatprep.subr.mxu0 0.0
        %4294 = vmatpush1.msra.mxu0 %v1190
        %4295 = vmatprep.subr.mxu0 0.0
        %4296 = vmatpush1.msra.mxu0 %v1191
        %4297 = vmatprep.subr.mxu0 0.0
        %4298 = vmatpush1.msra.mxu0 %v1192
        %4299 = vmatprep.mubr.f32.mxu0 %v224
        %4300 = vmatmul.mubr.f32.gmra.mrb[0].mxu0 %v223
        %v4301 = vpop.f32.mrb[0].mxu0
        %v4302 = vadd.f32 %v4232, %v4301
        %v4303 = vpop.f32.mrb[0].mxu0
        %4304 = vdwg.mxu0
        %4305 = vmatprep.subr.mxu0 0.0
        %4306 = vmatpush1.msra.mxu0 %v1193
        %4307 = vmatprep.subr.mxu0 0.0
        %4308 = vmatpush1.msra.mxu0 %v1194
        %4309 = vmatprep.subr.mxu0 0.0
        %4310 = vmatpush1.msra.mxu0 %v1195
        %4311 = vmatprep.subr.mxu0 0.0
        %4312 = vmatpush1.msra.mxu0 %v1196
        %4313 = vmatprep.subr.mxu0 0.0
        %4314 = vmatpush1.msra.mxu0 %v1197
        %4315 = vmatprep.subr.mxu0 0.0
        %4316 = vmatpush1.msra.mxu0 %v1198
        %4317 = vmatprep.subr.mxu0 0.0
        %4318 = vmatpush1.msra.mxu0 %v1199
        %4319 = vmatprep.subr.mxu0 0.0
        %4320 = vmatpush1.msra.mxu0 %v1200
        %4321 = vmatprep.subr.mxu0 0.0
        %4322 = vmatpush1.msra.mxu0 %v1201
        %4323 = vmatprep.subr.mxu0 0.0
        %4324 = vmatpush1.msra.mxu0 %v1202
        %4325 = vmatprep.subr.mxu0 0.0
        %4326 = vmatpush1.msra.mxu0 %v1203
        %4327 = vmatprep.subr.mxu0 0.0
        %4328 = vmatpush1.msra.mxu0 %v1204
        %4329 = vmatprep.subr.mxu0 0.0
        %4330 = vmatpush1.msra.mxu0 %v1205
        %4331 = vmatprep.subr.mxu0 0.0
        %4332 = vmatpush1.msra.mxu0 %v1206
        %4333 = vmatprep.subr.mxu0 0.0
        %4334 = vmatpush1.msra.mxu0 %v1207
        %4335 = vmatprep.subr.mxu0 0.0
        %4336 = vmatpush1.msra.mxu0 %v1208
        %4337 = vmatprep.subr.mxu0 0.0
        %4338 = vmatpush1.msra.mxu0 %v1209
        %4339 = vmatprep.subr.mxu0 0.0
        %4340 = vmatpush1.msra.mxu0 %v1210
        %4341 = vmatprep.subr.mxu0 0.0
        %4342 = vmatpush1.msra.mxu0 %v1211
        %4343 = vmatprep.subr.mxu0 0.0
        %4344 = vmatpush1.msra.mxu0 %v1212
        %4345 = vmatprep.subr.mxu0 0.0
        %4346 = vmatpush1.msra.mxu0 %v1213
        %4347 = vmatprep.subr.mxu0 0.0
        %4348 = vmatpush1.msra.mxu0 %v1214
        %4349 = vmatprep.subr.mxu0 0.0
        %4350 = vmatpush1.msra.mxu0 %v1215
        %4351 = vmatprep.subr.mxu0 0.0
        %4352 = vmatpush1.msra.mxu0 %v1216
        %4353 = vmatprep.subr.mxu0 0.0
        %4354 = vmatpush1.msra.mxu0 %v1217
        %4355 = vmatprep.subr.mxu0 0.0
        %4356 = vmatpush1.msra.mxu0 %v1218
        %4357 = vmatprep.subr.mxu0 0.0
        %4358 = vmatpush1.msra.mxu0 %v1219
        %4359 = vmatprep.subr.mxu0 0.0
        %4360 = vmatpush1.msra.mxu0 %v1220
        %4361 = vmatprep.subr.mxu0 0.0
        %4362 = vmatpush1.msra.mxu0 %v1221
        %4363 = vmatprep.subr.mxu0 0.0
        %4364 = vmatpush1.msra.mxu0 %v1222
        %4365 = vmatprep.subr.mxu0 0.0
        %4366 = vmatpush1.msra.mxu0 %v1223
        %4367 = vmatprep.subr.mxu0 0.0
        %4368 = vmatpush1.msra.mxu0 %v1224
        %4369 = vmatprep.mubr.f32.mxu0 %v226
        %4370 = vmatmul.mubr.f32.gmra.mrb[0].mxu0 %v225
        %v4371 = vpop.f32.mrb[0].mxu0
        %v4372 = vadd.f32 %v4302, %v4371
        %v4373 = vpop.f32.mrb[0].mxu0
        %4374 = vdwg.mxu0
        %4375 = vmatprep.subr.mxu0 0.0
        %4376 = vmatpush1.msra.mxu0 %v1225
        %4377 = vmatprep.subr.mxu0 0.0
        %4378 = vmatpush1.msra.mxu0 %v1226
        %4379 = vmatprep.subr.mxu0 0.0
        %4380 = vmatpush1.msra.mxu0 %v1227
        %4381 = vmatprep.subr.mxu0 0.0
        %4382 = vmatpush1.msra.mxu0 %v1228
        %4383 = vmatprep.subr.mxu0 0.0
        %4384 = vmatpush1.msra.mxu0 %v1229
        %4385 = vmatprep.subr.mxu0 0.0
        %4386 = vmatpush1.msra.mxu0 %v1230
        %4387 = vmatprep.subr.mxu0 0.0
        %4388 = vmatpush1.msra.mxu0 %v1231
        %4389 = vmatprep.subr.mxu0 0.0
        %4390 = vmatpush1.msra.mxu0 %v1232
        %4391 = vmatprep.subr.mxu0 0.0
        %4392 = vmatpush1.msra.mxu0 %v1233
        %4393 = vmatprep.subr.mxu0 0.0
        %4394 = vmatpush1.msra.mxu0 %v1234
        %4395 = vmatprep.subr.mxu0 0.0
        %4396 = vmatpush1.msra.mxu0 %v1235
        %4397 = vmatprep.subr.mxu0 0.0
        %4398 = vmatpush1.msra.mxu0 %v1236
        %4399 = vmatprep.subr.mxu0 0.0
        %4400 = vmatpush1.msra.mxu0 %v1237
        %4401 = vmatprep.subr.mxu0 0.0
        %4402 = vmatpush1.msra.mxu0 %v1238
        %4403 = vmatprep.subr.mxu0 0.0
        %4404 = vmatpush1.msra.mxu0 %v1239
        %4405 = vmatprep.subr.mxu0 0.0
        %4406 = vmatpush1.msra.mxu0 %v1240
        %4407 = vmatprep.subr.mxu0 0.0
        %4408 = vmatpush1.msra.mxu0 %v1241
        %4409 = vmatprep.subr.mxu0 0.0
        %4410 = vmatpush1.msra.mxu0 %v1242
        %4411 = vmatprep.subr.mxu0 0.0
        %4412 = vmatpush1.msra.mxu0 %v1243
        %4413 = vmatprep.subr.mxu0 0.0
        %4414 = vmatpush1.msra.mxu0 %v1244
        %4415 = vmatprep.subr.mxu0 0.0
        %4416 = vmatpush1.msra.mxu0 %v1245
        %4417 = vmatprep.subr.mxu0 0.0
        %4418 = vmatpush1.msra.mxu0 %v1246
        %4419 = vmatprep.subr.mxu0 0.0
        %4420 = vmatpush1.msra.mxu0 %v1247
        %4421 = vmatprep.subr.mxu0 0.0
        %4422 = vmatpush1.msra.mxu0 %v1248
        %4423 = vmatprep.subr.mxu0 0.0
        %4424 = vmatpush1.msra.mxu0 %v1249
        %4425 = vmatprep.subr.mxu0 0.0
        %4426 = vmatpush1.msra.mxu0 %v1250
        %4427 = vmatprep.subr.mxu0 0.0
        %4428 = vmatpush1.msra.mxu0 %v1251
        %4429 = vmatprep.subr.mxu0 0.0
        %4430 = vmatpush1.msra.mxu0 %v1252
        %4431 = vmatprep.subr.mxu0 0.0
        %4432 = vmatpush1.msra.mxu0 %v1253
        %4433 = vmatprep.subr.mxu0 0.0
        %4434 = vmatpush1.msra.mxu0 %v1254
        %4435 = vmatprep.subr.mxu0 0.0
        %4436 = vmatpush1.msra.mxu0 %v1255
        %4437 = vmatprep.subr.mxu0 0.0
        %4438 = vmatpush1.msra.mxu0 %v1256
        %4439 = vmatprep.mubr.f32.mxu0 %v228
        %4440 = vmatmul.mubr.f32.gmra.mrb[0].mxu0 %v227
        %v4441 = vpop.f32.mrb[0].mxu0
        %v4442 = vadd.f32 %v4372, %v4441
        %v4443 = vpop.f32.mrb[0].mxu0
        %4444 = vdwg.mxu0
        %4445 = vmatprep.subr.mxu0 0.0
        %4446 = vmatpush1.msra.mxu0 %v1257
        %4447 = vmatprep.subr.mxu0 0.0
        %4448 = vmatpush1.msra.mxu0 %v1258
        %4449 = vmatprep.subr.mxu0 0.0
        %4450 = vmatpush1.msra.mxu0 %v1259
        %4451 = vmatprep.subr.mxu0 0.0
        %4452 = vmatpush1.msra.mxu0 %v1260
        %4453 = vmatprep.subr.mxu0 0.0
        %4454 = vmatpush1.msra.mxu0 %v1261
        %4455 = vmatprep.subr.mxu0 0.0
        %4456 = vmatpush1.msra.mxu0 %v1262
        %4457 = vmatprep.subr.mxu0 0.0
        %4458 = vmatpush1.msra.mxu0 %v1263
        %4459 = vmatprep.subr.mxu0 0.0
        %4460 = vmatpush1.msra.mxu0 %v1264
        %4461 = vmatprep.subr.mxu0 0.0
        %4462 = vmatpush1.msra.mxu0 %v1265
        %4463 = vmatprep.subr.mxu0 0.0
        %4464 = vmatpush1.msra.mxu0 %v1266
        %4465 = vmatprep.subr.mxu0 0.0
        %4466 = vmatpush1.msra.mxu0 %v1267
        %4467 = vmatprep.subr.mxu0 0.0
        %4468 = vmatpush1.msra.mxu0 %v1268
        %4469 = vmatprep.subr.mxu0 0.0
        %4470 = vmatpush1.msra.mxu0 %v1269
        %4471 = vmatprep.subr.mxu0 0.0
        %4472 = vmatpush1.msra.mxu0 %v1270
        %4473 = vmatprep.subr.mxu0 0.0
        %4474 = vmatpush1.msra.mxu0 %v1271
        %4475 = vmatprep.subr.mxu0 0.0
        %4476 = vmatpush1.msra.mxu0 %v1272
        %4477 = vmatprep.subr.mxu0 0.0
        %4478 = vmatpush1.msra.mxu0 %v1273
        %4479 = vmatprep.subr.mxu0 0.0
        %4480 = vmatpush1.msra.mxu0 %v1274
        %4481 = vmatprep.subr.mxu0 0.0
        %4482 = vmatpush1.msra.mxu0 %v1275
        %4483 = vmatprep.subr.mxu0 0.0
        %4484 = vmatpush1.msra.mxu0 %v1276
        %4485 = vmatprep.subr.mxu0 0.0
        %4486 = vmatpush1.msra.mxu0 %v1277
        %4487 = vmatprep.subr.mxu0 0.0
        %4488 = vmatpush1.msra.mxu0 %v1278
        %4489 = vmatprep.subr.mxu0 0.0
        %4490 = vmatpush1.msra.mxu0 %v1279
        %4491 = vmatprep.subr.mxu0 0.0
        %4492 = vmatpush1.msra.mxu0 %v1280
        %4493 = vmatprep.subr.mxu0 0.0
        %4494 = vmatpush1.msra.mxu0 %v1281
        %4495 = vmatprep.subr.mxu0 0.0
        %4496 = vmatpush1.msra.mxu0 %v1282
        %4497 = vmatprep.subr.mxu0 0.0
        %4498 = vmatpush1.msra.mxu0 %v1283
        %4499 = vmatprep.subr.mxu0 0.0
        %4500 = vmatpush1.msra.mxu0 %v1284
        %4501 = vmatprep.subr.mxu0 0.0
        %4502 = vmatpush1.msra.mxu0 %v1285
        %4503 = vmatprep.subr.mxu0 0.0
        %4504 = vmatpush1.msra.mxu0 %v1286
        %4505 = vmatprep.subr.mxu0 0.0
        %4506 = vmatpush1.msra.mxu0 %v1287
        %4507 = vmatprep.subr.mxu0 0.0
        %4508 = vmatpush1.msra.mxu0 %v1288
        %4509 = vmatprep.mubr.f32.mxu0 %v230
        %4510 = vmatmul.mubr.f32.gmra.mrb[0].mxu0 %v229
        %v4511 = vpop.f32.mrb[0].mxu0
        %v4512 = vadd.f32 %v4442, %v4511
        %v4513 = vpop.f32.mrb[0].mxu0
        %4514 = vdwg.mxu0
        %4515 = vmatprep.subr.mxu0 0.0
        %4516 = vmatpush1.msra.mxu0 %v1289
        %4517 = vmatprep.subr.mxu0 0.0
        %4518 = vmatpush1.msra.mxu0 %v1290
        %4519 = vmatprep.subr.mxu0 0.0
        %4520 = vmatpush1.msra.mxu0 %v1291
        %4521 = vmatprep.subr.mxu0 0.0
        %4522 = vmatpush1.msra.mxu0 %v1292
        %4523 = vmatprep.subr.mxu0 0.0
        %4524 = vmatpush1.msra.mxu0 %v1293
        %4525 = vmatprep.subr.mxu0 0.0
        %4526 = vmatpush1.msra.mxu0 %v1294
        %4527 = vmatprep.subr.mxu0 0.0
        %4528 = vmatpush1.msra.mxu0 %v1295
        %4529 = vmatprep.subr.mxu0 0.0
        %4530 = vmatpush1.msra.mxu0 %v1296
        %4531 = vmatprep.subr.mxu0 0.0
        %4532 = vmatpush1.msra.mxu0 %v1297
        %4533 = vmatprep.subr.mxu0 0.0
        %4534 = vmatpush1.msra.mxu0 %v1298
        %4535 = vmatprep.subr.mxu0 0.0
        %4536 = vmatpush1.msra.mxu0 %v1299
        %4537 = vmatprep.subr.mxu0 0.0
        %4538 = vmatpush1.msra.mxu0 %v1300
        %4539 = vmatprep.subr.mxu0 0.0
        %4540 = vmatpush1.msra.mxu0 %v1301
        %4541 = vmatprep.subr.mxu0 0.0
        %4542 = vmatpush1.msra.mxu0 %v1302
        %4543 = vmatprep.subr.mxu0 0.0
        %4544 = vmatpush1.msra.mxu0 %v1303
        %4545 = vmatprep.subr.mxu0 0.0
        %4546 = vmatpush1.msra.mxu0 %v1304
        %4547 = vmatprep.subr.mxu0 0.0
        %4548 = vmatpush1.msra.mxu0 %v1305
        %4549 = vmatprep.subr.mxu0 0.0
        %4550 = vmatpush1.msra.mxu0 %v1306
        %4551 = vmatprep.subr.mxu0 0.0
        %4552 = vmatpush1.msra.mxu0 %v1307
        %4553 = vmatprep.subr.mxu0 0.0
        %4554 = vmatpush1.msra.mxu0 %v1308
        %4555 = vmatprep.subr.mxu0 0.0
        %4556 = vmatpush1.msra.mxu0 %v1309
        %4557 = vmatprep.subr.mxu0 0.0
        %4558 = vmatpush1.msra.mxu0 %v1310
        %4559 = vmatprep.subr.mxu0 0.0
        %4560 = vmatpush1.msra.mxu0 %v1311
        %4561 = vmatprep.subr.mxu0 0.0
        %4562 = vmatpush1.msra.mxu0 %v1312
        %4563 = vmatprep.subr.mxu0 0.0
        %4564 = vmatpush1.msra.mxu0 %v1313
        %4565 = vmatprep.subr.mxu0 0.0
        %4566 = vmatpush1.msra.mxu0 %v1314
        %4567 = vmatprep.subr.mxu0 0.0
        %4568 = vmatpush1.msra.mxu0 %v1315
        %4569 = vmatprep.subr.mxu0 0.0
        %4570 = vmatpush1.msra.mxu0 %v1316
        %4571 = vmatprep.subr.mxu0 0.0
        %4572 = vmatpush1.msra.mxu0 %v1317
        %4573 = vmatprep.subr.mxu0 0.0
        %4574 = vmatpush1.msra.mxu0 %v1318
        %4575 = vmatprep.subr.mxu0 0.0
        %4576 = vmatpush1.msra.mxu0 %v1319
        %4577 = vmatprep.subr.mxu0 0.0
        %4578 = vmatpush1.msra.mxu0 %v1320
        %4579 = vmatprep.mubr.f32.mxu0 %v232
        %4580 = vmatmul.mubr.f32.gmra.mrb[0].mxu0 %v231
        %v4581 = vpop.f32.mrb[0].mxu0
        %v4582 = vadd.f32 %v4512, %v4581
        %v4583 = vpop.f32.mrb[0].mxu0
        %4584 = vdwg.mxu0
        %4585 = vmatprep.subr.mxu0 0.0
        %4586 = vmatpush1.msra.mxu0 %v1321
        %4587 = vmatprep.subr.mxu0 0.0
        %4588 = vmatpush1.msra.mxu0 %v1322
        %4589 = vmatprep.subr.mxu0 0.0
        %4590 = vmatpush1.msra.mxu0 %v1323
        %4591 = vmatprep.subr.mxu0 0.0
        %4592 = vmatpush1.msra.mxu0 %v1324
        %4593 = vmatprep.subr.mxu0 0.0
        %4594 = vmatpush1.msra.mxu0 %v1325
        %4595 = vmatprep.subr.mxu0 0.0
        %4596 = vmatpush1.msra.mxu0 %v1326
        %4597 = vmatprep.subr.mxu0 0.0
        %4598 = vmatpush1.msra.mxu0 %v1327
        %4599 = vmatprep.subr.mxu0 0.0
        %4600 = vmatpush1.msra.mxu0 %v1328
        %4601 = vmatprep.subr.mxu0 0.0
        %4602 = vmatpush1.msra.mxu0 %v1329
        %4603 = vmatprep.subr.mxu0 0.0
        %4604 = vmatpush1.msra.mxu0 %v1330
        %4605 = vmatprep.subr.mxu0 0.0
        %4606 = vmatpush1.msra.mxu0 %v1331
        %4607 = vmatprep.subr.mxu0 0.0
        %4608 = vmatpush1.msra.mxu0 %v1332
        %4609 = vmatprep.subr.mxu0 0.0
        %4610 = vmatpush1.msra.mxu0 %v1333
        %4611 = vmatprep.subr.mxu0 0.0
        %4612 = vmatpush1.msra.mxu0 %v1334
        %4613 = vmatprep.subr.mxu0 0.0
        %4614 = vmatpush1.msra.mxu0 %v1335
        %4615 = vmatprep.subr.mxu0 0.0
        %4616 = vmatpush1.msra.mxu0 %v1336
        %4617 = vmatprep.subr.mxu0 0.0
        %4618 = vmatpush1.msra.mxu0 %v1337
        %4619 = vmatprep.subr.mxu0 0.0
        %4620 = vmatpush1.msra.mxu0 %v1338
        %4621 = vmatprep.subr.mxu0 0.0
        %4622 = vmatpush1.msra.mxu0 %v1339
        %4623 = vmatprep.subr.mxu0 0.0
        %4624 = vmatpush1.msra.mxu0 %v1340
        %4625 = vmatprep.subr.mxu0 0.0
        %4626 = vmatpush1.msra.mxu0 %v1341
        %4627 = vmatprep.subr.mxu0 0.0
        %4628 = vmatpush1.msra.mxu0 %v1342
        %4629 = vmatprep.subr.mxu0 0.0
        %4630 = vmatpush1.msra.mxu0 %v1343
        %4631 = vmatprep.subr.mxu0 0.0
        %4632 = vmatpush1.msra.mxu0 %v1344
        %4633 = vmatprep.subr.mxu0 0.0
        %4634 = vmatpush1.msra.mxu0 %v1345
        %4635 = vmatprep.subr.mxu0 0.0
        %4636 = vmatpush1.msra.mxu0 %v1346
        %4637 = vmatprep.subr.mxu0 0.0
        %4638 = vmatpush1.msra.mxu0 %v1347
        %4639 = vmatprep.subr.mxu0 0.0
        %4640 = vmatpush1.msra.mxu0 %v1348
        %4641 = vmatprep.subr.mxu0 0.0
        %4642 = vmatpush1.msra.mxu0 %v1349
        %4643 = vmatprep.subr.mxu0 0.0
        %4644 = vmatpush1.msra.mxu0 %v1350
        %4645 = vmatprep.subr.mxu0 0.0
        %4646 = vmatpush1.msra.mxu0 %v1351
        %4647 = vmatprep.subr.mxu0 0.0
        %4648 = vmatpush1.msra.mxu0 %v1352
        %4649 = vmatprep.mubr.f32.mxu0 %v234
        %4650 = vmatmul.mubr.f32.gmra.mrb[0].mxu0 %v233
        %v4651 = vpop.f32.mrb[0].mxu0
        %v4652 = vadd.f32 %v4582, %v4651
        %v4653 = vpop.f32.mrb[0].mxu0
        %4654 = vdwg.mxu0
        %4655 = vmatprep.subr.mxu0 0.0
        %4656 = vmatpush1.msra.mxu0 %v1353
        %4657 = vmatprep.subr.mxu0 0.0
        %4658 = vmatpush1.msra.mxu0 %v1354
        %4659 = vmatprep.subr.mxu0 0.0
        %4660 = vmatpush1.msra.mxu0 %v1355
        %4661 = vmatprep.subr.mxu0 0.0
        %4662 = vmatpush1.msra.mxu0 %v1356
        %4663 = vmatprep.subr.mxu0 0.0
        %4664 = vmatpush1.msra.mxu0 %v1357
        %4665 = vmatprep.subr.mxu0 0.0
        %4666 = vmatpush1.msra.mxu0 %v1358
        %4667 = vmatprep.subr.mxu0 0.0
        %4668 = vmatpush1.msra.mxu0 %v1359
        %4669 = vmatprep.subr.mxu0 0.0
        %4670 = vmatpush1.msra.mxu0 %v1360
        %4671 = vmatprep.subr.mxu0 0.0
        %4672 = vmatpush1.msra.mxu0 %v1361
        %4673 = vmatprep.subr.mxu0 0.0
        %4674 = vmatpush1.msra.mxu0 %v1362
        %4675 = vmatprep.subr.mxu0 0.0
        %4676 = vmatpush1.msra.mxu0 %v1363
        %4677 = vmatprep.subr.mxu0 0.0
        %4678 = vmatpush1.msra.mxu0 %v1364
        %4679 = vmatprep.subr.mxu0 0.0
        %4680 = vmatpush1.msra.mxu0 %v1365
        %4681 = vmatprep.subr.mxu0 0.0
        %4682 = vmatpush1.msra.mxu0 %v1366
        %4683 = vmatprep.subr.mxu0 0.0
        %4684 = vmatpush1.msra.mxu0 %v1367
        %4685 = vmatprep.subr.mxu0 0.0
        %4686 = vmatpush1.msra.mxu0 %v1368
        %4687 = vmatprep.subr.mxu0 0.0
        %4688 = vmatpush1.msra.mxu0 %v1369
        %4689 = vmatprep.subr.mxu0 0.0
        %4690 = vmatpush1.msra.mxu0 %v1370
        %4691 = vmatprep.subr.mxu0 0.0
        %4692 = vmatpush1.msra.mxu0 %v1371
        %4693 = vmatprep.subr.mxu0 0.0
        %4694 = vmatpush1.msra.mxu0 %v1372
        %4695 = vmatprep.subr.mxu0 0.0
        %4696 = vmatpush1.msra.mxu0 %v1373
        %4697 = vmatprep.subr.mxu0 0.0
        %4698 = vmatpush1.msra.mxu0 %v1374
        %4699 = vmatprep.subr.mxu0 0.0
        %4700 = vmatpush1.msra.mxu0 %v1375
        %4701 = vmatprep.subr.mxu0 0.0
        %4702 = vmatpush1.msra.mxu0 %v1376
        %4703 = vmatprep.subr.mxu0 0.0
        %4704 = vmatpush1.msra.mxu0 %v1377
        %4705 = vmatprep.subr.mxu0 0.0
        %4706 = vmatpush1.msra.mxu0 %v1378
        %4707 = vmatprep.subr.mxu0 0.0
        %4708 = vmatpush1.msra.mxu0 %v1379
        %4709 = vmatprep.subr.mxu0 0.0
        %4710 = vmatpush1.msra.mxu0 %v1380
        %4711 = vmatprep.subr.mxu0 0.0
        %4712 = vmatpush1.msra.mxu0 %v1381
        %4713 = vmatprep.subr.mxu0 0.0
        %4714 = vmatpush1.msra.mxu0 %v1382
        %4715 = vmatprep.subr.mxu0 0.0
        %4716 = vmatpush1.msra.mxu0 %v1383
        %4717 = vmatprep.subr.mxu0 0.0
        %4718 = vmatpush1.msra.mxu0 %v1384
        %4719 = vmatprep.mubr.f32.mxu0 %v236
        %4720 = vmatmul.mubr.f32.gmra.mrb[0].mxu0 %v235
        %v4721 = vpop.f32.mrb[0].mxu0
        %v4722 = vadd.f32 %v4652, %v4721
        %v4723 = vpop.f32.mrb[0].mxu0
        %4724 = vdwg.mxu0
        %4725 = vmatprep.subr.mxu0 0.0
        %4726 = vmatpush1.msra.mxu0 %v1385
        %4727 = vmatprep.subr.mxu0 0.0
        %4728 = vmatpush1.msra.mxu0 %v1386
        %4729 = vmatprep.subr.mxu0 0.0
        %4730 = vmatpush1.msra.mxu0 %v1387
        %4731 = vmatprep.subr.mxu0 0.0
        %4732 = vmatpush1.msra.mxu0 %v1388
        %4733 = vmatprep.subr.mxu0 0.0
        %4734 = vmatpush1.msra.mxu0 %v1389
        %4735 = vmatprep.subr.mxu0 0.0
        %4736 = vmatpush1.msra.mxu0 %v1390
        %4737 = vmatprep.subr.mxu0 0.0
        %4738 = vmatpush1.msra.mxu0 %v1391
        %4739 = vmatprep.subr.mxu0 0.0
        %4740 = vmatpush1.msra.mxu0 %v1392
        %4741 = vmatprep.subr.mxu0 0.0
        %4742 = vmatpush1.msra.mxu0 %v1393
        %4743 = vmatprep.subr.mxu0 0.0
        %4744 = vmatpush1.msra.mxu0 %v1394
        %4745 = vmatprep.subr.mxu0 0.0
        %4746 = vmatpush1.msra.mxu0 %v1395
        %4747 = vmatprep.subr.mxu0 0.0
        %4748 = vmatpush1.msra.mxu0 %v1396
        %4749 = vmatprep.subr.mxu0 0.0
        %4750 = vmatpush1.msra.mxu0 %v1397
        %4751 = vmatprep.subr.mxu0 0.0
        %4752 = vmatpush1.msra.mxu0 %v1398
        %4753 = vmatprep.subr.mxu0 0.0
        %4754 = vmatpush1.msra.mxu0 %v1399
        %4755 = vmatprep.subr.mxu0 0.0
        %4756 = vmatpush1.msra.mxu0 %v1400
        %4757 = vmatprep.subr.mxu0 0.0
        %4758 = vmatpush1.msra.mxu0 %v1401
        %4759 = vmatprep.subr.mxu0 0.0
        %4760 = vmatpush1.msra.mxu0 %v1402
        %4761 = vmatprep.subr.mxu0 0.0
        %4762 = vmatpush1.msra.mxu0 %v1403
        %4763 = vmatprep.subr.mxu0 0.0
        %4764 = vmatpush1.msra.mxu0 %v1404
        %4765 = vmatprep.subr.mxu0 0.0
        %4766 = vmatpush1.msra.mxu0 %v1405
        %4767 = vmatprep.subr.mxu0 0.0
        %4768 = vmatpush1.msra.mxu0 %v1406
        %4769 = vmatprep.subr.mxu0 0.0
        %4770 = vmatpush1.msra.mxu0 %v1407
        %4771 = vmatprep.subr.mxu0 0.0
        %4772 = vmatpush1.msra.mxu0 %v1408
        %4773 = vmatprep.subr.mxu0 0.0
        %4774 = vmatpush1.msra.mxu0 %v1409
        %4775 = vmatprep.subr.mxu0 0.0
        %4776 = vmatpush1.msra.mxu0 %v1410
        %4777 = vmatprep.subr.mxu0 0.0
        %4778 = vmatpush1.msra.mxu0 %v1411
        %4779 = vmatprep.subr.mxu0 0.0
        %4780 = vmatpush1.msra.mxu0 %v1412
        %4781 = vmatprep.subr.mxu0 0.0
        %4782 = vmatpush1.msra.mxu0 %v1413
        %4783 = vmatprep.subr.mxu0 0.0
        %4784 = vmatpush1.msra.mxu0 %v1414
        %4785 = vmatprep.subr.mxu0 0.0
        %4786 = vmatpush1.msra.mxu0 %v1415
        %4787 = vmatprep.subr.mxu0 0.0
        %4788 = vmatpush1.msra.mxu0 %v1416
        %4789 = vmatprep.mubr.f32.mxu0 %v238
        %4790 = vmatmul.mubr.f32.gmra.mrb[0].mxu0 %v237
        %v4791 = vpop.f32.mrb[0].mxu0
        %v4792 = vadd.f32 %v4722, %v4791
        %v4793 = vpop.f32.mrb[0].mxu0
        %4794 = vdwg.mxu0
        %4795 = vmatprep.subr.mxu0 0.0
        %4796 = vmatpush1.msra.mxu0 %v1417
        %4797 = vmatprep.subr.mxu0 0.0
        %4798 = vmatpush1.msra.mxu0 %v1418
        %4799 = vmatprep.subr.mxu0 0.0
        %4800 = vmatpush1.msra.mxu0 %v1419
        %4801 = vmatprep.subr.mxu0 0.0
        %4802 = vmatpush1.msra.mxu0 %v1420
        %4803 = vmatprep.subr.mxu0 0.0
        %4804 = vmatpush1.msra.mxu0 %v1421
        %4805 = vmatprep.subr.mxu0 0.0
        %4806 = vmatpush1.msra.mxu0 %v1422
        %4807 = vmatprep.subr.mxu0 0.0
        %4808 = vmatpush1.msra.mxu0 %v1423
        %4809 = vmatprep.subr.mxu0 0.0
        %4810 = vmatpush1.msra.mxu0 %v1424
        %4811 = vmatprep.subr.mxu0 0.0
        %4812 = vmatpush1.msra.mxu0 %v1425
        %4813 = vmatprep.subr.mxu0 0.0
        %4814 = vmatpush1.msra.mxu0 %v1426
        %4815 = vmatprep.subr.mxu0 0.0
        %4816 = vmatpush1.msra.mxu0 %v1427
        %4817 = vmatprep.subr.mxu0 0.0
        %4818 = vmatpush1.msra.mxu0 %v1428
        %4819 = vmatprep.subr.mxu0 0.0
        %4820 = vmatpush1.msra.mxu0 %v1429
        %4821 = vmatprep.subr.mxu0 0.0
        %4822 = vmatpush1.msra.mxu0 %v1430
        %4823 = vmatprep.subr.mxu0 0.0
        %4824 = vmatpush1.msra.mxu0 %v1431
        %4825 = vmatprep.subr.mxu0 0.0
        %4826 = vmatpush1.msra.mxu0 %v1432
        %4827 = vmatprep.subr.mxu0 0.0
        %4828 = vmatpush1.msra.mxu0 %v1433
        %4829 = vmatprep.subr.mxu0 0.0
        %4830 = vmatpush1.msra.mxu0 %v1434
        %4831 = vmatprep.subr.mxu0 0.0
        %4832 = vmatpush1.msra.mxu0 %v1435
        %4833 = vmatprep.subr.mxu0 0.0
        %4834 = vmatpush1.msra.mxu0 %v1436
        %4835 = vmatprep.subr.mxu0 0.0
        %4836 = vmatpush1.msra.mxu0 %v1437
        %4837 = vmatprep.subr.mxu0 0.0
        %4838 = vmatpush1.msra.mxu0 %v1438
        %4839 = vmatprep.subr.mxu0 0.0
        %4840 = vmatpush1.msra.mxu0 %v1439
        %4841 = vmatprep.subr.mxu0 0.0
        %4842 = vmatpush1.msra.mxu0 %v1440
        %4843 = vmatprep.subr.mxu0 0.0
        %4844 = vmatpush1.msra.mxu0 %v1441
        %4845 = vmatprep.subr.mxu0 0.0
        %4846 = vmatpush1.msra.mxu0 %v1442
        %4847 = vmatprep.subr.mxu0 0.0
        %4848 = vmatpush1.msra.mxu0 %v1443
        %4849 = vmatprep.subr.mxu0 0.0
        %4850 = vmatpush1.msra.mxu0 %v1444
        %4851 = vmatprep.subr.mxu0 0.0
        %4852 = vmatpush1.msra.mxu0 %v1445
        %4853 = vmatprep.subr.mxu0 0.0
        %4854 = vmatpush1.msra.mxu0 %v1446
        %4855 = vmatprep.subr.mxu0 0.0
        %4856 = vmatpush1.msra.mxu0 %v1447
        %4857 = vmatprep.subr.mxu0 0.0
        %4858 = vmatpush1.msra.mxu0 %v1448
        %4859 = vmatprep.mubr.f32.mxu0 %v240
        %4860 = vmatmul.mubr.f32.gmra.mrb[0].mxu0 %v239
        %v4861 = vpop.f32.mrb[0].mxu0
        %v4862 = vadd.f32 %v4792, %v4861
        %v4863 = vpop.f32.mrb[0].mxu0
        %4864 = vdwg.mxu0
        %4865 = vmatprep.subr.mxu0 0.0
        %4866 = vmatpush1.msra.mxu0 %v1449
        %4867 = vmatprep.subr.mxu0 0.0
        %4868 = vmatpush1.msra.mxu0 %v1450
        %4869 = vmatprep.subr.mxu0 0.0
        %4870 = vmatpush1.msra.mxu0 %v1451
        %4871 = vmatprep.subr.mxu0 0.0
        %4872 = vmatpush1.msra.mxu0 %v1452
        %4873 = vmatprep.subr.mxu0 0.0
        %4874 = vmatpush1.msra.mxu0 %v1453
        %4875 = vmatprep.subr.mxu0 0.0
        %4876 = vmatpush1.msra.mxu0 %v1454
        %4877 = vmatprep.subr.mxu0 0.0
        %4878 = vmatpush1.msra.mxu0 %v1455
        %4879 = vmatprep.subr.mxu0 0.0
        %4880 = vmatpush1.msra.mxu0 %v1456
        %4881 = vmatprep.subr.mxu0 0.0
        %4882 = vmatpush1.msra.mxu0 %v1457
        %4883 = vmatprep.subr.mxu0 0.0
        %4884 = vmatpush1.msra.mxu0 %v1458
        %4885 = vmatprep.subr.mxu0 0.0
        %4886 = vmatpush1.msra.mxu0 %v1459
        %4887 = vmatprep.subr.mxu0 0.0
        %4888 = vmatpush1.msra.mxu0 %v1460
        %4889 = vmatprep.subr.mxu0 0.0
        %4890 = vmatpush1.msra.mxu0 %v1461
        %4891 = vmatprep.subr.mxu0 0.0
        %4892 = vmatpush1.msra.mxu0 %v1462
        %4893 = vmatprep.subr.mxu0 0.0
        %4894 = vmatpush1.msra.mxu0 %v1463
        %4895 = vmatprep.subr.mxu0 0.0
        %4896 = vmatpush1.msra.mxu0 %v1464
        %4897 = vmatprep.subr.mxu0 0.0
        %4898 = vmatpush1.msra.mxu0 %v1465
        %4899 = vmatprep.subr.mxu0 0.0
        %4900 = vmatpush1.msra.mxu0 %v1466
        %4901 = vmatprep.subr.mxu0 0.0
        %4902 = vmatpush1.msra.mxu0 %v1467
        %4903 = vmatprep.subr.mxu0 0.0
        %4904 = vmatpush1.msra.mxu0 %v1468
        %4905 = vmatprep.subr.mxu0 0.0
        %4906 = vmatpush1.msra.mxu0 %v1469
        %4907 = vmatprep.subr.mxu0 0.0
        %4908 = vmatpush1.msra.mxu0 %v1470
        %4909 = vmatprep.subr.mxu0 0.0
        %4910 = vmatpush1.msra.mxu0 %v1471
        %4911 = vmatprep.subr.mxu0 0.0
        %4912 = vmatpush1.msra.mxu0 %v1472
        %4913 = vmatprep.subr.mxu0 0.0
        %4914 = vmatpush1.msra.mxu0 %v1473
        %4915 = vmatprep.subr.mxu0 0.0
        %4916 = vmatpush1.msra.mxu0 %v1474
        %4917 = vmatprep.subr.mxu0 0.0
        %4918 = vmatpush1.msra.mxu0 %v1475
        %4919 = vmatprep.subr.mxu0 0.0
        %4920 = vmatpush1.msra.mxu0 %v1476
        %4921 = vmatprep.subr.mxu0 0.0
        %4922 = vmatpush1.msra.mxu0 %v1477
        %4923 = vmatprep.subr.mxu0 0.0
        %4924 = vmatpush1.msra.mxu0 %v1478
        %4925 = vmatprep.subr.mxu0 0.0
        %4926 = vmatpush1.msra.mxu0 %v1479
        %4927 = vmatprep.subr.mxu0 0.0
        %4928 = vmatpush1.msra.mxu0 %v1480
        %4929 = vmatprep.mubr.f32.mxu0 %v242
        %4930 = vmatmul.mubr.f32.gmra.mrb[0].mxu0 %v241
        %v4931 = vpop.f32.mrb[0].mxu0
        %v4932 = vadd.f32 %v4862, %v4931
        %v4933 = vpop.f32.mrb[0].mxu0
        %4934 = vdwg.mxu0
        %4935 = vmatprep.subr.mxu0 0.0
        %4936 = vmatpush1.msra.mxu0 %v1481
        %4937 = vmatprep.subr.mxu0 0.0
        %4938 = vmatpush1.msra.mxu0 %v1482
        %4939 = vmatprep.subr.mxu0 0.0
        %4940 = vmatpush1.msra.mxu0 %v1483
        %4941 = vmatprep.subr.mxu0 0.0
        %4942 = vmatpush1.msra.mxu0 %v1484
        %4943 = vmatprep.subr.mxu0 0.0
        %4944 = vmatpush1.msra.mxu0 %v1485
        %4945 = vmatprep.subr.mxu0 0.0
        %4946 = vmatpush1.msra.mxu0 %v1486
        %4947 = vmatprep.subr.mxu0 0.0
        %4948 = vmatpush1.msra.mxu0 %v1487
        %4949 = vmatprep.subr.mxu0 0.0
        %4950 = vmatpush1.msra.mxu0 %v1488
        %4951 = vmatprep.subr.mxu0 0.0
        %4952 = vmatpush1.msra.mxu0 %v1489
        %4953 = vmatprep.subr.mxu0 0.0
        %4954 = vmatpush1.msra.mxu0 %v1490
        %4955 = vmatprep.subr.mxu0 0.0
        %4956 = vmatpush1.msra.mxu0 %v1491
        %4957 = vmatprep.subr.mxu0 0.0
        %4958 = vmatpush1.msra.mxu0 %v1492
        %4959 = vmatprep.subr.mxu0 0.0
        %4960 = vmatpush1.msra.mxu0 %v1493
        %4961 = vmatprep.subr.mxu0 0.0
        %4962 = vmatpush1.msra.mxu0 %v1494
        %4963 = vmatprep.subr.mxu0 0.0
        %4964 = vmatpush1.msra.mxu0 %v1495
        %4965 = vmatprep.subr.mxu0 0.0
        %4966 = vmatpush1.msra.mxu0 %v1496
        %4967 = vmatprep.subr.mxu0 0.0
        %4968 = vmatpush1.msra.mxu0 %v1497
        %4969 = vmatprep.subr.mxu0 0.0
        %4970 = vmatpush1.msra.mxu0 %v1498
        %4971 = vmatprep.subr.mxu0 0.0
        %4972 = vmatpush1.msra.mxu0 %v1499
        %4973 = vmatprep.subr.mxu0 0.0
        %4974 = vmatpush1.msra.mxu0 %v1500
        %4975 = vmatprep.subr.mxu0 0.0
        %4976 = vmatpush1.msra.mxu0 %v1501
        %4977 = vmatprep.subr.mxu0 0.0
        %4978 = vmatpush1.msra.mxu0 %v1502
        %4979 = vmatprep.subr.mxu0 0.0
        %4980 = vmatpush1.msra.mxu0 %v1503
        %4981 = vmatprep.subr.mxu0 0.0
        %4982 = vmatpush1.msra.mxu0 %v1504
        %4983 = vmatprep.subr.mxu0 0.0
        %4984 = vmatpush1.msra.mxu0 %v1505
        %4985 = vmatprep.subr.mxu0 0.0
        %4986 = vmatpush1.msra.mxu0 %v1506
        %4987 = vmatprep.subr.mxu0 0.0
        %4988 = vmatpush1.msra.mxu0 %v1507
        %4989 = vmatprep.subr.mxu0 0.0
        %4990 = vmatpush1.msra.mxu0 %v1508
        %4991 = vmatprep.subr.mxu0 0.0
        %4992 = vmatpush1.msra.mxu0 %v1509
        %4993 = vmatprep.subr.mxu0 0.0
        %4994 = vmatpush1.msra.mxu0 %v1510
        %4995 = vmatprep.subr.mxu0 0.0
        %4996 = vmatpush1.msra.mxu0 %v1511
        %4997 = vmatprep.subr.mxu0 0.0
        %4998 = vmatpush1.msra.mxu0 %v1512
        %4999 = vmatprep.mubr.f32.mxu0 %v244
        %5000 = vmatmul.mubr.f32.gmra.mrb[0].mxu0 %v243
        %v5001 = vpop.f32.mrb[0].mxu0
        %v5002 = vadd.f32 %v4932, %v5001
        %v5003 = vpop.f32.mrb[0].mxu0
        %5004 = vdwg.mxu0
        %5005 = vmatprep.subr.mxu0 0.0
        %5006 = vmatpush1.msra.mxu0 %v1513
        %5007 = vmatprep.subr.mxu0 0.0
        %5008 = vmatpush1.msra.mxu0 %v1514
        %5009 = vmatprep.subr.mxu0 0.0
        %5010 = vmatpush1.msra.mxu0 %v1515
        %5011 = vmatprep.subr.mxu0 0.0
        %5012 = vmatpush1.msra.mxu0 %v1516
        %5013 = vmatprep.subr.mxu0 0.0
        %5014 = vmatpush1.msra.mxu0 %v1517
        %5015 = vmatprep.subr.mxu0 0.0
        %5016 = vmatpush1.msra.mxu0 %v1518
        %5017 = vmatprep.subr.mxu0 0.0
        %5018 = vmatpush1.msra.mxu0 %v1519
        %5019 = vmatprep.subr.mxu0 0.0
        %5020 = vmatpush1.msra.mxu0 %v1520
        %5021 = vmatprep.subr.mxu0 0.0
        %5022 = vmatpush1.msra.mxu0 %v1521
        %5023 = vmatprep.subr.mxu0 0.0
        %5024 = vmatpush1.msra.mxu0 %v1522
        %5025 = vmatprep.subr.mxu0 0.0
        %5026 = vmatpush1.msra.mxu0 %v1523
        %5027 = vmatprep.subr.mxu0 0.0
        %5028 = vmatpush1.msra.mxu0 %v1524
        %5029 = vmatprep.subr.mxu0 0.0
        %5030 = vmatpush1.msra.mxu0 %v1525
        %5031 = vmatprep.subr.mxu0 0.0
        %5032 = vmatpush1.msra.mxu0 %v1526
        %5033 = vmatprep.subr.mxu0 0.0
        %5034 = vmatpush1.msra.mxu0 %v1527
        %5035 = vmatprep.subr.mxu0 0.0
        %5036 = vmatpush1.msra.mxu0 %v1528
        %5037 = vmatprep.subr.mxu0 0.0
        %5038 = vmatpush1.msra.mxu0 %v1529
        %5039 = vmatprep.subr.mxu0 0.0
        %5040 = vmatpush1.msra.mxu0 %v1530
        %5041 = vmatprep.subr.mxu0 0.0
        %5042 = vmatpush1.msra.mxu0 %v1531
        %5043 = vmatprep.subr.mxu0 0.0
        %5044 = vmatpush1.msra.mxu0 %v1532
        %5045 = vmatprep.subr.mxu0 0.0
        %5046 = vmatpush1.msra.mxu0 %v1533
        %5047 = vmatprep.subr.mxu0 0.0
        %5048 = vmatpush1.msra.mxu0 %v1534
        %5049 = vmatprep.subr.mxu0 0.0
        %5050 = vmatpush1.msra.mxu0 %v1535
        %5051 = vmatprep.subr.mxu0 0.0
        %5052 = vmatpush1.msra.mxu0 %v1536
        %5053 = vmatprep.subr.mxu0 0.0
        %5054 = vmatpush1.msra.mxu0 %v1537
        %5055 = vmatprep.subr.mxu0 0.0
        %5056 = vmatpush1.msra.mxu0 %v1538
        %5057 = vmatprep.subr.mxu0 0.0
        %5058 = vmatpush1.msra.mxu0 %v1539
        %5059 = vmatprep.subr.mxu0 0.0
        %5060 = vmatpush1.msra.mxu0 %v1540
        %5061 = vmatprep.subr.mxu0 0.0
        %5062 = vmatpush1.msra.mxu0 %v1541
        %5063 = vmatprep.subr.mxu0 0.0
        %5064 = vmatpush1.msra.mxu0 %v1542
        %5065 = vmatprep.subr.mxu0 0.0
        %5066 = vmatpush1.msra.mxu0 %v1543
        %5067 = vmatprep.subr.mxu0 0.0
        %5068 = vmatpush1.msra.mxu0 %v1544
        %5069 = vmatprep.mubr.f32.mxu0 %v246
        %5070 = vmatmul.mubr.f32.gmra.mrb[0].mxu0 %v245
        %v5071 = vpop.f32.mrb[0].mxu0
        %v5072 = vadd.f32 %v5002, %v5071
        %v5073 = vpop.f32.mrb[0].mxu0
        %5074 = vdwg.mxu0
        %5075 = vmatprep.subr.mxu0 0.0
        %5076 = vmatpush1.msra.mxu0 %v1545
        %5077 = vmatprep.subr.mxu0 0.0
        %5078 = vmatpush1.msra.mxu0 %v1546
        %5079 = vmatprep.subr.mxu0 0.0
        %5080 = vmatpush1.msra.mxu0 %v1547
        %5081 = vmatprep.subr.mxu0 0.0
        %5082 = vmatpush1.msra.mxu0 %v1548
        %5083 = vmatprep.subr.mxu0 0.0
        %5084 = vmatpush1.msra.mxu0 %v1549
        %5085 = vmatprep.subr.mxu0 0.0
        %5086 = vmatpush1.msra.mxu0 %v1550
        %5087 = vmatprep.subr.mxu0 0.0
        %5088 = vmatpush1.msra.mxu0 %v1551
        %5089 = vmatprep.subr.mxu0 0.0
        %5090 = vmatpush1.msra.mxu0 %v1552
        %5091 = vmatprep.subr.mxu0 0.0
        %5092 = vmatpush1.msra.mxu0 %v1553
        %5093 = vmatprep.subr.mxu0 0.0
        %5094 = vmatpush1.msra.mxu0 %v1554
        %5095 = vmatprep.subr.mxu0 0.0
        %5096 = vmatpush1.msra.mxu0 %v1555
        %5097 = vmatprep.subr.mxu0 0.0
        %5098 = vmatpush1.msra.mxu0 %v1556
        %5099 = vmatprep.subr.mxu0 0.0
        %5100 = vmatpush1.msra.mxu0 %v1557
        %5101 = vmatprep.subr.mxu0 0.0
        %5102 = vmatpush1.msra.mxu0 %v1558
        %5103 = vmatprep.subr.mxu0 0.0
        %5104 = vmatpush1.msra.mxu0 %v1559
        %5105 = vmatprep.subr.mxu0 0.0
        %5106 = vmatpush1.msra.mxu0 %v1560
        %5107 = vmatprep.subr.mxu0 0.0
        %5108 = vmatpush1.msra.mxu0 %v1561
        %5109 = vmatprep.subr.mxu0 0.0
        %5110 = vmatpush1.msra.mxu0 %v1562
        %5111 = vmatprep.subr.mxu0 0.0
        %5112 = vmatpush1.msra.mxu0 %v1563
        %5113 = vmatprep.subr.mxu0 0.0
        %5114 = vmatpush1.msra.mxu0 %v1564
        %5115 = vmatprep.subr.mxu0 0.0
        %5116 = vmatpush1.msra.mxu0 %v1565
        %5117 = vmatprep.subr.mxu0 0.0
        %5118 = vmatpush1.msra.mxu0 %v1566
        %5119 = vmatprep.subr.mxu0 0.0
        %5120 = vmatpush1.msra.mxu0 %v1567
        %5121 = vmatprep.subr.mxu0 0.0
        %5122 = vmatpush1.msra.mxu0 %v1568
        %5123 = vmatprep.subr.mxu0 0.0
        %5124 = vmatpush1.msra.mxu0 %v1569
        %5125 = vmatprep.subr.mxu0 0.0
        %5126 = vmatpush1.msra.mxu0 %v1570
        %5127 = vmatprep.subr.mxu0 0.0
        %5128 = vmatpush1.msra.mxu0 %v1571
        %5129 = vmatprep.subr.mxu0 0.0
        %5130 = vmatpush1.msra.mxu0 %v1572
        %5131 = vmatprep.subr.mxu0 0.0
        %5132 = vmatpush1.msra.mxu0 %v1573
        %5133 = vmatprep.subr.mxu0 0.0
        %5134 = vmatpush1.msra.mxu0 %v1574
        %5135 = vmatprep.subr.mxu0 0.0
        %5136 = vmatpush1.msra.mxu0 %v1575
        %5137 = vmatprep.subr.mxu0 0.0
        %5138 = vmatpush1.msra.mxu0 %v1576
        %5139 = vmatprep.mubr.f32.mxu0 %v248
        %5140 = vmatmul.mubr.f32.gmra.mrb[0].mxu0 %v247
        %v5141 = vpop.f32.mrb[0].mxu0
        %v5142 = vadd.f32 %v5072, %v5141
        %v5143 = vpop.f32.mrb[0].mxu0
        %5144 = vdwg.mxu0
        %5145 = vmatprep.subr.mxu0 0.0
        %5146 = vmatpush1.msra.mxu0 %v1577
        %5147 = vmatprep.subr.mxu0 0.0
        %5148 = vmatpush1.msra.mxu0 %v1578
        %5149 = vmatprep.subr.mxu0 0.0
        %5150 = vmatpush1.msra.mxu0 %v1579
        %5151 = vmatprep.subr.mxu0 0.0
        %5152 = vmatpush1.msra.mxu0 %v1580
        %5153 = vmatprep.subr.mxu0 0.0
        %5154 = vmatpush1.msra.mxu0 %v1581
        %5155 = vmatprep.subr.mxu0 0.0
        %5156 = vmatpush1.msra.mxu0 %v1582
        %5157 = vmatprep.subr.mxu0 0.0
        %5158 = vmatpush1.msra.mxu0 %v1583
        %5159 = vmatprep.subr.mxu0 0.0
        %5160 = vmatpush1.msra.mxu0 %v1584
        %5161 = vmatprep.subr.mxu0 0.0
        %5162 = vmatpush1.msra.mxu0 %v1585
        %5163 = vmatprep.subr.mxu0 0.0
        %5164 = vmatpush1.msra.mxu0 %v1586
        %5165 = vmatprep.subr.mxu0 0.0
        %5166 = vmatpush1.msra.mxu0 %v1587
        %5167 = vmatprep.subr.mxu0 0.0
        %5168 = vmatpush1.msra.mxu0 %v1588
        %5169 = vmatprep.subr.mxu0 0.0
        %5170 = vmatpush1.msra.mxu0 %v1589
        %5171 = vmatprep.subr.mxu0 0.0
        %5172 = vmatpush1.msra.mxu0 %v1590
        %5173 = vmatprep.subr.mxu0 0.0
        %5174 = vmatpush1.msra.mxu0 %v1591
        %5175 = vmatprep.subr.mxu0 0.0
        %5176 = vmatpush1.msra.mxu0 %v1592
        %5177 = vmatprep.subr.mxu0 0.0
        %5178 = vmatpush1.msra.mxu0 %v1593
        %5179 = vmatprep.subr.mxu0 0.0
        %5180 = vmatpush1.msra.mxu0 %v1594
        %5181 = vmatprep.subr.mxu0 0.0
        %5182 = vmatpush1.msra.mxu0 %v1595
        %5183 = vmatprep.subr.mxu0 0.0
        %5184 = vmatpush1.msra.mxu0 %v1596
        %5185 = vmatprep.subr.mxu0 0.0
        %5186 = vmatpush1.msra.mxu0 %v1597
        %5187 = vmatprep.subr.mxu0 0.0
        %5188 = vmatpush1.msra.mxu0 %v1598
        %5189 = vmatprep.subr.mxu0 0.0
        %5190 = vmatpush1.msra.mxu0 %v1599
        %5191 = vmatprep.subr.mxu0 0.0
        %5192 = vmatpush1.msra.mxu0 %v1600
        %5193 = vmatprep.subr.mxu0 0.0
        %5194 = vmatpush1.msra.mxu0 %v1601
        %5195 = vmatprep.subr.mxu0 0.0
        %5196 = vmatpush1.msra.mxu0 %v1602
        %5197 = vmatprep.subr.mxu0 0.0
        %5198 = vmatpush1.msra.mxu0 %v1603
        %5199 = vmatprep.subr.mxu0 0.0
        %5200 = vmatpush1.msra.mxu0 %v1604
        %5201 = vmatprep.subr.mxu0 0.0
        %5202 = vmatpush1.msra.mxu0 %v1605
        %5203 = vmatprep.subr.mxu0 0.0
        %5204 = vmatpush1.msra.mxu0 %v1606
        %5205 = vmatprep.subr.mxu0 0.0
        %5206 = vmatpush1.msra.mxu0 %v1607
        %5207 = vmatprep.subr.mxu0 0.0
        %5208 = vmatpush1.msra.mxu0 %v1608
        %5209 = vmatprep.mubr.f32.mxu0 %v250
        %5210 = vmatmul.mubr.f32.gmra.mrb[0].mxu0 %v249
        %v5211 = vpop.f32.mrb[0].mxu0
        %v5212 = vadd.f32 %v5142, %v5211
        %v5213 = vpop.f32.mrb[0].mxu0
        %5214 = vdwg.mxu0
        %5215 = vmatprep.subr.mxu0 0.0
        %5216 = vmatpush1.msra.mxu0 %v1609
        %5217 = vmatprep.subr.mxu0 0.0
        %5218 = vmatpush1.msra.mxu0 %v1610
        %5219 = vmatprep.subr.mxu0 0.0
        %5220 = vmatpush1.msra.mxu0 %v1611
        %5221 = vmatprep.subr.mxu0 0.0
        %5222 = vmatpush1.msra.mxu0 %v1612
        %5223 = vmatprep.subr.mxu0 0.0
        %5224 = vmatpush1.msra.mxu0 %v1613
        %5225 = vmatprep.subr.mxu0 0.0
        %5226 = vmatpush1.msra.mxu0 %v1614
        %5227 = vmatprep.subr.mxu0 0.0
        %5228 = vmatpush1.msra.mxu0 %v1615
        %5229 = vmatprep.subr.mxu0 0.0
        %5230 = vmatpush1.msra.mxu0 %v1616
        %5231 = vmatprep.subr.mxu0 0.0
        %5232 = vmatpush1.msra.mxu0 %v1617
        %5233 = vmatprep.subr.mxu0 0.0
        %5234 = vmatpush1.msra.mxu0 %v1618
        %5235 = vmatprep.subr.mxu0 0.0
        %5236 = vmatpush1.msra.mxu0 %v1619
        %5237 = vmatprep.subr.mxu0 0.0
        %5238 = vmatpush1.msra.mxu0 %v1620
        %5239 = vmatprep.subr.mxu0 0.0
        %5240 = vmatpush1.msra.mxu0 %v1621
        %5241 = vmatprep.subr.mxu0 0.0
        %5242 = vmatpush1.msra.mxu0 %v1622
        %5243 = vmatprep.subr.mxu0 0.0
        %5244 = vmatpush1.msra.mxu0 %v1623
        %5245 = vmatprep.subr.mxu0 0.0
        %5246 = vmatpush1.msra.mxu0 %v1624
        %5247 = vmatprep.subr.mxu0 0.0
        %5248 = vmatpush1.msra.mxu0 %v1625
        %5249 = vmatprep.subr.mxu0 0.0
        %5250 = vmatpush1.msra.mxu0 %v1626
        %5251 = vmatprep.subr.mxu0 0.0
        %5252 = vmatpush1.msra.mxu0 %v1627
        %5253 = vmatprep.subr.mxu0 0.0
        %5254 = vmatpush1.msra.mxu0 %v1628
        %5255 = vmatprep.subr.mxu0 0.0
        %5256 = vmatpush1.msra.mxu0 %v1629
        %5257 = vmatprep.subr.mxu0 0.0
        %5258 = vmatpush1.msra.mxu0 %v1630
        %5259 = vmatprep.subr.mxu0 0.0
        %5260 = vmatpush1.msra.mxu0 %v1631
        %5261 = vmatprep.subr.mxu0 0.0
        %5262 = vmatpush1.msra.mxu0 %v1632
        %5263 = vmatprep.subr.mxu0 0.0
        %5264 = vmatpush1.msra.mxu0 %v1633
        %5265 = vmatprep.subr.mxu0 0.0
        %5266 = vmatpush1.msra.mxu0 %v1634
        %5267 = vmatprep.subr.mxu0 0.0
        %5268 = vmatpush1.msra.mxu0 %v1635
        %5269 = vmatprep.subr.mxu0 0.0
        %5270 = vmatpush1.msra.mxu0 %v1636
        %5271 = vmatprep.subr.mxu0 0.0
        %5272 = vmatpush1.msra.mxu0 %v1637
        %5273 = vmatprep.subr.mxu0 0.0
        %5274 = vmatpush1.msra.mxu0 %v1638
        %5275 = vmatprep.subr.mxu0 0.0
        %5276 = vmatpush1.msra.mxu0 %v1639
        %5277 = vmatprep.subr.mxu0 0.0
        %5278 = vmatpush1.msra.mxu0 %v1640
        %5279 = vmatprep.mubr.f32.mxu0 %v252
        %5280 = vmatmul.mubr.f32.gmra.mrb[0].mxu0 %v251
        %v5281 = vpop.f32.mrb[0].mxu0
        %v5282 = vadd.f32 %v5212, %v5281
        %v5283 = vpop.f32.mrb[0].mxu0
        %5284 = vdwg.mxu0
        %5285 = vmatprep.subr.mxu0 0.0
        %5286 = vmatpush1.msra.mxu0 %v1641
        %5287 = vmatprep.subr.mxu0 0.0
        %5288 = vmatpush1.msra.mxu0 %v1642
        %5289 = vmatprep.subr.mxu0 0.0
        %5290 = vmatpush1.msra.mxu0 %v1643
        %5291 = vmatprep.subr.mxu0 0.0
        %5292 = vmatpush1.msra.mxu0 %v1644
        %5293 = vmatprep.subr.mxu0 0.0
        %5294 = vmatpush1.msra.mxu0 %v1645
        %5295 = vmatprep.subr.mxu0 0.0
        %5296 = vmatpush1.msra.mxu0 %v1646
        %5297 = vmatprep.subr.mxu0 0.0
        %5298 = vmatpush1.msra.mxu0 %v1647
        %5299 = vmatprep.subr.mxu0 0.0
        %5300 = vmatpush1.msra.mxu0 %v1648
        %5301 = vmatprep.subr.mxu0 0.0
        %5302 = vmatpush1.msra.mxu0 %v1649
        %5303 = vmatprep.subr.mxu0 0.0
        %5304 = vmatpush1.msra.mxu0 %v1650
        %5305 = vmatprep.subr.mxu0 0.0
        %5306 = vmatpush1.msra.mxu0 %v1651
        %5307 = vmatprep.subr.mxu0 0.0
        %5308 = vmatpush1.msra.mxu0 %v1652
        %5309 = vmatprep.subr.mxu0 0.0
        %5310 = vmatpush1.msra.mxu0 %v1653
        %5311 = vmatprep.subr.mxu0 0.0
        %5312 = vmatpush1.msra.mxu0 %v1654
        %5313 = vmatprep.subr.mxu0 0.0
        %5314 = vmatpush1.msra.mxu0 %v1655
        %5315 = vmatprep.subr.mxu0 0.0
        %5316 = vmatpush1.msra.mxu0 %v1656
        %5317 = vmatprep.subr.mxu0 0.0
        %5318 = vmatpush1.msra.mxu0 %v1657
        %5319 = vmatprep.subr.mxu0 0.0
        %5320 = vmatpush1.msra.mxu0 %v1658
        %5321 = vmatprep.subr.mxu0 0.0
        %5322 = vmatpush1.msra.mxu0 %v1659
        %5323 = vmatprep.subr.mxu0 0.0
        %5324 = vmatpush1.msra.mxu0 %v1660
        %5325 = vmatprep.subr.mxu0 0.0
        %5326 = vmatpush1.msra.mxu0 %v1661
        %5327 = vmatprep.subr.mxu0 0.0
        %5328 = vmatpush1.msra.mxu0 %v1662
        %5329 = vmatprep.subr.mxu0 0.0
        %5330 = vmatpush1.msra.mxu0 %v1663
        %5331 = vmatprep.subr.mxu0 0.0
        %5332 = vmatpush1.msra.mxu0 %v1664
        %5333 = vmatprep.subr.mxu0 0.0
        %5334 = vmatpush1.msra.mxu0 %v1665
        %5335 = vmatprep.subr.mxu0 0.0
        %5336 = vmatpush1.msra.mxu0 %v1666
        %5337 = vmatprep.subr.mxu0 0.0
        %5338 = vmatpush1.msra.mxu0 %v1667
        %5339 = vmatprep.subr.mxu0 0.0
        %5340 = vmatpush1.msra.mxu0 %v1668
        %5341 = vmatprep.subr.mxu0 0.0
        %5342 = vmatpush1.msra.mxu0 %v1669
        %5343 = vmatprep.subr.mxu0 0.0
        %5344 = vmatpush1.msra.mxu0 %v1670
        %5345 = vmatprep.subr.mxu0 0.0
        %5346 = vmatpush1.msra.mxu0 %v1671
        %5347 = vmatprep.subr.mxu0 0.0
        %5348 = vmatpush1.msra.mxu0 %v1672
        %5349 = vmatprep.mubr.f32.mxu0 %v254
        %5350 = vmatmul.mubr.f32.gmra.mrb[0].mxu0 %v253
        %v5351 = vpop.f32.mrb[0].mxu0
        %v5352 = vadd.f32 %v5282, %v5351
        %v5353 = vpop.f32.mrb[0].mxu0
        %5354 = vdwg.mxu0
        %5355 = vmatprep.subr.mxu0 0.0
        %5356 = vmatpush1.msra.mxu0 %v1673
        %5357 = vmatprep.subr.mxu0 0.0
        %5358 = vmatpush1.msra.mxu0 %v1674
        %5359 = vmatprep.subr.mxu0 0.0
        %5360 = vmatpush1.msra.mxu0 %v1675
        %5361 = vmatprep.subr.mxu0 0.0
        %5362 = vmatpush1.msra.mxu0 %v1676
        %5363 = vmatprep.subr.mxu0 0.0
        %5364 = vmatpush1.msra.mxu0 %v1677
        %5365 = vmatprep.subr.mxu0 0.0
        %5366 = vmatpush1.msra.mxu0 %v1678
        %5367 = vmatprep.subr.mxu0 0.0
        %5368 = vmatpush1.msra.mxu0 %v1679
        %5369 = vmatprep.subr.mxu0 0.0
        %5370 = vmatpush1.msra.mxu0 %v1680
        %5371 = vmatprep.subr.mxu0 0.0
        %5372 = vmatpush1.msra.mxu0 %v1681
        %5373 = vmatprep.subr.mxu0 0.0
        %5374 = vmatpush1.msra.mxu0 %v1682
        %5375 = vmatprep.subr.mxu0 0.0
        %5376 = vmatpush1.msra.mxu0 %v1683
        %5377 = vmatprep.subr.mxu0 0.0
        %5378 = vmatpush1.msra.mxu0 %v1684
        %5379 = vmatprep.subr.mxu0 0.0
        %5380 = vmatpush1.msra.mxu0 %v1685
        %5381 = vmatprep.subr.mxu0 0.0
        %5382 = vmatpush1.msra.mxu0 %v1686
        %5383 = vmatprep.subr.mxu0 0.0
        %5384 = vmatpush1.msra.mxu0 %v1687
        %5385 = vmatprep.subr.mxu0 0.0
        %5386 = vmatpush1.msra.mxu0 %v1688
        %5387 = vmatprep.subr.mxu0 0.0
        %5388 = vmatpush1.msra.mxu0 %v1689
        %5389 = vmatprep.subr.mxu0 0.0
        %5390 = vmatpush1.msra.mxu0 %v1690
        %5391 = vmatprep.subr.mxu0 0.0
        %5392 = vmatpush1.msra.mxu0 %v1691
        %5393 = vmatprep.subr.mxu0 0.0
        %5394 = vmatpush1.msra.mxu0 %v1692
        %5395 = vmatprep.subr.mxu0 0.0
        %5396 = vmatpush1.msra.mxu0 %v1693
        %5397 = vmatprep.subr.mxu0 0.0
        %5398 = vmatpush1.msra.mxu0 %v1694
        %5399 = vmatprep.subr.mxu0 0.0
        %5400 = vmatpush1.msra.mxu0 %v1695
        %5401 = vmatprep.subr.mxu0 0.0
        %5402 = vmatpush1.msra.mxu0 %v1696
        %5403 = vmatprep.subr.mxu0 0.0
        %5404 = vmatpush1.msra.mxu0 %v1697
        %5405 = vmatprep.subr.mxu0 0.0
        %5406 = vmatpush1.msra.mxu0 %v1698
        %5407 = vmatprep.subr.mxu0 0.0
        %5408 = vmatpush1.msra.mxu0 %v1699
        %5409 = vmatprep.subr.mxu0 0.0
        %5410 = vmatpush1.msra.mxu0 %v1700
        %5411 = vmatprep.subr.mxu0 0.0
        %5412 = vmatpush1.msra.mxu0 %v1701
        %5413 = vmatprep.subr.mxu0 0.0
        %5414 = vmatpush1.msra.mxu0 %v1702
        %5415 = vmatprep.subr.mxu0 0.0
        %5416 = vmatpush1.msra.mxu0 %v1703
        %5417 = vmatprep.subr.mxu0 0.0
        %5418 = vmatpush1.msra.mxu0 %v1704
        %5419 = vmatprep.mubr.f32.mxu0 %v256
        %5420 = vmatmul.mubr.f32.gmra.mrb[0].mxu0 %v255
        %v5421 = vpop.f32.mrb[0].mxu0
        %v5422 = vadd.f32 %v5352, %v5421
        %v5423 = vpop.f32.mrb[0].mxu0
        %5424 = vdwg.mxu0
        %5425 = vmatprep.subr.mxu0 0.0
        %5426 = vmatpush1.msra.mxu0 %v1705
        %5427 = vmatprep.subr.mxu0 0.0
        %5428 = vmatpush1.msra.mxu0 %v1706
        %5429 = vmatprep.subr.mxu0 0.0
        %5430 = vmatpush1.msra.mxu0 %v1707
        %5431 = vmatprep.subr.mxu0 0.0
        %5432 = vmatpush1.msra.mxu0 %v1708
        %5433 = vmatprep.subr.mxu0 0.0
        %5434 = vmatpush1.msra.mxu0 %v1709
        %5435 = vmatprep.subr.mxu0 0.0
        %5436 = vmatpush1.msra.mxu0 %v1710
        %5437 = vmatprep.subr.mxu0 0.0
        %5438 = vmatpush1.msra.mxu0 %v1711
        %5439 = vmatprep.subr.mxu0 0.0
        %5440 = vmatpush1.msra.mxu0 %v1712
        %5441 = vmatprep.subr.mxu0 0.0
        %5442 = vmatpush1.msra.mxu0 %v1713
        %5443 = vmatprep.subr.mxu0 0.0
        %5444 = vmatpush1.msra.mxu0 %v1714
        %5445 = vmatprep.subr.mxu0 0.0
        %5446 = vmatpush1.msra.mxu0 %v1715
        %5447 = vmatprep.subr.mxu0 0.0
        %5448 = vmatpush1.msra.mxu0 %v1716
        %5449 = vmatprep.subr.mxu0 0.0
        %5450 = vmatpush1.msra.mxu0 %v1717
        %5451 = vmatprep.subr.mxu0 0.0
        %5452 = vmatpush1.msra.mxu0 %v1718
        %5453 = vmatprep.subr.mxu0 0.0
        %5454 = vmatpush1.msra.mxu0 %v1719
        %5455 = vmatprep.subr.mxu0 0.0
        %5456 = vmatpush1.msra.mxu0 %v1720
        %5457 = vmatprep.subr.mxu0 0.0
        %5458 = vmatpush1.msra.mxu0 %v1721
        %5459 = vmatprep.subr.mxu0 0.0
        %5460 = vmatpush1.msra.mxu0 %v1722
        %5461 = vmatprep.subr.mxu0 0.0
        %5462 = vmatpush1.msra.mxu0 %v1723
        %5463 = vmatprep.subr.mxu0 0.0
        %5464 = vmatpush1.msra.mxu0 %v1724
        %5465 = vmatprep.subr.mxu0 0.0
        %5466 = vmatpush1.msra.mxu0 %v1725
        %5467 = vmatprep.subr.mxu0 0.0
        %5468 = vmatpush1.msra.mxu0 %v1726
        %5469 = vmatprep.subr.mxu0 0.0
        %5470 = vmatpush1.msra.mxu0 %v1727
        %5471 = vmatprep.subr.mxu0 0.0
        %5472 = vmatpush1.msra.mxu0 %v1728
        %5473 = vmatprep.subr.mxu0 0.0
        %5474 = vmatpush1.msra.mxu0 %v1729
        %5475 = vmatprep.subr.mxu0 0.0
        %5476 = vmatpush1.msra.mxu0 %v1730
        %5477 = vmatprep.subr.mxu0 0.0
        %5478 = vmatpush1.msra.mxu0 %v1731
        %5479 = vmatprep.subr.mxu0 0.0
        %5480 = vmatpush1.msra.mxu0 %v1732
        %5481 = vmatprep.subr.mxu0 0.0
        %5482 = vmatpush1.msra.mxu0 %v1733
        %5483 = vmatprep.subr.mxu0 0.0
        %5484 = vmatpush1.msra.mxu0 %v1734
        %5485 = vmatprep.subr.mxu0 0.0
        %5486 = vmatpush1.msra.mxu0 %v1735
        %5487 = vmatprep.subr.mxu0 0.0
        %5488 = vmatpush1.msra.mxu0 %v1736
        %5489 = vmatprep.mubr.f32.mxu0 %v258
        %5490 = vmatmul.mubr.f32.gmra.mrb[0].mxu0 %v257
        %v5491 = vpop.f32.mrb[0].mxu0
        %v5492 = vadd.f32 %v5422, %v5491
        %v5493 = vpop.f32.mrb[0].mxu0
        %5494 = vdwg.mxu0
        %5495 = vmatprep.subr.mxu0 0.0
        %5496 = vmatpush1.msra.mxu0 %v1737
        %5497 = vmatprep.subr.mxu0 0.0
        %5498 = vmatpush1.msra.mxu0 %v1738
        %5499 = vmatprep.subr.mxu0 0.0
        %5500 = vmatpush1.msra.mxu0 %v1739
        %5501 = vmatprep.subr.mxu0 0.0
        %5502 = vmatpush1.msra.mxu0 %v1740
        %5503 = vmatprep.subr.mxu0 0.0
        %5504 = vmatpush1.msra.mxu0 %v1741
        %5505 = vmatprep.subr.mxu0 0.0
        %5506 = vmatpush1.msra.mxu0 %v1742
        %5507 = vmatprep.subr.mxu0 0.0
        %5508 = vmatpush1.msra.mxu0 %v1743
        %5509 = vmatprep.subr.mxu0 0.0
        %5510 = vmatpush1.msra.mxu0 %v1744
        %5511 = vmatprep.subr.mxu0 0.0
        %5512 = vmatpush1.msra.mxu0 %v1745
        %5513 = vmatprep.subr.mxu0 0.0
        %5514 = vmatpush1.msra.mxu0 %v1746
        %5515 = vmatprep.subr.mxu0 0.0
        %5516 = vmatpush1.msra.mxu0 %v1747
        %5517 = vmatprep.subr.mxu0 0.0
        %5518 = vmatpush1.msra.mxu0 %v1748
        %5519 = vmatprep.subr.mxu0 0.0
        %5520 = vmatpush1.msra.mxu0 %v1749
        %5521 = vmatprep.subr.mxu0 0.0
        %5522 = vmatpush1.msra.mxu0 %v1750
        %5523 = vmatprep.subr.mxu0 0.0
        %5524 = vmatpush1.msra.mxu0 %v1751
        %5525 = vmatprep.subr.mxu0 0.0
        %5526 = vmatpush1.msra.mxu0 %v1752
        %5527 = vmatprep.subr.mxu0 0.0
        %5528 = vmatpush1.msra.mxu0 %v1753
        %5529 = vmatprep.subr.mxu0 0.0
        %5530 = vmatpush1.msra.mxu0 %v1754
        %5531 = vmatprep.subr.mxu0 0.0
        %5532 = vmatpush1.msra.mxu0 %v1755
        %5533 = vmatprep.subr.mxu0 0.0
        %5534 = vmatpush1.msra.mxu0 %v1756
        %5535 = vmatprep.subr.mxu0 0.0
        %5536 = vmatpush1.msra.mxu0 %v1757
        %5537 = vmatprep.subr.mxu0 0.0
        %5538 = vmatpush1.msra.mxu0 %v1758
        %5539 = vmatprep.subr.mxu0 0.0
        %5540 = vmatpush1.msra.mxu0 %v1759
        %5541 = vmatprep.subr.mxu0 0.0
        %5542 = vmatpush1.msra.mxu0 %v1760
        %5543 = vmatprep.subr.mxu0 0.0
        %5544 = vmatpush1.msra.mxu0 %v1761
        %5545 = vmatprep.subr.mxu0 0.0
        %5546 = vmatpush1.msra.mxu0 %v1762
        %5547 = vmatprep.subr.mxu0 0.0
        %5548 = vmatpush1.msra.mxu0 %v1763
        %5549 = vmatprep.subr.mxu0 0.0
        %5550 = vmatpush1.msra.mxu0 %v1764
        %5551 = vmatprep.subr.mxu0 0.0
        %5552 = vmatpush1.msra.mxu0 %v1765
        %5553 = vmatprep.subr.mxu0 0.0
        %5554 = vmatpush1.msra.mxu0 %v1766
        %5555 = vmatprep.subr.mxu0 0.0
        %5556 = vmatpush1.msra.mxu0 %v1767
        %5557 = vmatprep.subr.mxu0 0.0
        %5558 = vmatpush1.msra.mxu0 %v1768
        %5559 = vmatprep.mubr.f32.mxu0 %v260
        %5560 = vmatmul.mubr.f32.gmra.mrb[0].mxu0 %v259
        %v5561 = vpop.f32.mrb[0].mxu0
        %v5562 = vadd.f32 %v5492, %v5561
        %v5563 = vpop.f32.mrb[0].mxu0
        %5564 = vdwg.mxu0
        %5565 = vmatprep.subr.mxu0 0.0
        %5566 = vmatpush1.msra.mxu0 %v1769
        %5567 = vmatprep.subr.mxu0 0.0
        %5568 = vmatpush1.msra.mxu0 %v1770
        %5569 = vmatprep.subr.mxu0 0.0
        %5570 = vmatpush1.msra.mxu0 %v1771
        %5571 = vmatprep.subr.mxu0 0.0
        %5572 = vmatpush1.msra.mxu0 %v1772
        %5573 = vmatprep.subr.mxu0 0.0
        %5574 = vmatpush1.msra.mxu0 %v1773
        %5575 = vmatprep.subr.mxu0 0.0
        %5576 = vmatpush1.msra.mxu0 %v1774
        %5577 = vmatprep.subr.mxu0 0.0
        %5578 = vmatpush1.msra.mxu0 %v1775
        %5579 = vmatprep.subr.mxu0 0.0
        %5580 = vmatpush1.msra.mxu0 %v1776
        %5581 = vmatprep.subr.mxu0 0.0
        %5582 = vmatpush1.msra.mxu0 %v1777
        %5583 = vmatprep.subr.mxu0 0.0
        %5584 = vmatpush1.msra.mxu0 %v1778
        %5585 = vmatprep.subr.mxu0 0.0
        %5586 = vmatpush1.msra.mxu0 %v1779
        %5587 = vmatprep.subr.mxu0 0.0
        %5588 = vmatpush1.msra.mxu0 %v1780
        %5589 = vmatprep.subr.mxu0 0.0
        %5590 = vmatpush1.msra.mxu0 %v1781
        %5591 = vmatprep.subr.mxu0 0.0
        %5592 = vmatpush1.msra.mxu0 %v1782
        %5593 = vmatprep.subr.mxu0 0.0
        %5594 = vmatpush1.msra.mxu0 %v1783
        %5595 = vmatprep.subr.mxu0 0.0
        %5596 = vmatpush1.msra.mxu0 %v1784
        %5597 = vmatprep.subr.mxu0 0.0
        %5598 = vmatpush1.msra.mxu0 %v1785
        %5599 = vmatprep.subr.mxu0 0.0
        %5600 = vmatpush1.msra.mxu0 %v1786
        %5601 = vmatprep.subr.mxu0 0.0
        %5602 = vmatpush1.msra.mxu0 %v1787
        %5603 = vmatprep.subr.mxu0 0.0
        %5604 = vmatpush1.msra.mxu0 %v1788
        %5605 = vmatprep.subr.mxu0 0.0
        %5606 = vmatpush1.msra.mxu0 %v1789
        %5607 = vmatprep.subr.mxu0 0.0
        %5608 = vmatpush1.msra.mxu0 %v1790
        %5609 = vmatprep.subr.mxu0 0.0
        %5610 = vmatpush1.msra.mxu0 %v1791
        %5611 = vmatprep.subr.mxu0 0.0
        %5612 = vmatpush1.msra.mxu0 %v1792
        %5613 = vmatprep.subr.mxu0 0.0
        %5614 = vmatpush1.msra.mxu0 %v1793
        %5615 = vmatprep.subr.mxu0 0.0
        %5616 = vmatpush1.msra.mxu0 %v1794
        %5617 = vmatprep.subr.mxu0 0.0
        %5618 = vmatpush1.msra.mxu0 %v1795
        %5619 = vmatprep.subr.mxu0 0.0
        %5620 = vmatpush1.msra.mxu0 %v1796
        %5621 = vmatprep.subr.mxu0 0.0
        %5622 = vmatpush1.msra.mxu0 %v1797
        %5623 = vmatprep.subr.mxu0 0.0
        %5624 = vmatpush1.msra.mxu0 %v1798
        %5625 = vmatprep.subr.mxu0 0.0
        %5626 = vmatpush1.msra.mxu0 %v1799
        %5627 = vmatprep.subr.mxu0 0.0
        %5628 = vmatpush1.msra.mxu0 %v1800
        %5629 = vmatprep.mubr.f32.mxu0 %v262
        %5630 = vmatmul.mubr.f32.gmra.mrb[0].mxu0 %v261
        %v5631 = vpop.f32.mrb[0].mxu0
        %v5632 = vadd.f32 %v5562, %v5631
        %v5633 = vpop.f32.mrb[0].mxu0
        %5634 = vdwg.mxu0
        %5635 = vmatprep.subr.mxu0 0.0
        %5636 = vmatpush1.msra.mxu0 %v1801
        %5637 = vmatprep.subr.mxu0 0.0
        %5638 = vmatpush1.msra.mxu0 %v1802
        %5639 = vmatprep.subr.mxu0 0.0
        %5640 = vmatpush1.msra.mxu0 %v1803
        %5641 = vmatprep.subr.mxu0 0.0
        %5642 = vmatpush1.msra.mxu0 %v1804
        %5643 = vmatprep.subr.mxu0 0.0
        %5644 = vmatpush1.msra.mxu0 %v1805
        %5645 = vmatprep.subr.mxu0 0.0
        %5646 = vmatpush1.msra.mxu0 %v1806
        %5647 = vmatprep.subr.mxu0 0.0
        %5648 = vmatpush1.msra.mxu0 %v1807
        %5649 = vmatprep.subr.mxu0 0.0
        %5650 = vmatpush1.msra.mxu0 %v1808
        %5651 = vmatprep.subr.mxu0 0.0
        %5652 = vmatpush1.msra.mxu0 %v1809
        %5653 = vmatprep.subr.mxu0 0.0
        %5654 = vmatpush1.msra.mxu0 %v1810
        %5655 = vmatprep.subr.mxu0 0.0
        %5656 = vmatpush1.msra.mxu0 %v1811
        %5657 = vmatprep.subr.mxu0 0.0
        %5658 = vmatpush1.msra.mxu0 %v1812
        %5659 = vmatprep.subr.mxu0 0.0
        %5660 = vmatpush1.msra.mxu0 %v1813
        %5661 = vmatprep.subr.mxu0 0.0
        %5662 = vmatpush1.msra.mxu0 %v1814
        %5663 = vmatprep.subr.mxu0 0.0
        %5664 = vmatpush1.msra.mxu0 %v1815
        %5665 = vmatprep.subr.mxu0 0.0
        %5666 = vmatpush1.msra.mxu0 %v1816
        %5667 = vmatprep.subr.mxu0 0.0
        %5668 = vmatpush1.msra.mxu0 %v1817
        %5669 = vmatprep.subr.mxu0 0.0
        %5670 = vmatpush1.msra.mxu0 %v1818
        %5671 = vmatprep.subr.mxu0 0.0
        %5672 = vmatpush1.msra.mxu0 %v1819
        %5673 = vmatprep.subr.mxu0 0.0
        %5674 = vmatpush1.msra.mxu0 %v1820
        %5675 = vmatprep.subr.mxu0 0.0
        %5676 = vmatpush1.msra.mxu0 %v1821
        %5677 = vmatprep.subr.mxu0 0.0
        %5678 = vmatpush1.msra.mxu0 %v1822
        %5679 = vmatprep.subr.mxu0 0.0
        %5680 = vmatpush1.msra.mxu0 %v1823
        %5681 = vmatprep.subr.mxu0 0.0
        %5682 = vmatpush1.msra.mxu0 %v1824
        %5683 = vmatprep.subr.mxu0 0.0
        %5684 = vmatpush1.msra.mxu0 %v1825
        %5685 = vmatprep.subr.mxu0 0.0
        %5686 = vmatpush1.msra.mxu0 %v1826
        %5687 = vmatprep.subr.mxu0 0.0
        %5688 = vmatpush1.msra.mxu0 %v1827
        %5689 = vmatprep.subr.mxu0 0.0
        %5690 = vmatpush1.msra.mxu0 %v1828
        %5691 = vmatprep.subr.mxu0 0.0
        %5692 = vmatpush1.msra.mxu0 %v1829
        %5693 = vmatprep.subr.mxu0 0.0
        %5694 = vmatpush1.msra.mxu0 %v1830
        %5695 = vmatprep.subr.mxu0 0.0
        %5696 = vmatpush1.msra.mxu0 %v1831
        %5697 = vmatprep.subr.mxu0 0.0
        %5698 = vmatpush1.msra.mxu0 %v1832
        %5699 = vmatprep.mubr.f32.mxu0 %v264
        %5700 = vmatmul.mubr.f32.gmra.mrb[0].mxu0 %v263
        %v5701 = vpop.f32.mrb[0].mxu0
        %v5702 = vadd.f32 %v5632, %v5701
        %v5703 = vpop.f32.mrb[0].mxu0
        %5704 = vdwg.mxu0
        %5705 = vmatprep.subr.mxu0 0.0
        %5706 = vmatpush1.msra.mxu0 %v1833
        %5707 = vmatprep.subr.mxu0 0.0
        %5708 = vmatpush1.msra.mxu0 %v1834
        %5709 = vmatprep.subr.mxu0 0.0
        %5710 = vmatpush1.msra.mxu0 %v1835
        %5711 = vmatprep.subr.mxu0 0.0
        %5712 = vmatpush1.msra.mxu0 %v1836
        %5713 = vmatprep.subr.mxu0 0.0
        %5714 = vmatpush1.msra.mxu0 %v1837
        %5715 = vmatprep.subr.mxu0 0.0
        %5716 = vmatpush1.msra.mxu0 %v1838
        %5717 = vmatprep.subr.mxu0 0.0
        %5718 = vmatpush1.msra.mxu0 %v1839
        %5719 = vmatprep.subr.mxu0 0.0
        %5720 = vmatpush1.msra.mxu0 %v1840
        %5721 = vmatprep.subr.mxu0 0.0
        %5722 = vmatpush1.msra.mxu0 %v1841
        %5723 = vmatprep.subr.mxu0 0.0
        %5724 = vmatpush1.msra.mxu0 %v1842
        %5725 = vmatprep.subr.mxu0 0.0
        %5726 = vmatpush1.msra.mxu0 %v1843
        %5727 = vmatprep.subr.mxu0 0.0
        %5728 = vmatpush1.msra.mxu0 %v1844
        %5729 = vmatprep.subr.mxu0 0.0
        %5730 = vmatpush1.msra.mxu0 %v1845
        %5731 = vmatprep.subr.mxu0 0.0
        %5732 = vmatpush1.msra.mxu0 %v1846
        %5733 = vmatprep.subr.mxu0 0.0
        %5734 = vmatpush1.msra.mxu0 %v1847
        %5735 = vmatprep.subr.mxu0 0.0
        %5736 = vmatpush1.msra.mxu0 %v1848
        %5737 = vmatprep.subr.mxu0 0.0
        %5738 = vmatpush1.msra.mxu0 %v1849
        %5739 = vmatprep.subr.mxu0 0.0
        %5740 = vmatpush1.msra.mxu0 %v1850
        %5741 = vmatprep.subr.mxu0 0.0
        %5742 = vmatpush1.msra.mxu0 %v1851
        %5743 = vmatprep.subr.mxu0 0.0
        %5744 = vmatpush1.msra.mxu0 %v1852
        %5745 = vmatprep.subr.mxu0 0.0
        %5746 = vmatpush1.msra.mxu0 %v1853
        %5747 = vmatprep.subr.mxu0 0.0
        %5748 = vmatpush1.msra.mxu0 %v1854
        %5749 = vmatprep.subr.mxu0 0.0
        %5750 = vmatpush1.msra.mxu0 %v1855
        %5751 = vmatprep.subr.mxu0 0.0
        %5752 = vmatpush1.msra.mxu0 %v1856
        %5753 = vmatprep.subr.mxu0 0.0
        %5754 = vmatpush1.msra.mxu0 %v1857
        %5755 = vmatprep.subr.mxu0 0.0
        %5756 = vmatpush1.msra.mxu0 %v1858
        %5757 = vmatprep.subr.mxu0 0.0
        %5758 = vmatpush1.msra.mxu0 %v1859
        %5759 = vmatprep.subr.mxu0 0.0
        %5760 = vmatpush1.msra.mxu0 %v1860
        %5761 = vmatprep.subr.mxu0 0.0
        %5762 = vmatpush1.msra.mxu0 %v1861
        %5763 = vmatprep.subr.mxu0 0.0
        %5764 = vmatpush1.msra.mxu0 %v1862
        %5765 = vmatprep.subr.mxu0 0.0
        %5766 = vmatpush1.msra.mxu0 %v1863
        %5767 = vmatprep.subr.mxu0 0.0
        %5768 = vmatpush1.msra.mxu0 %v1864
        %5769 = vmatprep.mubr.f32.mxu0 %v266
        %5770 = vmatmul.mubr.f32.gmra.mrb[0].mxu0 %v265
        %v5771 = vpop.f32.mrb[0].mxu0
        %v5772 = vadd.f32 %v5702, %v5771
        %v5773 = vpop.f32.mrb[0].mxu0
        %5774 = vdwg.mxu0
        %5775 = vmatprep.subr.mxu0 0.0
        %5776 = vmatpush1.msra.mxu0 %v1865
        %5777 = vmatprep.subr.mxu0 0.0
        %5778 = vmatpush1.msra.mxu0 %v1866
        %5779 = vmatprep.subr.mxu0 0.0
        %5780 = vmatpush1.msra.mxu0 %v1867
        %5781 = vmatprep.subr.mxu0 0.0
        %5782 = vmatpush1.msra.mxu0 %v1868
        %5783 = vmatprep.subr.mxu0 0.0
        %5784 = vmatpush1.msra.mxu0 %v1869
        %5785 = vmatprep.subr.mxu0 0.0
        %5786 = vmatpush1.msra.mxu0 %v1870
        %5787 = vmatprep.subr.mxu0 0.0
        %5788 = vmatpush1.msra.mxu0 %v1871
        %5789 = vmatprep.subr.mxu0 0.0
        %5790 = vmatpush1.msra.mxu0 %v1872
        %5791 = vmatprep.subr.mxu0 0.0
        %5792 = vmatpush1.msra.mxu0 %v1873
        %5793 = vmatprep.subr.mxu0 0.0
        %5794 = vmatpush1.msra.mxu0 %v1874
        %5795 = vmatprep.subr.mxu0 0.0
        %5796 = vmatpush1.msra.mxu0 %v1875
        %5797 = vmatprep.subr.mxu0 0.0
        %5798 = vmatpush1.msra.mxu0 %v1876
        %5799 = vmatprep.subr.mxu0 0.0
        %5800 = vmatpush1.msra.mxu0 %v1877
        %5801 = vmatprep.subr.mxu0 0.0
        %5802 = vmatpush1.msra.mxu0 %v1878
        %5803 = vmatprep.subr.mxu0 0.0
        %5804 = vmatpush1.msra.mxu0 %v1879
        %5805 = vmatprep.subr.mxu0 0.0
        %5806 = vmatpush1.msra.mxu0 %v1880
        %5807 = vmatprep.subr.mxu0 0.0
        %5808 = vmatpush1.msra.mxu0 %v1881
        %5809 = vmatprep.subr.mxu0 0.0
        %5810 = vmatpush1.msra.mxu0 %v1882
        %5811 = vmatprep.subr.mxu0 0.0
        %5812 = vmatpush1.msra.mxu0 %v1883
        %5813 = vmatprep.subr.mxu0 0.0
        %5814 = vmatpush1.msra.mxu0 %v1884
        %5815 = vmatprep.subr.mxu0 0.0
        %5816 = vmatpush1.msra.mxu0 %v1885
        %5817 = vmatprep.subr.mxu0 0.0
        %5818 = vmatpush1.msra.mxu0 %v1886
        %5819 = vmatprep.subr.mxu0 0.0
        %5820 = vmatpush1.msra.mxu0 %v1887
        %5821 = vmatprep.subr.mxu0 0.0
        %5822 = vmatpush1.msra.mxu0 %v1888
        %5823 = vmatprep.subr.mxu0 0.0
        %5824 = vmatpush1.msra.mxu0 %v1889
        %5825 = vmatprep.subr.mxu0 0.0
        %5826 = vmatpush1.msra.mxu0 %v1890
        %5827 = vmatprep.subr.mxu0 0.0
        %5828 = vmatpush1.msra.mxu0 %v1891
        %5829 = vmatprep.subr.mxu0 0.0
        %5830 = vmatpush1.msra.mxu0 %v1892
        %5831 = vmatprep.subr.mxu0 0.0
        %5832 = vmatpush1.msra.mxu0 %v1893
        %5833 = vmatprep.subr.mxu0 0.0
        %5834 = vmatpush1.msra.mxu0 %v1894
        %5835 = vmatprep.subr.mxu0 0.0
        %5836 = vmatpush1.msra.mxu0 %v1895
        %5837 = vmatprep.subr.mxu0 0.0
        %5838 = vmatpush1.msra.mxu0 %v1896
        %5839 = vmatprep.mubr.f32.mxu0 %v268
        %5840 = vmatmul.mubr.f32.gmra.mrb[0].mxu0 %v267
        %v5841 = vpop.f32.mrb[0].mxu0
        %v5842 = vadd.f32 %v5772, %v5841
        %v5843 = vpop.f32.mrb[0].mxu0
        %5844 = vdwg.mxu0
        %5845 = vmatprep.subr.mxu0 0.0
        %5846 = vmatpush1.msra.mxu0 %v1897
        %5847 = vmatprep.subr.mxu0 0.0
        %5848 = vmatpush1.msra.mxu0 %v1898
        %5849 = vmatprep.subr.mxu0 0.0
        %5850 = vmatpush1.msra.mxu0 %v1899
        %5851 = vmatprep.subr.mxu0 0.0
        %5852 = vmatpush1.msra.mxu0 %v1900
        %5853 = vmatprep.subr.mxu0 0.0
        %5854 = vmatpush1.msra.mxu0 %v1901
        %5855 = vmatprep.subr.mxu0 0.0
        %5856 = vmatpush1.msra.mxu0 %v1902
        %5857 = vmatprep.subr.mxu0 0.0
        %5858 = vmatpush1.msra.mxu0 %v1903
        %5859 = vmatprep.subr.mxu0 0.0
        %5860 = vmatpush1.msra.mxu0 %v1904
        %5861 = vmatprep.subr.mxu0 0.0
        %5862 = vmatpush1.msra.mxu0 %v1905
        %5863 = vmatprep.subr.mxu0 0.0
        %5864 = vmatpush1.msra.mxu0 %v1906
        %5865 = vmatprep.subr.mxu0 0.0
        %5866 = vmatpush1.msra.mxu0 %v1907
        %5867 = vmatprep.subr.mxu0 0.0
        %5868 = vmatpush1.msra.mxu0 %v1908
        %5869 = vmatprep.subr.mxu0 0.0
        %5870 = vmatpush1.msra.mxu0 %v1909
        %5871 = vmatprep.subr.mxu0 0.0
        %5872 = vmatpush1.msra.mxu0 %v1910
        %5873 = vmatprep.subr.mxu0 0.0
        %5874 = vmatpush1.msra.mxu0 %v1911
        %5875 = vmatprep.subr.mxu0 0.0
        %5876 = vmatpush1.msra.mxu0 %v1912
        %5877 = vmatprep.subr.mxu0 0.0
        %5878 = vmatpush1.msra.mxu0 %v1913
        %5879 = vmatprep.subr.mxu0 0.0
        %5880 = vmatpush1.msra.mxu0 %v1914
        %5881 = vmatprep.subr.mxu0 0.0
        %5882 = vmatpush1.msra.mxu0 %v1915
        %5883 = vmatprep.subr.mxu0 0.0
        %5884 = vmatpush1.msra.mxu0 %v1916
        %5885 = vmatprep.subr.mxu0 0.0
        %5886 = vmatpush1.msra.mxu0 %v1917
        %5887 = vmatprep.subr.mxu0 0.0
        %5888 = vmatpush1.msra.mxu0 %v1918
        %5889 = vmatprep.subr.mxu0 0.0
        %5890 = vmatpush1.msra.mxu0 %v1919
        %5891 = vmatprep.subr.mxu0 0.0
        %5892 = vmatpush1.msra.mxu0 %v1920
        %5893 = vmatprep.subr.mxu0 0.0
        %5894 = vmatpush1.msra.mxu0 %v1921
        %5895 = vmatprep.subr.mxu0 0.0
        %5896 = vmatpush1.msra.mxu0 %v1922
        %5897 = vmatprep.subr.mxu0 0.0
        %5898 = vmatpush1.msra.mxu0 %v1923
        %5899 = vmatprep.subr.mxu0 0.0
        %5900 = vmatpush1.msra.mxu0 %v1924
        %5901 = vmatprep.subr.mxu0 0.0
        %5902 = vmatpush1.msra.mxu0 %v1925
        %5903 = vmatprep.subr.mxu0 0.0
        %5904 = vmatpush1.msra.mxu0 %v1926
        %5905 = vmatprep.subr.mxu0 0.0
        %5906 = vmatpush1.msra.mxu0 %v1927
        %5907 = vmatprep.subr.mxu0 0.0
        %5908 = vmatpush1.msra.mxu0 %v1928
        %5909 = vmatprep.mubr.f32.mxu0 %v270
        %5910 = vmatmul.mubr.f32.gmra.mrb[0].mxu0 %v269
        %v5911 = vpop.f32.mrb[0].mxu0
        %v5912 = vadd.f32 %v5842, %v5911
        %v5913 = vpop.f32.mrb[0].mxu0
        %5914 = vdwg.mxu0
        %5915 = vmatprep.subr.mxu0 0.0
        %5916 = vmatpush1.msra.mxu0 %v1929
        %5917 = vmatprep.subr.mxu0 0.0
        %5918 = vmatpush1.msra.mxu0 %v1930
        %5919 = vmatprep.subr.mxu0 0.0
        %5920 = vmatpush1.msra.mxu0 %v1931
        %5921 = vmatprep.subr.mxu0 0.0
        %5922 = vmatpush1.msra.mxu0 %v1932
        %5923 = vmatprep.subr.mxu0 0.0
        %5924 = vmatpush1.msra.mxu0 %v1933
        %5925 = vmatprep.subr.mxu0 0.0
        %5926 = vmatpush1.msra.mxu0 %v1934
        %5927 = vmatprep.subr.mxu0 0.0
        %5928 = vmatpush1.msra.mxu0 %v1935
        %5929 = vmatprep.subr.mxu0 0.0
        %5930 = vmatpush1.msra.mxu0 %v1936
        %5931 = vmatprep.subr.mxu0 0.0
        %5932 = vmatpush1.msra.mxu0 %v1937
        %5933 = vmatprep.subr.mxu0 0.0
        %5934 = vmatpush1.msra.mxu0 %v1938
        %5935 = vmatprep.subr.mxu0 0.0
        %5936 = vmatpush1.msra.mxu0 %v1939
        %5937 = vmatprep.subr.mxu0 0.0
        %5938 = vmatpush1.msra.mxu0 %v1940
        %5939 = vmatprep.subr.mxu0 0.0
        %5940 = vmatpush1.msra.mxu0 %v1941
        %5941 = vmatprep.subr.mxu0 0.0
        %5942 = vmatpush1.msra.mxu0 %v1942
        %5943 = vmatprep.subr.mxu0 0.0
        %5944 = vmatpush1.msra.mxu0 %v1943
        %5945 = vmatprep.subr.mxu0 0.0
        %5946 = vmatpush1.msra.mxu0 %v1944
        %5947 = vmatprep.subr.mxu0 0.0
        %5948 = vmatpush1.msra.mxu0 %v1945
        %5949 = vmatprep.subr.mxu0 0.0
        %5950 = vmatpush1.msra.mxu0 %v1946
        %5951 = vmatprep.subr.mxu0 0.0
        %5952 = vmatpush1.msra.mxu0 %v1947
        %5953 = vmatprep.subr.mxu0 0.0
        %5954 = vmatpush1.msra.mxu0 %v1948
        %5955 = vmatprep.subr.mxu0 0.0
        %5956 = vmatpush1.msra.mxu0 %v1949
        %5957 = vmatprep.subr.mxu0 0.0
        %5958 = vmatpush1.msra.mxu0 %v1950
        %5959 = vmatprep.subr.mxu0 0.0
        %5960 = vmatpush1.msra.mxu0 %v1951
        %5961 = vmatprep.subr.mxu0 0.0
        %5962 = vmatpush1.msra.mxu0 %v1952
        %5963 = vmatprep.subr.mxu0 0.0
        %5964 = vmatpush1.msra.mxu0 %v1953
        %5965 = vmatprep.subr.mxu0 0.0
        %5966 = vmatpush1.msra.mxu0 %v1954
        %5967 = vmatprep.subr.mxu0 0.0
        %5968 = vmatpush1.msra.mxu0 %v1955
        %5969 = vmatprep.subr.mxu0 0.0
        %5970 = vmatpush1.msra.mxu0 %v1956
        %5971 = vmatprep.subr.mxu0 0.0
        %5972 = vmatpush1.msra.mxu0 %v1957
        %5973 = vmatprep.subr.mxu0 0.0
        %5974 = vmatpush1.msra.mxu0 %v1958
        %5975 = vmatprep.subr.mxu0 0.0
        %5976 = vmatpush1.msra.mxu0 %v1959
        %5977 = vmatprep.subr.mxu0 0.0
        %5978 = vmatpush1.msra.mxu0 %v1960
        %5979 = vmatprep.mubr.f32.mxu0 %v272
        %5980 = vmatmul.mubr.f32.gmra.mrb[0].mxu0 %v271
        %v5981 = vpop.f32.mrb[0].mxu0
        %v5982 = vadd.f32 %v5912, %v5981
        %v5983 = vpop.f32.mrb[0].mxu0
        %5984 = vdwg.mxu0
        %5985 = vmatprep.subr.mxu0 0.0
        %5986 = vmatpush1.msra.mxu0 %v1961
        %5987 = vmatprep.subr.mxu0 0.0
        %5988 = vmatpush1.msra.mxu0 %v1962
        %5989 = vmatprep.subr.mxu0 0.0
        %5990 = vmatpush1.msra.mxu0 %v1963
        %5991 = vmatprep.subr.mxu0 0.0
        %5992 = vmatpush1.msra.mxu0 %v1964
        %5993 = vmatprep.subr.mxu0 0.0
        %5994 = vmatpush1.msra.mxu0 %v1965
        %5995 = vmatprep.subr.mxu0 0.0
        %5996 = vmatpush1.msra.mxu0 %v1966
        %5997 = vmatprep.subr.mxu0 0.0
        %5998 = vmatpush1.msra.mxu0 %v1967
        %5999 = vmatprep.subr.mxu0 0.0
        %6000 = vmatpush1.msra.mxu0 %v1968
        %6001 = vmatprep.subr.mxu0 0.0
        %6002 = vmatpush1.msra.mxu0 %v1969
        %6003 = vmatprep.subr.mxu0 0.0
        %6004 = vmatpush1.msra.mxu0 %v1970
        %6005 = vmatprep.subr.mxu0 0.0
        %6006 = vmatpush1.msra.mxu0 %v1971
        %6007 = vmatprep.subr.mxu0 0.0
        %6008 = vmatpush1.msra.mxu0 %v1972
        %6009 = vmatprep.subr.mxu0 0.0
        %6010 = vmatpush1.msra.mxu0 %v1973
        %6011 = vmatprep.subr.mxu0 0.0
        %6012 = vmatpush1.msra.mxu0 %v1974
        %6013 = vmatprep.subr.mxu0 0.0
        %6014 = vmatpush1.msra.mxu0 %v1975
        %6015 = vmatprep.subr.mxu0 0.0
        %6016 = vmatpush1.msra.mxu0 %v1976
        %6017 = vmatprep.subr.mxu0 0.0
        %6018 = vmatpush1.msra.mxu0 %v1977
        %6019 = vmatprep.subr.mxu0 0.0
        %6020 = vmatpush1.msra.mxu0 %v1978
        %6021 = vmatprep.subr.mxu0 0.0
        %6022 = vmatpush1.msra.mxu0 %v1979
        %6023 = vmatprep.subr.mxu0 0.0
        %6024 = vmatpush1.msra.mxu0 %v1980
        %6025 = vmatprep.subr.mxu0 0.0
        %6026 = vmatpush1.msra.mxu0 %v1981
        %6027 = vmatprep.subr.mxu0 0.0
        %6028 = vmatpush1.msra.mxu0 %v1982
        %6029 = vmatprep.subr.mxu0 0.0
        %6030 = vmatpush1.msra.mxu0 %v1983
        %6031 = vmatprep.subr.mxu0 0.0
        %6032 = vmatpush1.msra.mxu0 %v1984
        %6033 = vmatprep.subr.mxu0 0.0
        %6034 = vmatpush1.msra.mxu0 %v1985
        %6035 = vmatprep.subr.mxu0 0.0
        %6036 = vmatpush1.msra.mxu0 %v1986
        %6037 = vmatprep.subr.mxu0 0.0
        %6038 = vmatpush1.msra.mxu0 %v1987
        %6039 = vmatprep.subr.mxu0 0.0
        %6040 = vmatpush1.msra.mxu0 %v1988
        %6041 = vmatprep.subr.mxu0 0.0
        %6042 = vmatpush1.msra.mxu0 %v1989
        %6043 = vmatprep.subr.mxu0 0.0
        %6044 = vmatpush1.msra.mxu0 %v1990
        %6045 = vmatprep.subr.mxu0 0.0
        %6046 = vmatpush1.msra.mxu0 %v1991
        %6047 = vmatprep.subr.mxu0 0.0
        %6048 = vmatpush1.msra.mxu0 %v1992
        %6049 = vmatprep.mubr.f32.mxu0 %v274
        %6050 = vmatmul.mubr.f32.gmra.mrb[0].mxu0 %v273
        %v6051 = vpop.f32.mrb[0].mxu0
        %v6052 = vadd.f32 %v5982, %v6051
        %v6053 = vpop.f32.mrb[0].mxu0
        %6054 = vdwg.mxu0
        %6055 = vmatprep.subr.mxu0 0.0
        %6056 = vmatpush1.msra.mxu0 %v1993
        %6057 = vmatprep.subr.mxu0 0.0
        %6058 = vmatpush1.msra.mxu0 %v1994
        %6059 = vmatprep.subr.mxu0 0.0
        %6060 = vmatpush1.msra.mxu0 %v1995
        %6061 = vmatprep.subr.mxu0 0.0
        %6062 = vmatpush1.msra.mxu0 %v1996
        %6063 = vmatprep.subr.mxu0 0.0
        %6064 = vmatpush1.msra.mxu0 %v1997
        %6065 = vmatprep.subr.mxu0 0.0
        %6066 = vmatpush1.msra.mxu0 %v1998
        %6067 = vmatprep.subr.mxu0 0.0
        %6068 = vmatpush1.msra.mxu0 %v1999
        %6069 = vmatprep.subr.mxu0 0.0
        %6070 = vmatpush1.msra.mxu0 %v2000
        %6071 = vmatprep.subr.mxu0 0.0
        %6072 = vmatpush1.msra.mxu0 %v2001
        %6073 = vmatprep.subr.mxu0 0.0
        %6074 = vmatpush1.msra.mxu0 %v2002
        %6075 = vmatprep.subr.mxu0 0.0
        %6076 = vmatpush1.msra.mxu0 %v2003
        %6077 = vmatprep.subr.mxu0 0.0
        %6078 = vmatpush1.msra.mxu0 %v2004
        %6079 = vmatprep.subr.mxu0 0.0
        %6080 = vmatpush1.msra.mxu0 %v2005
        %6081 = vmatprep.subr.mxu0 0.0
        %6082 = vmatpush1.msra.mxu0 %v2006
        %6083 = vmatprep.subr.mxu0 0.0
        %6084 = vmatpush1.msra.mxu0 %v2007
        %6085 = vmatprep.subr.mxu0 0.0
        %6086 = vmatpush1.msra.mxu0 %v2008
        %6087 = vmatprep.subr.mxu0 0.0
        %6088 = vmatpush1.msra.mxu0 %v2009
        %6089 = vmatprep.subr.mxu0 0.0
        %6090 = vmatpush1.msra.mxu0 %v2010
        %6091 = vmatprep.subr.mxu0 0.0
        %6092 = vmatpush1.msra.mxu0 %v2011
        %6093 = vmatprep.subr.mxu0 0.0
        %6094 = vmatpush1.msra.mxu0 %v2012
        %6095 = vmatprep.subr.mxu0 0.0
        %6096 = vmatpush1.msra.mxu0 %v2013
        %6097 = vmatprep.subr.mxu0 0.0
        %6098 = vmatpush1.msra.mxu0 %v2014
        %6099 = vmatprep.subr.mxu0 0.0
        %6100 = vmatpush1.msra.mxu0 %v2015
        %6101 = vmatprep.subr.mxu0 0.0
        %6102 = vmatpush1.msra.mxu0 %v2016
        %6103 = vmatprep.subr.mxu0 0.0
        %6104 = vmatpush1.msra.mxu0 %v2017
        %6105 = vmatprep.subr.mxu0 0.0
        %6106 = vmatpush1.msra.mxu0 %v2018
        %6107 = vmatprep.subr.mxu0 0.0
        %6108 = vmatpush1.msra.mxu0 %v2019
        %6109 = vmatprep.subr.mxu0 0.0
        %6110 = vmatpush1.msra.mxu0 %v2020
        %6111 = vmatprep.subr.mxu0 0.0
        %6112 = vmatpush1.msra.mxu0 %v2021
        %6113 = vmatprep.subr.mxu0 0.0
        %6114 = vmatpush1.msra.mxu0 %v2022
        %6115 = vmatprep.subr.mxu0 0.0
        %6116 = vmatpush1.msra.mxu0 %v2023
        %6117 = vmatprep.subr.mxu0 0.0
        %6118 = vmatpush1.msra.mxu0 %v2024
        %6119 = vmatprep.mubr.f32.mxu0 %v276
        %6120 = vmatmul.mubr.f32.gmra.mrb[0].mxu0 %v275
        %v6121 = vpop.f32.mrb[0].mxu0
        %v6122 = vadd.f32 %v6052, %v6121
        %v6123 = vpop.f32.mrb[0].mxu0
        %6124 = vdwg.mxu0
        %6125 = vmatprep.subr.mxu0 0.0
        %6126 = vmatpush1.msra.mxu0 %v2025
        %6127 = vmatprep.subr.mxu0 0.0
        %6128 = vmatpush1.msra.mxu0 %v2026
        %6129 = vmatprep.subr.mxu0 0.0
        %6130 = vmatpush1.msra.mxu0 %v2027
        %6131 = vmatprep.subr.mxu0 0.0
        %6132 = vmatpush1.msra.mxu0 %v2028
        %6133 = vmatprep.subr.mxu0 0.0
        %6134 = vmatpush1.msra.mxu0 %v2029
        %6135 = vmatprep.subr.mxu0 0.0
        %6136 = vmatpush1.msra.mxu0 %v2030
        %6137 = vmatprep.subr.mxu0 0.0
        %6138 = vmatpush1.msra.mxu0 %v2031
        %6139 = vmatprep.subr.mxu0 0.0
        %6140 = vmatpush1.msra.mxu0 %v2032
        %6141 = vmatprep.subr.mxu0 0.0
        %6142 = vmatpush1.msra.mxu0 %v2033
        %6143 = vmatprep.subr.mxu0 0.0
        %6144 = vmatpush1.msra.mxu0 %v2034
        %6145 = vmatprep.subr.mxu0 0.0
        %6146 = vmatpush1.msra.mxu0 %v2035
        %6147 = vmatprep.subr.mxu0 0.0
        %6148 = vmatpush1.msra.mxu0 %v2036
        %6149 = vmatprep.subr.mxu0 0.0
        %6150 = vmatpush1.msra.mxu0 %v2037
        %6151 = vmatprep.subr.mxu0 0.0
        %6152 = vmatpush1.msra.mxu0 %v2038
        %6153 = vmatprep.subr.mxu0 0.0
        %6154 = vmatpush1.msra.mxu0 %v2039
        %6155 = vmatprep.subr.mxu0 0.0
        %6156 = vmatpush1.msra.mxu0 %v2040
        %6157 = vmatprep.subr.mxu0 0.0
        %6158 = vmatpush1.msra.mxu0 %v2041
        %6159 = vmatprep.subr.mxu0 0.0
        %6160 = vmatpush1.msra.mxu0 %v2042
        %6161 = vmatprep.subr.mxu0 0.0
        %6162 = vmatpush1.msra.mxu0 %v2043
        %6163 = vmatprep.subr.mxu0 0.0
        %6164 = vmatpush1.msra.mxu0 %v2044
        %6165 = vmatprep.subr.mxu0 0.0
        %6166 = vmatpush1.msra.mxu0 %v2045
        %6167 = vmatprep.subr.mxu0 0.0
        %6168 = vmatpush1.msra.mxu0 %v2046
        %6169 = vmatprep.subr.mxu0 0.0
        %6170 = vmatpush1.msra.mxu0 %v2047
        %6171 = vmatprep.subr.mxu0 0.0
        %6172 = vmatpush1.msra.mxu0 %v2048
        %6173 = vmatprep.subr.mxu0 0.0
        %6174 = vmatpush1.msra.mxu0 %v2049
        %6175 = vmatprep.subr.mxu0 0.0
        %6176 = vmatpush1.msra.mxu0 %v2050
        %6177 = vmatprep.subr.mxu0 0.0
        %6178 = vmatpush1.msra.mxu0 %v2051
        %6179 = vmatprep.subr.mxu0 0.0
        %6180 = vmatpush1.msra.mxu0 %v2052
        %6181 = vmatprep.subr.mxu0 0.0
        %6182 = vmatpush1.msra.mxu0 %v2053
        %6183 = vmatprep.subr.mxu0 0.0
        %6184 = vmatpush1.msra.mxu0 %v2054
        %6185 = vmatprep.subr.mxu0 0.0
        %6186 = vmatpush1.msra.mxu0 %v2055
        %6187 = vmatprep.subr.mxu0 0.0
        %6188 = vmatpush1.msra.mxu0 %v2056
        %6189 = vmatprep.mubr.f32.mxu0 %v278
        %6190 = vmatmul.mubr.f32.gmra.mrb[0].mxu0 %v277
        %v6191 = vpop.f32.mrb[0].mxu0
        %v6192 = vadd.f32 %v6122, %v6191
        %v6193 = vpop.f32.mrb[0].mxu0
        %6194 = vdwg.mxu0
        %6195 = vmatprep.subr.mxu0 0.0
        %6196 = vmatpush1.msra.mxu0 %v2057
        %6197 = vmatprep.subr.mxu0 0.0
        %6198 = vmatpush1.msra.mxu0 %v2058
        %6199 = vmatprep.subr.mxu0 0.0
        %6200 = vmatpush1.msra.mxu0 %v2059
        %6201 = vmatprep.subr.mxu0 0.0
        %6202 = vmatpush1.msra.mxu0 %v2060
        %6203 = vmatprep.subr.mxu0 0.0
        %6204 = vmatpush1.msra.mxu0 %v2061
        %6205 = vmatprep.subr.mxu0 0.0
        %6206 = vmatpush1.msra.mxu0 %v2062
        %6207 = vmatprep.subr.mxu0 0.0
        %6208 = vmatpush1.msra.mxu0 %v2063
        %6209 = vmatprep.subr.mxu0 0.0
        %6210 = vmatpush1.msra.mxu0 %v2064
        %6211 = vmatprep.subr.mxu0 0.0
        %6212 = vmatpush1.msra.mxu0 %v2065
        %6213 = vmatprep.subr.mxu0 0.0
        %6214 = vmatpush1.msra.mxu0 %v2066
        %6215 = vmatprep.subr.mxu0 0.0
        %6216 = vmatpush1.msra.mxu0 %v2067
        %6217 = vmatprep.subr.mxu0 0.0
        %6218 = vmatpush1.msra.mxu0 %v2068
        %6219 = vmatprep.subr.mxu0 0.0
        %6220 = vmatpush1.msra.mxu0 %v2069
        %6221 = vmatprep.subr.mxu0 0.0
        %6222 = vmatpush1.msra.mxu0 %v2070
        %6223 = vmatprep.subr.mxu0 0.0
        %6224 = vmatpush1.msra.mxu0 %v2071
        %6225 = vmatprep.subr.mxu0 0.0
        %6226 = vmatpush1.msra.mxu0 %v2072
        %6227 = vmatprep.subr.mxu0 0.0
        %6228 = vmatpush1.msra.mxu0 %v2073
        %6229 = vmatprep.subr.mxu0 0.0
        %6230 = vmatpush1.msra.mxu0 %v2074
        %6231 = vmatprep.subr.mxu0 0.0
        %6232 = vmatpush1.msra.mxu0 %v2075
        %6233 = vmatprep.subr.mxu0 0.0
        %6234 = vmatpush1.msra.mxu0 %v2076
        %6235 = vmatprep.subr.mxu0 0.0
        %6236 = vmatpush1.msra.mxu0 %v2077
        %6237 = vmatprep.subr.mxu0 0.0
        %6238 = vmatpush1.msra.mxu0 %v2078
        %6239 = vmatprep.subr.mxu0 0.0
        %6240 = vmatpush1.msra.mxu0 %v2079
        %6241 = vmatprep.subr.mxu0 0.0
        %6242 = vmatpush1.msra.mxu0 %v2080
        %6243 = vmatprep.subr.mxu0 0.0
        %6244 = vmatpush1.msra.mxu0 %v2081
        %6245 = vmatprep.subr.mxu0 0.0
        %6246 = vmatpush1.msra.mxu0 %v2082
        %6247 = vmatprep.subr.mxu0 0.0
        %6248 = vmatpush1.msra.mxu0 %v2083
        %6249 = vmatprep.subr.mxu0 0.0
        %6250 = vmatpush1.msra.mxu0 %v2084
        %6251 = vmatprep.subr.mxu0 0.0
        %6252 = vmatpush1.msra.mxu0 %v2085
        %6253 = vmatprep.subr.mxu0 0.0
        %6254 = vmatpush1.msra.mxu0 %v2086
        %6255 = vmatprep.subr.mxu0 0.0
        %6256 = vmatpush1.msra.mxu0 %v2087
        %6257 = vmatprep.subr.mxu0 0.0
        %6258 = vmatpush1.msra.mxu0 %v2088
        %6259 = vmatprep.mubr.f32.mxu0 %v280
        %6260 = vmatmul.mubr.f32.gmra.mrb[0].mxu0 %v279
        %v6261 = vpop.f32.mrb[0].mxu0
        %v6262 = vadd.f32 %v6192, %v6261
        %v6263 = vpop.f32.mrb[0].mxu0
        %6264 = vdwg.mxu0
        %6265 = vmatprep.subr.mxu0 0.0
        %6266 = vmatpush1.msra.mxu0 %v2089
        %6267 = vmatprep.subr.mxu0 0.0
        %6268 = vmatpush1.msra.mxu0 %v2090
        %6269 = vmatprep.subr.mxu0 0.0
        %6270 = vmatpush1.msra.mxu0 %v2091
        %6271 = vmatprep.subr.mxu0 0.0
        %6272 = vmatpush1.msra.mxu0 %v2092
        %6273 = vmatprep.subr.mxu0 0.0
        %6274 = vmatpush1.msra.mxu0 %v2093
        %6275 = vmatprep.subr.mxu0 0.0
        %6276 = vmatpush1.msra.mxu0 %v2094
        %6277 = vmatprep.subr.mxu0 0.0
        %6278 = vmatpush1.msra.mxu0 %v2095
        %6279 = vmatprep.subr.mxu0 0.0
        %6280 = vmatpush1.msra.mxu0 %v2096
        %6281 = vmatprep.subr.mxu0 0.0
        %6282 = vmatpush1.msra.mxu0 %v2097
        %6283 = vmatprep.subr.mxu0 0.0
        %6284 = vmatpush1.msra.mxu0 %v2098
        %6285 = vmatprep.subr.mxu0 0.0
        %6286 = vmatpush1.msra.mxu0 %v2099
        %6287 = vmatprep.subr.mxu0 0.0
        %6288 = vmatpush1.msra.mxu0 %v2100
        %6289 = vmatprep.subr.mxu0 0.0
        %6290 = vmatpush1.msra.mxu0 %v2101
        %6291 = vmatprep.subr.mxu0 0.0
        %6292 = vmatpush1.msra.mxu0 %v2102
        %6293 = vmatprep.subr.mxu0 0.0
        %6294 = vmatpush1.msra.mxu0 %v2103
        %6295 = vmatprep.subr.mxu0 0.0
        %6296 = vmatpush1.msra.mxu0 %v2104
        %6297 = vmatprep.subr.mxu0 0.0
        %6298 = vmatpush1.msra.mxu0 %v2105
        %6299 = vmatprep.subr.mxu0 0.0
        %6300 = vmatpush1.msra.mxu0 %v2106
        %6301 = vmatprep.subr.mxu0 0.0
        %6302 = vmatpush1.msra.mxu0 %v2107
        %6303 = vmatprep.subr.mxu0 0.0
        %6304 = vmatpush1.msra.mxu0 %v2108
        %6305 = vmatprep.subr.mxu0 0.0
        %6306 = vmatpush1.msra.mxu0 %v2109
        %6307 = vmatprep.subr.mxu0 0.0
        %6308 = vmatpush1.msra.mxu0 %v2110
        %6309 = vmatprep.subr.mxu0 0.0
        %6310 = vmatpush1.msra.mxu0 %v2111
        %6311 = vmatprep.subr.mxu0 0.0
        %6312 = vmatpush1.msra.mxu0 %v2112
        %6313 = vmatprep.subr.mxu0 0.0
        %6314 = vmatpush1.msra.mxu0 %v2113
        %6315 = vmatprep.subr.mxu0 0.0
        %6316 = vmatpush1.msra.mxu0 %v2114
        %6317 = vmatprep.subr.mxu0 0.0
        %6318 = vmatpush1.msra.mxu0 %v2115
        %6319 = vmatprep.subr.mxu0 0.0
        %6320 = vmatpush1.msra.mxu0 %v2116
        %6321 = vmatprep.subr.mxu0 0.0
        %6322 = vmatpush1.msra.mxu0 %v2117
        %6323 = vmatprep.subr.mxu0 0.0
        %6324 = vmatpush1.msra.mxu0 %v2118
        %6325 = vmatprep.subr.mxu0 0.0
        %6326 = vmatpush1.msra.mxu0 %v2119
        %6327 = vmatprep.subr.mxu0 0.0
        %6328 = vmatpush1.msra.mxu0 %v2120
        %6329 = vmatprep.mubr.f32.mxu0 %v282
        %6330 = vmatmul.mubr.f32.gmra.mrb[0].mxu0 %v281
        %v6331 = vpop.f32.mrb[0].mxu0
        %v6332 = vadd.f32 %v6262, %v6331
        %v6333 = vpop.f32.mrb[0].mxu0
        %6334 = vdwg.mxu0
        %6335 = vmatprep.subr.mxu0 0.0
        %6336 = vmatpush1.msra.mxu0 %v2121
        %6337 = vmatprep.subr.mxu0 0.0
        %6338 = vmatpush1.msra.mxu0 %v2122
        %6339 = vmatprep.subr.mxu0 0.0
        %6340 = vmatpush1.msra.mxu0 %v2123
        %6341 = vmatprep.subr.mxu0 0.0
        %6342 = vmatpush1.msra.mxu0 %v2124
        %6343 = vmatprep.subr.mxu0 0.0
        %6344 = vmatpush1.msra.mxu0 %v2125
        %6345 = vmatprep.subr.mxu0 0.0
        %6346 = vmatpush1.msra.mxu0 %v2126
        %6347 = vmatprep.subr.mxu0 0.0
        %6348 = vmatpush1.msra.mxu0 %v2127
        %6349 = vmatprep.subr.mxu0 0.0
        %6350 = vmatpush1.msra.mxu0 %v2128
        %6351 = vmatprep.subr.mxu0 0.0
        %6352 = vmatpush1.msra.mxu0 %v2129
        %6353 = vmatprep.subr.mxu0 0.0
        %6354 = vmatpush1.msra.mxu0 %v2130
        %6355 = vmatprep.subr.mxu0 0.0
        %6356 = vmatpush1.msra.mxu0 %v2131
        %6357 = vmatprep.subr.mxu0 0.0
        %6358 = vmatpush1.msra.mxu0 %v2132
        %6359 = vmatprep.subr.mxu0 0.0
        %6360 = vmatpush1.msra.mxu0 %v2133
        %6361 = vmatprep.subr.mxu0 0.0
        %6362 = vmatpush1.msra.mxu0 %v2134
        %6363 = vmatprep.subr.mxu0 0.0
        %6364 = vmatpush1.msra.mxu0 %v2135
        %6365 = vmatprep.subr.mxu0 0.0
        %6366 = vmatpush1.msra.mxu0 %v2136
        %6367 = vmatprep.subr.mxu0 0.0
        %6368 = vmatpush1.msra.mxu0 %v2137
        %6369 = vmatprep.subr.mxu0 0.0
        %6370 = vmatpush1.msra.mxu0 %v2138
        %6371 = vmatprep.subr.mxu0 0.0
        %6372 = vmatpush1.msra.mxu0 %v2139
        %6373 = vmatprep.subr.mxu0 0.0
        %6374 = vmatpush1.msra.mxu0 %v2140
        %6375 = vmatprep.subr.mxu0 0.0
        %6376 = vmatpush1.msra.mxu0 %v2141
        %6377 = vmatprep.subr.mxu0 0.0
        %6378 = vmatpush1.msra.mxu0 %v2142
        %6379 = vmatprep.subr.mxu0 0.0
        %6380 = vmatpush1.msra.mxu0 %v2143
        %6381 = vmatprep.subr.mxu0 0.0
        %6382 = vmatpush1.msra.mxu0 %v2144
        %6383 = vmatprep.subr.mxu0 0.0
        %6384 = vmatpush1.msra.mxu0 %v2145
        %6385 = vmatprep.subr.mxu0 0.0
        %6386 = vmatpush1.msra.mxu0 %v2146
        %6387 = vmatprep.subr.mxu0 0.0
        %6388 = vmatpush1.msra.mxu0 %v2147
        %6389 = vmatprep.subr.mxu0 0.0
        %6390 = vmatpush1.msra.mxu0 %v2148
        %6391 = vmatprep.subr.mxu0 0.0
        %6392 = vmatpush1.msra.mxu0 %v2149
        %6393 = vmatprep.subr.mxu0 0.0
        %6394 = vmatpush1.msra.mxu0 %v2150
        %6395 = vmatprep.subr.mxu0 0.0
        %6396 = vmatpush1.msra.mxu0 %v2151
        %6397 = vmatprep.subr.mxu0 0.0
        %6398 = vmatpush1.msra.mxu0 %v2152
        %6399 = vmatprep.mubr.f32.mxu0 %v284
        %6400 = vmatmul.mubr.f32.gmra.mrb[0].mxu0 %v283
        %v6401 = vpop.f32.mrb[0].mxu0
        %v6402 = vadd.f32 %v6332, %v6401
        %v6403 = vpop.f32.mrb[0].mxu0
        %6404 = vdwg.mxu0
        %6405 = vmatprep.subr.mxu0 0.0
        %6406 = vmatpush1.msra.mxu0 %v2153
        %6407 = vmatprep.subr.mxu0 0.0
        %6408 = vmatpush1.msra.mxu0 %v2154
        %6409 = vmatprep.subr.mxu0 0.0
        %6410 = vmatpush1.msra.mxu0 %v2155
        %6411 = vmatprep.subr.mxu0 0.0
        %6412 = vmatpush1.msra.mxu0 %v2156
        %6413 = vmatprep.subr.mxu0 0.0
        %6414 = vmatpush1.msra.mxu0 %v2157
        %6415 = vmatprep.subr.mxu0 0.0
        %6416 = vmatpush1.msra.mxu0 %v2158
        %6417 = vmatprep.subr.mxu0 0.0
        %6418 = vmatpush1.msra.mxu0 %v2159
        %6419 = vmatprep.subr.mxu0 0.0
        %6420 = vmatpush1.msra.mxu0 %v2160
        %6421 = vmatprep.subr.mxu0 0.0
        %6422 = vmatpush1.msra.mxu0 %v2161
        %6423 = vmatprep.subr.mxu0 0.0
        %6424 = vmatpush1.msra.mxu0 %v2162
        %6425 = vmatprep.subr.mxu0 0.0
        %6426 = vmatpush1.msra.mxu0 %v2163
        %6427 = vmatprep.subr.mxu0 0.0
        %6428 = vmatpush1.msra.mxu0 %v2164
        %6429 = vmatprep.subr.mxu0 0.0
        %6430 = vmatpush1.msra.mxu0 %v2165
        %6431 = vmatprep.subr.mxu0 0.0
        %6432 = vmatpush1.msra.mxu0 %v2166
        %6433 = vmatprep.subr.mxu0 0.0
        %6434 = vmatpush1.msra.mxu0 %v2167
        %6435 = vmatprep.subr.mxu0 0.0
        %6436 = vmatpush1.msra.mxu0 %v2168
        %6437 = vmatprep.subr.mxu0 0.0
        %6438 = vmatpush1.msra.mxu0 %v2169
        %6439 = vmatprep.subr.mxu0 0.0
        %6440 = vmatpush1.msra.mxu0 %v2170
        %6441 = vmatprep.subr.mxu0 0.0
        %6442 = vmatpush1.msra.mxu0 %v2171
        %6443 = vmatprep.subr.mxu0 0.0
        %6444 = vmatpush1.msra.mxu0 %v2172
        %6445 = vmatprep.subr.mxu0 0.0
        %6446 = vmatpush1.msra.mxu0 %v2173
        %6447 = vmatprep.subr.mxu0 0.0
        %6448 = vmatpush1.msra.mxu0 %v2174
        %6449 = vmatprep.subr.mxu0 0.0
        %6450 = vmatpush1.msra.mxu0 %v2175
        %6451 = vmatprep.subr.mxu0 0.0
        %6452 = vmatpush1.msra.mxu0 %v2176
        %6453 = vmatprep.subr.mxu0 0.0
        %6454 = vmatpush1.msra.mxu0 %v2177
        %6455 = vmatprep.subr.mxu0 0.0
        %6456 = vmatpush1.msra.mxu0 %v2178
        %6457 = vmatprep.subr.mxu0 0.0
        %6458 = vmatpush1.msra.mxu0 %v2179
        %6459 = vmatprep.subr.mxu0 0.0
        %6460 = vmatpush1.msra.mxu0 %v2180
        %6461 = vmatprep.subr.mxu0 0.0
        %6462 = vmatpush1.msra.mxu0 %v2181
        %6463 = vmatprep.subr.mxu0 0.0
        %6464 = vmatpush1.msra.mxu0 %v2182
        %6465 = vmatprep.subr.mxu0 0.0
        %6466 = vmatpush1.msra.mxu0 %v2183
        %6467 = vmatprep.subr.mxu0 0.0
        %6468 = vmatpush1.msra.mxu0 %v2184
        %6469 = vmatprep.mubr.f32.mxu0 %v286
        %6470 = vmatmul.mubr.f32.gmra.mrb[0].mxu0 %v285
        %v6471 = vpop.f32.mrb[0].mxu0
        %v6472 = vadd.f32 %v6402, %v6471
        %v6473 = vpop.f32.mrb[0].mxu0
        %6474 = vdwg.mxu0
        %6475 = vmatprep.subr.mxu0 0.0
        %6476 = vmatpush1.msra.mxu0 %v2185
        %6477 = vmatprep.subr.mxu0 0.0
        %6478 = vmatpush1.msra.mxu0 %v2186
        %6479 = vmatprep.subr.mxu0 0.0
        %6480 = vmatpush1.msra.mxu0 %v2187
        %6481 = vmatprep.subr.mxu0 0.0
        %6482 = vmatpush1.msra.mxu0 %v2188
        %6483 = vmatprep.subr.mxu0 0.0
        %6484 = vmatpush1.msra.mxu0 %v2189
        %6485 = vmatprep.subr.mxu0 0.0
        %6486 = vmatpush1.msra.mxu0 %v2190
        %6487 = vmatprep.subr.mxu0 0.0
        %6488 = vmatpush1.msra.mxu0 %v2191
        %6489 = vmatprep.subr.mxu0 0.0
        %6490 = vmatpush1.msra.mxu0 %v2192
        %6491 = vmatprep.subr.mxu0 0.0
        %6492 = vmatpush1.msra.mxu0 %v2193
        %6493 = vmatprep.subr.mxu0 0.0
        %6494 = vmatpush1.msra.mxu0 %v2194
        %6495 = vmatprep.subr.mxu0 0.0
        %6496 = vmatpush1.msra.mxu0 %v2195
        %6497 = vmatprep.subr.mxu0 0.0
        %6498 = vmatpush1.msra.mxu0 %v2196
        %6499 = vmatprep.subr.mxu0 0.0
        %6500 = vmatpush1.msra.mxu0 %v2197
        %6501 = vmatprep.subr.mxu0 0.0
        %6502 = vmatpush1.msra.mxu0 %v2198
        %6503 = vmatprep.subr.mxu0 0.0
        %6504 = vmatpush1.msra.mxu0 %v2199
        %6505 = vmatprep.subr.mxu0 0.0
        %6506 = vmatpush1.msra.mxu0 %v2200
        %6507 = vmatprep.subr.mxu0 0.0
        %6508 = vmatpush1.msra.mxu0 %v2201
        %6509 = vmatprep.subr.mxu0 0.0
        %6510 = vmatpush1.msra.mxu0 %v2202
        %6511 = vmatprep.subr.mxu0 0.0
        %6512 = vmatpush1.msra.mxu0 %v2203
        %6513 = vmatprep.subr.mxu0 0.0
        %6514 = vmatpush1.msra.mxu0 %v2204
        %6515 = vmatprep.subr.mxu0 0.0
        %6516 = vmatpush1.msra.mxu0 %v2205
        %6517 = vmatprep.subr.mxu0 0.0
        %6518 = vmatpush1.msra.mxu0 %v2206
        %6519 = vmatprep.subr.mxu0 0.0
        %6520 = vmatpush1.msra.mxu0 %v2207
        %6521 = vmatprep.subr.mxu0 0.0
        %6522 = vmatpush1.msra.mxu0 %v2208
        %6523 = vmatprep.subr.mxu0 0.0
        %6524 = vmatpush1.msra.mxu0 %v2209
        %6525 = vmatprep.subr.mxu0 0.0
        %6526 = vmatpush1.msra.mxu0 %v2210
        %6527 = vmatprep.subr.mxu0 0.0
        %6528 = vmatpush1.msra.mxu0 %v2211
        %6529 = vmatprep.subr.mxu0 0.0
        %6530 = vmatpush1.msra.mxu0 %v2212
        %6531 = vmatprep.subr.mxu0 0.0
        %6532 = vmatpush1.msra.mxu0 %v2213
        %6533 = vmatprep.subr.mxu0 0.0
        %6534 = vmatpush1.msra.mxu0 %v2214
        %6535 = vmatprep.subr.mxu0 0.0
        %6536 = vmatpush1.msra.mxu0 %v2215
        %6537 = vmatprep.subr.mxu0 0.0
        %6538 = vmatpush1.msra.mxu0 %v2216
        %6539 = vmatprep.mubr.f32.mxu0 %v288
        %6540 = vmatmul.mubr.f32.gmra.mrb[0].mxu0 %v287
        %v6541 = vpop.f32.mrb[0].mxu0
        %v6542 = vadd.f32 %v6472, %v6541
        %v6543 = vpop.f32.mrb[0].mxu0
        %6544 = vdwg.mxu0
        %6545 = vmatprep.subr.mxu0 0.0
        %6546 = vmatpush1.msra.mxu0 %v2217
        %6547 = vmatprep.subr.mxu0 0.0
        %6548 = vmatpush1.msra.mxu0 %v2218
        %6549 = vmatprep.subr.mxu0 0.0
        %6550 = vmatpush1.msra.mxu0 %v2219
        %6551 = vmatprep.subr.mxu0 0.0
        %6552 = vmatpush1.msra.mxu0 %v2220
        %6553 = vmatprep.subr.mxu0 0.0
        %6554 = vmatpush1.msra.mxu0 %v2221
        %6555 = vmatprep.subr.mxu0 0.0
        %6556 = vmatpush1.msra.mxu0 %v2222
        %6557 = vmatprep.subr.mxu0 0.0
        %6558 = vmatpush1.msra.mxu0 %v2223
        %6559 = vmatprep.subr.mxu0 0.0
        %6560 = vmatpush1.msra.mxu0 %v2224
        %6561 = vmatprep.subr.mxu0 0.0
        %6562 = vmatpush1.msra.mxu0 %v2225
        %6563 = vmatprep.subr.mxu0 0.0
        %6564 = vmatpush1.msra.mxu0 %v2226
        %6565 = vmatprep.subr.mxu0 0.0
        %6566 = vmatpush1.msra.mxu0 %v2227
        %6567 = vmatprep.subr.mxu0 0.0
        %6568 = vmatpush1.msra.mxu0 %v2228
        %6569 = vmatprep.subr.mxu0 0.0
        %6570 = vmatpush1.msra.mxu0 %v2229
        %6571 = vmatprep.subr.mxu0 0.0
        %6572 = vmatpush1.msra.mxu0 %v2230
        %6573 = vmatprep.subr.mxu0 0.0
        %6574 = vmatpush1.msra.mxu0 %v2231
        %6575 = vmatprep.subr.mxu0 0.0
        %6576 = vmatpush1.msra.mxu0 %v2232
        %6577 = vmatprep.subr.mxu0 0.0
        %6578 = vmatpush1.msra.mxu0 %v2233
        %6579 = vmatprep.subr.mxu0 0.0
        %6580 = vmatpush1.msra.mxu0 %v2234
        %6581 = vmatprep.subr.mxu0 0.0
        %6582 = vmatpush1.msra.mxu0 %v2235
        %6583 = vmatprep.subr.mxu0 0.0
        %6584 = vmatpush1.msra.mxu0 %v2236
        %6585 = vmatprep.subr.mxu0 0.0
        %6586 = vmatpush1.msra.mxu0 %v2237
        %6587 = vmatprep.subr.mxu0 0.0
        %6588 = vmatpush1.msra.mxu0 %v2238
        %6589 = vmatprep.subr.mxu0 0.0
        %6590 = vmatpush1.msra.mxu0 %v2239
        %6591 = vmatprep.subr.mxu0 0.0
        %6592 = vmatpush1.msra.mxu0 %v2240
        %6593 = vmatprep.subr.mxu0 0.0
        %6594 = vmatpush1.msra.mxu0 %v2241
        %6595 = vmatprep.subr.mxu0 0.0
        %6596 = vmatpush1.msra.mxu0 %v2242
        %6597 = vmatprep.subr.mxu0 0.0
        %6598 = vmatpush1.msra.mxu0 %v2243
        %6599 = vmatprep.subr.mxu0 0.0
        %6600 = vmatpush1.msra.mxu0 %v2244
        %6601 = vmatprep.subr.mxu0 0.0
        %6602 = vmatpush1.msra.mxu0 %v2245
        %6603 = vmatprep.subr.mxu0 0.0
        %6604 = vmatpush1.msra.mxu0 %v2246
        %6605 = vmatprep.subr.mxu0 0.0
        %6606 = vmatpush1.msra.mxu0 %v2247
        %6607 = vmatprep.subr.mxu0 0.0
        %6608 = vmatpush1.msra.mxu0 %v2248
        %6609 = vmatprep.mubr.f32.mxu0 %v290
        %6610 = vmatmul.mubr.f32.gmra.mrb[0].mxu0 %v289
        %v6611 = vpop.f32.mrb[0].mxu0
        %v6612 = vadd.f32 %v6542, %v6611
        %v6613 = vpop.f32.mrb[0].mxu0
        %6614 = vdwg.mxu0
        %6615 = vmatprep.subr.mxu0 0.0
        %6616 = vmatpush1.msra.mxu0 %v2249
        %6617 = vmatprep.subr.mxu0 0.0
        %6618 = vmatpush1.msra.mxu0 %v2250
        %6619 = vmatprep.subr.mxu0 0.0
        %6620 = vmatpush1.msra.mxu0 %v2251
        %6621 = vmatprep.subr.mxu0 0.0
        %6622 = vmatpush1.msra.mxu0 %v2252
        %6623 = vmatprep.subr.mxu0 0.0
        %6624 = vmatpush1.msra.mxu0 %v2253
        %6625 = vmatprep.subr.mxu0 0.0
        %6626 = vmatpush1.msra.mxu0 %v2254
        %6627 = vmatprep.subr.mxu0 0.0
        %6628 = vmatpush1.msra.mxu0 %v2255
        %6629 = vmatprep.subr.mxu0 0.0
        %6630 = vmatpush1.msra.mxu0 %v2256
        %6631 = vmatprep.subr.mxu0 0.0
        %6632 = vmatpush1.msra.mxu0 %v2257
        %6633 = vmatprep.subr.mxu0 0.0
        %6634 = vmatpush1.msra.mxu0 %v2258
        %6635 = vmatprep.subr.mxu0 0.0
        %6636 = vmatpush1.msra.mxu0 %v2259
        %6637 = vmatprep.subr.mxu0 0.0
        %6638 = vmatpush1.msra.mxu0 %v2260
        %6639 = vmatprep.subr.mxu0 0.0
        %6640 = vmatpush1.msra.mxu0 %v2261
        %6641 = vmatprep.subr.mxu0 0.0
        %6642 = vmatpush1.msra.mxu0 %v2262
        %6643 = vmatprep.subr.mxu0 0.0
        %6644 = vmatpush1.msra.mxu0 %v2263
        %6645 = vmatprep.subr.mxu0 0.0
        %6646 = vmatpush1.msra.mxu0 %v2264
        %6647 = vmatprep.subr.mxu0 0.0
        %6648 = vmatpush1.msra.mxu0 %v2265
        %6649 = vmatprep.subr.mxu0 0.0
        %6650 = vmatpush1.msra.mxu0 %v2266
        %6651 = vmatprep.subr.mxu0 0.0
        %6652 = vmatpush1.msra.mxu0 %v2267
        %6653 = vmatprep.subr.mxu0 0.0
        %6654 = vmatpush1.msra.mxu0 %v2268
        %6655 = vmatprep.subr.mxu0 0.0
        %6656 = vmatpush1.msra.mxu0 %v2269
        %6657 = vmatprep.subr.mxu0 0.0
        %6658 = vmatpush1.msra.mxu0 %v2270
        %6659 = vmatprep.subr.mxu0 0.0
        %6660 = vmatpush1.msra.mxu0 %v2271
        %6661 = vmatprep.subr.mxu0 0.0
        %6662 = vmatpush1.msra.mxu0 %v2272
        %6663 = vmatprep.subr.mxu0 0.0
        %6664 = vmatpush1.msra.mxu0 %v2273
        %6665 = vmatprep.subr.mxu0 0.0
        %6666 = vmatpush1.msra.mxu0 %v2274
        %6667 = vmatprep.subr.mxu0 0.0
        %6668 = vmatpush1.msra.mxu0 %v2275
        %6669 = vmatprep.subr.mxu0 0.0
        %6670 = vmatpush1.msra.mxu0 %v2276
        %6671 = vmatprep.subr.mxu0 0.0
        %6672 = vmatpush1.msra.mxu0 %v2277
        %6673 = vmatprep.subr.mxu0 0.0
        %6674 = vmatpush1.msra.mxu0 %v2278
        %6675 = vmatprep.subr.mxu0 0.0
        %6676 = vmatpush1.msra.mxu0 %v2279
        %6677 = vmatprep.subr.mxu0 0.0
        %6678 = vmatpush1.msra.mxu0 %v2280
        %6679 = vmatprep.mubr.f32.mxu0 %v292
        %6680 = vmatmul.mubr.f32.gmra.mrb[0].mxu0 %v291
        %v6681 = vpop.f32.mrb[0].mxu0
        %v6682 = vadd.f32 %v6612, %v6681
        %v6683 = vpop.f32.mrb[0].mxu0
        %6684 = vdwg.mxu0
        %6685 = vmatprep.subr.mxu0 0.0
        %6686 = vmatpush1.msra.mxu0 %v2281
        %6687 = vmatprep.subr.mxu0 0.0
        %6688 = vmatpush1.msra.mxu0 %v2282
        %6689 = vmatprep.subr.mxu0 0.0
        %6690 = vmatpush1.msra.mxu0 %v2283
        %6691 = vmatprep.subr.mxu0 0.0
        %6692 = vmatpush1.msra.mxu0 %v2284
        %6693 = vmatprep.subr.mxu0 0.0
        %6694 = vmatpush1.msra.mxu0 %v2285
        %6695 = vmatprep.subr.mxu0 0.0
        %6696 = vmatpush1.msra.mxu0 %v2286
        %6697 = vmatprep.subr.mxu0 0.0
        %6698 = vmatpush1.msra.mxu0 %v2287
        %6699 = vmatprep.subr.mxu0 0.0
        %6700 = vmatpush1.msra.mxu0 %v2288
        %6701 = vmatprep.subr.mxu0 0.0
        %6702 = vmatpush1.msra.mxu0 %v2289
        %6703 = vmatprep.subr.mxu0 0.0
        %6704 = vmatpush1.msra.mxu0 %v2290
        %6705 = vmatprep.subr.mxu0 0.0
        %6706 = vmatpush1.msra.mxu0 %v2291
        %6707 = vmatprep.subr.mxu0 0.0
        %6708 = vmatpush1.msra.mxu0 %v2292
        %6709 = vmatprep.subr.mxu0 0.0
        %6710 = vmatpush1.msra.mxu0 %v2293
        %6711 = vmatprep.subr.mxu0 0.0
        %6712 = vmatpush1.msra.mxu0 %v2294
        %6713 = vmatprep.subr.mxu0 0.0
        %6714 = vmatpush1.msra.mxu0 %v2295
        %6715 = vmatprep.subr.mxu0 0.0
        %6716 = vmatpush1.msra.mxu0 %v2296
        %6717 = vmatprep.subr.mxu0 0.0
        %6718 = vmatpush1.msra.mxu0 %v2297
        %6719 = vmatprep.subr.mxu0 0.0
        %6720 = vmatpush1.msra.mxu0 %v2298
        %6721 = vmatprep.subr.mxu0 0.0
        %6722 = vmatpush1.msra.mxu0 %v2299
        %6723 = vmatprep.subr.mxu0 0.0
        %6724 = vmatpush1.msra.mxu0 %v2300
        %6725 = vmatprep.subr.mxu0 0.0
        %6726 = vmatpush1.msra.mxu0 %v2301
        %6727 = vmatprep.subr.mxu0 0.0
        %6728 = vmatpush1.msra.mxu0 %v2302
        %6729 = vmatprep.subr.mxu0 0.0
        %6730 = vmatpush1.msra.mxu0 %v2303
        %6731 = vmatprep.subr.mxu0 0.0
        %6732 = vmatpush1.msra.mxu0 %v2304
        %6733 = vmatprep.subr.mxu0 0.0
        %6734 = vmatpush1.msra.mxu0 %v2305
        %6735 = vmatprep.subr.mxu0 0.0
        %6736 = vmatpush1.msra.mxu0 %v2306
        %6737 = vmatprep.subr.mxu0 0.0
        %6738 = vmatpush1.msra.mxu0 %v2307
        %6739 = vmatprep.subr.mxu0 0.0
        %6740 = vmatpush1.msra.mxu0 %v2308
        %6741 = vmatprep.subr.mxu0 0.0
        %6742 = vmatpush1.msra.mxu0 %v2309
        %6743 = vmatprep.subr.mxu0 0.0
        %6744 = vmatpush1.msra.mxu0 %v2310
        %6745 = vmatprep.subr.mxu0 0.0
        %6746 = vmatpush1.msra.mxu0 %v2311
        %6747 = vmatprep.subr.mxu0 0.0
        %6748 = vmatpush1.msra.mxu0 %v2312
        %6749 = vmatprep.mubr.f32.mxu0 %v294
        %6750 = vmatmul.mubr.f32.gmra.mrb[0].mxu0 %v293
        %v6751 = vpop.f32.mrb[0].mxu0
        %v6752 = vadd.f32 %v6682, %v6751
        %v6753 = vpop.f32.mrb[0].mxu0
        %6754 = vdwg.mxu0
        %6755 = vmatprep.subr.mxu0 0.0
        %6756 = vmatpush1.msra.mxu0 %v2313
        %6757 = vmatprep.subr.mxu0 0.0
        %6758 = vmatpush1.msra.mxu0 %v2314
        %6759 = vmatprep.subr.mxu0 0.0
        %6760 = vmatpush1.msra.mxu0 %v2315
        %6761 = vmatprep.subr.mxu0 0.0
        %6762 = vmatpush1.msra.mxu0 %v2316
        %6763 = vmatprep.subr.mxu0 0.0
        %6764 = vmatpush1.msra.mxu0 %v2317
        %6765 = vmatprep.subr.mxu0 0.0
        %6766 = vmatpush1.msra.mxu0 %v2318
        %6767 = vmatprep.subr.mxu0 0.0
        %6768 = vmatpush1.msra.mxu0 %v2319
        %6769 = vmatprep.subr.mxu0 0.0
        %6770 = vmatpush1.msra.mxu0 %v2320
        %6771 = vmatprep.subr.mxu0 0.0
        %6772 = vmatpush1.msra.mxu0 %v2321
        %6773 = vmatprep.subr.mxu0 0.0
        %6774 = vmatpush1.msra.mxu0 %v2322
        %6775 = vmatprep.subr.mxu0 0.0
        %6776 = vmatpush1.msra.mxu0 %v2323
        %6777 = vmatprep.subr.mxu0 0.0
        %6778 = vmatpush1.msra.mxu0 %v2324
        %6779 = vmatprep.subr.mxu0 0.0
        %6780 = vmatpush1.msra.mxu0 %v2325
        %6781 = vmatprep.subr.mxu0 0.0
        %6782 = vmatpush1.msra.mxu0 %v2326
        %6783 = vmatprep.subr.mxu0 0.0
        %6784 = vmatpush1.msra.mxu0 %v2327
        %6785 = vmatprep.subr.mxu0 0.0
        %6786 = vmatpush1.msra.mxu0 %v2328
        %6787 = vmatprep.subr.mxu0 0.0
        %6788 = vmatpush1.msra.mxu0 %v2329
        %6789 = vmatprep.subr.mxu0 0.0
        %6790 = vmatpush1.msra.mxu0 %v2330
        %6791 = vmatprep.subr.mxu0 0.0
        %6792 = vmatpush1.msra.mxu0 %v2331
        %6793 = vmatprep.subr.mxu0 0.0
        %6794 = vmatpush1.msra.mxu0 %v2332
        %6795 = vmatprep.subr.mxu0 0.0
        %6796 = vmatpush1.msra.mxu0 %v2333
        %6797 = vmatprep.subr.mxu0 0.0
        %6798 = vmatpush1.msra.mxu0 %v2334
        %6799 = vmatprep.subr.mxu0 0.0
        %6800 = vmatpush1.msra.mxu0 %v2335
        %6801 = vmatprep.subr.mxu0 0.0
        %6802 = vmatpush1.msra.mxu0 %v2336
        %6803 = vmatprep.subr.mxu0 0.0
        %6804 = vmatpush1.msra.mxu0 %v2337
        %6805 = vmatprep.subr.mxu0 0.0
        %6806 = vmatpush1.msra.mxu0 %v2338
        %6807 = vmatprep.subr.mxu0 0.0
        %6808 = vmatpush1.msra.mxu0 %v2339
        %6809 = vmatprep.subr.mxu0 0.0
        %6810 = vmatpush1.msra.mxu0 %v2340
        %6811 = vmatprep.subr.mxu0 0.0
        %6812 = vmatpush1.msra.mxu0 %v2341
        %6813 = vmatprep.subr.mxu0 0.0
        %6814 = vmatpush1.msra.mxu0 %v2342
        %6815 = vmatprep.subr.mxu0 0.0
        %6816 = vmatpush1.msra.mxu0 %v2343
        %6817 = vmatprep.subr.mxu0 0.0
        %6818 = vmatpush1.msra.mxu0 %v2344
        %6819 = vmatprep.mubr.f32.mxu0 %v296
        %6820 = vmatmul.mubr.f32.gmra.mrb[0].mxu0 %v295
        %v6821 = vpop.f32.mrb[0].mxu0
        %v6822 = vadd.f32 %v6752, %v6821
        %v6823 = vpop.f32.mrb[0].mxu0
        %6824 = vdwg.mxu0
        %v6825 = vmax.f32 %v6822, 0.0
        %v6826 = vld [vmem:[%s2] sm:$0xf]
        %vm6827 = vcmask 31744
        %v6829 = vsel %vm6827, %v6825, 0
        %vm6831 = vcmask 1043456
        %v6833 = vsel %vm6831, %v6826, 0
        %6835 = vmatprep.subr.mxu0 0.0
        %6836 = vmatpush1.msra.mxu0 %v6833
        %6837 = vmatprep.subr.mxu0 0.0
        %6838 = vmatpush1.msra.mxu0 0.0
        %6839 = vmatprep.subr.mxu0 0.0
        %6840 = vmatpush1.msra.mxu0 0.0
        %6841 = vmatprep.subr.mxu0 0.0
        %6842 = vmatpush1.msra.mxu0 0.0
        %6843 = vmatprep.subr.mxu0 0.0
        %6844 = vmatpush1.msra.mxu0 0.0
        %6845 = vmatprep.subr.mxu0 0.0
        %6846 = vmatpush1.msra.mxu0 0.0
        %6847 = vmatprep.subr.mxu0 0.0
        %6848 = vmatpush1.msra.mxu0 0.0
        %6849 = vmatprep.subr.mxu0 0.0
        %6850 = vmatpush1.msra.mxu0 0.0
        %6851 = vmatprep.subr.mxu0 0.0
        %6852 = vmatpush1.msra.mxu0 0.0
        %6853 = vmatprep.subr.mxu0 0.0
        %6854 = vmatpush1.msra.mxu0 0.0
        %6855 = vmatprep.subr.mxu0 0.0
        %6856 = vmatpush1.msra.mxu0 0.0
        %6857 = vmatprep.subr.mxu0 0.0
        %6858 = vmatpush1.msra.mxu0 0.0
        %6859 = vmatprep.subr.mxu0 0.0
        %6860 = vmatpush1.msra.mxu0 0.0
        %6861 = vmatprep.subr.mxu0 0.0
        %6862 = vmatpush1.msra.mxu0 0.0
        %6863 = vmatprep.subr.mxu0 0.0
        %6864 = vmatpush1.msra.mxu0 0.0
        %6865 = vmatprep.subr.mxu0 0.0
        %6866 = vmatpush1.msra.mxu0 0.0
        %6867 = vmatprep.subr.mxu0 0.0
        %6868 = vmatpush1.msra.mxu0 0.0
        %6869 = vmatprep.subr.mxu0 0.0
        %6870 = vmatpush1.msra.mxu0 0.0
        %6871 = vmatprep.subr.mxu0 0.0
        %6872 = vmatpush1.msra.mxu0 0.0
        %6873 = vmatprep.subr.mxu0 0.0
        %6874 = vmatpush1.msra.mxu0 0.0
        %6875 = vmatprep.subr.mxu0 0.0
        %6876 = vmatpush1.msra.mxu0 0.0
        %6877 = vmatprep.subr.mxu0 0.0
        %6878 = vmatpush1.msra.mxu0 0.0
        %6879 = vmatprep.subr.mxu0 0.0
        %6880 = vmatpush1.msra.mxu0 0.0
        %6881 = vmatprep.subr.mxu0 0.0
        %6882 = vmatpush1.msra.mxu0 0.0
        %6883 = vmatprep.subr.mxu0 0.0
        %6884 = vmatpush1.msra.mxu0 0.0
        %6885 = vmatprep.subr.mxu0 0.0
        %6886 = vmatpush1.msra.mxu0 0.0
        %6887 = vmatprep.subr.mxu0 0.0
        %6888 = vmatpush1.msra.mxu0 0.0
        %6889 = vmatprep.subr.mxu0 0.0
        %6890 = vmatpush1.msra.mxu0 0.0
        %6891 = vmatprep.subr.mxu0 0.0
        %6892 = vmatpush1.msra.mxu0 0.0
        %6893 = vmatprep.subr.mxu0 0.0
        %6894 = vmatpush1.msra.mxu0 0.0
        %6895 = vmatprep.subr.mxu0 0.0
        %6896 = vmatpush1.msra.mxu0 0.0
        %6897 = vmatprep.subr.mxu0 0.0
        %6898 = vmatpush1.msra.mxu0 0.0
        %6899 = vmatprep.mubr.f32.mxu0 0.0
        %6900 = vmatmul.mubr.f32.gmra.mrb[0].mxu0 %v6829
        %v6901 = vpop.f32.mrb[0].mxu0
        %v6902 = vadd.f32 3.0, %v6901
        %v6903 = vpop.f32.mrb[0].mxu0
        %6904 = vdwg.mxu0
        %v6905 = vmax.f32 %v6902, 0.0
        %v6906 = vmin.f32 %v6905, 6.0
        %v6907 = vmul.f32 %v6906, 0.33333334
        %vm6908 = vcmask 523264
        %6909 = vst.msk [vmem:[%s163] sm:$0xff] %vm6908, %v6907
        %s6910 = sand.u32 %s93, 1
        %s6911 = scalar_lea.sflag [#allocation3], %s6910
        %s6912 = sand.u32 %s93, 1
        %s6913 = smul.addr %s6912, 8
        %s6914 = scalar_lea.vmem [#allocation2], %s6913
        // Predicated region
        $region33: #{tpu_custom_call.1} parent=31 // pred_check
          %p6915 = pneg %p103
        $region34: #{tpu_custom_call.1} parent=31 // pred_check_branch
          %6917 = sbr.rel (%p6915) target = $region36
        $region35: #{tpu_custom_call.1} parent=31 // pred_region
          %s6919 = ssub.s32 128, 128
          %6920 = vsyncadd %s6911, %s6919
          %s6921 = smul.addr %s17, 128
          %s6922 = scalar_lea.hbm %s3, %s6921
          %s6924 = sshll.u32 %s6914, 4
          %s6925 = int_to_ptr.vmem [resolvable:$true] %s6924
          %6927 = dma.vmem_to_hbm [thread:$0]  %s6925, 128, %s6922, %s6911
        $region36: #{tpu_custom_call.1} parent=31 // pred_fallthru
          _
      $region32: #{tpu_custom_call.1} parent=5 // pred_fallthru
        _
      %p6928 = scmp.le.s32.totalorder 2, %s12
      // Predicated region
      $region37: #{tpu_custom_call.1} parent=5 // pred_check
        %p6929 = pneg %p6928
      $region38: #{tpu_custom_call.1} parent=5 // pred_check_branch
        %6931 = sbr.rel (%p6929) target = $region40
      $region39: #{tpu_custom_call.1} parent=5 // pred_region
        %s6932 = ssub.s32 %s12, 2
        // Predicated region
        $region41: #{tpu_custom_call.1} parent=39 // pred_check
          %p6933 = pneg %p109
        $region42: #{tpu_custom_call.1} parent=39 // pred_check_branch
          %6935 = sbr.rel (%p6933) target = $region44
        $region43: #{tpu_custom_call.1} parent=39 // pred_region
          %s6936 = sand.u32 %s94, 1
          %s6937 = scalar_lea.sflag [#allocation3], %s6936
          %s6938 = sand.u32 %s94, 1
          %s6939 = smul.addr %s6938, 8
          %s6940 = scalar_lea.vmem [#allocation2], %s6939
          %6941 = dma.done %s6937, 128
        $region44: #{tpu_custom_call.1} parent=39 // pred_fallthru
          _
      $region40: #{tpu_custom_call.1} parent=5 // pred_fallthru
        _
    $region6: #{tpu_custom_call.1} parent=1 // loop_footer
      %s16 = sadd.s32 1, %s12
    $region7: #{tpu_custom_call.1} parent=1 // loop_footer_branch
      %11 = sbr.rel target = $region3
    $region8: #{tpu_custom_call.1} parent=1 // loop_exit
      _
    %6942 = vsyncpa [#allocation3], 1
    %s6943 = scalar_lea.sflag [#allocation3], 1
    %6944 = vsyncpa %s6943, 1

</llo_original>
